<compile_context>
chip_gen: v7x
topology: tpu7x:2x2x1
jax: 0.10.0
libtpu: 0.0.40
codegen_flags: <defaults>
</compile_context>

<pallas_src>
import functools

import jax
import jax.numpy as jnp
from jax.experimental import pallas as pl
from jax.experimental.pallas import tpu as pltpu


def _round_up(v, m):
    return ((v + m - 1) // m) * m


# ----------------------------------------------------------------------------
# Pallas kernel 1: fused Conv2d(stride=1,"same") + folded BN + ReLU + MaxPool2
#   Per batch element b (grid=(N,)):
#     - assemble im2col^T (Kp, Lacc) in VMEM from lane-shifted slices of the
#       row-flattened zero-padded image (Lacc = H*Wp output positions, the
#       Wp-W garbage columns are cropped by the pooling matmul below)
#     - acc(Cout, Lacc) = W^T(Cout, Kp) @ patch(Kp, Lacc)     (bf16 MXU, f32 acc)
#     - bias + ReLU
#     - 2x2 max-pool: lane-shift maxima (w+1 and h+1 neighbours), then a 0/1
#       selection matmul S(Lacc, Lpool) that crops + stride-2 subsamples.
# ----------------------------------------------------------------------------
def _conv_pool_kernel(x_ref, w_ref, b_ref, s_ref, o_ref, patch_ref, *,
                      cin, k, wp, lacc, kp):
    xfull = x_ref[0]                                     # (cin, lin) bf16
    # Fused im2col: tap (di, dj) is the contiguous lane slice at di*wp + dj.
    for di in range(k):
        for dj in range(k):
            tap = di * k + dj
            off = di * wp + dj
            patch_ref[pl.ds(tap * cin, cin), :] = xfull[:, off:off + lacc]
    tail = kp - k * k * cin
    if tail:                                             # keep padded K rows finite
        patch_ref[pl.ds(k * k * cin, tail), :] = jnp.zeros(
            (tail, lacc), patch_ref.dtype)

    acc = jnp.dot(w_ref[...], patch_ref[...],
                  preferred_element_type=jnp.float32)    # (cout, lacc)
    acc = jnp.maximum(acc + b_ref[...], 0.0)             # bias + ReLU

    def shl(a, s):                                       # out[:, i] = a[:, i+s]
        # wrap-around tail is never selected by the pooling matrix
        return jnp.concatenate([a[:, s:], a[:, :s]], axis=1)

    v = jnp.maximum(acc, shl(acc, 1))                    # horizontal 2-max
    v = jnp.maximum(v, shl(v, wp))                       # vertical 2-max
    pooled = jnp.dot(v.astype(jnp.bfloat16), s_ref[...],
                     preferred_element_type=jnp.float32)  # crop + stride-2 pick
    o_ref[...] = pooled[None].astype(o_ref.dtype)


def conv_bn_relu_pool(act_nchw, wT, b, sel, cfg):
    n = act_nchw.shape[0]
    cin, cout = cfg["cin"], cfg["cout"]
    k, pad, wp = cfg["k"], cfg["pad"], cfg["wp"]
    lacc, lpool, kp = cfg["lacc"], cfg["lpool"], cfg["kp"]
    h, w = cfg["h"], cfg["w"]
    # Zero-pad and row-flatten so in-kernel tap extraction is a static lane
    # slice.  (h+k) rows guarantee every tap slice of length lacc stays in
    # bounds; only a ~1.3x padded copy instead of the old k^2 im2col blow-up.
    xp = jnp.pad(act_nchw, ((0, 0), (0, 0), (pad, k - pad), (pad, pad)))
    lin = (h + k) * wp
    xf = xp.reshape(n, cin, lin).astype(jnp.bfloat16)

    out = pl.pallas_call(
        functools.partial(_conv_pool_kernel,
                          cin=cin, k=k, wp=wp, lacc=lacc, kp=kp),
        grid=(n,),
        in_specs=[
            pl.BlockSpec((1, cin, lin), lambda bb: (bb, 0, 0)),
            pl.BlockSpec((cout, kp), lambda bb: (0, 0)),     # resident weights
            pl.BlockSpec((cout, 1), lambda bb: (0, 0)),      # resident bias
            pl.BlockSpec((lacc, lpool), lambda bb: (0, 0)),  # resident pool-select
        ],
        out_specs=pl.BlockSpec((1, cout, lpool), lambda bb: (bb, 0, 0)),
        out_shape=jax.ShapeDtypeStruct((n, cout, lpool), jnp.bfloat16),
        scratch_shapes=[pltpu.VMEM((kp, lacc), jnp.bfloat16)],
        compiler_params=pltpu.CompilerParams(
            dimension_semantics=("parallel",),
        ),
    )(xf, wT.astype(jnp.bfloat16),
      b.reshape(cout, 1).astype(jnp.float32),
      sel.astype(jnp.bfloat16))
    return out.reshape(n, cout, h // 2, w // 2)


# ----------------------------------------------------------------------------
# Pallas kernel 2: fused FC head (Linear+BN+ReLU, Linear) -> theta
#   (N, 256) @ (256, 32) -> ReLU -> @ (32, 6).  Tiny; kept f32 (precision of
#   theta matters more than speed here).
# ----------------------------------------------------------------------------
def _fc_head_kernel(f_ref, w1_ref, b1_ref, w2_ref, b2_ref, o_ref):
    hid = jnp.dot(f_ref[...], w1_ref[...], preferred_element_type=jnp.float32)
    hid = jnp.maximum(hid + b1_ref[...], 0.0)
    theta = jnp.dot(hid, w2_ref[...], preferred_element_type=jnp.float32)
    o_ref[...] = theta + b2_ref[...]


def fc_head(feat, wf1, bf1, wf2, bf2):
    n = feat.shape[0]
    return pl.pallas_call(
        _fc_head_kernel,
        out_shape=jax.ShapeDtypeStruct((n, 6), jnp.float32),
    )(feat.astype(jnp.float32),
      wf1.astype(jnp.float32), bf1.reshape(1, -1).astype(jnp.float32),
      wf2.astype(jnp.float32), bf2.reshape(1, -1).astype(jnp.float32))


# ----------------------------------------------------------------------------
# Pallas kernel 3: bilinear grid_sample (align_corners=False, zero padding)
#   Separable formulation, tiled over (batch, output-pixel chunk):
#     Ax[w, p], Ay[h, p]: two-corner one-hot weight matrices (OOB masked to 0,
#       indices clamped before the int cast -> no aliasing / UB)
#     M  = img(C*H, W) @ Ax(W, THW)          (bf16 MXU, f32 acc)
#     out[c, p] = sum_h Ay[h, p] * M[c*H+h, p]   (VPU)
# ----------------------------------------------------------------------------
def _grid_sample_kernel(ix_ref, iy_ref, x_ref, o_ref, *, C, H, W):
    thw = ix_ref.shape[-1]
    ix = ix_ref[0]                           # (1, thw) pixel-space x coords
    iy = iy_ref[0]                           # (1, thw) pixel-space y coords
    img = x_ref[0]                           # (C*H, W) bf16, rows = (c, h)

    x0f = jnp.floor(ix)
    y0f = jnp.floor(iy)
    fx = ix - x0f
    fy = iy - y0f

    def axis_matrix(c0f, frac, size, dtype):
        v0 = (c0f >= 0.0) & (c0f <= size - 1.0)
        v1 = (c0f + 1.0 >= 0.0) & (c0f + 1.0 <= size - 1.0)
        w0 = jnp.where(v0, 1.0 - frac, 0.0)                     # (1, thw)
        w1 = jnp.where(v1, frac, 0.0)
        c0 = jnp.clip(c0f, 0.0, size - 1.0).astype(jnp.int32)   # safe int cast
        c1 = jnp.clip(c0f + 1.0, 0.0, size - 1.0).astype(jnp.int32)
        rows = jax.lax.broadcasted_iota(jnp.int32, (size, thw), 0)
        m = jnp.where(rows == c0, w0, 0.0) + jnp.where(rows == c1, w1, 0.0)
        return m.astype(dtype)

    ax = axis_matrix(x0f, fx, W, jnp.bfloat16)       # (W, thw) -> MXU RHS
    ay = axis_matrix(y0f, fy, H, jnp.float32)        # (H, thw) -> VPU combine

    m = jnp.dot(img, ax, preferred_element_type=jnp.float32)    # (C*H, thw)
    out = jnp.sum(m.reshape(C, H, thw) * ay[None, :, :], axis=1)  # (C, thw)
    o_ref[...] = out[None].astype(o_ref.dtype)


def _pick_hw_chunk(total, cap=2048):
    if total <= cap:
        return total
    for d in range(cap, 0, -1):
        if total % d == 0 and d % 128 == 0:
            return d
    return total                                   # fallback: single chunk


def grid_sample_pallas(x, ix, iy):
    N, C, H, W = x.shape
    HW = H * W
    thw = _pick_hw_chunk(HW)
    x_rows = x.reshape(N, C * H, W).astype(jnp.bfloat16)
    out = pl.pallas_call(
        functools.partial(_grid_sample_kernel, C=C, H=H, W=W),
        grid=(N, HW // thw),
        in_specs=[
            pl.BlockSpec((1, 1, thw), lambda b, j: (b, 0, j)),
            pl.BlockSpec((1, 1, thw), lambda b, j: (b, 0, j)),
            pl.BlockSpec((1, C * H, W), lambda b, j: (b, 0, 0)),  # resident img
        ],
        out_specs=pl.BlockSpec((1, C, thw), lambda b, j: (b, 0, j)),
        out_shape=jax.ShapeDtypeStruct((N, C, HW), jnp.float32),
        compiler_params=pltpu.CompilerParams(
            dimension_semantics=("parallel", "parallel"),
        ),
    )(ix.reshape(N, 1, HW).astype(jnp.float32),
      iy.reshape(N, 1, HW).astype(jnp.float32),
      x_rows)
    return out.reshape(N, C, H, W)


# ----------------------------------------------------------------------------
# Plain-JAX glue
# ----------------------------------------------------------------------------
def affine_sample_coords(theta, H, W):
    # F.affine_grid(theta, size, align_corners=False) followed by the
    # grid_sample un-normalization to pixel coordinates.
    xs = (2.0 * jnp.arange(W, dtype=jnp.float32) + 1.0) / W - 1.0
    ys = (2.0 * jnp.arange(H, dtype=jnp.float32) + 1.0) / H - 1.0
    xg, yg = jnp.meshgrid(xs, ys)                             # (H, W) each
    base = jnp.stack(
        [xg.ravel(), yg.ravel(), jnp.ones(H * W, jnp.float32)], axis=-1)
    g = jnp.einsum("nij,pj->npi", theta, base)                # (N, HW, 2)
    ix = ((g[..., 0] + 1.0) * W - 1.0) * 0.5
    iy = ((g[..., 1] + 1.0) * H - 1.0) * 0.5
    return ix, iy


def stn_layer_cfgs(in_channels, height, width):
    C = in_channels
    cfgs, h, w = [], height, width
    for cin, cout, k in [(C, 2 * C, 5), (2 * C, 4 * C, 3), (4 * C, 8 * C, 3)]:
        pad = k // 2
        wp = w + 2 * pad
        cfgs.append(dict(cin=cin, cout=cout, k=k, pad=pad, h=h, w=w, wp=wp,
                         lacc=h * wp, lpool=(h // 2) * (w // 2),
                         kp=_round_up(cin * k * k, 16)))
        h, w = h // 2, w // 2
    return cfgs


def _make_pool_select(h, w, wp):
    # 0/1 matrix (Lacc, Lpool): picks position (2*h2*wp + 2*w2) -> (h2, w2),
    # simultaneously cropping the Wp-W garbage columns.
    lacc, lpool = h * wp, (h // 2) * (w // 2)
    rows = jnp.arange(lacc)
    rr, cc = rows // wp, rows % wp
    valid = (rr % 2 == 0) & (cc % 2 == 0) & (cc < w)
    col = jnp.where(valid, (rr // 2) * (w // 2) + cc // 2, 0)
    sel = jnp.zeros((lacc, lpool), jnp.float32)
    sel = sel.at[rows, col].add(jnp.where(valid, 1.0, 0.0))
    return sel.astype(jnp.bfloat16)


# ----------------------------------------------------------------------------
# Parameters (deterministic, synthetic) — shapes follow STN.__init__
# ----------------------------------------------------------------------------
def _fold_bn_rows(wT, b, gamma, beta, mean, var, eps=1e-5):
    scale = gamma / jnp.sqrt(var + eps)                  # per output row
    return wT * scale[:, None], (b - mean) * scale + beta


def _fold_bn_cols(w, b, gamma, beta, mean, var, eps=1e-5):
    scale = gamma / jnp.sqrt(var + eps)                  # per output column
    return w * scale[None, :], (b - mean) * scale + beta


def _bn_params(key, c):
    k1, k2 = jax.random.split(key)
    gamma = 1.0 + 0.1 * jax.random.normal(k1, (c,), jnp.float32)
    beta = 0.1 * jax.random.normal(k2, (c,), jnp.float32)
    return gamma, beta, jnp.zeros((c,), jnp.float32), jnp.ones((c,), jnp.float32)


def init_params(key, in_channels, height, width):
    cfgs = stn_layer_cfgs(in_channels, height, width)
    ks = jax.random.split(key, 9)
    params = {}
    for i, cfg in enumerate(cfgs):
        kw, kb = ks[2 * i], ks[2 * i + 1]
        w = 0.05 * jax.random.normal(
            kw, (cfg["cout"], cfg["cin"], cfg["k"], cfg["k"]), jnp.float32)
        # tap-major column order (di, dj, ci) matching the in-kernel patch rows
        wT = w.transpose(0, 2, 3, 1).reshape(cfg["cout"], -1)
        b = jnp.zeros((cfg["cout"],), jnp.float32)
        wT, b = _fold_bn_rows(wT, b, *_bn_params(kb, cfg["cout"]))
        wT = jnp.pad(wT, ((0, 0), (0, cfg["kp"] - wT.shape[1])))
        params[f"w{i + 1}"] = wT
        params[f"b{i + 1}"] = b
        params[f"s{i + 1}"] = _make_pool_select(cfg["h"], cfg["w"], cfg["wp"])

    fin = cfgs[-1]["cout"] * cfgs[-1]["lpool"]           # 8*C*16 (needs 32x32 input)
    wf1 = 0.05 * jax.random.normal(ks[6], (fin, 32), jnp.float32)
    bf1 = 0.01 * jax.random.normal(ks[7], (32,), jnp.float32)
    wf1, bf1 = _fold_bn_cols(wf1, bf1, *_bn_params(ks[8], 32))
    params["wf1"], params["bf1"] = wf1, bf1
    params["wf2"] = jnp.zeros((32, 6), jnp.float32)      # zeroed, as in __init__
    params["bf2"] = jnp.array([1, 0, 0, 0, 1, 0], jnp.float32)  # identity affine
    return params


# ----------------------------------------------------------------------------
# Full STN forward
# ----------------------------------------------------------------------------
@jax.jit
def stn_forward(x, params):
    N, C, H, W = x.shape
    cfgs = stn_layer_cfgs(C, H, W)
    y = x
    for i, cfg in enumerate(cfgs):
        y = conv_bn_relu_pool(y, params[f"w{i + 1}"], params[f"b{i + 1}"],
                              params[f"s{i + 1}"], cfg)     # (N, Cout, h/2, w/2) bf16
    feat = y.astype(jnp.float32).reshape(N, -1)             # PyTorch NCHW flatten
    theta = fc_head(feat, params["wf1"], params["bf1"],
                    params["wf2"], params["bf2"]).reshape(N, 2, 3)
    ix, iy = affine_sample_coords(theta, H, W)
    return grid_sample_pallas(x, ix, iy)


if __name__ == "__main__":
    key = jax.random.PRNGKey(0)
    k_in, k_par = jax.random.split(key)

    N, C, H, W = 2, 2, 32, 32     # STN's FC head (8C*16 features) requires 32x32
    x = jax.random.normal(k_in, (N, C, H, W), jnp.float32)
    params = init_params(k_par, C, H, W)

    out = jax.block_until_ready(stn_forward(x, params))

    assert out.shape == x.shape
    assert bool(jnp.all(jnp.isfinite(out)))
    # With the zero-initialized final FC layer, theta is the identity affine
    # transform, so grid_sample should reproduce the input (up to bf16 rounding).
    assert bool(jnp.allclose(out, x, atol=2e-2, rtol=2e-2))

    print("KERNEL_OK")
</pallas_src>

<mosaic_0001>
module attributes {stable_mosaic.version = 11 : i64} {
  func.func @_conv_pool_kernel(%arg0: i32, %arg1: memref<1x2x1332xbf16, #tpu.memory_space<vmem>>, %arg2: memref<4x64xbf16, #tpu.memory_space<vmem>>, %arg3: memref<4x1xf32, #tpu.memory_space<vmem>>, %arg4: memref<1152x256xbf16, #tpu.memory_space<vmem>>, %arg5: memref<1x4x256xbf16, #tpu.memory_space<vmem>>, %arg6: memref<64x1152xbf16, #tpu.memory_space<vmem>>) attributes {dimension_semantics = [#tpu.dimension_semantics<parallel>], iteration_bounds = array<i64: 2>, scalar_prefetch = 0 : i64, scratch_operands = 1 : i64, tpu.core_type = #tpu.core_type<tc>, window_params = [{transform_indices = @transform_0, window_bounds = array<i64: 1, 2, 1332>}, {pipeline_mode = #tpu.pipeline_mode<synchronous>, transform_indices = @transform_1, window_bounds = array<i64: 4, 64>}, {pipeline_mode = #tpu.pipeline_mode<synchronous>, transform_indices = @transform_2, window_bounds = array<i64: 4, 1>}, {pipeline_mode = #tpu.pipeline_mode<synchronous>, transform_indices = @transform_3, window_bounds = array<i64: 1152, 256>}, {transform_indices = @transform_4, window_bounds = array<i64: 1, 4, 256>}]} {
    %c0 = arith.constant 0 : index
    %c0_0 = arith.constant 0 : index
    %c0_1 = arith.constant 0 : index
    %0 = vector.load %arg1[%c0, %c0_0, %c0_1] : memref<1x2x1332xbf16, #tpu.memory_space<vmem>>, vector<1x2x1332xbf16>
    %1 = vector.shape_cast %0 : vector<1x2x1332xbf16> to vector<2x1332xbf16>
    %2 = vector.extract_strided_slice %1 {offsets = [0, 0], sizes = [2, 1152], strides = [1, 1]} : vector<2x1332xbf16> to vector<2x1152xbf16>
    %c0_2 = arith.constant 0 : index
    %c0_3 = arith.constant 0 : index
    %3 = vector.load %arg6[%c0_2, %c0_3] : memref<64x1152xbf16, #tpu.memory_space<vmem>>, vector<2x1152xbf16>
    tpu.vector_store %arg6[%c0_2, %c0_3], %2 {strides = array<i32>} : memref<64x1152xbf16, #tpu.memory_space<vmem>>, vector<2x1152xbf16>,
    %4 = vector.extract_strided_slice %1 {offsets = [0, 1], sizes = [2, 1152], strides = [1, 1]} : vector<2x1332xbf16> to vector<2x1152xbf16>
    %c2 = arith.constant 2 : index
    %c0_4 = arith.constant 0 : index
    %5 = vector.load %arg6[%c2, %c0_4] : memref<64x1152xbf16, #tpu.memory_space<vmem>>, vector<2x1152xbf16>
    tpu.vector_store %arg6[%c2, %c0_4], %4 {strides = array<i32>} : memref<64x1152xbf16, #tpu.memory_space<vmem>>, vector<2x1152xbf16>,
    %6 = vector.extract_strided_slice %1 {offsets = [0, 2], sizes = [2, 1152], strides = [1, 1]} : vector<2x1332xbf16> to vector<2x1152xbf16>
    %c4 = arith.constant 4 : index
    %c0_5 = arith.constant 0 : index
    %7 = vector.load %arg6[%c4, %c0_5] : memref<64x1152xbf16, #tpu.memory_space<vmem>>, vector<2x1152xbf16>
    tpu.vector_store %arg6[%c4, %c0_5], %6 {strides = array<i32>} : memref<64x1152xbf16, #tpu.memory_space<vmem>>, vector<2x1152xbf16>,
    %8 = vector.extract_strided_slice %1 {offsets = [0, 3], sizes = [2, 1152], strides = [1, 1]} : vector<2x1332xbf16> to vector<2x1152xbf16>
    %c6 = arith.constant 6 : index
    %c0_6 = arith.constant 0 : index
    %9 = vector.load %arg6[%c6, %c0_6] : memref<64x1152xbf16, #tpu.memory_space<vmem>>, vector<2x1152xbf16>
    tpu.vector_store %arg6[%c6, %c0_6], %8 {strides = array<i32>} : memref<64x1152xbf16, #tpu.memory_space<vmem>>, vector<2x1152xbf16>,
    %10 = vector.extract_strided_slice %1 {offsets = [0, 4], sizes = [2, 1152], strides = [1, 1]} : vector<2x1332xbf16> to vector<2x1152xbf16>
    %c8 = arith.constant 8 : index
    %c0_7 = arith.constant 0 : index
    %11 = vector.load %arg6[%c8, %c0_7] : memref<64x1152xbf16, #tpu.memory_space<vmem>>, vector<2x1152xbf16>
    tpu.vector_store %arg6[%c8, %c0_7], %10 {strides = array<i32>} : memref<64x1152xbf16, #tpu.memory_space<vmem>>, vector<2x1152xbf16>,
    %12 = vector.extract_strided_slice %1 {offsets = [0, 36], sizes = [2, 1152], strides = [1, 1]} : vector<2x1332xbf16> to vector<2x1152xbf16>
    %c10 = arith.constant 10 : index
    %c0_8 = arith.constant 0 : index
    %13 = vector.load %arg6[%c10, %c0_8] : memref<64x1152xbf16, #tpu.memory_space<vmem>>, vector<2x1152xbf16>
    tpu.vector_store %arg6[%c10, %c0_8], %12 {strides = array<i32>} : memref<64x1152xbf16, #tpu.memory_space<vmem>>, vector<2x1152xbf16>,
    %14 = vector.extract_strided_slice %1 {offsets = [0, 37], sizes = [2, 1152], strides = [1, 1]} : vector<2x1332xbf16> to vector<2x1152xbf16>
    %c12 = arith.constant 12 : index
    %c0_9 = arith.constant 0 : index
    %15 = vector.load %arg6[%c12, %c0_9] : memref<64x1152xbf16, #tpu.memory_space<vmem>>, vector<2x1152xbf16>
    tpu.vector_store %arg6[%c12, %c0_9], %14 {strides = array<i32>} : memref<64x1152xbf16, #tpu.memory_space<vmem>>, vector<2x1152xbf16>,
    %16 = vector.extract_strided_slice %1 {offsets = [0, 38], sizes = [2, 1152], strides = [1, 1]} : vector<2x1332xbf16> to vector<2x1152xbf16>
    %c14 = arith.constant 14 : index
    %c0_10 = arith.constant 0 : index
    %17 = vector.load %arg6[%c14, %c0_10] : memref<64x1152xbf16, #tpu.memory_space<vmem>>, vector<2x1152xbf16>
    tpu.vector_store %arg6[%c14, %c0_10], %16 {strides = array<i32>} : memref<64x1152xbf16, #tpu.memory_space<vmem>>, vector<2x1152xbf16>,
    %18 = vector.extract_strided_slice %1 {offsets = [0, 39], sizes = [2, 1152], strides = [1, 1]} : vector<2x1332xbf16> to vector<2x1152xbf16>
    %c16 = arith.constant 16 : index
    %c0_11 = arith.constant 0 : index
    %19 = vector.load %arg6[%c16, %c0_11] : memref<64x1152xbf16, #tpu.memory_space<vmem>>, vector<2x1152xbf16>
    tpu.vector_store %arg6[%c16, %c0_11], %18 {strides = array<i32>} : memref<64x1152xbf16, #tpu.memory_space<vmem>>, vector<2x1152xbf16>,
    %20 = vector.extract_strided_slice %1 {offsets = [0, 40], sizes = [2, 1152], strides = [1, 1]} : vector<2x1332xbf16> to vector<2x1152xbf16>
    %c18 = arith.constant 18 : index
    %c0_12 = arith.constant 0 : index
    %21 = vector.load %arg6[%c18, %c0_12] : memref<64x1152xbf16, #tpu.memory_space<vmem>>, vector<2x1152xbf16>
    tpu.vector_store %arg6[%c18, %c0_12], %20 {strides = array<i32>} : memref<64x1152xbf16, #tpu.memory_space<vmem>>, vector<2x1152xbf16>,
    %22 = vector.extract_strided_slice %1 {offsets = [0, 72], sizes = [2, 1152], strides = [1, 1]} : vector<2x1332xbf16> to vector<2x1152xbf16>
    %c20 = arith.constant 20 : index
    %c0_13 = arith.constant 0 : index
    %23 = vector.load %arg6[%c20, %c0_13] : memref<64x1152xbf16, #tpu.memory_space<vmem>>, vector<2x1152xbf16>
    tpu.vector_store %arg6[%c20, %c0_13], %22 {strides = array<i32>} : memref<64x1152xbf16, #tpu.memory_space<vmem>>, vector<2x1152xbf16>,
    %24 = vector.extract_strided_slice %1 {offsets = [0, 73], sizes = [2, 1152], strides = [1, 1]} : vector<2x1332xbf16> to vector<2x1152xbf16>
    %c22 = arith.constant 22 : index
    %c0_14 = arith.constant 0 : index
    %25 = vector.load %arg6[%c22, %c0_14] : memref<64x1152xbf16, #tpu.memory_space<vmem>>, vector<2x1152xbf16>
    tpu.vector_store %arg6[%c22, %c0_14], %24 {strides = array<i32>} : memref<64x1152xbf16, #tpu.memory_space<vmem>>, vector<2x1152xbf16>,
    %26 = vector.extract_strided_slice %1 {offsets = [0, 74], sizes = [2, 1152], strides = [1, 1]} : vector<2x1332xbf16> to vector<2x1152xbf16>
    %c24 = arith.constant 24 : index
    %c0_15 = arith.constant 0 : index
    %27 = vector.load %arg6[%c24, %c0_15] : memref<64x1152xbf16, #tpu.memory_space<vmem>>, vector<2x1152xbf16>
    tpu.vector_store %arg6[%c24, %c0_15], %26 {strides = array<i32>} : memref<64x1152xbf16, #tpu.memory_space<vmem>>, vector<2x1152xbf16>,
    %28 = vector.extract_strided_slice %1 {offsets = [0, 75], sizes = [2, 1152], strides = [1, 1]} : vector<2x1332xbf16> to vector<2x1152xbf16>
    %c26 = arith.constant 26 : index
    %c0_16 = arith.constant 0 : index
    %29 = vector.load %arg6[%c26, %c0_16] : memref<64x1152xbf16, #tpu.memory_space<vmem>>, vector<2x1152xbf16>
    tpu.vector_store %arg6[%c26, %c0_16], %28 {strides = array<i32>} : memref<64x1152xbf16, #tpu.memory_space<vmem>>, vector<2x1152xbf16>,
    %30 = vector.extract_strided_slice %1 {offsets = [0, 76], sizes = [2, 1152], strides = [1, 1]} : vector<2x1332xbf16> to vector<2x1152xbf16>
    %c28 = arith.constant 28 : index
    %c0_17 = arith.constant 0 : index
    %31 = vector.load %arg6[%c28, %c0_17] : memref<64x1152xbf16, #tpu.memory_space<vmem>>, vector<2x1152xbf16>
    tpu.vector_store %arg6[%c28, %c0_17], %30 {strides = array<i32>} : memref<64x1152xbf16, #tpu.memory_space<vmem>>, vector<2x1152xbf16>,
    %32 = vector.extract_strided_slice %1 {offsets = [0, 108], sizes = [2, 1152], strides = [1, 1]} : vector<2x1332xbf16> to vector<2x1152xbf16>
    %c30 = arith.constant 30 : index
    %c0_18 = arith.constant 0 : index
    %33 = vector.load %arg6[%c30, %c0_18] : memref<64x1152xbf16, #tpu.memory_space<vmem>>, vector<2x1152xbf16>
    tpu.vector_store %arg6[%c30, %c0_18], %32 {strides = array<i32>} : memref<64x1152xbf16, #tpu.memory_space<vmem>>, vector<2x1152xbf16>,
    %34 = vector.extract_strided_slice %1 {offsets = [0, 109], sizes = [2, 1152], strides = [1, 1]} : vector<2x1332xbf16> to vector<2x1152xbf16>
    %c32 = arith.constant 32 : index
    %c0_19 = arith.constant 0 : index
    %35 = vector.load %arg6[%c32, %c0_19] : memref<64x1152xbf16, #tpu.memory_space<vmem>>, vector<2x1152xbf16>
    tpu.vector_store %arg6[%c32, %c0_19], %34 {strides = array<i32>} : memref<64x1152xbf16, #tpu.memory_space<vmem>>, vector<2x1152xbf16>,
    %36 = vector.extract_strided_slice %1 {offsets = [0, 110], sizes = [2, 1152], strides = [1, 1]} : vector<2x1332xbf16> to vector<2x1152xbf16>
    %c34 = arith.constant 34 : index
    %c0_20 = arith.constant 0 : index
    %37 = vector.load %arg6[%c34, %c0_20] : memref<64x1152xbf16, #tpu.memory_space<vmem>>, vector<2x1152xbf16>
    tpu.vector_store %arg6[%c34, %c0_20], %36 {strides = array<i32>} : memref<64x1152xbf16, #tpu.memory_space<vmem>>, vector<2x1152xbf16>,
    %38 = vector.extract_strided_slice %1 {offsets = [0, 111], sizes = [2, 1152], strides = [1, 1]} : vector<2x1332xbf16> to vector<2x1152xbf16>
    %c36 = arith.constant 36 : index
    %c0_21 = arith.constant 0 : index
    %39 = vector.load %arg6[%c36, %c0_21] : memref<64x1152xbf16, #tpu.memory_space<vmem>>, vector<2x1152xbf16>
    tpu.vector_store %arg6[%c36, %c0_21], %38 {strides = array<i32>} : memref<64x1152xbf16, #tpu.memory_space<vmem>>, vector<2x1152xbf16>,
    %40 = vector.extract_strided_slice %1 {offsets = [0, 112], sizes = [2, 1152], strides = [1, 1]} : vector<2x1332xbf16> to vector<2x1152xbf16>
    %c38 = arith.constant 38 : index
    %c0_22 = arith.constant 0 : index
    %41 = vector.load %arg6[%c38, %c0_22] : memref<64x1152xbf16, #tpu.memory_space<vmem>>, vector<2x1152xbf16>
    tpu.vector_store %arg6[%c38, %c0_22], %40 {strides = array<i32>} : memref<64x1152xbf16, #tpu.memory_space<vmem>>, vector<2x1152xbf16>,
    %42 = vector.extract_strided_slice %1 {offsets = [0, 144], sizes = [2, 1152], strides = [1, 1]} : vector<2x1332xbf16> to vector<2x1152xbf16>
    %c40 = arith.constant 40 : index
    %c0_23 = arith.constant 0 : index
    %43 = vector.load %arg6[%c40, %c0_23] : memref<64x1152xbf16, #tpu.memory_space<vmem>>, vector<2x1152xbf16>
    tpu.vector_store %arg6[%c40, %c0_23], %42 {strides = array<i32>} : memref<64x1152xbf16, #tpu.memory_space<vmem>>, vector<2x1152xbf16>,
    %44 = vector.extract_strided_slice %1 {offsets = [0, 145], sizes = [2, 1152], strides = [1, 1]} : vector<2x1332xbf16> to vector<2x1152xbf16>
    %c42 = arith.constant 42 : index
    %c0_24 = arith.constant 0 : index
    %45 = vector.load %arg6[%c42, %c0_24] : memref<64x1152xbf16, #tpu.memory_space<vmem>>, vector<2x1152xbf16>
    tpu.vector_store %arg6[%c42, %c0_24], %44 {strides = array<i32>} : memref<64x1152xbf16, #tpu.memory_space<vmem>>, vector<2x1152xbf16>,
    %46 = vector.extract_strided_slice %1 {offsets = [0, 146], sizes = [2, 1152], strides = [1, 1]} : vector<2x1332xbf16> to vector<2x1152xbf16>
    %c44 = arith.constant 44 : index
    %c0_25 = arith.constant 0 : index
    %47 = vector.load %arg6[%c44, %c0_25] : memref<64x1152xbf16, #tpu.memory_space<vmem>>, vector<2x1152xbf16>
    tpu.vector_store %arg6[%c44, %c0_25], %46 {strides = array<i32>} : memref<64x1152xbf16, #tpu.memory_space<vmem>>, vector<2x1152xbf16>,
    %48 = vector.extract_strided_slice %1 {offsets = [0, 147], sizes = [2, 1152], strides = [1, 1]} : vector<2x1332xbf16> to vector<2x1152xbf16>
    %c46 = arith.constant 46 : index
    %c0_26 = arith.constant 0 : index
    %49 = vector.load %arg6[%c46, %c0_26] : memref<64x1152xbf16, #tpu.memory_space<vmem>>, vector<2x1152xbf16>
    tpu.vector_store %arg6[%c46, %c0_26], %48 {strides = array<i32>} : memref<64x1152xbf16, #tpu.memory_space<vmem>>, vector<2x1152xbf16>,
    %50 = vector.extract_strided_slice %1 {offsets = [0, 148], sizes = [2, 1152], strides = [1, 1]} : vector<2x1332xbf16> to vector<2x1152xbf16>
    %c48 = arith.constant 48 : index
    %c0_27 = arith.constant 0 : index
    %51 = vector.load %arg6[%c48, %c0_27] : memref<64x1152xbf16, #tpu.memory_space<vmem>>, vector<2x1152xbf16>
    tpu.vector_store %arg6[%c48, %c0_27], %50 {strides = array<i32>} : memref<64x1152xbf16, #tpu.memory_space<vmem>>, vector<2x1152xbf16>,
    %cst = arith.constant 0.000000e+00 : bf16
    %52 = vector.broadcast %cst : bf16 to vector<14x1152xbf16>
    %c50 = arith.constant 50 : index
    %c0_28 = arith.constant 0 : index
    %53 = vector.load %arg6[%c50, %c0_28] : memref<64x1152xbf16, #tpu.memory_space<vmem>>, vector<14x1152xbf16>
    tpu.vector_store %arg6[%c50, %c0_28], %52 {strides = array<i32>} : memref<64x1152xbf16, #tpu.memory_space<vmem>>, vector<14x1152xbf16>,
    %c0_29 = arith.constant 0 : index
    %c0_30 = arith.constant 0 : index
    %54 = vector.load %arg2[%c0_29, %c0_30] : memref<4x64xbf16, #tpu.memory_space<vmem>>, vector<4x64xbf16>
    %c0_31 = arith.constant 0 : index
    %c0_32 = arith.constant 0 : index
    %55 = vector.load %arg6[%c0_31, %c0_32] : memref<64x1152xbf16, #tpu.memory_space<vmem>>, vector<64x1152xbf16>
    %cst_33 = arith.constant dense<0.000000e+00> : vector<4x1152xf32>
    %56 = tpu.matmul %54, %55, %cst_33 {dimension_numbers = #tpu.dot_dimension_numbers<[1], [0], [0], [1], [0, 0, 1, 1], [], []>} : vector<4x64xbf16>, vector<64x1152xbf16>, vector<4x1152xf32> -> vector<4x1152xf32>
    %c0_34 = arith.constant 0 : index
    %c0_35 = arith.constant 0 : index
    %57 = vector.load %arg3[%c0_34, %c0_35] : memref<4x1xf32, #tpu.memory_space<vmem>>, vector<4x1xf32>
    %58 = vector.broadcast %57 : vector<4x1xf32> to vector<4x1152xf32>
    %59 = arith.addf %56, %58 : vector<4x1152xf32>
    %cst_36 = arith.constant 0.000000e+00 : f32
    %60 = vector.broadcast %cst_36 : f32 to vector<4x1152xf32>
    %61 = arith.maximumf %59, %60 : vector<4x1152xf32>
    %62 = vector.extract_strided_slice %61 {offsets = [0, 1], sizes = [4, 1151], strides = [1, 1]} : vector<4x1152xf32> to vector<4x1151xf32>
    %63 = vector.extract_strided_slice %61 {offsets = [0, 0], sizes = [4, 1], strides = [1, 1]} : vector<4x1152xf32> to vector<4x1xf32>
    %64 = tpu.concatenate %62, %63 in 1 : vector<4x1151xf32>, vector<4x1xf32> -> vector<4x1152xf32>
    %65 = arith.maximumf %61, %64 : vector<4x1152xf32>
    %66 = vector.extract_strided_slice %65 {offsets = [0, 36], sizes = [4, 1116], strides = [1, 1]} : vector<4x1152xf32> to vector<4x1116xf32>
    %67 = vector.extract_strided_slice %65 {offsets = [0, 0], sizes = [4, 36], strides = [1, 1]} : vector<4x1152xf32> to vector<4x36xf32>
    %68 = tpu.concatenate %66, %67 in 1 : vector<4x1116xf32>, vector<4x36xf32> -> vector<4x1152xf32>
    %69 = arith.maximumf %65, %68 : vector<4x1152xf32>
    %70 = arith.truncf %69 : vector<4x1152xf32> to vector<4x1152xbf16>
    %c0_37 = arith.constant 0 : index
    %c0_38 = arith.constant 0 : index
    %71 = vector.load %arg4[%c0_37, %c0_38] : memref<1152x256xbf16, #tpu.memory_space<vmem>>, vector<1152x256xbf16>
    %cst_39 = arith.constant dense<0.000000e+00> : vector<4x256xf32>
    %72 = tpu.matmul %70, %71, %cst_39 {dimension_numbers = #tpu.dot_dimension_numbers<[1], [0], [0], [1], [0, 0, 1, 1], [], []>} : vector<4x1152xbf16>, vector<1152x256xbf16>, vector<4x256xf32> -> vector<4x256xf32>
    %73 = vector.shape_cast %72 : vector<4x256xf32> to vector<1x4x256xf32>
    %74 = arith.truncf %73 : vector<1x4x256xf32> to vector<1x4x256xbf16>
    %c0_40 = arith.constant 0 : index
    %c0_41 = arith.constant 0 : index
    %c0_42 = arith.constant 0 : index
    %75 = vector.load %arg5[%c0_40, %c0_41, %c0_42] : memref<1x4x256xbf16, #tpu.memory_space<vmem>>, vector<1x4x256xbf16>
    tpu.vector_store %arg5[%c0_40, %c0_41, %c0_42], %74 {strides = array<i32>} : memref<1x4x256xbf16, #tpu.memory_space<vmem>>, vector<1x4x256xbf16>,
    return
  }
  func.func @transform_0(%arg0: i32) -> (i32, i32, i32) {
    %c0_i32 = arith.constant 0 : i32
    %c0_i32_0 = arith.constant 0 : i32
    %c0_i32_1 = arith.constant 0 : i32
    return %arg0, %c0_i32, %c0_i32_0 : i32, i32, i32
  }
  func.func @transform_1(%arg0: i32) -> (i32, i32) {
    %c0_i32 = arith.constant 0 : i32
    %c0_i32_0 = arith.constant 0 : i32
    %c0_i32_1 = arith.constant 0 : i32
    return %c0_i32, %c0_i32_0 : i32, i32
  }
  func.func @transform_2(%arg0: i32) -> (i32, i32) {
    %c0_i32 = arith.constant 0 : i32
    %c0_i32_0 = arith.constant 0 : i32
    %c0_i32_1 = arith.constant 0 : i32
    return %c0_i32, %c0_i32_0 : i32, i32
  }
  func.func @transform_3(%arg0: i32) -> (i32, i32) {
    %c0_i32 = arith.constant 0 : i32
    %c0_i32_0 = arith.constant 0 : i32
    %c0_i32_1 = arith.constant 0 : i32
    return %c0_i32, %c0_i32_0 : i32, i32
  }
  func.func @transform_4(%arg0: i32) -> (i32, i32, i32) {
    %c0_i32 = arith.constant 0 : i32
    %c0_i32_0 = arith.constant 0 : i32
    %c0_i32_1 = arith.constant 0 : i32
    return %arg0, %c0_i32, %c0_i32_0 : i32, i32, i32
  }
}

module attributes {stable_mosaic.version = 11 : i64} {
  func.func @_conv_pool_kernel(%arg0: i32, %arg1: memref<1x4x342xbf16, #tpu.memory_space<vmem>>, %arg2: memref<8x48xbf16, #tpu.memory_space<vmem>>, %arg3: memref<8x1xf32, #tpu.memory_space<vmem>>, %arg4: memref<288x64xbf16, #tpu.memory_space<vmem>>, %arg5: memref<1x8x64xbf16, #tpu.memory_space<vmem>>, %arg6: memref<48x288xbf16, #tpu.memory_space<vmem>>) attributes {dimension_semantics = [#tpu.dimension_semantics<parallel>], iteration_bounds = array<i64: 2>, scalar_prefetch = 0 : i64, scratch_operands = 1 : i64, tpu.core_type = #tpu.core_type<tc>, window_params = [{transform_indices = @transform_0, window_bounds = array<i64: 1, 4, 342>}, {pipeline_mode = #tpu.pipeline_mode<synchronous>, transform_indices = @transform_1, window_bounds = array<i64: 8, 48>}, {pipeline_mode = #tpu.pipeline_mode<synchronous>, transform_indices = @transform_2, window_bounds = array<i64: 8, 1>}, {pipeline_mode = #tpu.pipeline_mode<synchronous>, transform_indices = @transform_3, window_bounds = array<i64: 288, 64>}, {transform_indices = @transform_4, window_bounds = array<i64: 1, 8, 64>}]} {
    %c0 = arith.constant 0 : index
    %c0_0 = arith.constant 0 : index
    %c0_1 = arith.constant 0 : index
    %0 = vector.load %arg1[%c0, %c0_0, %c0_1] : memref<1x4x342xbf16, #tpu.memory_space<vmem>>, vector<1x4x342xbf16>
    %1 = vector.shape_cast %0 : vector<1x4x342xbf16> to vector<4x342xbf16>
    %2 = vector.extract_strided_slice %1 {offsets = [0, 0], sizes = [4, 288], strides = [1, 1]} : vector<4x342xbf16> to vector<4x288xbf16>
    %c0_2 = arith.constant 0 : index
    %c0_3 = arith.constant 0 : index
    %3 = vector.load %arg6[%c0_2, %c0_3] : memref<48x288xbf16, #tpu.memory_space<vmem>>, vector<4x288xbf16>
    tpu.vector_store %arg6[%c0_2, %c0_3], %2 {strides = array<i32>} : memref<48x288xbf16, #tpu.memory_space<vmem>>, vector<4x288xbf16>,
    %4 = vector.extract_strided_slice %1 {offsets = [0, 1], sizes = [4, 288], strides = [1, 1]} : vector<4x342xbf16> to vector<4x288xbf16>
    %c4 = arith.constant 4 : index
    %c0_4 = arith.constant 0 : index
    %5 = vector.load %arg6[%c4, %c0_4] : memref<48x288xbf16, #tpu.memory_space<vmem>>, vector<4x288xbf16>
    tpu.vector_store %arg6[%c4, %c0_4], %4 {strides = array<i32>} : memref<48x288xbf16, #tpu.memory_space<vmem>>, vector<4x288xbf16>,
    %6 = vector.extract_strided_slice %1 {offsets = [0, 2], sizes = [4, 288], strides = [1, 1]} : vector<4x342xbf16> to vector<4x288xbf16>
    %c8 = arith.constant 8 : index
    %c0_5 = arith.constant 0 : index
    %7 = vector.load %arg6[%c8, %c0_5] : memref<48x288xbf16, #tpu.memory_space<vmem>>, vector<4x288xbf16>
    tpu.vector_store %arg6[%c8, %c0_5], %6 {strides = array<i32>} : memref<48x288xbf16, #tpu.memory_space<vmem>>, vector<4x288xbf16>,
    %8 = vector.extract_strided_slice %1 {offsets = [0, 18], sizes = [4, 288], strides = [1, 1]} : vector<4x342xbf16> to vector<4x288xbf16>
    %c12 = arith.constant 12 : index
    %c0_6 = arith.constant 0 : index
    %9 = vector.load %arg6[%c12, %c0_6] : memref<48x288xbf16, #tpu.memory_space<vmem>>, vector<4x288xbf16>
    tpu.vector_store %arg6[%c12, %c0_6], %8 {strides = array<i32>} : memref<48x288xbf16, #tpu.memory_space<vmem>>, vector<4x288xbf16>,
    %10 = vector.extract_strided_slice %1 {offsets = [0, 19], sizes = [4, 288], strides = [1, 1]} : vector<4x342xbf16> to vector<4x288xbf16>
    %c16 = arith.constant 16 : index
    %c0_7 = arith.constant 0 : index
    %11 = vector.load %arg6[%c16, %c0_7] : memref<48x288xbf16, #tpu.memory_space<vmem>>, vector<4x288xbf16>
    tpu.vector_store %arg6[%c16, %c0_7], %10 {strides = array<i32>} : memref<48x288xbf16, #tpu.memory_space<vmem>>, vector<4x288xbf16>,
    %12 = vector.extract_strided_slice %1 {offsets = [0, 20], sizes = [4, 288], strides = [1, 1]} : vector<4x342xbf16> to vector<4x288xbf16>
    %c20 = arith.constant 20 : index
    %c0_8 = arith.constant 0 : index
    %13 = vector.load %arg6[%c20, %c0_8] : memref<48x288xbf16, #tpu.memory_space<vmem>>, vector<4x288xbf16>
    tpu.vector_store %arg6[%c20, %c0_8], %12 {strides = array<i32>} : memref<48x288xbf16, #tpu.memory_space<vmem>>, vector<4x288xbf16>,
    %14 = vector.extract_strided_slice %1 {offsets = [0, 36], sizes = [4, 288], strides = [1, 1]} : vector<4x342xbf16> to vector<4x288xbf16>
    %c24 = arith.constant 24 : index
    %c0_9 = arith.constant 0 : index
    %15 = vector.load %arg6[%c24, %c0_9] : memref<48x288xbf16, #tpu.memory_space<vmem>>, vector<4x288xbf16>
    tpu.vector_store %arg6[%c24, %c0_9], %14 {strides = array<i32>} : memref<48x288xbf16, #tpu.memory_space<vmem>>, vector<4x288xbf16>,
    %16 = vector.extract_strided_slice %1 {offsets = [0, 37], sizes = [4, 288], strides = [1, 1]} : vector<4x342xbf16> to vector<4x288xbf16>
    %c28 = arith.constant 28 : index
    %c0_10 = arith.constant 0 : index
    %17 = vector.load %arg6[%c28, %c0_10] : memref<48x288xbf16, #tpu.memory_space<vmem>>, vector<4x288xbf16>
    tpu.vector_store %arg6[%c28, %c0_10], %16 {strides = array<i32>} : memref<48x288xbf16, #tpu.memory_space<vmem>>, vector<4x288xbf16>,
    %18 = vector.extract_strided_slice %1 {offsets = [0, 38], sizes = [4, 288], strides = [1, 1]} : vector<4x342xbf16> to vector<4x288xbf16>
    %c32 = arith.constant 32 : index
    %c0_11 = arith.constant 0 : index
    %19 = vector.load %arg6[%c32, %c0_11] : memref<48x288xbf16, #tpu.memory_space<vmem>>, vector<4x288xbf16>
    tpu.vector_store %arg6[%c32, %c0_11], %18 {strides = array<i32>} : memref<48x288xbf16, #tpu.memory_space<vmem>>, vector<4x288xbf16>,
    %cst = arith.constant 0.000000e+00 : bf16
    %20 = vector.broadcast %cst : bf16 to vector<12x288xbf16>
    %c36 = arith.constant 36 : index
    %c0_12 = arith.constant 0 : index
    %21 = vector.load %arg6[%c36, %c0_12] : memref<48x288xbf16, #tpu.memory_space<vmem>>, vector<12x288xbf16>
    tpu.vector_store %arg6[%c36, %c0_12], %20 {strides = array<i32>} : memref<48x288xbf16, #tpu.memory_space<vmem>>, vector<12x288xbf16>,
    %c0_13 = arith.constant 0 : index
    %c0_14 = arith.constant 0 : index
    %22 = vector.load %arg2[%c0_13, %c0_14] : memref<8x48xbf16, #tpu.memory_space<vmem>>, vector<8x48xbf16>
    %c0_15 = arith.constant 0 : index
    %c0_16 = arith.constant 0 : index
    %23 = vector.load %arg6[%c0_15, %c0_16] : memref<48x288xbf16, #tpu.memory_space<vmem>>, vector<48x288xbf16>
    %cst_17 = arith.constant dense<0.000000e+00> : vector<8x288xf32>
    %24 = tpu.matmul %22, %23, %cst_17 {dimension_numbers = #tpu.dot_dimension_numbers<[1], [0], [0], [1], [0, 0, 1, 1], [], []>} : vector<8x48xbf16>, vector<48x288xbf16>, vector<8x288xf32> -> vector<8x288xf32>
    %c0_18 = arith.constant 0 : index
    %c0_19 = arith.constant 0 : index
    %25 = vector.load %arg3[%c0_18, %c0_19] : memref<8x1xf32, #tpu.memory_space<vmem>>, vector<8x1xf32>
    %26 = vector.broadcast %25 : vector<8x1xf32> to vector<8x288xf32>
    %27 = arith.addf %24, %26 : vector<8x288xf32>
    %cst_20 = arith.constant 0.000000e+00 : f32
    %28 = vector.broadcast %cst_20 : f32 to vector<8x288xf32>
    %29 = arith.maximumf %27, %28 : vector<8x288xf32>
    %30 = vector.extract_strided_slice %29 {offsets = [0, 1], sizes = [8, 287], strides = [1, 1]} : vector<8x288xf32> to vector<8x287xf32>
    %31 = vector.extract_strided_slice %29 {offsets = [0, 0], sizes = [8, 1], strides = [1, 1]} : vector<8x288xf32> to vector<8x1xf32>
    %32 = tpu.concatenate %30, %31 in 1 : vector<8x287xf32>, vector<8x1xf32> -> vector<8x288xf32>
    %33 = arith.maximumf %29, %32 : vector<8x288xf32>
    %34 = vector.extract_strided_slice %33 {offsets = [0, 18], sizes = [8, 270], strides = [1, 1]} : vector<8x288xf32> to vector<8x270xf32>
    %35 = vector.extract_strided_slice %33 {offsets = [0, 0], sizes = [8, 18], strides = [1, 1]} : vector<8x288xf32> to vector<8x18xf32>
    %36 = tpu.concatenate %34, %35 in 1 : vector<8x270xf32>, vector<8x18xf32> -> vector<8x288xf32>
    %37 = arith.maximumf %33, %36 : vector<8x288xf32>
    %38 = arith.truncf %37 : vector<8x288xf32> to vector<8x288xbf16>
    %c0_21 = arith.constant 0 : index
    %c0_22 = arith.constant 0 : index
    %39 = vector.load %arg4[%c0_21, %c0_22] : memref<288x64xbf16, #tpu.memory_space<vmem>>, vector<288x64xbf16>
    %cst_23 = arith.constant dense<0.000000e+00> : vector<8x64xf32>
    %40 = tpu.matmul %38, %39, %cst_23 {dimension_numbers = #tpu.dot_dimension_numbers<[1], [0], [0], [1], [0, 0, 1, 1], [], []>} : vector<8x288xbf16>, vector<288x64xbf16>, vector<8x64xf32> -> vector<8x64xf32>
    %41 = vector.shape_cast %40 : vector<8x64xf32> to vector<1x8x64xf32>
    %42 = arith.truncf %41 : vector<1x8x64xf32> to vector<1x8x64xbf16>
    %c0_24 = arith.constant 0 : index
    %c0_25 = arith.constant 0 : index
    %c0_26 = arith.constant 0 : index
    %43 = vector.load %arg5[%c0_24, %c0_25, %c0_26] : memref<1x8x64xbf16, #tpu.memory_space<vmem>>, vector<1x8x64xbf16>
    tpu.vector_store %arg5[%c0_24, %c0_25, %c0_26], %42 {strides = array<i32>} : memref<1x8x64xbf16, #tpu.memory_space<vmem>>, vector<1x8x64xbf16>,
    return
  }
  func.func @transform_0(%arg0: i32) -> (i32, i32, i32) {
    %c0_i32 = arith.constant 0 : i32
    %c0_i32_0 = arith.constant 0 : i32
    %c0_i32_1 = arith.constant 0 : i32
    return %arg0, %c0_i32, %c0_i32_0 : i32, i32, i32
  }
  func.func @transform_1(%arg0: i32) -> (i32, i32) {
    %c0_i32 = arith.constant 0 : i32
    %c0_i32_0 = arith.constant 0 : i32
    %c0_i32_1 = arith.constant 0 : i32
    return %c0_i32, %c0_i32_0 : i32, i32
  }
  func.func @transform_2(%arg0: i32) -> (i32, i32) {
    %c0_i32 = arith.constant 0 : i32
    %c0_i32_0 = arith.constant 0 : i32
    %c0_i32_1 = arith.constant 0 : i32
    return %c0_i32, %c0_i32_0 : i32, i32
  }
  func.func @transform_3(%arg0: i32) -> (i32, i32) {
    %c0_i32 = arith.constant 0 : i32
    %c0_i32_0 = arith.constant 0 : i32
    %c0_i32_1 = arith.constant 0 : i32
    return %c0_i32, %c0_i32_0 : i32, i32
  }
  func.func @transform_4(%arg0: i32) -> (i32, i32, i32) {
    %c0_i32 = arith.constant 0 : i32
    %c0_i32_0 = arith.constant 0 : i32
    %c0_i32_1 = arith.constant 0 : i32
    return %arg0, %c0_i32, %c0_i32_0 : i32, i32, i32
  }
}

module attributes {stable_mosaic.version = 11 : i64} {
  func.func @_conv_pool_kernel(%arg0: i32, %arg1: memref<1x8x110xbf16, #tpu.memory_space<vmem>>, %arg2: memref<16x80xbf16, #tpu.memory_space<vmem>>, %arg3: memref<16x1xf32, #tpu.memory_space<vmem>>, %arg4: memref<80x16xbf16, #tpu.memory_space<vmem>>, %arg5: memref<1x16x16xbf16, #tpu.memory_space<vmem>>, %arg6: memref<80x80xbf16, #tpu.memory_space<vmem>>) attributes {dimension_semantics = [#tpu.dimension_semantics<parallel>], iteration_bounds = array<i64: 2>, scalar_prefetch = 0 : i64, scratch_operands = 1 : i64, tpu.core_type = #tpu.core_type<tc>, window_params = [{transform_indices = @transform_0, window_bounds = array<i64: 1, 8, 110>}, {pipeline_mode = #tpu.pipeline_mode<synchronous>, transform_indices = @transform_1, window_bounds = array<i64: 16, 80>}, {pipeline_mode = #tpu.pipeline_mode<synchronous>, transform_indices = @transform_2, window_bounds = array<i64: 16, 1>}, {pipeline_mode = #tpu.pipeline_mode<synchronous>, transform_indices = @transform_3, window_bounds = array<i64: 80, 16>}, {transform_indices = @transform_4, window_bounds = array<i64: 1, 16, 16>}]} {
    %c0 = arith.constant 0 : index
    %c0_0 = arith.constant 0 : index
    %c0_1 = arith.constant 0 : index
    %0 = vector.load %arg1[%c0, %c0_0, %c0_1] : memref<1x8x110xbf16, #tpu.memory_space<vmem>>, vector<1x8x110xbf16>
    %1 = vector.shape_cast %0 : vector<1x8x110xbf16> to vector<8x110xbf16>
    %2 = vector.extract_strided_slice %1 {offsets = [0, 0], sizes = [8, 80], strides = [1, 1]} : vector<8x110xbf16> to vector<8x80xbf16>
    %c0_2 = arith.constant 0 : index
    %c0_3 = arith.constant 0 : index
    %3 = vector.load %arg6[%c0_2, %c0_3] : memref<80x80xbf16, #tpu.memory_space<vmem>>, vector<8x80xbf16>
    tpu.vector_store %arg6[%c0_2, %c0_3], %2 {strides = array<i32>} : memref<80x80xbf16, #tpu.memory_space<vmem>>, vector<8x80xbf16>,
    %4 = vector.extract_strided_slice %1 {offsets = [0, 1], sizes = [8, 80], strides = [1, 1]} : vector<8x110xbf16> to vector<8x80xbf16>
    %c8 = arith.constant 8 : index
    %c0_4 = arith.constant 0 : index
    %5 = vector.load %arg6[%c8, %c0_4] : memref<80x80xbf16, #tpu.memory_space<vmem>>, vector<8x80xbf16>
    tpu.vector_store %arg6[%c8, %c0_4], %4 {strides = array<i32>} : memref<80x80xbf16, #tpu.memory_space<vmem>>, vector<8x80xbf16>,
    %6 = vector.extract_strided_slice %1 {offsets = [0, 2], sizes = [8, 80], strides = [1, 1]} : vector<8x110xbf16> to vector<8x80xbf16>
    %c16 = arith.constant 16 : index
    %c0_5 = arith.constant 0 : index
    %7 = vector.load %arg6[%c16, %c0_5] : memref<80x80xbf16, #tpu.memory_space<vmem>>, vector<8x80xbf16>
    tpu.vector_store %arg6[%c16, %c0_5], %6 {strides = array<i32>} : memref<80x80xbf16, #tpu.memory_space<vmem>>, vector<8x80xbf16>,
    %8 = vector.extract_strided_slice %1 {offsets = [0, 10], sizes = [8, 80], strides = [1, 1]} : vector<8x110xbf16> to vector<8x80xbf16>
    %c24 = arith.constant 24 : index
    %c0_6 = arith.constant 0 : index
    %9 = vector.load %arg6[%c24, %c0_6] : memref<80x80xbf16, #tpu.memory_space<vmem>>, vector<8x80xbf16>
    tpu.vector_store %arg6[%c24, %c0_6], %8 {strides = array<i32>} : memref<80x80xbf16, #tpu.memory_space<vmem>>, vector<8x80xbf16>,
    %10 = vector.extract_strided_slice %1 {offsets = [0, 11], sizes = [8, 80], strides = [1, 1]} : vector<8x110xbf16> to vector<8x80xbf16>
    %c32 = arith.constant 32 : index
    %c0_7 = arith.constant 0 : index
    %11 = vector.load %arg6[%c32, %c0_7] : memref<80x80xbf16, #tpu.memory_space<vmem>>, vector<8x80xbf16>
    tpu.vector_store %arg6[%c32, %c0_7], %10 {strides = array<i32>} : memref<80x80xbf16, #tpu.memory_space<vmem>>, vector<8x80xbf16>,
    %12 = vector.extract_strided_slice %1 {offsets = [0, 12], sizes = [8, 80], strides = [1, 1]} : vector<8x110xbf16> to vector<8x80xbf16>
    %c40 = arith.constant 40 : index
    %c0_8 = arith.constant 0 : index
    %13 = vector.load %arg6[%c40, %c0_8] : memref<80x80xbf16, #tpu.memory_space<vmem>>, vector<8x80xbf16>
    tpu.vector_store %arg6[%c40, %c0_8], %12 {strides = array<i32>} : memref<80x80xbf16, #tpu.memory_space<vmem>>, vector<8x80xbf16>,
    %14 = vector.extract_strided_slice %1 {offsets = [0, 20], sizes = [8, 80], strides = [1, 1]} : vector<8x110xbf16> to vector<8x80xbf16>
    %c48 = arith.constant 48 : index
    %c0_9 = arith.constant 0 : index
    %15 = vector.load %arg6[%c48, %c0_9] : memref<80x80xbf16, #tpu.memory_space<vmem>>, vector<8x80xbf16>
    tpu.vector_store %arg6[%c48, %c0_9], %14 {strides = array<i32>} : memref<80x80xbf16, #tpu.memory_space<vmem>>, vector<8x80xbf16>,
    %16 = vector.extract_strided_slice %1 {offsets = [0, 21], sizes = [8, 80], strides = [1, 1]} : vector<8x110xbf16> to vector<8x80xbf16>
    %c56 = arith.constant 56 : index
    %c0_10 = arith.constant 0 : index
    %17 = vector.load %arg6[%c56, %c0_10] : memref<80x80xbf16, #tpu.memory_space<vmem>>, vector<8x80xbf16>
    tpu.vector_store %arg6[%c56, %c0_10], %16 {strides = array<i32>} : memref<80x80xbf16, #tpu.memory_space<vmem>>, vector<8x80xbf16>,
    %18 = vector.extract_strided_slice %1 {offsets = [0, 22], sizes = [8, 80], strides = [1, 1]} : vector<8x110xbf16> to vector<8x80xbf16>
    %c64 = arith.constant 64 : index
    %c0_11 = arith.constant 0 : index
    %19 = vector.load %arg6[%c64, %c0_11] : memref<80x80xbf16, #tpu.memory_space<vmem>>, vector<8x80xbf16>
    tpu.vector_store %arg6[%c64, %c0_11], %18 {strides = array<i32>} : memref<80x80xbf16, #tpu.memory_space<vmem>>, vector<8x80xbf16>,
    %cst = arith.constant 0.000000e+00 : bf16
    %20 = vector.broadcast %cst : bf16 to vector<8x80xbf16>
    %c72 = arith.constant 72 : index
    %c0_12 = arith.constant 0 : index
    %21 = vector.load %arg6[%c72, %c0_12] : memref<80x80xbf16, #tpu.memory_space<vmem>>, vector<8x80xbf16>
    tpu.vector_store %arg6[%c72, %c0_12], %20 {strides = array<i32>} : memref<80x80xbf16, #tpu.memory_space<vmem>>, vector<8x80xbf16>,
    %c0_13 = arith.constant 0 : index
    %c0_14 = arith.constant 0 : index
    %22 = vector.load %arg2[%c0_13, %c0_14] : memref<16x80xbf16, #tpu.memory_space<vmem>>, vector<16x80xbf16>
    %c0_15 = arith.constant 0 : index
    %c0_16 = arith.constant 0 : index
    %23 = vector.load %arg6[%c0_15, %c0_16] : memref<80x80xbf16, #tpu.memory_space<vmem>>, vector<80x80xbf16>
    %cst_17 = arith.constant dense<0.000000e+00> : vector<16x80xf32>
    %24 = tpu.matmul %22, %23, %cst_17 {dimension_numbers = #tpu.dot_dimension_numbers<[1], [0], [0], [1], [0, 0, 1, 1], [], []>} : vector<16x80xbf16>, vector<80x80xbf16>, vector<16x80xf32> -> vector<16x80xf32>
    %c0_18 = arith.constant 0 : index
    %c0_19 = arith.constant 0 : index
    %25 = vector.load %arg3[%c0_18, %c0_19] : memref<16x1xf32, #tpu.memory_space<vmem>>, vector<16x1xf32>
    %26 = vector.broadcast %25 : vector<16x1xf32> to vector<16x80xf32>
    %27 = arith.addf %24, %26 : vector<16x80xf32>
    %cst_20 = arith.constant 0.000000e+00 : f32
    %28 = vector.broadcast %cst_20 : f32 to vector<16x80xf32>
    %29 = arith.maximumf %27, %28 : vector<16x80xf32>
    %30 = vector.extract_strided_slice %29 {offsets = [0, 1], sizes = [16, 79], strides = [1, 1]} : vector<16x80xf32> to vector<16x79xf32>
    %31 = vector.extract_strided_slice %29 {offsets = [0, 0], sizes = [16, 1], strides = [1, 1]} : vector<16x80xf32> to vector<16x1xf32>
    %32 = tpu.concatenate %30, %31 in 1 : vector<16x79xf32>, vector<16x1xf32> -> vector<16x80xf32>
    %33 = arith.maximumf %29, %32 : vector<16x80xf32>
    %34 = vector.extract_strided_slice %33 {offsets = [0, 10], sizes = [16, 70], strides = [1, 1]} : vector<16x80xf32> to vector<16x70xf32>
    %35 = vector.extract_strided_slice %33 {offsets = [0, 0], sizes = [16, 10], strides = [1, 1]} : vector<16x80xf32> to vector<16x10xf32>
    %36 = tpu.concatenate %34, %35 in 1 : vector<16x70xf32>, vector<16x10xf32> -> vector<16x80xf32>
    %37 = arith.maximumf %33, %36 : vector<16x80xf32>
    %38 = arith.truncf %37 : vector<16x80xf32> to vector<16x80xbf16>
    %c0_21 = arith.constant 0 : index
    %c0_22 = arith.constant 0 : index
    %39 = vector.load %arg4[%c0_21, %c0_22] : memref<80x16xbf16, #tpu.memory_space<vmem>>, vector<80x16xbf16>
    %cst_23 = arith.constant dense<0.000000e+00> : vector<16x16xf32>
    %40 = tpu.matmul %38, %39, %cst_23 {dimension_numbers = #tpu.dot_dimension_numbers<[1], [0], [0], [1], [0, 0, 1, 1], [], []>} : vector<16x80xbf16>, vector<80x16xbf16>, vector<16x16xf32> -> vector<16x16xf32>
    %41 = vector.shape_cast %40 : vector<16x16xf32> to vector<1x16x16xf32>
    %42 = arith.truncf %41 : vector<1x16x16xf32> to vector<1x16x16xbf16>
    %c0_24 = arith.constant 0 : index
    %c0_25 = arith.constant 0 : index
    %c0_26 = arith.constant 0 : index
    %43 = vector.load %arg5[%c0_24, %c0_25, %c0_26] : memref<1x16x16xbf16, #tpu.memory_space<vmem>>, vector<1x16x16xbf16>
    tpu.vector_store %arg5[%c0_24, %c0_25, %c0_26], %42 {strides = array<i32>} : memref<1x16x16xbf16, #tpu.memory_space<vmem>>, vector<1x16x16xbf16>,
    return
  }
  func.func @transform_0(%arg0: i32) -> (i32, i32, i32) {
    %c0_i32 = arith.constant 0 : i32
    %c0_i32_0 = arith.constant 0 : i32
    %c0_i32_1 = arith.constant 0 : i32
    return %arg0, %c0_i32, %c0_i32_0 : i32, i32, i32
  }
  func.func @transform_1(%arg0: i32) -> (i32, i32) {
    %c0_i32 = arith.constant 0 : i32
    %c0_i32_0 = arith.constant 0 : i32
    %c0_i32_1 = arith.constant 0 : i32
    return %c0_i32, %c0_i32_0 : i32, i32
  }
  func.func @transform_2(%arg0: i32) -> (i32, i32) {
    %c0_i32 = arith.constant 0 : i32
    %c0_i32_0 = arith.constant 0 : i32
    %c0_i32_1 = arith.constant 0 : i32
    return %c0_i32, %c0_i32_0 : i32, i32
  }
  func.func @transform_3(%arg0: i32) -> (i32, i32) {
    %c0_i32 = arith.constant 0 : i32
    %c0_i32_0 = arith.constant 0 : i32
    %c0_i32_1 = arith.constant 0 : i32
    return %c0_i32, %c0_i32_0 : i32, i32
  }
  func.func @transform_4(%arg0: i32) -> (i32, i32, i32) {
    %c0_i32 = arith.constant 0 : i32
    %c0_i32_0 = arith.constant 0 : i32
    %c0_i32_1 = arith.constant 0 : i32
    return %arg0, %c0_i32, %c0_i32_0 : i32, i32, i32
  }
}

module attributes {stable_mosaic.version = 11 : i64} {
  func.func @_fc_head_kernel(%arg0: memref<2x256xf32, #tpu.memory_space<vmem>>, %arg1: memref<256x32xf32, #tpu.memory_space<vmem>>, %arg2: memref<1x32xf32, #tpu.memory_space<vmem>>, %arg3: memref<32x6xf32, #tpu.memory_space<vmem>>, %arg4: memref<1x6xf32, #tpu.memory_space<vmem>>, %arg5: memref<2x6xf32, #tpu.memory_space<vmem>>) attributes {dimension_semantics = [], scalar_prefetch = 0 : i64, scratch_operands = 0 : i64, tpu.core_type = #tpu.core_type<tc>} {
    %c0 = arith.constant 0 : index
    %c0_0 = arith.constant 0 : index
    %0 = vector.load %arg0[%c0, %c0_0] : memref<2x256xf32, #tpu.memory_space<vmem>>, vector<2x256xf32>
    %c0_1 = arith.constant 0 : index
    %c0_2 = arith.constant 0 : index
    %1 = vector.load %arg1[%c0_1, %c0_2] : memref<256x32xf32, #tpu.memory_space<vmem>>, vector<256x32xf32>
    %cst = arith.constant dense<0.000000e+00> : vector<2x32xf32>
    %2 = tpu.matmul %0, %1, %cst {dimension_numbers = #tpu.dot_dimension_numbers<[1], [0], [0], [1], [0, 0, 1, 1], [], []>} : vector<2x256xf32>, vector<256x32xf32>, vector<2x32xf32> -> vector<2x32xf32>
    %c0_3 = arith.constant 0 : index
    %c0_4 = arith.constant 0 : index
    %3 = vector.load %arg2[%c0_3, %c0_4] : memref<1x32xf32, #tpu.memory_space<vmem>>, vector<1x32xf32>
    %4 = vector.broadcast %3 : vector<1x32xf32> to vector<2x32xf32>
    %5 = arith.addf %2, %4 : vector<2x32xf32>
    %cst_5 = arith.constant 0.000000e+00 : f32
    %6 = vector.broadcast %cst_5 : f32 to vector<2x32xf32>
    %7 = arith.maximumf %5, %6 : vector<2x32xf32>
    %c0_6 = arith.constant 0 : index
    %c0_7 = arith.constant 0 : index
    %8 = vector.load %arg3[%c0_6, %c0_7] : memref<32x6xf32, #tpu.memory_space<vmem>>, vector<32x6xf32>
    %cst_8 = arith.constant dense<0.000000e+00> : vector<2x6xf32>
    %9 = tpu.matmul %7, %8, %cst_8 {dimension_numbers = #tpu.dot_dimension_numbers<[1], [0], [0], [1], [0, 0, 1, 1], [], []>} : vector<2x32xf32>, vector<32x6xf32>, vector<2x6xf32> -> vector<2x6xf32>
    %c0_9 = arith.constant 0 : index
    %c0_10 = arith.constant 0 : index
    %10 = vector.load %arg4[%c0_9, %c0_10] : memref<1x6xf32, #tpu.memory_space<vmem>>, vector<1x6xf32>
    %11 = vector.broadcast %10 : vector<1x6xf32> to vector<2x6xf32>
    %12 = arith.addf %9, %11 : vector<2x6xf32>
    %c0_11 = arith.constant 0 : index
    %c0_12 = arith.constant 0 : index
    %13 = vector.load %arg5[%c0_11, %c0_12] : memref<2x6xf32, #tpu.memory_space<vmem>>, vector<2x6xf32>
    tpu.vector_store %arg5[%c0_11, %c0_12], %12 {strides = array<i32>} : memref<2x6xf32, #tpu.memory_space<vmem>>, vector<2x6xf32>,
    return
  }
}

module attributes {stable_mosaic.version = 11 : i64} {
  func.func @_grid_sample_kernel(%arg0: i32, %arg1: i32, %arg2: memref<1x1x1024xf32, #tpu.memory_space<vmem>>, %arg3: memref<1x1x1024xf32, #tpu.memory_space<vmem>>, %arg4: memref<1x64x32xbf16, #tpu.memory_space<vmem>>, %arg5: memref<1x2x1024xf32, #tpu.memory_space<vmem>>) attributes {dimension_semantics = [#tpu.dimension_semantics<parallel>, #tpu.dimension_semantics<parallel>], iteration_bounds = array<i64: 2, 1>, scalar_prefetch = 0 : i64, scratch_operands = 0 : i64, tpu.core_type = #tpu.core_type<tc>, window_params = [{transform_indices = @transform_0, window_bounds = array<i64: 1, 1, 1024>}, {transform_indices = @transform_1, window_bounds = array<i64: 1, 1, 1024>}, {transform_indices = @transform_2, window_bounds = array<i64: 1, 64, 32>}, {transform_indices = @transform_3, window_bounds = array<i64: 1, 2, 1024>}]} {
    %c0 = arith.constant 0 : index
    %c0_0 = arith.constant 0 : index
    %c0_1 = arith.constant 0 : index
    %0 = vector.load %arg2[%c0, %c0_0, %c0_1] : memref<1x1x1024xf32, #tpu.memory_space<vmem>>, vector<1x1x1024xf32>
    %1 = vector.shape_cast %0 : vector<1x1x1024xf32> to vector<1x1024xf32>
    %c0_2 = arith.constant 0 : index
    %c0_3 = arith.constant 0 : index
    %c0_4 = arith.constant 0 : index
    %2 = vector.load %arg3[%c0_2, %c0_3, %c0_4] : memref<1x1x1024xf32, #tpu.memory_space<vmem>>, vector<1x1x1024xf32>
    %3 = vector.shape_cast %2 : vector<1x1x1024xf32> to vector<1x1024xf32>
    %c0_5 = arith.constant 0 : index
    %c0_6 = arith.constant 0 : index
    %c0_7 = arith.constant 0 : index
    %4 = vector.load %arg4[%c0_5, %c0_6, %c0_7] : memref<1x64x32xbf16, #tpu.memory_space<vmem>>, vector<1x64x32xbf16>
    %5 = vector.shape_cast %4 : vector<1x64x32xbf16> to vector<64x32xbf16>
    %6 = math.floor %1 : vector<1x1024xf32>
    %7 = math.floor %3 : vector<1x1024xf32>
    %8 = arith.subf %1, %6 : vector<1x1024xf32>
    %9 = arith.subf %3, %7 : vector<1x1024xf32>
    %cst = arith.constant 0.000000e+00 : f32
    %10 = vector.broadcast %cst : f32 to vector<1x1024xf32>
    %11 = arith.cmpf oge, %6, %10 : vector<1x1024xf32>
    %cst_8 = arith.constant 3.100000e+01 : f32
    %12 = vector.broadcast %cst_8 : f32 to vector<1x1024xf32>
    %13 = arith.cmpf ole, %6, %12 : vector<1x1024xf32>
    %14 = arith.andi %11, %13 : vector<1x1024xi1>
    %cst_9 = arith.constant 1.000000e+00 : f32
    %15 = vector.broadcast %cst_9 : f32 to vector<1x1024xf32>
    %16 = arith.addf %6, %15 : vector<1x1024xf32>
    %cst_10 = arith.constant 0.000000e+00 : f32
    %17 = vector.broadcast %cst_10 : f32 to vector<1x1024xf32>
    %18 = arith.cmpf oge, %16, %17 : vector<1x1024xf32>
    %cst_11 = arith.constant 1.000000e+00 : f32
    %19 = vector.broadcast %cst_11 : f32 to vector<1x1024xf32>
    %20 = arith.addf %6, %19 : vector<1x1024xf32>
    %cst_12 = arith.constant 3.100000e+01 : f32
    %21 = vector.broadcast %cst_12 : f32 to vector<1x1024xf32>
    %22 = arith.cmpf ole, %20, %21 : vector<1x1024xf32>
    %23 = arith.andi %18, %22 : vector<1x1024xi1>
    %cst_13 = arith.constant 1.000000e+00 : f32
    %24 = vector.broadcast %cst_13 : f32 to vector<1x1024xf32>
    %25 = arith.subf %24, %8 : vector<1x1024xf32>
    %cst_14 = arith.constant 0.000000e+00 : f32
    %26 = vector.broadcast %cst_14 : f32 to vector<1x1024xf32>
    %27 = arith.select %14, %25, %26 : vector<1x1024xi1>, vector<1x1024xf32>
    %cst_15 = arith.constant 0.000000e+00 : f32
    %28 = vector.broadcast %cst_15 : f32 to vector<1x1024xf32>
    %29 = arith.select %23, %8, %28 : vector<1x1024xi1>, vector<1x1024xf32>
    %cst_16 = arith.constant 0.000000e+00 : f32
    %cst_17 = arith.constant 3.100000e+01 : f32
    %30 = vector.broadcast %cst_16 : f32 to vector<1x1024xf32>
    %31 = arith.maximumf %30, %6 : vector<1x1024xf32>
    %32 = vector.broadcast %cst_17 : f32 to vector<1x1024xf32>
    %33 = arith.minimumf %32, %31 : vector<1x1024xf32>
    %34 = arith.fptosi %33 : vector<1x1024xf32> to vector<1x1024xi32>
    %cst_18 = arith.constant 1.000000e+00 : f32
    %35 = vector.broadcast %cst_18 : f32 to vector<1x1024xf32>
    %36 = arith.addf %6, %35 : vector<1x1024xf32>
    %cst_19 = arith.constant 0.000000e+00 : f32
    %cst_20 = arith.constant 3.100000e+01 : f32
    %37 = vector.broadcast %cst_19 : f32 to vector<1x1024xf32>
    %38 = arith.maximumf %37, %36 : vector<1x1024xf32>
    %39 = vector.broadcast %cst_20 : f32 to vector<1x1024xf32>
    %40 = arith.minimumf %39, %38 : vector<1x1024xf32>
    %41 = arith.fptosi %40 : vector<1x1024xf32> to vector<1x1024xi32>
    %42 = tpu.iota {dimensions = array<i32: 0>} : vector<32x1024xi32>
    %43 = vector.broadcast %34 : vector<1x1024xi32> to vector<32x1024xi32>
    %44 = arith.cmpi eq, %42, %43 : vector<32x1024xi32>
    %cst_21 = arith.constant 0.000000e+00 : f32
    %45 = vector.shape_cast %27 : vector<1x1024xf32> to vector<1x1024xf32>
    %46 = vector.broadcast %45 : vector<1x1024xf32> to vector<32x1024xf32>
    %47 = vector.broadcast %cst_21 : f32 to vector<32x1024xf32>
    %48 = arith.select %44, %46, %47 : vector<32x1024xi1>, vector<32x1024xf32>
    %49 = vector.broadcast %41 : vector<1x1024xi32> to vector<32x1024xi32>
    %50 = arith.cmpi eq, %42, %49 : vector<32x1024xi32>
    %cst_22 = arith.constant 0.000000e+00 : f32
    %51 = vector.shape_cast %29 : vector<1x1024xf32> to vector<1x1024xf32>
    %52 = vector.broadcast %51 : vector<1x1024xf32> to vector<32x1024xf32>
    %53 = vector.broadcast %cst_22 : f32 to vector<32x1024xf32>
    %54 = arith.select %50, %52, %53 : vector<32x1024xi1>, vector<32x1024xf32>
    %55 = arith.addf %48, %54 : vector<32x1024xf32>
    %56 = arith.truncf %55 : vector<32x1024xf32> to vector<32x1024xbf16>
    %cst_23 = arith.constant 0.000000e+00 : f32
    %57 = vector.broadcast %cst_23 : f32 to vector<1x1024xf32>
    %58 = arith.cmpf oge, %7, %57 : vector<1x1024xf32>
    %cst_24 = arith.constant 3.100000e+01 : f32
    %59 = vector.broadcast %cst_24 : f32 to vector<1x1024xf32>
    %60 = arith.cmpf ole, %7, %59 : vector<1x1024xf32>
    %61 = arith.andi %58, %60 : vector<1x1024xi1>
    %cst_25 = arith.constant 1.000000e+00 : f32
    %62 = vector.broadcast %cst_25 : f32 to vector<1x1024xf32>
    %63 = arith.addf %7, %62 : vector<1x1024xf32>
    %cst_26 = arith.constant 0.000000e+00 : f32
    %64 = vector.broadcast %cst_26 : f32 to vector<1x1024xf32>
    %65 = arith.cmpf oge, %63, %64 : vector<1x1024xf32>
    %cst_27 = arith.constant 1.000000e+00 : f32
    %66 = vector.broadcast %cst_27 : f32 to vector<1x1024xf32>
    %67 = arith.addf %7, %66 : vector<1x1024xf32>
    %cst_28 = arith.constant 3.100000e+01 : f32
    %68 = vector.broadcast %cst_28 : f32 to vector<1x1024xf32>
    %69 = arith.cmpf ole, %67, %68 : vector<1x1024xf32>
    %70 = arith.andi %65, %69 : vector<1x1024xi1>
    %cst_29 = arith.constant 1.000000e+00 : f32
    %71 = vector.broadcast %cst_29 : f32 to vector<1x1024xf32>
    %72 = arith.subf %71, %9 : vector<1x1024xf32>
    %cst_30 = arith.constant 0.000000e+00 : f32
    %73 = vector.broadcast %cst_30 : f32 to vector<1x1024xf32>
    %74 = arith.select %61, %72, %73 : vector<1x1024xi1>, vector<1x1024xf32>
    %cst_31 = arith.constant 0.000000e+00 : f32
    %75 = vector.broadcast %cst_31 : f32 to vector<1x1024xf32>
    %76 = arith.select %70, %9, %75 : vector<1x1024xi1>, vector<1x1024xf32>
    %cst_32 = arith.constant 0.000000e+00 : f32
    %cst_33 = arith.constant 3.100000e+01 : f32
    %77 = vector.broadcast %cst_32 : f32 to vector<1x1024xf32>
    %78 = arith.maximumf %77, %7 : vector<1x1024xf32>
    %79 = vector.broadcast %cst_33 : f32 to vector<1x1024xf32>
    %80 = arith.minimumf %79, %78 : vector<1x1024xf32>
    %81 = arith.fptosi %80 : vector<1x1024xf32> to vector<1x1024xi32>
    %cst_34 = arith.constant 1.000000e+00 : f32
    %82 = vector.broadcast %cst_34 : f32 to vector<1x1024xf32>
    %83 = arith.addf %7, %82 : vector<1x1024xf32>
    %cst_35 = arith.constant 0.000000e+00 : f32
    %cst_36 = arith.constant 3.100000e+01 : f32
    %84 = vector.broadcast %cst_35 : f32 to vector<1x1024xf32>
    %85 = arith.maximumf %84, %83 : vector<1x1024xf32>
    %86 = vector.broadcast %cst_36 : f32 to vector<1x1024xf32>
    %87 = arith.minimumf %86, %85 : vector<1x1024xf32>
    %88 = arith.fptosi %87 : vector<1x1024xf32> to vector<1x1024xi32>
    %89 = tpu.iota {dimensions = array<i32: 0>} : vector<32x1024xi32>
    %90 = vector.broadcast %81 : vector<1x1024xi32> to vector<32x1024xi32>
    %91 = arith.cmpi eq, %89, %90 : vector<32x1024xi32>
    %cst_37 = arith.constant 0.000000e+00 : f32
    %92 = vector.shape_cast %74 : vector<1x1024xf32> to vector<1x1024xf32>
    %93 = vector.broadcast %92 : vector<1x1024xf32> to vector<32x1024xf32>
    %94 = vector.broadcast %cst_37 : f32 to vector<32x1024xf32>
    %95 = arith.select %91, %93, %94 : vector<32x1024xi1>, vector<32x1024xf32>
    %96 = vector.broadcast %88 : vector<1x1024xi32> to vector<32x1024xi32>
    %97 = arith.cmpi eq, %89, %96 : vector<32x1024xi32>
    %cst_38 = arith.constant 0.000000e+00 : f32
    %98 = vector.shape_cast %76 : vector<1x1024xf32> to vector<1x1024xf32>
    %99 = vector.broadcast %98 : vector<1x1024xf32> to vector<32x1024xf32>
    %100 = vector.broadcast %cst_38 : f32 to vector<32x1024xf32>
    %101 = arith.select %97, %99, %100 : vector<32x1024xi1>, vector<32x1024xf32>
    %102 = arith.addf %95, %101 : vector<32x1024xf32>
    %cst_39 = arith.constant dense<0.000000e+00> : vector<64x1024xf32>
    %103 = tpu.matmul %5, %56, %cst_39 {dimension_numbers = #tpu.dot_dimension_numbers<[1], [0], [0], [1], [0, 0, 1, 1], [], []>} : vector<64x32xbf16>, vector<32x1024xbf16>, vector<64x1024xf32> -> vector<64x1024xf32>
    %104 = vector.shape_cast %103 : vector<64x1024xf32> to vector<2x32x1024xf32>
    %105 = vector.shape_cast %102 : vector<32x1024xf32> to vector<1x32x1024xf32>
    %106 = vector.broadcast %105 : vector<1x32x1024xf32> to vector<2x32x1024xf32>
    %107 = arith.mulf %104, %106 : vector<2x32x1024xf32>
    %cst_40 = arith.constant dense<0.000000e+00> : vector<2x1024xf32>
    %108 = vector.multi_reduction <add>, %107, %cst_40 [1] : vector<2x32x1024xf32> to vector<2x1024xf32>
    %109 = vector.shape_cast %108 : vector<2x1024xf32> to vector<1x2x1024xf32>
    %c0_41 = arith.constant 0 : index
    %c0_42 = arith.constant 0 : index
    %c0_43 = arith.constant 0 : index
    %110 = vector.load %arg5[%c0_41, %c0_42, %c0_43] : memref<1x2x1024xf32, #tpu.memory_space<vmem>>, vector<1x2x1024xf32>
    tpu.vector_store %arg5[%c0_41, %c0_42, %c0_43], %109 {strides = array<i32>} : memref<1x2x1024xf32, #tpu.memory_space<vmem>>, vector<1x2x1024xf32>,
    return
  }
  func.func @transform_0(%arg0: i32, %arg1: i32) -> (i32, i32, i32) {
    %c0_i32 = arith.constant 0 : i32
    %c0_i32_0 = arith.constant 0 : i32
    return %arg0, %c0_i32, %arg1 : i32, i32, i32
  }
  func.func @transform_1(%arg0: i32, %arg1: i32) -> (i32, i32, i32) {
    %c0_i32 = arith.constant 0 : i32
    %c0_i32_0 = arith.constant 0 : i32
    return %arg0, %c0_i32, %arg1 : i32, i32, i32
  }
  func.func @transform_2(%arg0: i32, %arg1: i32) -> (i32, i32, i32) {
    %c0_i32 = arith.constant 0 : i32
    %c0_i32_0 = arith.constant 0 : i32
    %c0_i32_1 = arith.constant 0 : i32
    return %arg0, %c0_i32, %c0_i32_0 : i32, i32, i32
  }
  func.func @transform_3(%arg0: i32, %arg1: i32) -> (i32, i32, i32) {
    %c0_i32 = arith.constant 0 : i32
    %c0_i32_0 = arith.constant 0 : i32
    return %arg0, %c0_i32, %arg1 : i32, i32, i32
  }
}

</mosaic_0001>

<llo_original>
// kernel: stn_forward.6
$region0: #{stn_forward.6}
  #allocation0 [shape = 'u32[]', space=smem, size = 0x4, offset = 0x4, fixed_abs, tag = 'smem constant byte address 0x4 - core index']
  #allocation1 [shape = 'u32[144,128]{1,0:T(1,128)}', space=vmem, size = 0x12000, scoped, tag = 'internal scratch']
  #allocation2 [shape = 'bf16[48,288]{1,0:T(16,128)(2,1)}', space=vmem, size = 0x9000, scoped, tag = 'scratch operand']
  %s0 = inlined_call_operand.vmem [shape: bf16[2,4,342], index: 0, kind: input, shape index: {}]
  %s1 = inlined_call_operand.vmem [shape: bf16[8,48], index: 1, kind: input, shape index: {}]
  %s2 = inlined_call_operand.vmem [shape: f32[8,1], index: 2, kind: input, shape index: {}]
  %s3 = inlined_call_operand.vmem [shape: bf16[288,64], index: 3, kind: input, shape index: {}]
  %s4 = inlined_call_operand.vmem [shape: bf16[2,8,64], index: 4, kind: output, shape index: {}]
  %s5 = sld [smem:[#allocation0]]
  $region49: #{stn_forward.6} parent=0
    _
  %s7 = ssub.s32 1, %s5
  %s8 = scalar_select 0, %s7, %s5
  loop: start=0, step=1, limit=4
  $region2: #{stn_forward.6} parent=0 // loop_pre_header
    _
  $region3: #{stn_forward.6} parent=0 // loop_header
    %s10 = sphi 0, %s14
    %p11 = scmp.ge.s32.totalorder %s10, 4
    %s20 = sphi 0, %s22
    %s23 = sphi 0, %s20
    %s24 = sphi 0, %s23
    %s40 = sphi 0, %s24
    %s44 = sphi 0, %s44
    %s46 = sphi 0, %s44
    %s47 = sphi 0, %s46
    %s61 = sphi 0, %s47
    %s65 = sphi 0, %s65
    %s67 = sphi 0, %s65
    %s68 = sphi 0, %s67
    %s82 = sphi 0, %s68
    %s86 = sphi 0, %s86
    %s88 = sphi 0, %s86
    %s89 = sphi 0, %s88
    %s103 = sphi 0, %s89
    %s109 = sphi 0, %s111
    %s112 = sphi 0, %s109
    %s113 = sphi 0, %s112
    %s129 = sphi 0, %s113
  $region4: #{stn_forward.6} parent=0 // loop_header_branch
    %13 = sbr.rel (%p11) target = $region8
  $region5: #{stn_forward.6} parent=0 // loop_body
    %s15 = ssub.s32 %s10, 1
    %s16 = ssub.s32 %s10, 2
    %s17 = sadd.s32 %s10, 1
    %s18 = ssub.s32 %s10, %s17
    %p19 = scmp.eq.s32.totalorder %s18, 0
    %s21 = sadd.s32 %s20, 1
    %s22 = scalar_select %p19, %s20, %s21
    %p25 = pneg %p19
    %p26 = scmp.eq.s32.totalorder %s10, 1
    %p27 = por %p25, %p26
    %p28 = scmp.ne.s32.totalorder %s20, %s23
    %p29 = scmp.eq.s32.totalorder %s10, 0
    %p30 = por %p28, %p29
    %p31 = scmp.ne.s32.totalorder %s20, %s23
    %p32 = scmp.eq.s32.totalorder %s15, 1
    %p33 = por %p31, %p32
    %p34 = scmp.ne.s32.totalorder %s23, %s24
    %p35 = scmp.eq.s32.totalorder %s15, 0
    %p36 = por %p34, %p35
    %p37 = scmp.ne.s32.totalorder %s23, %s24
    %p38 = scmp.eq.s32.totalorder %s16, 1
    %p39 = por %p37, %p38
    %p41 = scmp.ne.s32.totalorder %s24, %s40
    %p42 = scmp.eq.s32.totalorder %s16, 0
    %p43 = por %p41, %p42
    %s45 = sadd.s32 %s44, 1
    %p48 = scmp.eq.s32.totalorder %s10, 1
    %p49 = scmp.ne.s32.totalorder %s44, %s46
    %p50 = scmp.eq.s32.totalorder %s10, 0
    %p51 = por %p49, %p50
    %p52 = scmp.ne.s32.totalorder %s44, %s46
    %p53 = scmp.eq.s32.totalorder %s15, 1
    %p54 = por %p52, %p53
    %p55 = scmp.ne.s32.totalorder %s46, %s47
    %p56 = scmp.eq.s32.totalorder %s15, 0
    %p57 = por %p55, %p56
    %p58 = scmp.ne.s32.totalorder %s46, %s47
    %p59 = scmp.eq.s32.totalorder %s16, 1
    %p60 = por %p58, %p59
    %p62 = scmp.ne.s32.totalorder %s47, %s61
    %p63 = scmp.eq.s32.totalorder %s16, 0
    %p64 = por %p62, %p63
    %s66 = sadd.s32 %s65, 1
    %p69 = scmp.eq.s32.totalorder %s10, 1
    %p70 = scmp.ne.s32.totalorder %s65, %s67
    %p71 = scmp.eq.s32.totalorder %s10, 0
    %p72 = por %p70, %p71
    %p73 = scmp.ne.s32.totalorder %s65, %s67
    %p74 = scmp.eq.s32.totalorder %s15, 1
    %p75 = por %p73, %p74
    %p76 = scmp.ne.s32.totalorder %s67, %s68
    %p77 = scmp.eq.s32.totalorder %s15, 0
    %p78 = por %p76, %p77
    %p79 = scmp.ne.s32.totalorder %s67, %s68
    %p80 = scmp.eq.s32.totalorder %s16, 1
    %p81 = por %p79, %p80
    %p83 = scmp.ne.s32.totalorder %s68, %s82
    %p84 = scmp.eq.s32.totalorder %s16, 0
    %p85 = por %p83, %p84
    %s87 = sadd.s32 %s86, 1
    %p90 = scmp.eq.s32.totalorder %s10, 1
    %p91 = scmp.ne.s32.totalorder %s86, %s88
    %p92 = scmp.eq.s32.totalorder %s10, 0
    %p93 = por %p91, %p92
    %p94 = scmp.ne.s32.totalorder %s86, %s88
    %p95 = scmp.eq.s32.totalorder %s15, 1
    %p96 = por %p94, %p95
    %p97 = scmp.ne.s32.totalorder %s88, %s89
    %p98 = scmp.eq.s32.totalorder %s15, 0
    %p99 = por %p97, %p98
    %p100 = scmp.ne.s32.totalorder %s88, %s89
    %p101 = scmp.eq.s32.totalorder %s16, 1
    %p102 = por %p100, %p101
    %p104 = scmp.ne.s32.totalorder %s89, %s103
    %p105 = scmp.eq.s32.totalorder %s16, 0
    %p106 = por %p104, %p105
    %s107 = ssub.s32 %s10, %s17
    %p108 = scmp.eq.s32.totalorder %s107, 0
    %s110 = sadd.s32 %s109, 1
    %s111 = scalar_select %p108, %s109, %s110
    %p114 = pneg %p108
    %p115 = scmp.eq.s32.totalorder %s10, 1
    %p116 = por %p114, %p115
    %p117 = scmp.ne.s32.totalorder %s109, %s112
    %p118 = scmp.eq.s32.totalorder %s10, 0
    %p119 = por %p117, %p118
    %p120 = scmp.ne.s32.totalorder %s109, %s112
    %p121 = scmp.eq.s32.totalorder %s15, 1
    %p122 = por %p120, %p121
    %p123 = scmp.ne.s32.totalorder %s112, %s113
    %p124 = scmp.eq.s32.totalorder %s15, 0
    %p125 = por %p123, %p124
    %p126 = scmp.ne.s32.totalorder %s112, %s113
    %p127 = scmp.eq.s32.totalorder %s16, 1
    %p128 = por %p126, %p127
    %p130 = scmp.ne.s32.totalorder %s113, %s129
    %p131 = scmp.eq.s32.totalorder %s16, 0
    %p132 = por %p130, %p131
    %p133 = scmp.le.s32.totalorder 1, %s10
    %p134 = scmp.lt.s32.totalorder %s10, 3
    %p135 = pnand %p133, %p134
    %p136 = pneg %p135
    // Predicated region
    $region9: #{stn_forward.6} parent=5 // pred_check
      _
    $region10: #{stn_forward.6} parent=5 // pred_check_branch
      %138 = sbr.rel (%p135) target = $region12
    $region11: #{stn_forward.6} parent=5 // pred_region
      %s139 = ssub.s32 %s10, 1
      // Predicated region
      $region13: #{stn_forward.6} parent=11 // pred_check
        %p140 = pneg %p57
      $region14: #{stn_forward.6} parent=11 // pred_check_branch
        %142 = sbr.rel (%p140) target = $region16
      $region15: #{stn_forward.6} parent=11 // pred_region
        _
      $region16: #{stn_forward.6} parent=11 // pred_fallthru
        _
      // Predicated region
      $region17: #{stn_forward.6} parent=11 // pred_check
        %p143 = pneg %p78
      $region18: #{stn_forward.6} parent=11 // pred_check_branch
        %145 = sbr.rel (%p143) target = $region20
      $region19: #{stn_forward.6} parent=11 // pred_region
        _
      $region20: #{stn_forward.6} parent=11 // pred_fallthru
        _
      // Predicated region
      $region21: #{stn_forward.6} parent=11 // pred_check
        %p146 = pneg %p99
      $region22: #{stn_forward.6} parent=11 // pred_check_branch
        %148 = sbr.rel (%p146) target = $region24
      $region23: #{stn_forward.6} parent=11 // pred_region
        _
      $region24: #{stn_forward.6} parent=11 // pred_fallthru
        _
    $region12: #{stn_forward.6} parent=5 // pred_fallthru
      _
    %p149 = scmp.lt.s32.totalorder %s10, 2
    // Predicated region
    $region25: #{stn_forward.6} parent=5 // pred_check
      %p150 = pneg %p149
    $region26: #{stn_forward.6} parent=5 // pred_check_branch
      %152 = sbr.rel (%p150) target = $region28
    $region27: #{stn_forward.6} parent=5 // pred_region
      // Predicated region
      $region29: #{stn_forward.6} parent=27 // pred_check
        %p153 = pneg %p30
      $region30: #{stn_forward.6} parent=27 // pred_check_branch
        %155 = sbr.rel (%p153) target = $region32
      $region31: #{stn_forward.6} parent=27 // pred_region
        %p156 = scmp.lt.s32.totalorder %s10, 1
        %s157 = scalar_select %p156, %s10, 1
        %s158 = smul.addr %s157, 3
        %s159 = smul.addr %s158, 2
        %s160 = scalar_lea.vmem %s0, %s159
      $region32: #{stn_forward.6} parent=27 // pred_fallthru
        _
    $region28: #{stn_forward.6} parent=5 // pred_fallthru
      _
    %p161 = scmp.le.s32.totalorder 1, %s10
    %p162 = scmp.lt.s32.totalorder %s10, 3
    %p163 = pnand %p161, %p162
    %p164 = pneg %p163
    // Predicated region
    $region33: #{stn_forward.6} parent=5 // pred_check
      _
    $region34: #{stn_forward.6} parent=5 // pred_check_branch
      %166 = sbr.rel (%p163) target = $region36
    $region35: #{stn_forward.6} parent=5 // pred_region
      %s167 = ssub.s32 %s10, 1
      %p168 = scmp.lt.s32.totalorder %s15, 1
      %s169 = scalar_select %p168, %s15, 1
      %s170 = smul.addr %s169, 3
      %s171 = smul.addr %s170, 2
      %s172 = scalar_lea.vmem %s0, %s171
      %p173 = pneg %p36
      %p174 = pneg %p33
      %p175 = pneg %p57
      %p176 = pneg %p54
      %p177 = pneg %p78
      %p178 = pneg %p75
      %p179 = pneg %p99
      %p180 = pneg %p96
      %p181 = pneg %p125
      %p182 = pneg %p122
      %p183 = scmp.lt.s32.totalorder %s15, 1
      %s184 = scalar_select %p183, %s15, 1
      %s185 = smul.addr %s184, 4
      %s186 = scalar_lea.vmem %s4, %s185
      %p187 = scmp.lt.s32.totalorder %s15, 1
      %s188 = scalar_select %p187, %s15, 1
      %s189 = smul.addr %s188, 3
      %s190 = smul.addr %s189, 2
      %s191 = scalar_lea.vmem %s0, %s190
      %p192 = scmp.lt.s32.totalorder %s15, 1
      %s193 = scalar_select %p192, %s15, 1
      %s194 = smul.addr %s193, 4
      %s195 = scalar_lea.vmem %s4, %s194
      %v197 = vld [vmem:[%s191] sm:$0x3f]
      %v199 = vcombine.high %v197, %v197
      %v201 = vunpack.c.l.s4 1983009808
      %v202 = vunpack.c.0.s8 %v201
      %v203 = vlaneseq
      %v204 = vshrl.u32 %v203, 7
      %v205 = vsub.s32 %v202, %v204
      %v206 = vrot.slane %v197, %v205
      %v208 = vunpack.c.l.s4 1983009808
      %v209 = vunpack.c.0.s8 %v208
      %v210 = vlaneseq
      %v211 = vshrl.u32 %v210, 7
      %v212 = vsub.s32 %v209, %v211
      %v213 = vrot.slane %v199, %v212
      %v214 = vcombine.high %v206, %v206
      %218 = vst [vmem:[#allocation2] sm:$0x3] %v206
      %219 = vst [vmem:[#allocation2 + $0x8] sm:$0x3] %v214
      %vm220 = vcmask 254976
      %221 = vst.msk [vmem:[#allocation2 + $0x10] sm:$0x3] %vm220, %v213
      %v222 = vcombine.low %v197, %v197
      %v224 = vunpack.c.l.s4 1983009808
      %v225 = vunpack.c.0.s8 %v224
      %v226 = vlaneseq
      %v227 = vshrl.u32 %v226, 7
      %v228 = vsub.s32 %v225, %v227
      %v229 = vrot.slane %v222, %v228
      %v230 = vcombine.high %v229, %v229
      %231 = vrot.lane.b32.xlu0 %v229, 127
      %v232 = vpop.permute.xlu0 %231
      %233 = vrot.lane.b32.xlu0 %v230, 127
      %v234 = vpop.permute.xlu0 %233
      %235 = vrot.lane.b32.xlu0 %v206, 127
      %v236 = vpop.permute.xlu0 %235
      %vm237 = vcmask 1039360
      %v238 = vsel %vm237, %v232, %v234
      %v239 = vsel %vm237, %v234, %v236
      %243 = vst [vmem:[#allocation2] sm:$0xc] %v238
      %244 = vst [vmem:[#allocation2 + $0x8] sm:$0xc] %v239
      %vm245 = vcmask 257026
      %246 = vst.msk [vmem:[#allocation2 + $0x10] sm:$0xc] %vm245, %v236
      %v247 = vcombine.low %v206, %v206
      %v248 = vcombine.low %v213, %v213
      %249 = vrot.lane.b32.xlu0 %v247, 126
      %v250 = vpop.permute.xlu0 %249
      %251 = vrot.lane.b32.xlu0 %v206, 126
      %v252 = vpop.permute.xlu0 %251
      %253 = vrot.lane.b32.xlu0 %v248, 126
      %v254 = vpop.permute.xlu0 %253
      %vm255 = vcmask 1031168
      %v256 = vsel %vm255, %v250, %v252
      %v257 = vsel %vm255, %v252, %v254
      %261 = vst [vmem:[#allocation2] sm:$0x30] %v256
      %262 = vst [vmem:[#allocation2 + $0x8] sm:$0x30] %v257
      %vm263 = vcmask 259076
      %264 = vst.msk [vmem:[#allocation2 + $0x10] sm:$0x30] %vm263, %v254
      %v265 = vcombine.low %v229, %v229
      %266 = vrot.lane.b32.xlu0 %v265, 110
      %v267 = vpop.permute.xlu0 %266
      %268 = vrot.lane.b32.xlu0 %v229, 110
      %v269 = vpop.permute.xlu0 %268
      %270 = vrot.lane.b32.xlu0 %v247, 110
      %v271 = vpop.permute.xlu0 %270
      %vm272 = vcmask 900096
      %v273 = vsel %vm272, %v267, %v269
      %v274 = vsel %vm272, %v269, %v271
      %278 = vst [vmem:[#allocation2] sm:$0xc0] %v273
      %279 = vst [vmem:[#allocation2 + $0x8] sm:$0xc0] %v274
      %vm280 = vcmask 261126
      %281 = vst.msk [vmem:[#allocation2 + $0x10] sm:$0xc0] %vm280, %v271
      %282 = vrot.lane.b32.xlu0 %v206, 109
      %v283 = vpop.permute.xlu0 %282
      %284 = vrot.lane.b32.xlu0 %v214, 109
      %v285 = vpop.permute.xlu0 %284
      %286 = vrot.lane.b32.xlu0 %v213, 109
      %v287 = vpop.permute.xlu0 %286
      %vm288 = vcmask 891904
      %v289 = vsel %vm288, %v283, %v285
      %v290 = vsel %vm288, %v285, %v287
      %294 = vst [vmem:[#allocation2 + $0x18] sm:$0x3] %v289
      %295 = vst [vmem:[#allocation2 + $0x20] sm:$0x3] %v290
      %296 = vst.msk [vmem:[#allocation2 + $0x28] sm:$0x3] %vm220, %v287
      %297 = vrot.lane.b32.xlu0 %v229, 108
      %v298 = vpop.permute.xlu0 %297
      %299 = vrot.lane.b32.xlu0 %v230, 108
      %v300 = vpop.permute.xlu0 %299
      %301 = vrot.lane.b32.xlu0 %v206, 108
      %v302 = vpop.permute.xlu0 %301
      %vm303 = vcmask 883712
      %v304 = vsel %vm303, %v298, %v300
      %v305 = vsel %vm303, %v300, %v302
      %309 = vst [vmem:[#allocation2 + $0x18] sm:$0xc] %v304
      %310 = vst [vmem:[#allocation2 + $0x20] sm:$0xc] %v305
      %311 = vst.msk [vmem:[#allocation2 + $0x28] sm:$0xc] %vm245, %v302
      %312 = vrot.lane.b32.xlu0 %v247, 92
      %v313 = vpop.permute.xlu0 %312
      %314 = vrot.lane.b32.xlu0 %v206, 92
      %v315 = vpop.permute.xlu0 %314
      %316 = vrot.lane.b32.xlu0 %v248, 92
      %v317 = vpop.permute.xlu0 %316
      %vm318 = vcmask 752640
      %v319 = vsel %vm318, %v313, %v315
      %v320 = vsel %vm318, %v315, %v317
      %324 = vst [vmem:[#allocation2 + $0x18] sm:$0x30] %v319
      %325 = vst [vmem:[#allocation2 + $0x20] sm:$0x30] %v320
      %326 = vst.msk [vmem:[#allocation2 + $0x28] sm:$0x30] %vm263, %v317
      %327 = vrot.lane.b32.xlu0 %v265, 91
      %v328 = vpop.permute.xlu0 %327
      %329 = vrot.lane.b32.xlu0 %v229, 91
      %v330 = vpop.permute.xlu0 %329
      %331 = vrot.lane.b32.xlu0 %v247, 91
      %v332 = vpop.permute.xlu0 %331
      %vm333 = vcmask 744448
      %v334 = vsel %vm333, %v328, %v330
      %v335 = vsel %vm333, %v330, %v332
      %339 = vst [vmem:[#allocation2 + $0x18] sm:$0xc0] %v334
      %340 = vst [vmem:[#allocation2 + $0x20] sm:$0xc0] %v335
      %341 = vst.msk [vmem:[#allocation2 + $0x28] sm:$0xc0] %vm280, %v332
      %342 = vrot.lane.b32.xlu0 %v206, 90
      %v343 = vpop.permute.xlu0 %342
      %344 = vrot.lane.b32.xlu0 %v214, 90
      %v345 = vpop.permute.xlu0 %344
      %346 = vrot.lane.b32.xlu0 %v213, 90
      %v347 = vpop.permute.xlu0 %346
      %vm348 = vcmask 736256
      %v349 = vsel %vm348, %v343, %v345
      %v350 = vsel %vm348, %v345, %v347
      %354 = vst [vmem:[#allocation2 + $0x30] sm:$0x3] %v349
      %355 = vst [vmem:[#allocation2 + $0x38] sm:$0x3] %v350
      %356 = vst.msk [vmem:[#allocation2 + $0x40] sm:$0x3] %vm220, %v347
      %357 = vst [vmem:[#allocation2 + $0x30] sm:$0xfc] 0
      %358 = vst [vmem:[#allocation2 + $0x38] sm:$0xfc] 0
      %vm359 = vcmask 261122
      %360 = vst.msk [vmem:[#allocation2 + $0x40] sm:$0xfc] %vm359, 0
      %v361 = vld [vmem:[%s1] sm:$0xf]
      %v362 = vld [vmem:[#allocation2] sm:$0xff]
      %v363 = vld [vmem:[#allocation2 + $0x8] sm:$0xff]
      %v364 = vld [vmem:[#allocation2 + $0x10] sm:$0xff]
      %v365 = vld [vmem:[#allocation2 + $0x18] sm:$0xff]
      %v366 = vld [vmem:[#allocation2 + $0x20] sm:$0xff]
      %v367 = vld [vmem:[#allocation2 + $0x28] sm:$0xff]
      %v368 = vld [vmem:[#allocation2 + $0x30] sm:$0xff]
      %v369 = vld [vmem:[#allocation2 + $0x38] sm:$0xff]
      %v370 = vld [vmem:[#allocation2 + $0x40] sm:$0xff]
      %v371 = vld [vmem:[%s2] sm:$0xff]
      %373 = vset.pattern.permute.xlu0 0
      %374 = vperm.xlu0 %373, %v371
      %v375 = vpop.permute.xlu0 %374
      %vm377 = vcmask 392192
      %v379 = vsel %vm377, %v361, 0
      %381 = vmatprep.subr.bf16.mxu0 %v363
      %382 = vmatpush1.bf16.msra.mxu0 %v362
      %383 = vmatprep.subr.bf16.mxu0 %v366
      %384 = vmatpush1.bf16.msra.mxu0 %v365
      %385 = vmatprep.subr.bf16.mxu0 %v369
      %386 = vmatpush1.bf16.msra.mxu0 %v368
      %387 = vmatprep.subr.bf16.mxu0 0
      %388 = vmatpush1.bf16.msra.mxu0 0
      %389 = vmatprep.subr.bf16.mxu0 0
      %390 = vmatpush1.bf16.msra.mxu0 0
      %391 = vmatprep.subr.bf16.mxu0 0
      %392 = vmatpush1.bf16.msra.mxu0 0
      %393 = vmatprep.subr.bf16.mxu0 0
      %394 = vmatpush1.bf16.msra.mxu0 0
      %395 = vmatprep.subr.bf16.mxu0 0
      %396 = vmatpush1.bf16.msra.mxu0 0
      %397 = vmatprep.subr.bf16.mxu0 0
      %398 = vmatpush1.bf16.msra.mxu0 0
      %399 = vmatprep.subr.bf16.mxu0 0
      %400 = vmatpush1.bf16.msra.mxu0 0
      %401 = vmatprep.subr.bf16.mxu0 0
      %402 = vmatpush1.bf16.msra.mxu0 0
      %403 = vmatprep.subr.bf16.mxu0 0
      %404 = vmatpush1.bf16.msra.mxu0 0
      %405 = vmatprep.subr.bf16.mxu0 0
      %406 = vmatpush1.bf16.msra.mxu0 0
      %407 = vmatprep.subr.bf16.mxu0 0
      %408 = vmatpush1.bf16.msra.mxu0 0
      %409 = vmatprep.subr.bf16.mxu0 0
      %410 = vmatpush1.bf16.msra.mxu0 0
      %411 = vmatprep.subr.bf16.mxu0 0
      %412 = vmatpush1.bf16.msra.mxu0 0
      %413 = vmatprep.mubr.bf16.mxu0 0
      %414 = vmatmul.mubr.bf16.gmra.mrb[0].mxu0 %v379
      %v415 = vpop.f32.mrb[0].mxu0
      %v416 = vadd.f32 %v375, %v415
      %v417 = vpop.f32.mrb[0].mxu0
      %v418 = vadd.f32 %v375, %v417
      %v419 = vpop.f32.mrb[0].mxu0
      %v420 = vpop.f32.mrb[0].mxu0
      %421 = vdwg.mxu0
      %422 = vmatprep.subr.bf16.mxu0 0
      %423 = vmatpush1.bf16.msra.mxu0 %v364
      %424 = vmatprep.subr.bf16.mxu0 0
      %425 = vmatpush1.bf16.msra.mxu0 %v367
      %426 = vmatprep.subr.bf16.mxu0 0
      %427 = vmatpush1.bf16.msra.mxu0 %v370
      %428 = vmatprep.subr.bf16.mxu0 0
      %429 = vmatpush1.bf16.msra.mxu0 0
      %430 = vmatprep.subr.bf16.mxu0 0
      %431 = vmatpush1.bf16.msra.mxu0 0
      %432 = vmatprep.subr.bf16.mxu0 0
      %433 = vmatpush1.bf16.msra.mxu0 0
      %434 = vmatprep.subr.bf16.mxu0 0
      %435 = vmatpush1.bf16.msra.mxu0 0
      %436 = vmatprep.subr.bf16.mxu0 0
      %437 = vmatpush1.bf16.msra.mxu0 0
      %438 = vmatprep.subr.bf16.mxu0 0
      %439 = vmatpush1.bf16.msra.mxu0 0
      %440 = vmatprep.subr.bf16.mxu0 0
      %441 = vmatpush1.bf16.msra.mxu0 0
      %442 = vmatprep.subr.bf16.mxu0 0
      %443 = vmatpush1.bf16.msra.mxu0 0
      %444 = vmatprep.subr.bf16.mxu0 0
      %445 = vmatpush1.bf16.msra.mxu0 0
      %446 = vmatprep.subr.bf16.mxu0 0
      %447 = vmatpush1.bf16.msra.mxu0 0
      %448 = vmatprep.subr.bf16.mxu0 0
      %449 = vmatpush1.bf16.msra.mxu0 0
      %450 = vmatprep.subr.bf16.mxu0 0
      %451 = vmatpush1.bf16.msra.mxu0 0
      %452 = vmatprep.subr.bf16.mxu0 0
      %453 = vmatpush1.bf16.msra.mxu0 0
      %454 = vmatprep.mubr.bf16.mxu0 0
      %455 = vmatmul.mubr.bf16.gmra.mrb[0].mxu0 %v379
      %v456 = vpop.f32.mrb[0].mxu0
      %v457 = vadd.f32 %v375, %v456
      %v458 = vpop.f32.mrb[0].mxu0
      %v459 = vpop.f32.mrb[0].mxu0
      %v460 = vpop.f32.mrb[0].mxu0
      %461 = vdwg.mxu0
      %v462 = vmax.f32 %v416, 0.0
      %v463 = vmax.f32 %v418, 0.0
      %v464 = vmax.f32 %v457, 0.0
      %468 = vrot.lane.b32.xlu0 %v462, 127
      %v469 = vpop.permute.xlu0 %468
      %470 = vrot.lane.b32.xlu0 %v463, 127
      %v471 = vpop.permute.xlu0 %470
      %472 = vrot.lane.b32.xlu0 %v464, 127
      %v473 = vpop.permute.xlu0 %472
      %vm474 = vcmask 1039360
      %v475 = vsel %vm474, %v469, %v471
      %v476 = vsel %vm474, %v471, %v473
      %480 = vrot.lane.b32.xlu0 %v462, 31
      %v481 = vpop.permute.xlu0 %480
      %vm483 = vcmask 252928
      %v484 = vsel %vm483, %v473, %v481
      %v485 = vmax.f32 %v462, %v475
      %v486 = vmax.f32 %v463, %v476
      %v487 = vmax.f32 %v464, %v484
      %491 = vrot.lane.b32.xlu0 %v485, 110
      %v492 = vpop.permute.xlu0 %491
      %493 = vrot.lane.b32.xlu0 %v486, 110
      %v494 = vpop.permute.xlu0 %493
      %495 = vrot.lane.b32.xlu0 %v487, 110
      %v496 = vpop.permute.xlu0 %495
      %vm497 = vcmask 900096
      %v498 = vsel %vm497, %v492, %v494
      %v499 = vsel %vm497, %v494, %v496
      %503 = vrot.lane.b32.xlu0 %v485, 14
      %v504 = vpop.permute.xlu0 %503
      %vm506 = vcmask 113664
      %v507 = vsel %vm506, %v496, %v504
      %v508 = vmax.f32 %v485, %v498
      %v509 = vmax.f32 %v486, %v499
      %v510 = vmax.f32 %v487, %v507
      %v511 = vpack.c.bf16 %v508, %v508
      %v512 = vpack.c.bf16 %v509, %v509
      %v513 = vpack.c.bf16 %v510, %v510
      %v514 = vld [vmem:[%s3] sm:$0xf]
      %v515 = vld [vmem:[%s3 + $0x4] sm:$0xf]
      %v516 = vld [vmem:[%s3 + $0x8] sm:$0xf]
      %v517 = vld [vmem:[%s3 + $0xc] sm:$0xf]
      %v518 = vld [vmem:[%s3 + $0x10] sm:$0xf]
      %v519 = vld [vmem:[%s3 + $0x14] sm:$0xf]
      %v520 = vld [vmem:[%s3 + $0x18] sm:$0xf]
      %v521 = vld [vmem:[%s3 + $0x1c] sm:$0xf]
      %v522 = vld [vmem:[%s3 + $0x20] sm:$0xf]
      %v523 = vld [vmem:[%s3 + $0x24] sm:$0xf]
      %v524 = vld [vmem:[%s3 + $0x28] sm:$0xf]
      %v525 = vld [vmem:[%s3 + $0x2c] sm:$0xf]
      %v526 = vld [vmem:[%s3 + $0x30] sm:$0xf]
      %v527 = vld [vmem:[%s3 + $0x34] sm:$0xf]
      %v528 = vld [vmem:[%s3 + $0x38] sm:$0xf]
      %v529 = vld [vmem:[%s3 + $0x3c] sm:$0xf]
      %v530 = vld [vmem:[%s3 + $0x40] sm:$0xf]
      %v531 = vld [vmem:[%s3 + $0x44] sm:$0xf]
      %v532 = vld [vmem:[%s3 + $0x48] sm:$0xf]
      %v533 = vld [vmem:[%s3 + $0x4c] sm:$0xf]
      %v534 = vld [vmem:[%s3 + $0x50] sm:$0xf]
      %v535 = vld [vmem:[%s3 + $0x54] sm:$0xf]
      %v536 = vld [vmem:[%s3 + $0x58] sm:$0xf]
      %v537 = vld [vmem:[%s3 + $0x5c] sm:$0xf]
      %v538 = vld [vmem:[%s3 + $0x60] sm:$0xf]
      %v539 = vld [vmem:[%s3 + $0x64] sm:$0xf]
      %v540 = vld [vmem:[%s3 + $0x68] sm:$0xf]
      %v541 = vld [vmem:[%s3 + $0x6c] sm:$0xf]
      %v542 = vld [vmem:[%s3 + $0x70] sm:$0xf]
      %v543 = vld [vmem:[%s3 + $0x74] sm:$0xf]
      %v544 = vld [vmem:[%s3 + $0x78] sm:$0xf]
      %v545 = vld [vmem:[%s3 + $0x7c] sm:$0xf]
      %v546 = vld [vmem:[%s3 + $0x80] sm:$0xf]
      %v547 = vld [vmem:[%s3 + $0x84] sm:$0xf]
      %v548 = vld [vmem:[%s3 + $0x88] sm:$0xf]
      %v549 = vld [vmem:[%s3 + $0x8c] sm:$0xf]
      %v586 = vunpack.c.l.b16 %v514
      %v587 = vunpack.c.l.b16 %v515
      %v588 = vunpack.c.l.b16 %v516
      %v589 = vunpack.c.l.b16 %v517
      %v590 = vunpack.c.l.b16 %v518
      %v591 = vunpack.c.l.b16 %v519
      %v592 = vunpack.c.l.b16 %v520
      %v593 = vunpack.c.l.b16 %v521
      %v594 = vunpack.c.l.b16 %v522
      %v595 = vunpack.c.l.b16 %v523
      %v596 = vunpack.c.l.b16 %v524
      %v597 = vunpack.c.l.b16 %v525
      %v598 = vunpack.c.l.b16 %v526
      %v599 = vunpack.c.l.b16 %v527
      %v600 = vunpack.c.l.b16 %v528
      %v601 = vunpack.c.l.b16 %v529
      %v602 = vunpack.c.l.b16 %v530
      %v603 = vunpack.c.l.b16 %v531
      %v604 = vunpack.c.l.b16 %v532
      %v605 = vunpack.c.l.b16 %v533
      %v606 = vunpack.c.l.b16 %v534
      %v607 = vunpack.c.l.b16 %v535
      %v608 = vunpack.c.l.b16 %v536
      %v609 = vunpack.c.l.b16 %v537
      %v610 = vunpack.c.l.b16 %v538
      %v611 = vunpack.c.l.b16 %v539
      %v612 = vunpack.c.l.b16 %v540
      %v613 = vunpack.c.l.b16 %v541
      %v614 = vunpack.c.l.b16 %v542
      %v615 = vunpack.c.l.b16 %v543
      %v616 = vunpack.c.l.b16 %v544
      %v617 = vunpack.c.l.b16 %v545
      %v618 = vunpack.c.l.b16 %v546
      %v619 = vunpack.c.l.b16 %v547
      %v620 = vunpack.c.l.b16 %v548
      %v621 = vunpack.c.l.b16 %v549
      %v622 = vpack.c.b16 %v587, %v586
      %v623 = vpack.c.b16 %v589, %v588
      %v624 = vpack.c.b16 %v591, %v590
      %v625 = vpack.c.b16 %v593, %v592
      %v626 = vpack.c.b16 %v595, %v594
      %v627 = vpack.c.b16 %v597, %v596
      %v628 = vpack.c.b16 %v599, %v598
      %v629 = vpack.c.b16 %v601, %v600
      %v630 = vpack.c.b16 %v603, %v602
      %v631 = vpack.c.b16 %v605, %v604
      %v632 = vpack.c.b16 %v607, %v606
      %v633 = vpack.c.b16 %v609, %v608
      %v634 = vpack.c.b16 %v611, %v610
      %v635 = vpack.c.b16 %v613, %v612
      %v636 = vpack.c.b16 %v615, %v614
      %v637 = vpack.c.b16 %v617, %v616
      %v638 = vpack.c.b16 %v619, %v618
      %v639 = vpack.c.b16 %v621, %v620
      %vm658 = vcmask 261120
      %v660 = vsel %vm658, %v513, 0
      %662 = vmatprep.subr.bf16.mxu0 0
      %663 = vmatpush1.bf16.msra.mxu0 %v622
      %664 = vmatprep.subr.bf16.mxu0 0
      %665 = vmatpush1.bf16.msra.mxu0 %v623
      %666 = vmatprep.subr.bf16.mxu0 0
      %667 = vmatpush1.bf16.msra.mxu0 %v624
      %668 = vmatprep.subr.bf16.mxu0 0
      %669 = vmatpush1.bf16.msra.mxu0 %v625
      %670 = vmatprep.subr.bf16.mxu0 0
      %671 = vmatpush1.bf16.msra.mxu0 %v626
      %672 = vmatprep.subr.bf16.mxu0 0
      %673 = vmatpush1.bf16.msra.mxu0 %v627
      %674 = vmatprep.subr.bf16.mxu0 0
      %675 = vmatpush1.bf16.msra.mxu0 %v628
      %676 = vmatprep.subr.bf16.mxu0 0
      %677 = vmatpush1.bf16.msra.mxu0 %v629
      %678 = vmatprep.subr.bf16.mxu0 0
      %679 = vmatpush1.bf16.msra.mxu0 %v630
      %680 = vmatprep.subr.bf16.mxu0 0
      %681 = vmatpush1.bf16.msra.mxu0 %v631
      %682 = vmatprep.subr.bf16.mxu0 0
      %683 = vmatpush1.bf16.msra.mxu0 %v632
      %684 = vmatprep.subr.bf16.mxu0 0
      %685 = vmatpush1.bf16.msra.mxu0 %v633
      %686 = vmatprep.subr.bf16.mxu0 0
      %687 = vmatpush1.bf16.msra.mxu0 %v634
      %688 = vmatprep.subr.bf16.mxu0 0
      %689 = vmatpush1.bf16.msra.mxu0 %v635
      %690 = vmatprep.subr.bf16.mxu0 0
      %691 = vmatpush1.bf16.msra.mxu0 %v636
      %692 = vmatprep.subr.bf16.mxu0 0
      %693 = vmatpush1.bf16.msra.mxu0 %v637
      %694 = vmatprep.mubr.bf16.mxu0 %v512
      %695 = vmatmul.mubr.bf16.gmra.mrb[0].mxu0 %v511
      %v696 = vpop.f32.mrb[0].mxu0
      %v697 = vadd.f32 0.0, %v696
      %v698 = vpop.f32.mrb[0].mxu0
      %v699 = vpop.f32.mrb[0].mxu0
      %v700 = vpop.f32.mrb[0].mxu0
      %701 = vdwg.mxu0
      %702 = vmatprep.subr.bf16.mxu0 0
      %703 = vmatpush1.bf16.msra.mxu0 %v638
      %704 = vmatprep.subr.bf16.mxu0 0
      %705 = vmatpush1.bf16.msra.mxu0 %v639
      %706 = vmatprep.subr.bf16.mxu0 0
      %707 = vmatpush1.bf16.msra.mxu0 0
      %708 = vmatprep.subr.bf16.mxu0 0
      %709 = vmatpush1.bf16.msra.mxu0 0
      %710 = vmatprep.subr.bf16.mxu0 0
      %711 = vmatpush1.bf16.msra.mxu0 0
      %712 = vmatprep.subr.bf16.mxu0 0
      %713 = vmatpush1.bf16.msra.mxu0 0
      %714 = vmatprep.subr.bf16.mxu0 0
      %715 = vmatpush1.bf16.msra.mxu0 0
      %716 = vmatprep.subr.bf16.mxu0 0
      %717 = vmatpush1.bf16.msra.mxu0 0
      %718 = vmatprep.subr.bf16.mxu0 0
      %719 = vmatpush1.bf16.msra.mxu0 0
      %720 = vmatprep.subr.bf16.mxu0 0
      %721 = vmatpush1.bf16.msra.mxu0 0
      %722 = vmatprep.subr.bf16.mxu0 0
      %723 = vmatpush1.bf16.msra.mxu0 0
      %724 = vmatprep.subr.bf16.mxu0 0
      %725 = vmatpush1.bf16.msra.mxu0 0
      %726 = vmatprep.subr.bf16.mxu0 0
      %727 = vmatpush1.bf16.msra.mxu0 0
      %728 = vmatprep.subr.bf16.mxu0 0
      %729 = vmatpush1.bf16.msra.mxu0 0
      %730 = vmatprep.subr.bf16.mxu0 0
      %731 = vmatpush1.bf16.msra.mxu0 0
      %732 = vmatprep.subr.bf16.mxu0 0
      %733 = vmatpush1.bf16.msra.mxu0 0
      %734 = vmatprep.mubr.bf16.mxu0 0
      %735 = vmatmul.mubr.bf16.gmra.mrb[0].mxu0 %v660
      %v736 = vpop.f32.mrb[0].mxu0
      %v737 = vadd.f32 %v697, %v736
      %v738 = vpop.f32.mrb[0].mxu0
      %v739 = vpop.f32.mrb[0].mxu0
      %v740 = vpop.f32.mrb[0].mxu0
      %741 = vdwg.mxu0
      %v742 = vpack.c.bf16 %v737, %v737
      %vm743 = vcmask 519168
      %744 = vst.msk [vmem:[%s195] sm:$0xf] %vm743, %v742
      %p745 = scmp.lt.s32.totalorder %s15, 1
      %s746 = scalar_select %p745, %s15, 1
      %s747 = smul.addr %s746, 4
      %s748 = scalar_lea.vmem %s4, %s747
      // Predicated region
      $region37: #{stn_forward.6} parent=35 // pred_check
        %p749 = pneg %p122
      $region38: #{stn_forward.6} parent=35 // pred_check_branch
        %751 = sbr.rel (%p749) target = $region40
      $region39: #{stn_forward.6} parent=35 // pred_region
        _
      $region40: #{stn_forward.6} parent=35 // pred_fallthru
        _
    $region36: #{stn_forward.6} parent=5 // pred_fallthru
      _
    %p752 = scmp.le.s32.totalorder 2, %s10
    // Predicated region
    $region41: #{stn_forward.6} parent=5 // pred_check
      %p753 = pneg %p752
    $region42: #{stn_forward.6} parent=5 // pred_check_branch
      %755 = sbr.rel (%p753) target = $region44
    $region43: #{stn_forward.6} parent=5 // pred_region
      %s756 = ssub.s32 %s10, 2
      // Predicated region
      $region45: #{stn_forward.6} parent=43 // pred_check
        %p757 = pneg %p128
      $region46: #{stn_forward.6} parent=43 // pred_check_branch
        %759 = sbr.rel (%p757) target = $region48
      $region47: #{stn_forward.6} parent=43 // pred_region
        %p760 = scmp.lt.s32.totalorder %s16, 1
        %s761 = scalar_select %p760, %s16, 1
        %s762 = smul.addr %s761, 4
        %s763 = scalar_lea.vmem %s4, %s762
      $region48: #{stn_forward.6} parent=43 // pred_fallthru
        _
    $region44: #{stn_forward.6} parent=5 // pred_fallthru
      _
  $region6: #{stn_forward.6} parent=0 // loop_footer
    %s14 = sadd.s32 1, %s10
  $region7: #{stn_forward.6} parent=0 // loop_footer_branch
    %9 = sbr.rel target = $region3
  $region8: #{stn_forward.6} parent=0 // loop_exit
    _

// kernel: stn_forward.7
$region0: #{stn_forward.7}
  #allocation0 [shape = 'u32[]', space=smem, size = 0x4, offset = 0x4, fixed_abs, tag = 'smem constant byte address 0x4 - core index']
  #allocation1 [shape = 'u32[144,128]{1,0:T(1,128)}', space=vmem, size = 0x12000, scoped, tag = 'internal scratch']
  #allocation2 [shape = 'bf16[80,80]{1,0:T(16,128)(2,1)}', space=vmem, size = 0x5000, scoped, tag = 'scratch operand']
  %s0 = inlined_call_operand.vmem [shape: bf16[2,8,110], index: 0, kind: input, shape index: {}]
  %s1 = inlined_call_operand.vmem [shape: bf16[16,80], index: 1, kind: input, shape index: {}]
  %s2 = inlined_call_operand.vmem [shape: f32[16,1], index: 2, kind: input, shape index: {}]
  %s3 = inlined_call_operand.vmem [shape: bf16[80,16], index: 3, kind: input, shape index: {}]
  %s4 = inlined_call_operand.vmem [shape: bf16[2,16,16], index: 4, kind: output, shape index: {}]
  %s5 = sld [smem:[#allocation0]]
  $region49: #{stn_forward.7} parent=0
    _
  %s7 = ssub.s32 1, %s5
  %s8 = scalar_select 0, %s7, %s5
  loop: start=0, step=1, limit=4
  $region2: #{stn_forward.7} parent=0 // loop_pre_header
    _
  $region3: #{stn_forward.7} parent=0 // loop_header
    %s10 = sphi 0, %s14
    %p11 = scmp.ge.s32.totalorder %s10, 4
    %s20 = sphi 0, %s22
    %s23 = sphi 0, %s20
    %s24 = sphi 0, %s23
    %s40 = sphi 0, %s24
    %s44 = sphi 0, %s44
    %s46 = sphi 0, %s44
    %s47 = sphi 0, %s46
    %s61 = sphi 0, %s47
    %s65 = sphi 0, %s65
    %s67 = sphi 0, %s65
    %s68 = sphi 0, %s67
    %s82 = sphi 0, %s68
    %s86 = sphi 0, %s86
    %s88 = sphi 0, %s86
    %s89 = sphi 0, %s88
    %s103 = sphi 0, %s89
    %s109 = sphi 0, %s111
    %s112 = sphi 0, %s109
    %s113 = sphi 0, %s112
    %s129 = sphi 0, %s113
  $region4: #{stn_forward.7} parent=0 // loop_header_branch
    %13 = sbr.rel (%p11) target = $region8
  $region5: #{stn_forward.7} parent=0 // loop_body
    %s15 = ssub.s32 %s10, 1
    %s16 = ssub.s32 %s10, 2
    %s17 = sadd.s32 %s10, 1
    %s18 = ssub.s32 %s10, %s17
    %p19 = scmp.eq.s32.totalorder %s18, 0
    %s21 = sadd.s32 %s20, 1
    %s22 = scalar_select %p19, %s20, %s21
    %p25 = pneg %p19
    %p26 = scmp.eq.s32.totalorder %s10, 1
    %p27 = por %p25, %p26
    %p28 = scmp.ne.s32.totalorder %s20, %s23
    %p29 = scmp.eq.s32.totalorder %s10, 0
    %p30 = por %p28, %p29
    %p31 = scmp.ne.s32.totalorder %s20, %s23
    %p32 = scmp.eq.s32.totalorder %s15, 1
    %p33 = por %p31, %p32
    %p34 = scmp.ne.s32.totalorder %s23, %s24
    %p35 = scmp.eq.s32.totalorder %s15, 0
    %p36 = por %p34, %p35
    %p37 = scmp.ne.s32.totalorder %s23, %s24
    %p38 = scmp.eq.s32.totalorder %s16, 1
    %p39 = por %p37, %p38
    %p41 = scmp.ne.s32.totalorder %s24, %s40
    %p42 = scmp.eq.s32.totalorder %s16, 0
    %p43 = por %p41, %p42
    %s45 = sadd.s32 %s44, 1
    %p48 = scmp.eq.s32.totalorder %s10, 1
    %p49 = scmp.ne.s32.totalorder %s44, %s46
    %p50 = scmp.eq.s32.totalorder %s10, 0
    %p51 = por %p49, %p50
    %p52 = scmp.ne.s32.totalorder %s44, %s46
    %p53 = scmp.eq.s32.totalorder %s15, 1
    %p54 = por %p52, %p53
    %p55 = scmp.ne.s32.totalorder %s46, %s47
    %p56 = scmp.eq.s32.totalorder %s15, 0
    %p57 = por %p55, %p56
    %p58 = scmp.ne.s32.totalorder %s46, %s47
    %p59 = scmp.eq.s32.totalorder %s16, 1
    %p60 = por %p58, %p59
    %p62 = scmp.ne.s32.totalorder %s47, %s61
    %p63 = scmp.eq.s32.totalorder %s16, 0
    %p64 = por %p62, %p63
    %s66 = sadd.s32 %s65, 1
    %p69 = scmp.eq.s32.totalorder %s10, 1
    %p70 = scmp.ne.s32.totalorder %s65, %s67
    %p71 = scmp.eq.s32.totalorder %s10, 0
    %p72 = por %p70, %p71
    %p73 = scmp.ne.s32.totalorder %s65, %s67
    %p74 = scmp.eq.s32.totalorder %s15, 1
    %p75 = por %p73, %p74
    %p76 = scmp.ne.s32.totalorder %s67, %s68
    %p77 = scmp.eq.s32.totalorder %s15, 0
    %p78 = por %p76, %p77
    %p79 = scmp.ne.s32.totalorder %s67, %s68
    %p80 = scmp.eq.s32.totalorder %s16, 1
    %p81 = por %p79, %p80
    %p83 = scmp.ne.s32.totalorder %s68, %s82
    %p84 = scmp.eq.s32.totalorder %s16, 0
    %p85 = por %p83, %p84
    %s87 = sadd.s32 %s86, 1
    %p90 = scmp.eq.s32.totalorder %s10, 1
    %p91 = scmp.ne.s32.totalorder %s86, %s88
    %p92 = scmp.eq.s32.totalorder %s10, 0
    %p93 = por %p91, %p92
    %p94 = scmp.ne.s32.totalorder %s86, %s88
    %p95 = scmp.eq.s32.totalorder %s15, 1
    %p96 = por %p94, %p95
    %p97 = scmp.ne.s32.totalorder %s88, %s89
    %p98 = scmp.eq.s32.totalorder %s15, 0
    %p99 = por %p97, %p98
    %p100 = scmp.ne.s32.totalorder %s88, %s89
    %p101 = scmp.eq.s32.totalorder %s16, 1
    %p102 = por %p100, %p101
    %p104 = scmp.ne.s32.totalorder %s89, %s103
    %p105 = scmp.eq.s32.totalorder %s16, 0
    %p106 = por %p104, %p105
    %s107 = ssub.s32 %s10, %s17
    %p108 = scmp.eq.s32.totalorder %s107, 0
    %s110 = sadd.s32 %s109, 1
    %s111 = scalar_select %p108, %s109, %s110
    %p114 = pneg %p108
    %p115 = scmp.eq.s32.totalorder %s10, 1
    %p116 = por %p114, %p115
    %p117 = scmp.ne.s32.totalorder %s109, %s112
    %p118 = scmp.eq.s32.totalorder %s10, 0
    %p119 = por %p117, %p118
    %p120 = scmp.ne.s32.totalorder %s109, %s112
    %p121 = scmp.eq.s32.totalorder %s15, 1
    %p122 = por %p120, %p121
    %p123 = scmp.ne.s32.totalorder %s112, %s113
    %p124 = scmp.eq.s32.totalorder %s15, 0
    %p125 = por %p123, %p124
    %p126 = scmp.ne.s32.totalorder %s112, %s113
    %p127 = scmp.eq.s32.totalorder %s16, 1
    %p128 = por %p126, %p127
    %p130 = scmp.ne.s32.totalorder %s113, %s129
    %p131 = scmp.eq.s32.totalorder %s16, 0
    %p132 = por %p130, %p131
    %p133 = scmp.le.s32.totalorder 1, %s10
    %p134 = scmp.lt.s32.totalorder %s10, 3
    %p135 = pnand %p133, %p134
    %p136 = pneg %p135
    // Predicated region
    $region9: #{stn_forward.7} parent=5 // pred_check
      _
    $region10: #{stn_forward.7} parent=5 // pred_check_branch
      %138 = sbr.rel (%p135) target = $region12
    $region11: #{stn_forward.7} parent=5 // pred_region
      %s139 = ssub.s32 %s10, 1
      // Predicated region
      $region13: #{stn_forward.7} parent=11 // pred_check
        %p140 = pneg %p57
      $region14: #{stn_forward.7} parent=11 // pred_check_branch
        %142 = sbr.rel (%p140) target = $region16
      $region15: #{stn_forward.7} parent=11 // pred_region
        _
      $region16: #{stn_forward.7} parent=11 // pred_fallthru
        _
      // Predicated region
      $region17: #{stn_forward.7} parent=11 // pred_check
        %p143 = pneg %p78
      $region18: #{stn_forward.7} parent=11 // pred_check_branch
        %145 = sbr.rel (%p143) target = $region20
      $region19: #{stn_forward.7} parent=11 // pred_region
        _
      $region20: #{stn_forward.7} parent=11 // pred_fallthru
        _
      // Predicated region
      $region21: #{stn_forward.7} parent=11 // pred_check
        %p146 = pneg %p99
      $region22: #{stn_forward.7} parent=11 // pred_check_branch
        %148 = sbr.rel (%p146) target = $region24
      $region23: #{stn_forward.7} parent=11 // pred_region
        _
      $region24: #{stn_forward.7} parent=11 // pred_fallthru
        _
    $region12: #{stn_forward.7} parent=5 // pred_fallthru
      _
    %p149 = scmp.lt.s32.totalorder %s10, 2
    // Predicated region
    $region25: #{stn_forward.7} parent=5 // pred_check
      %p150 = pneg %p149
    $region26: #{stn_forward.7} parent=5 // pred_check_branch
      %152 = sbr.rel (%p150) target = $region28
    $region27: #{stn_forward.7} parent=5 // pred_region
      // Predicated region
      $region29: #{stn_forward.7} parent=27 // pred_check
        %p153 = pneg %p30
      $region30: #{stn_forward.7} parent=27 // pred_check_branch
        %155 = sbr.rel (%p153) target = $region32
      $region31: #{stn_forward.7} parent=27 // pred_region
        %p156 = scmp.lt.s32.totalorder %s10, 1
        %s157 = scalar_select %p156, %s10, 1
        %s158 = smul.addr %s157, 4
        %s159 = scalar_lea.vmem %s0, %s158
      $region32: #{stn_forward.7} parent=27 // pred_fallthru
        _
    $region28: #{stn_forward.7} parent=5 // pred_fallthru
      _
    %p160 = scmp.le.s32.totalorder 1, %s10
    %p161 = scmp.lt.s32.totalorder %s10, 3
    %p162 = pnand %p160, %p161
    %p163 = pneg %p162
    // Predicated region
    $region33: #{stn_forward.7} parent=5 // pred_check
      _
    $region34: #{stn_forward.7} parent=5 // pred_check_branch
      %165 = sbr.rel (%p162) target = $region36
    $region35: #{stn_forward.7} parent=5 // pred_region
      %s166 = ssub.s32 %s10, 1
      %p167 = scmp.lt.s32.totalorder %s15, 1
      %s168 = scalar_select %p167, %s15, 1
      %s169 = smul.addr %s168, 4
      %s170 = scalar_lea.vmem %s0, %s169
      %p171 = pneg %p36
      %p172 = pneg %p33
      %p173 = pneg %p57
      %p174 = pneg %p54
      %p175 = pneg %p78
      %p176 = pneg %p75
      %p177 = pneg %p99
      %p178 = pneg %p96
      %p179 = pneg %p125
      %p180 = pneg %p122
      %p181 = scmp.lt.s32.totalorder %s15, 1
      %s182 = scalar_select %p181, %s15, 1
      %s183 = smul.addr %s182, 2
      %s184 = smul.addr %s183, 4
      %s185 = scalar_lea.vmem %s4, %s184
      %p186 = scmp.lt.s32.totalorder %s15, 1
      %s187 = scalar_select %p186, %s15, 1
      %s188 = smul.addr %s187, 4
      %s189 = scalar_lea.vmem %s0, %s188
      %p190 = scmp.lt.s32.totalorder %s15, 1
      %s191 = scalar_select %p190, %s15, 1
      %s192 = smul.addr %s191, 2
      %s193 = smul.addr %s192, 4
      %s194 = scalar_lea.vmem %s4, %s193
      %v196 = vld [vmem:[%s189] sm:$0xf]
      %vm197 = vcmask 650240
      %198 = vst.msk [vmem:[#allocation2] sm:$0xf] %vm197, %v196
      %v200 = vunpack.c.l.b16 %v196
      %v201 = vpack.c.b16 %v200, %v200
      %202 = vrot.lane.b32.xlu0 %v201, 127
      %v203 = vpop.permute.xlu0 %202
      %vm205 = vcmask 654340
      %206 = vst.msk [vmem:[#allocation2] sm:$0xf0] %vm205, %v203
      %207 = vrot.lane.b32.xlu0 %v201, 126
      %v208 = vpop.permute.xlu0 %207
      %210 = vst.msk [vmem:[#allocation2 + $0x8] sm:$0xf] %vm197, %v208
      %211 = vrot.lane.b32.xlu0 %v201, 118
      %v212 = vpop.permute.xlu0 %211
      %214 = vst.msk [vmem:[#allocation2 + $0x8] sm:$0xf0] %vm205, %v212
      %215 = vrot.lane.b32.xlu0 %v201, 117
      %v216 = vpop.permute.xlu0 %215
      %218 = vst.msk [vmem:[#allocation2 + $0x10] sm:$0xf] %vm197, %v216
      %219 = vrot.lane.b32.xlu0 %v201, 116
      %v220 = vpop.permute.xlu0 %219
      %222 = vst.msk [vmem:[#allocation2 + $0x10] sm:$0xf0] %vm205, %v220
      %223 = vrot.lane.b32.xlu0 %v201, 108
      %v224 = vpop.permute.xlu0 %223
      %226 = vst.msk [vmem:[#allocation2 + $0x18] sm:$0xf] %vm197, %v224
      %227 = vrot.lane.b32.xlu0 %v201, 107
      %v228 = vpop.permute.xlu0 %227
      %230 = vst.msk [vmem:[#allocation2 + $0x18] sm:$0xf0] %vm205, %v228
      %231 = vrot.lane.b32.xlu0 %v201, 106
      %v232 = vpop.permute.xlu0 %231
      %234 = vst.msk [vmem:[#allocation2 + $0x20] sm:$0xf] %vm197, %v232
      %235 = vst.msk [vmem:[#allocation2 + $0x20] sm:$0xf0] %vm205, 0
      %v236 = vld [vmem:[%s1] sm:$0xf]
      %v237 = vld [vmem:[%s1 + $0x4] sm:$0xf]
      %v238 = vld [vmem:[#allocation2] sm:$0xff]
      %v239 = vld [vmem:[#allocation2 + $0x8] sm:$0xff]
      %v240 = vld [vmem:[#allocation2 + $0x10] sm:$0xff]
      %v241 = vld [vmem:[#allocation2 + $0x18] sm:$0xff]
      %v242 = vld [vmem:[#allocation2 + $0x20] sm:$0xff]
      %v243 = vld [vmem:[%s2] sm:$0xff]
      %v244 = vld [vmem:[%s2 + $0x8] sm:$0xff]
      %246 = vset.pattern.permute.xlu0 0
      %247 = vperm.xlu0 %246, %v243
      %v248 = vpop.permute.xlu0 %247
      %251 = vset.pattern.permute.xlu0 0
      %252 = vperm.xlu0 %251, %v244
      %v253 = vpop.permute.xlu0 %252
      %v257 = vunpack.c.l.b16 %v236
      %v258 = vunpack.c.l.b16 %v237
      %v259 = vpack.c.b16 %v258, %v257
      %vm260 = vcmask 654336
      %v262 = vsel %vm260, %v259, 0
      %264 = vmatprep.subr.bf16.mxu0 0
      %265 = vmatpush1.bf16.msra.mxu0 %v238
      %266 = vmatprep.subr.bf16.mxu0 0
      %267 = vmatpush1.bf16.msra.mxu0 %v239
      %268 = vmatprep.subr.bf16.mxu0 0
      %269 = vmatpush1.bf16.msra.mxu0 %v240
      %270 = vmatprep.subr.bf16.mxu0 0
      %271 = vmatpush1.bf16.msra.mxu0 %v241
      %272 = vmatprep.subr.bf16.mxu0 0
      %273 = vmatpush1.bf16.msra.mxu0 %v242
      %274 = vmatprep.subr.bf16.mxu0 0
      %275 = vmatpush1.bf16.msra.mxu0 0
      %276 = vmatprep.subr.bf16.mxu0 0
      %277 = vmatpush1.bf16.msra.mxu0 0
      %278 = vmatprep.subr.bf16.mxu0 0
      %279 = vmatpush1.bf16.msra.mxu0 0
      %280 = vmatprep.subr.bf16.mxu0 0
      %281 = vmatpush1.bf16.msra.mxu0 0
      %282 = vmatprep.subr.bf16.mxu0 0
      %283 = vmatpush1.bf16.msra.mxu0 0
      %284 = vmatprep.subr.bf16.mxu0 0
      %285 = vmatpush1.bf16.msra.mxu0 0
      %286 = vmatprep.subr.bf16.mxu0 0
      %287 = vmatpush1.bf16.msra.mxu0 0
      %288 = vmatprep.subr.bf16.mxu0 0
      %289 = vmatpush1.bf16.msra.mxu0 0
      %290 = vmatprep.subr.bf16.mxu0 0
      %291 = vmatpush1.bf16.msra.mxu0 0
      %292 = vmatprep.subr.bf16.mxu0 0
      %293 = vmatpush1.bf16.msra.mxu0 0
      %294 = vmatprep.subr.bf16.mxu0 0
      %295 = vmatpush1.bf16.msra.mxu0 0
      %296 = vmatprep.mubr.bf16.mxu0 0
      %297 = vmatmul.mubr.bf16.gmra.mrb[0].mxu0 %v262
      %v298 = vpop.f32.mrb[0].mxu0
      %v299 = vadd.f32 %v248, %v298
      %v300 = vpop.f32.mrb[0].mxu0
      %v301 = vpop.f32.mrb[0].mxu0
      %v302 = vadd.f32 %v253, %v301
      %v303 = vpop.f32.mrb[0].mxu0
      %304 = vdwg.mxu0
      %v305 = vmax.f32 %v299, 0.0
      %v306 = vmax.f32 %v302, 0.0
      %309 = vrot.lane.b32.xlu0 %v305, 127
      %v310 = vpop.permute.xlu0 %309
      %311 = vrot.lane.b32.xlu0 %v306, 127
      %v312 = vpop.permute.xlu0 %311
      %315 = vrot.lane.b32.xlu0 %v305, 79
      %v316 = vpop.permute.xlu0 %315
      %317 = vrot.lane.b32.xlu0 %v306, 79
      %v318 = vpop.permute.xlu0 %317
      %vm321 = vcmask 646144
      %v322 = vsel %vm321, %v310, %v316
      %v323 = vsel %vm321, %v312, %v318
      %v324 = vmax.f32 %v305, %v322
      %v325 = vmax.f32 %v306, %v323
      %328 = vrot.lane.b32.xlu0 %v324, 118
      %v329 = vpop.permute.xlu0 %328
      %330 = vrot.lane.b32.xlu0 %v325, 118
      %v331 = vpop.permute.xlu0 %330
      %334 = vrot.lane.b32.xlu0 %v324, 70
      %v335 = vpop.permute.xlu0 %334
      %336 = vrot.lane.b32.xlu0 %v325, 70
      %v337 = vpop.permute.xlu0 %336
      %vm340 = vcmask 572416
      %v341 = vsel %vm340, %v329, %v335
      %v342 = vsel %vm340, %v331, %v337
      %v343 = vmax.f32 %v324, %v341
      %v344 = vmax.f32 %v325, %v342
      %v345 = vpack.c.bf16 %v344, %v343
      %v346 = vld [vmem:[%s3] sm:$0xf]
      %v347 = vld [vmem:[%s3 + $0x4] sm:$0xf]
      %v348 = vld [vmem:[%s3 + $0x8] sm:$0xf]
      %v349 = vld [vmem:[%s3 + $0xc] sm:$0xf]
      %v350 = vld [vmem:[%s3 + $0x10] sm:$0xf]
      %v351 = vld [vmem:[%s3 + $0x14] sm:$0xf]
      %v352 = vld [vmem:[%s3 + $0x18] sm:$0xf]
      %v353 = vld [vmem:[%s3 + $0x1c] sm:$0xf]
      %v354 = vld [vmem:[%s3 + $0x20] sm:$0xf]
      %v355 = vld [vmem:[%s3 + $0x24] sm:$0xf]
      %v366 = vunpack.c.l.b16 %v346
      %v367 = vunpack.c.l.b16 %v347
      %v368 = vunpack.c.l.b16 %v348
      %v369 = vunpack.c.l.b16 %v349
      %v370 = vunpack.c.l.b16 %v350
      %v371 = vunpack.c.l.b16 %v351
      %v372 = vunpack.c.l.b16 %v352
      %v373 = vunpack.c.l.b16 %v353
      %v374 = vunpack.c.l.b16 %v354
      %v375 = vunpack.c.l.b16 %v355
      %v376 = vpack.c.b16 %v367, %v366
      %v377 = vpack.c.b16 %v369, %v368
      %v378 = vpack.c.b16 %v371, %v370
      %v379 = vpack.c.b16 %v373, %v372
      %v380 = vpack.c.b16 %v375, %v374
      %v387 = vsel %vm260, %v345, 0
      %389 = vmatprep.subr.bf16.mxu0 0
      %390 = vmatpush1.bf16.msra.mxu0 %v376
      %391 = vmatprep.subr.bf16.mxu0 0
      %392 = vmatpush1.bf16.msra.mxu0 %v377
      %393 = vmatprep.subr.bf16.mxu0 0
      %394 = vmatpush1.bf16.msra.mxu0 %v378
      %395 = vmatprep.subr.bf16.mxu0 0
      %396 = vmatpush1.bf16.msra.mxu0 %v379
      %397 = vmatprep.subr.bf16.mxu0 0
      %398 = vmatpush1.bf16.msra.mxu0 %v380
      %399 = vmatprep.subr.bf16.mxu0 0
      %400 = vmatpush1.bf16.msra.mxu0 0
      %401 = vmatprep.subr.bf16.mxu0 0
      %402 = vmatpush1.bf16.msra.mxu0 0
      %403 = vmatprep.subr.bf16.mxu0 0
      %404 = vmatpush1.bf16.msra.mxu0 0
      %405 = vmatprep.subr.bf16.mxu0 0
      %406 = vmatpush1.bf16.msra.mxu0 0
      %407 = vmatprep.subr.bf16.mxu0 0
      %408 = vmatpush1.bf16.msra.mxu0 0
      %409 = vmatprep.subr.bf16.mxu0 0
      %410 = vmatpush1.bf16.msra.mxu0 0
      %411 = vmatprep.subr.bf16.mxu0 0
      %412 = vmatpush1.bf16.msra.mxu0 0
      %413 = vmatprep.subr.bf16.mxu0 0
      %414 = vmatpush1.bf16.msra.mxu0 0
      %415 = vmatprep.subr.bf16.mxu0 0
      %416 = vmatpush1.bf16.msra.mxu0 0
      %417 = vmatprep.subr.bf16.mxu0 0
      %418 = vmatpush1.bf16.msra.mxu0 0
      %419 = vmatprep.subr.bf16.mxu0 0
      %420 = vmatpush1.bf16.msra.mxu0 0
      %421 = vmatprep.mubr.bf16.mxu0 0
      %422 = vmatmul.mubr.bf16.gmra.mrb[0].mxu0 %v387
      %v423 = vpop.f32.mrb[0].mxu0
      %v424 = vadd.f32 0.0, %v423
      %v425 = vpop.f32.mrb[0].mxu0
      %v426 = vpop.f32.mrb[0].mxu0
      %v427 = vadd.f32 0.0, %v426
      %v428 = vpop.f32.mrb[0].mxu0
      %429 = vdwg.mxu0
      %v430 = vpack.c.bf16 %v427, %v424
      %v432 = vunpack.c.l.b16 %v430
      %v433 = vunpack.c.h.b16 %v430
      %v434 = vpack.c.b16 %v432, %v432
      %v435 = vpack.c.b16 %v433, %v433
      %vm438 = vcmask 125952
      %439 = vst.msk [vmem:[%s194] sm:$0xf] %vm438, %v434
      %440 = vst.msk [vmem:[%s194 + $0x4] sm:$0xf] %vm438, %v435
      %p441 = scmp.lt.s32.totalorder %s15, 1
      %s442 = scalar_select %p441, %s15, 1
      %s443 = smul.addr %s442, 2
      %s444 = smul.addr %s443, 4
      %s445 = scalar_lea.vmem %s4, %s444
      // Predicated region
      $region37: #{stn_forward.7} parent=35 // pred_check
        %p446 = pneg %p122
      $region38: #{stn_forward.7} parent=35 // pred_check_branch
        %448 = sbr.rel (%p446) target = $region40
      $region39: #{stn_forward.7} parent=35 // pred_region
        _
      $region40: #{stn_forward.7} parent=35 // pred_fallthru
        _
    $region36: #{stn_forward.7} parent=5 // pred_fallthru
      _
    %p449 = scmp.le.s32.totalorder 2, %s10
    // Predicated region
    $region41: #{stn_forward.7} parent=5 // pred_check
      %p450 = pneg %p449
    $region42: #{stn_forward.7} parent=5 // pred_check_branch
      %452 = sbr.rel (%p450) target = $region44
    $region43: #{stn_forward.7} parent=5 // pred_region
      %s453 = ssub.s32 %s10, 2
      // Predicated region
      $region45: #{stn_forward.7} parent=43 // pred_check
        %p454 = pneg %p128
      $region46: #{stn_forward.7} parent=43 // pred_check_branch
        %456 = sbr.rel (%p454) target = $region48
      $region47: #{stn_forward.7} parent=43 // pred_region
        %p457 = scmp.lt.s32.totalorder %s16, 1
        %s458 = scalar_select %p457, %s16, 1
        %s459 = smul.addr %s458, 2
        %s460 = smul.addr %s459, 4
        %s461 = scalar_lea.vmem %s4, %s460
      $region48: #{stn_forward.7} parent=43 // pred_fallthru
        _
    $region44: #{stn_forward.7} parent=5 // pred_fallthru
      _
  $region6: #{stn_forward.7} parent=0 // loop_footer
    %s14 = sadd.s32 1, %s10
  $region7: #{stn_forward.7} parent=0 // loop_footer_branch
    %9 = sbr.rel target = $region3
  $region8: #{stn_forward.7} parent=0 // loop_exit
    _

// kernel: stn_forward.8
$region0: #{stn_forward.8}
  #allocation0 [shape = 'u32[]', space=smem, size = 0x4, offset = 0x4, fixed_abs, tag = 'smem constant byte address 0x4 - core index']
  #allocation1 [shape = 'u32[144,128]{1,0:T(1,128)}', space=vmem, size = 0x12000, scoped, tag = 'internal scratch']
  %s0 = inlined_call_operand.vmem [shape: f32[2,256], index: 0, kind: input, shape index: {}]
  %s1 = inlined_call_operand.vmem [shape: f32[256,32], index: 1, kind: input, shape index: {}]
  %s2 = inlined_call_operand.vmem [shape: f32[1,32], index: 2, kind: input, shape index: {}]
  %s3 = inlined_call_operand.vmem [shape: f32[32,6], index: 3, kind: input, shape index: {}]
  %s4 = inlined_call_operand.vmem [shape: f32[1,6], index: 4, kind: input, shape index: {}]
  %s5 = inlined_call_operand.vmem [shape: f32[2,6], index: 5, kind: output, shape index: {}]
  %s6 = sld [smem:[#allocation0]]
  $region30: #{stn_forward.8} parent=0
    _
  %s8 = ssub.s32 1, %s6
  %s9 = scalar_select 0, %s8, %s6
  // Predicated region
  $region2: #{stn_forward.8} parent=0 // pred_check
    _
  $region3: #{stn_forward.8} parent=0 // pred_check_branch
    %11 = sbr.rel (0) target = $region5
  $region4: #{stn_forward.8} parent=0 // pred_region
    _
  $region5: #{stn_forward.8} parent=0 // pred_fallthru
    _
  // Predicated region
  $region6: #{stn_forward.8} parent=0 // pred_check
    _
  $region7: #{stn_forward.8} parent=0 // pred_check_branch
    %13 = sbr.rel (0) target = $region9
  $region8: #{stn_forward.8} parent=0 // pred_region
    _
  $region9: #{stn_forward.8} parent=0 // pred_fallthru
    _
  // Predicated region
  $region10: #{stn_forward.8} parent=0 // pred_check
    _
  $region11: #{stn_forward.8} parent=0 // pred_check_branch
    %15 = sbr.rel (0) target = $region13
  $region12: #{stn_forward.8} parent=0 // pred_region
    _
  $region13: #{stn_forward.8} parent=0 // pred_fallthru
    _
  // Predicated region
  $region14: #{stn_forward.8} parent=0 // pred_check
    _
  $region15: #{stn_forward.8} parent=0 // pred_check_branch
    %17 = sbr.rel (0) target = $region17
  $region16: #{stn_forward.8} parent=0 // pred_region
    _
  $region17: #{stn_forward.8} parent=0 // pred_fallthru
    _
  // Predicated region
  $region18: #{stn_forward.8} parent=0 // pred_check
    _
  $region19: #{stn_forward.8} parent=0 // pred_check_branch
    %19 = sbr.rel (0) target = $region21
  $region20: #{stn_forward.8} parent=0 // pred_region
    _
  $region21: #{stn_forward.8} parent=0 // pred_fallthru
    _
  %v20 = vld [vmem:[%s0] sm:$0xf]
  %v21 = vld [vmem:[%s1] sm:$0xff]
  %v22 = vld [vmem:[%s1 + $0x8] sm:$0xff]
  %v23 = vld [vmem:[%s1 + $0x10] sm:$0xff]
  %v24 = vld [vmem:[%s1 + $0x18] sm:$0xff]
  %v25 = vld [vmem:[%s1 + $0x20] sm:$0xff]
  %v26 = vld [vmem:[%s1 + $0x28] sm:$0xff]
  %v27 = vld [vmem:[%s1 + $0x30] sm:$0xff]
  %v28 = vld [vmem:[%s1 + $0x38] sm:$0xff]
  %v29 = vld [vmem:[%s1 + $0x40] sm:$0xff]
  %v30 = vld [vmem:[%s1 + $0x48] sm:$0xff]
  %v31 = vld [vmem:[%s1 + $0x50] sm:$0xff]
  %v32 = vld [vmem:[%s1 + $0x58] sm:$0xff]
  %v33 = vld [vmem:[%s1 + $0x60] sm:$0xff]
  %v34 = vld [vmem:[%s1 + $0x68] sm:$0xff]
  %v35 = vld [vmem:[%s1 + $0x70] sm:$0xff]
  %v36 = vld [vmem:[%s1 + $0x78] sm:$0xff]
  %v37 = vld [vmem:[%s1 + $0x80] sm:$0xff]
  %v38 = vld [vmem:[%s1 + $0x88] sm:$0xff]
  %v39 = vld [vmem:[%s1 + $0x90] sm:$0xff]
  %v40 = vld [vmem:[%s1 + $0x98] sm:$0xff]
  %v41 = vld [vmem:[%s1 + $0xa0] sm:$0xff]
  %v42 = vld [vmem:[%s1 + $0xa8] sm:$0xff]
  %v43 = vld [vmem:[%s1 + $0xb0] sm:$0xff]
  %v44 = vld [vmem:[%s1 + $0xb8] sm:$0xff]
  %v45 = vld [vmem:[%s1 + $0xc0] sm:$0xff]
  %v46 = vld [vmem:[%s1 + $0xc8] sm:$0xff]
  %v47 = vld [vmem:[%s1 + $0xd0] sm:$0xff]
  %v48 = vld [vmem:[%s1 + $0xd8] sm:$0xff]
  %v49 = vld [vmem:[%s1 + $0xe0] sm:$0xff]
  %v50 = vld [vmem:[%s1 + $0xe8] sm:$0xff]
  %v51 = vld [vmem:[%s1 + $0xf0] sm:$0xff]
  %v52 = vld [vmem:[%s1 + $0xf8] sm:$0xff]
  %v53 = vld [vmem:[%s2] sm:$0x1]
  %v55 = vlaneseq
  %v56 = vshrl.u32 %v55, 7
  %v57 = vsub.s32 0, %v56
  %v58 = vrot.slane %v53, %v57
  %v62 = vunpack.c.l.s4 1983009808
  %v63 = vunpack.c.0.s8 %v62
  %v64 = vlaneseq
  %v65 = vshrl.u32 %v64, 7
  %v66 = vsub.s32 %v63, %v65
  %v67 = vrot.slane %v20, %v66
  %v68 = vcombine.high %v67, %v67
  %71 = vmatprep.subr.mxu0 0.0
  %72 = vmatpush1.msra.mxu0 %v21
  %73 = vmatprep.subr.mxu0 0.0
  %74 = vmatpush1.msra.mxu0 %v22
  %75 = vmatprep.subr.mxu0 0.0
  %76 = vmatpush1.msra.mxu0 %v23
  %77 = vmatprep.subr.mxu0 0.0
  %78 = vmatpush1.msra.mxu0 %v24
  %79 = vmatprep.subr.mxu0 0.0
  %80 = vmatpush1.msra.mxu0 %v25
  %81 = vmatprep.subr.mxu0 0.0
  %82 = vmatpush1.msra.mxu0 %v26
  %83 = vmatprep.subr.mxu0 0.0
  %84 = vmatpush1.msra.mxu0 %v27
  %85 = vmatprep.subr.mxu0 0.0
  %86 = vmatpush1.msra.mxu0 %v28
  %87 = vmatprep.subr.mxu0 0.0
  %88 = vmatpush1.msra.mxu0 %v29
  %89 = vmatprep.subr.mxu0 0.0
  %90 = vmatpush1.msra.mxu0 %v30
  %91 = vmatprep.subr.mxu0 0.0
  %92 = vmatpush1.msra.mxu0 %v31
  %93 = vmatprep.subr.mxu0 0.0
  %94 = vmatpush1.msra.mxu0 %v32
  %95 = vmatprep.subr.mxu0 0.0
  %96 = vmatpush1.msra.mxu0 %v33
  %97 = vmatprep.subr.mxu0 0.0
  %98 = vmatpush1.msra.mxu0 %v34
  %99 = vmatprep.subr.mxu0 0.0
  %100 = vmatpush1.msra.mxu0 %v35
  %101 = vmatprep.subr.mxu0 0.0
  %102 = vmatpush1.msra.mxu0 %v36
  %103 = vmatprep.subr.mxu0 0.0
  %104 = vmatpush1.msra.mxu0 %v37
  %105 = vmatprep.subr.mxu0 0.0
  %106 = vmatpush1.msra.mxu0 %v38
  %107 = vmatprep.subr.mxu0 0.0
  %108 = vmatpush1.msra.mxu0 %v39
  %109 = vmatprep.subr.mxu0 0.0
  %110 = vmatpush1.msra.mxu0 %v40
  %111 = vmatprep.subr.mxu0 0.0
  %112 = vmatpush1.msra.mxu0 %v41
  %113 = vmatprep.subr.mxu0 0.0
  %114 = vmatpush1.msra.mxu0 %v42
  %115 = vmatprep.subr.mxu0 0.0
  %116 = vmatpush1.msra.mxu0 %v43
  %117 = vmatprep.subr.mxu0 0.0
  %118 = vmatpush1.msra.mxu0 %v44
  %119 = vmatprep.subr.mxu0 0.0
  %120 = vmatpush1.msra.mxu0 %v45
  %121 = vmatprep.subr.mxu0 0.0
  %122 = vmatpush1.msra.mxu0 %v46
  %123 = vmatprep.subr.mxu0 0.0
  %124 = vmatpush1.msra.mxu0 %v47
  %125 = vmatprep.subr.mxu0 0.0
  %126 = vmatpush1.msra.mxu0 %v48
  %127 = vmatprep.subr.mxu0 0.0
  %128 = vmatpush1.msra.mxu0 %v49
  %129 = vmatprep.subr.mxu0 0.0
  %130 = vmatpush1.msra.mxu0 %v50
  %131 = vmatprep.subr.mxu0 0.0
  %132 = vmatpush1.msra.mxu0 %v51
  %133 = vmatprep.subr.mxu0 0.0
  %134 = vmatpush1.msra.mxu0 %v52
  %135 = vmatprep.mubr.f32.mxu0 %v68
  %136 = vmatmul.mubr.f32.gmra.mrb[0].mxu0 %v67
  %v137 = vpop.f32.mrb[0].mxu0
  %v138 = vadd.f32 %v58, %v137
  %v139 = vpop.f32.mrb[0].mxu0
  %140 = vdwg.mxu0
  %v141 = vmax.f32 %v138, 0.0
  %v142 = vld [vmem:[%s3] sm:$0xff]
  %v143 = vld [vmem:[%s3 + $0x8] sm:$0xff]
  %v144 = vld [vmem:[%s3 + $0x10] sm:$0xff]
  %v145 = vld [vmem:[%s3 + $0x18] sm:$0xff]
  %v146 = vld [vmem:[%s4] sm:$0x1]
  %v148 = vlaneseq
  %v149 = vshrl.u32 %v148, 7
  %v150 = vsub.s32 0, %v149
  %v151 = vrot.slane %v146, %v150
  %vm153 = vcmask 261120
  %v155 = vsel %vm153, %v141, 0
  %157 = vmatprep.subr.mxu0 0.0
  %158 = vmatpush1.msra.mxu0 %v142
  %159 = vmatprep.subr.mxu0 0.0
  %160 = vmatpush1.msra.mxu0 %v143
  %161 = vmatprep.subr.mxu0 0.0
  %162 = vmatpush1.msra.mxu0 %v144
  %163 = vmatprep.subr.mxu0 0.0
  %164 = vmatpush1.msra.mxu0 %v145
  %165 = vmatprep.subr.mxu0 0.0
  %166 = vmatpush1.msra.mxu0 0.0
  %167 = vmatprep.subr.mxu0 0.0
  %168 = vmatpush1.msra.mxu0 0.0
  %169 = vmatprep.subr.mxu0 0.0
  %170 = vmatpush1.msra.mxu0 0.0
  %171 = vmatprep.subr.mxu0 0.0
  %172 = vmatpush1.msra.mxu0 0.0
  %173 = vmatprep.subr.mxu0 0.0
  %174 = vmatpush1.msra.mxu0 0.0
  %175 = vmatprep.subr.mxu0 0.0
  %176 = vmatpush1.msra.mxu0 0.0
  %177 = vmatprep.subr.mxu0 0.0
  %178 = vmatpush1.msra.mxu0 0.0
  %179 = vmatprep.subr.mxu0 0.0
  %180 = vmatpush1.msra.mxu0 0.0
  %181 = vmatprep.subr.mxu0 0.0
  %182 = vmatpush1.msra.mxu0 0.0
  %183 = vmatprep.subr.mxu0 0.0
  %184 = vmatpush1.msra.mxu0 0.0
  %185 = vmatprep.subr.mxu0 0.0
  %186 = vmatpush1.msra.mxu0 0.0
  %187 = vmatprep.subr.mxu0 0.0
  %188 = vmatpush1.msra.mxu0 0.0
  %189 = vmatprep.subr.mxu0 0.0
  %190 = vmatpush1.msra.mxu0 0.0
  %191 = vmatprep.subr.mxu0 0.0
  %192 = vmatpush1.msra.mxu0 0.0
  %193 = vmatprep.subr.mxu0 0.0
  %194 = vmatpush1.msra.mxu0 0.0
  %195 = vmatprep.subr.mxu0 0.0
  %196 = vmatpush1.msra.mxu0 0.0
  %197 = vmatprep.subr.mxu0 0.0
  %198 = vmatpush1.msra.mxu0 0.0
  %199 = vmatprep.subr.mxu0 0.0
  %200 = vmatpush1.msra.mxu0 0.0
  %201 = vmatprep.subr.mxu0 0.0
  %202 = vmatpush1.msra.mxu0 0.0
  %203 = vmatprep.subr.mxu0 0.0
  %204 = vmatpush1.msra.mxu0 0.0
  %205 = vmatprep.subr.mxu0 0.0
  %206 = vmatpush1.msra.mxu0 0.0
  %207 = vmatprep.subr.mxu0 0.0
  %208 = vmatpush1.msra.mxu0 0.0
  %209 = vmatprep.subr.mxu0 0.0
  %210 = vmatpush1.msra.mxu0 0.0
  %211 = vmatprep.subr.mxu0 0.0
  %212 = vmatpush1.msra.mxu0 0.0
  %213 = vmatprep.subr.mxu0 0.0
  %214 = vmatpush1.msra.mxu0 0.0
  %215 = vmatprep.subr.mxu0 0.0
  %216 = vmatpush1.msra.mxu0 0.0
  %217 = vmatprep.subr.mxu0 0.0
  %218 = vmatpush1.msra.mxu0 0.0
  %219 = vmatprep.subr.mxu0 0.0
  %220 = vmatpush1.msra.mxu0 0.0
  %221 = vmatprep.mubr.f32.mxu0 0.0
  %222 = vmatmul.mubr.f32.gmra.mrb[0].mxu0 %v155
  %v223 = vpop.f32.mrb[0].mxu0
  %v224 = vadd.f32 %v151, %v223
  %v225 = vpop.f32.mrb[0].mxu0
  %226 = vdwg.mxu0
  %vm227 = vcmask 41984
  %228 = vst.msk [vmem:[%s5] sm:$0x3] %vm227, %v224
  // Predicated region
  $region22: #{stn_forward.8} parent=0 // pred_check
    _
  $region23: #{stn_forward.8} parent=0 // pred_check_branch
    %230 = sbr.rel (0) target = $region25
  $region24: #{stn_forward.8} parent=0 // pred_region
    _
  $region25: #{stn_forward.8} parent=0 // pred_fallthru
    _
  // Predicated region
  $region26: #{stn_forward.8} parent=0 // pred_check
    _
  $region27: #{stn_forward.8} parent=0 // pred_check_branch
    %232 = sbr.rel (0) target = $region29
  $region28: #{stn_forward.8} parent=0 // pred_region
    _
  $region29: #{stn_forward.8} parent=0 // pred_fallthru
    _

// kernel: stn_forward.5
$region0: #{stn_forward.5}
  #allocation0 [shape = 'u32[]', space=smem, size = 0x4, offset = 0x4, fixed_abs, tag = 'smem constant byte address 0x4 - core index']
  #allocation1 [shape = 'u32[144,128]{1,0:T(1,128)}', space=vmem, size = 0x12000, scoped, tag = 'internal scratch']
  #allocation2 [shape = 'bf16[64,1152]{1,0:T(16,128)(2,1)}', space=vmem, size = 0x24000, scoped, tag = 'scratch operand']
  %s0 = inlined_call_operand.vmem [shape: bf16[2,2,1332], index: 0, kind: input, shape index: {}]
  %s1 = inlined_call_operand.vmem [shape: bf16[4,64], index: 1, kind: input, shape index: {}]
  %s2 = inlined_call_operand.vmem [shape: f32[4,1], index: 2, kind: input, shape index: {}]
  %s3 = inlined_call_operand.hbm [shape: bf16[1152,256], index: 3, kind: input, shape index: {}]
  %s4 = inlined_call_operand.vmem [shape: bf16[2,4,256], index: 4, kind: output, shape index: {}]
  %s5 = sld [smem:[#allocation0]]
  $region53: #{stn_forward.5} parent=0
    _
  %s7 = ssub.s32 1, %s5
  %s8 = scalar_select 0, %s7, %s5
  $region1: #{stn_forward.5} parent=0
    #allocation3 [shape = 'u8[589824]{0}', space=vmem, size = 0x90000, scoped, tag = 'input window, operand 3, single buffered']
    #allocation4 [shape = 's32[2]{0}', space=sflag, size = 0x8, scoped, tag = 'scoped memory for stn_forward.5']
    %9 = vsyncpa [#allocation4], 0
    loop: start=0, step=1, limit=4
    $region2: #{stn_forward.5} parent=1 // loop_pre_header
      _
    $region3: #{stn_forward.5} parent=1 // loop_header
      %s11 = sphi 0, %s15
      %p12 = scmp.ge.s32.totalorder %s11, 4
      %s21 = sphi 0, %s23
      %s24 = sphi 0, %s21
      %s25 = sphi 0, %s24
      %s41 = sphi 0, %s25
      %s45 = sphi 0, %s45
      %s47 = sphi 0, %s45
      %s48 = sphi 0, %s47
      %s62 = sphi 0, %s48
      %s66 = sphi 0, %s66
      %s68 = sphi 0, %s66
      %s69 = sphi 0, %s68
      %s83 = sphi 0, %s69
      %s87 = sphi 0, %s87
      %s89 = sphi 0, %s87
      %s90 = sphi 0, %s89
      %s104 = sphi 0, %s90
      %s110 = sphi 0, %s112
      %s113 = sphi 0, %s110
      %s114 = sphi 0, %s113
      %s130 = sphi 0, %s114
    $region4: #{stn_forward.5} parent=1 // loop_header_branch
      %14 = sbr.rel (%p12) target = $region8
    $region5: #{stn_forward.5} parent=1 // loop_body
      %s16 = ssub.s32 %s11, 1
      %s17 = ssub.s32 %s11, 2
      %s18 = sadd.s32 %s11, 1
      %s19 = ssub.s32 %s11, %s18
      %p20 = scmp.eq.s32.totalorder %s19, 0
      %s22 = sadd.s32 %s21, 1
      %s23 = scalar_select %p20, %s21, %s22
      %p26 = pneg %p20
      %p27 = scmp.eq.s32.totalorder %s11, 1
      %p28 = por %p26, %p27
      %p29 = scmp.ne.s32.totalorder %s21, %s24
      %p30 = scmp.eq.s32.totalorder %s11, 0
      %p31 = por %p29, %p30
      %p32 = scmp.ne.s32.totalorder %s21, %s24
      %p33 = scmp.eq.s32.totalorder %s16, 1
      %p34 = por %p32, %p33
      %p35 = scmp.ne.s32.totalorder %s24, %s25
      %p36 = scmp.eq.s32.totalorder %s16, 0
      %p37 = por %p35, %p36
      %p38 = scmp.ne.s32.totalorder %s24, %s25
      %p39 = scmp.eq.s32.totalorder %s17, 1
      %p40 = por %p38, %p39
      %p42 = scmp.ne.s32.totalorder %s25, %s41
      %p43 = scmp.eq.s32.totalorder %s17, 0
      %p44 = por %p42, %p43
      %s46 = sadd.s32 %s45, 1
      %p49 = scmp.eq.s32.totalorder %s11, 1
      %p50 = scmp.ne.s32.totalorder %s45, %s47
      %p51 = scmp.eq.s32.totalorder %s11, 0
      %p52 = por %p50, %p51
      %p53 = scmp.ne.s32.totalorder %s45, %s47
      %p54 = scmp.eq.s32.totalorder %s16, 1
      %p55 = por %p53, %p54
      %p56 = scmp.ne.s32.totalorder %s47, %s48
      %p57 = scmp.eq.s32.totalorder %s16, 0
      %p58 = por %p56, %p57
      %p59 = scmp.ne.s32.totalorder %s47, %s48
      %p60 = scmp.eq.s32.totalorder %s17, 1
      %p61 = por %p59, %p60
      %p63 = scmp.ne.s32.totalorder %s48, %s62
      %p64 = scmp.eq.s32.totalorder %s17, 0
      %p65 = por %p63, %p64
      %s67 = sadd.s32 %s66, 1
      %p70 = scmp.eq.s32.totalorder %s11, 1
      %p71 = scmp.ne.s32.totalorder %s66, %s68
      %p72 = scmp.eq.s32.totalorder %s11, 0
      %p73 = por %p71, %p72
      %p74 = scmp.ne.s32.totalorder %s66, %s68
      %p75 = scmp.eq.s32.totalorder %s16, 1
      %p76 = por %p74, %p75
      %p77 = scmp.ne.s32.totalorder %s68, %s69
      %p78 = scmp.eq.s32.totalorder %s16, 0
      %p79 = por %p77, %p78
      %p80 = scmp.ne.s32.totalorder %s68, %s69
      %p81 = scmp.eq.s32.totalorder %s17, 1
      %p82 = por %p80, %p81
      %p84 = scmp.ne.s32.totalorder %s69, %s83
      %p85 = scmp.eq.s32.totalorder %s17, 0
      %p86 = por %p84, %p85
      %s88 = sadd.s32 %s87, 1
      %p91 = scmp.eq.s32.totalorder %s11, 1
      %p92 = scmp.ne.s32.totalorder %s87, %s89
      %p93 = scmp.eq.s32.totalorder %s11, 0
      %p94 = por %p92, %p93
      %p95 = scmp.ne.s32.totalorder %s87, %s89
      %p96 = scmp.eq.s32.totalorder %s16, 1
      %p97 = por %p95, %p96
      %p98 = scmp.ne.s32.totalorder %s89, %s90
      %p99 = scmp.eq.s32.totalorder %s16, 0
      %p100 = por %p98, %p99
      %p101 = scmp.ne.s32.totalorder %s89, %s90
      %p102 = scmp.eq.s32.totalorder %s17, 1
      %p103 = por %p101, %p102
      %p105 = scmp.ne.s32.totalorder %s90, %s104
      %p106 = scmp.eq.s32.totalorder %s17, 0
      %p107 = por %p105, %p106
      %s108 = ssub.s32 %s11, %s18
      %p109 = scmp.eq.s32.totalorder %s108, 0
      %s111 = sadd.s32 %s110, 1
      %s112 = scalar_select %p109, %s110, %s111
      %p115 = pneg %p109
      %p116 = scmp.eq.s32.totalorder %s11, 1
      %p117 = por %p115, %p116
      %p118 = scmp.ne.s32.totalorder %s110, %s113
      %p119 = scmp.eq.s32.totalorder %s11, 0
      %p120 = por %p118, %p119
      %p121 = scmp.ne.s32.totalorder %s110, %s113
      %p122 = scmp.eq.s32.totalorder %s16, 1
      %p123 = por %p121, %p122
      %p124 = scmp.ne.s32.totalorder %s113, %s114
      %p125 = scmp.eq.s32.totalorder %s16, 0
      %p126 = por %p124, %p125
      %p127 = scmp.ne.s32.totalorder %s113, %s114
      %p128 = scmp.eq.s32.totalorder %s17, 1
      %p129 = por %p127, %p128
      %p131 = scmp.ne.s32.totalorder %s114, %s130
      %p132 = scmp.eq.s32.totalorder %s17, 0
      %p133 = por %p131, %p132
      %p134 = scmp.le.s32.totalorder 1, %s11
      %p135 = scmp.lt.s32.totalorder %s11, 3
      %p136 = pnand %p134, %p135
      %p137 = pneg %p136
      // Predicated region
      $region9: #{stn_forward.5} parent=5 // pred_check
        _
      $region10: #{stn_forward.5} parent=5 // pred_check_branch
        %139 = sbr.rel (%p136) target = $region12
      $region11: #{stn_forward.5} parent=5 // pred_region
        %s140 = ssub.s32 %s11, 1
        // Predicated region
        $region13: #{stn_forward.5} parent=11 // pred_check
          %p141 = pneg %p58
        $region14: #{stn_forward.5} parent=11 // pred_check_branch
          %143 = sbr.rel (%p141) target = $region16
        $region15: #{stn_forward.5} parent=11 // pred_region
          _
        $region16: #{stn_forward.5} parent=11 // pred_fallthru
          _
        // Predicated region
        $region17: #{stn_forward.5} parent=11 // pred_check
          %p144 = pneg %p79
        $region18: #{stn_forward.5} parent=11 // pred_check_branch
          %146 = sbr.rel (%p144) target = $region20
        $region19: #{stn_forward.5} parent=11 // pred_region
          _
        $region20: #{stn_forward.5} parent=11 // pred_fallthru
          _
        // Predicated region
        $region21: #{stn_forward.5} parent=11 // pred_check
          %p147 = pneg %p100
        $region22: #{stn_forward.5} parent=11 // pred_check_branch
          %149 = sbr.rel (%p147) target = $region24
        $region23: #{stn_forward.5} parent=11 // pred_region
          %s151 = ssub.s32 18432, 18432
          %152 = vsyncadd [#allocation4], %s151
          %s153 = sshll.u32 [#allocation3], 4
          %s154 = int_to_ptr.vmem [resolvable:$true] %s153
          %159 = dma.hbm_to_vmem [thread:$0]  %s3, 18432, %s154, [#allocation4], 128, 128, 8
        $region24: #{stn_forward.5} parent=11 // pred_fallthru
          _
      $region12: #{stn_forward.5} parent=5 // pred_fallthru
        _
      %p160 = scmp.lt.s32.totalorder %s11, 2
      // Predicated region
      $region25: #{stn_forward.5} parent=5 // pred_check
        %p161 = pneg %p160
      $region26: #{stn_forward.5} parent=5 // pred_check_branch
        %163 = sbr.rel (%p161) target = $region28
      $region27: #{stn_forward.5} parent=5 // pred_region
        // Predicated region
        $region29: #{stn_forward.5} parent=27 // pred_check
          %p164 = pneg %p31
        $region30: #{stn_forward.5} parent=27 // pred_check_branch
          %166 = sbr.rel (%p164) target = $region32
        $region31: #{stn_forward.5} parent=27 // pred_region
          %p167 = scmp.lt.s32.totalorder %s11, 1
          %s168 = scalar_select %p167, %s11, 1
          %s169 = smul.addr %s168, 11
          %s170 = scalar_lea.vmem %s0, %s169
        $region32: #{stn_forward.5} parent=27 // pred_fallthru
          _
      $region28: #{stn_forward.5} parent=5 // pred_fallthru
        _
      %p171 = scmp.le.s32.totalorder 1, %s11
      %p172 = scmp.lt.s32.totalorder %s11, 3
      %p173 = pnand %p171, %p172
      %p174 = pneg %p173
      // Predicated region
      $region33: #{stn_forward.5} parent=5 // pred_check
        _
      $region34: #{stn_forward.5} parent=5 // pred_check_branch
        %176 = sbr.rel (%p173) target = $region36
      $region35: #{stn_forward.5} parent=5 // pred_region
        %s177 = ssub.s32 %s11, 1
        // Predicated region
        $region37: #{stn_forward.5} parent=35 // pred_check
          %p178 = pneg %p100
        $region38: #{stn_forward.5} parent=35 // pred_check_branch
          %180 = sbr.rel (%p178) target = $region40
        $region39: #{stn_forward.5} parent=35 // pred_region
          %181 = dma.done [#allocation4], 18432
        $region40: #{stn_forward.5} parent=35 // pred_fallthru
          _
        %p182 = scmp.lt.s32.totalorder %s16, 1
        %s183 = scalar_select %p182, %s16, 1
        %s184 = smul.addr %s183, 11
        %s185 = scalar_lea.vmem %s0, %s184
        %p186 = pneg %p37
        %p187 = pneg %p34
        %p188 = pneg %p58
        %p189 = pneg %p55
        %p190 = pneg %p79
        %p191 = pneg %p76
        %p192 = pneg %p100
        %p193 = pneg %p97
        %p194 = pneg %p126
        %p195 = pneg %p123
        %p196 = scmp.lt.s32.totalorder %s16, 1
        %s197 = scalar_select %p196, %s16, 1
        %s198 = smul.addr %s197, 2
        %s199 = smul.addr %s198, 2
        %s200 = scalar_lea.vmem %s4, %s199
        %p201 = scmp.lt.s32.totalorder %s16, 1
        %s202 = scalar_select %p201, %s16, 1
        %s203 = smul.addr %s202, 11
        %s204 = scalar_lea.vmem %s0, %s203
        %p205 = scmp.lt.s32.totalorder %s16, 1
        %s206 = scalar_select %p205, %s16, 1
        %s207 = smul.addr %s206, 2
        %s208 = smul.addr %s207, 2
        %s209 = scalar_lea.vmem %s4, %s208
        %v211 = vld [vmem:[%s204] sm:$0xff]
        %v212 = vld [vmem:[%s204 + $0x8] sm:$0x7]
        %v215 = vcombine.high %v211, %v211
        %v217 = vunpack.c.l.s4 1966171168
        %v218 = vunpack.c.0.s8 %v217
        %v219 = vlaneseq
        %v220 = vshrl.u32 %v219, 7
        %v221 = vsub.s32 %v218, %v220
        %v222 = vrot.slane %v211, %v221
        %v224 = vunpack.c.l.s4 1966171168
        %v225 = vunpack.c.0.s8 %v224
        %v226 = vlaneseq
        %v227 = vshrl.u32 %v226, 7
        %v228 = vsub.s32 %v225, %v227
        %v229 = vrot.slane %v215, %v228
        %v230 = vcombine.high %v222, %v222
        %v231 = vcombine.high %v229, %v229
        %v233 = vunpack.c.l.s4 1966171168
        %v234 = vunpack.c.0.s8 %v233
        %v235 = vlaneseq
        %v236 = vshrl.u32 %v235, 7
        %v237 = vsub.s32 %v234, %v236
        %v238 = vrot.slane %v222, %v237
        %v240 = vunpack.c.l.s4 1966171168
        %v241 = vunpack.c.0.s8 %v240
        %v242 = vlaneseq
        %v243 = vshrl.u32 %v242, 7
        %v244 = vsub.s32 %v241, %v243
        %v245 = vrot.slane %v229, %v244
        %v247 = vunpack.c.l.s4 1966171168
        %v248 = vunpack.c.0.s8 %v247
        %v249 = vlaneseq
        %v250 = vshrl.u32 %v249, 7
        %v251 = vsub.s32 %v248, %v250
        %v252 = vrot.slane %v230, %v251
        %v254 = vunpack.c.l.s4 1966171168
        %v255 = vunpack.c.0.s8 %v254
        %v256 = vlaneseq
        %v257 = vshrl.u32 %v256, 7
        %v258 = vsub.s32 %v255, %v257
        %v259 = vrot.slane %v231, %v258
        %v260 = vcombine.high %v238, %v238
        %v261 = vcombine.high %v245, %v245
        %v262 = vcombine.high %v252, %v252
        %v263 = vcombine.high %v259, %v259
        %v265 = vunpack.c.l.s4 1966171168
        %v266 = vunpack.c.0.s8 %v265
        %v267 = vlaneseq
        %v268 = vshrl.u32 %v267, 7
        %v269 = vsub.s32 %v266, %v268
        %v270 = vrot.slane %v212, %v269
        %v272 = vunpack.c.l.s4 1966171168
        %v273 = vunpack.c.0.s8 %v272
        %v274 = vlaneseq
        %v275 = vshrl.u32 %v274, 7
        %v276 = vsub.s32 %v273, %v275
        %v277 = vrot.slane %v270, %v276
        %287 = vst [vmem:[#allocation2] sm:$0x1] %v238
        %288 = vst [vmem:[#allocation2 + $0x8] sm:$0x1] %v252
        %289 = vst [vmem:[#allocation2 + $0x10] sm:$0x1] %v260
        %290 = vst [vmem:[#allocation2 + $0x18] sm:$0x1] %v262
        %291 = vst [vmem:[#allocation2 + $0x20] sm:$0x1] %v245
        %292 = vst [vmem:[#allocation2 + $0x28] sm:$0x1] %v259
        %293 = vst [vmem:[#allocation2 + $0x30] sm:$0x1] %v261
        %294 = vst [vmem:[#allocation2 + $0x38] sm:$0x1] %v263
        %295 = vst [vmem:[#allocation2 + $0x40] sm:$0x1] %v277
        %v296 = vcombine.low %v211, %v211
        %v298 = vunpack.c.l.s4 1966171168
        %v299 = vunpack.c.0.s8 %v298
        %v300 = vlaneseq
        %v301 = vshrl.u32 %v300, 7
        %v302 = vsub.s32 %v299, %v301
        %v303 = vrot.slane %v296, %v302
        %v304 = vcombine.high %v303, %v303
        %v306 = vunpack.c.l.s4 1966171168
        %v307 = vunpack.c.0.s8 %v306
        %v308 = vlaneseq
        %v309 = vshrl.u32 %v308, 7
        %v310 = vsub.s32 %v307, %v309
        %v311 = vrot.slane %v303, %v310
        %v313 = vunpack.c.l.s4 1966171168
        %v314 = vunpack.c.0.s8 %v313
        %v315 = vlaneseq
        %v316 = vshrl.u32 %v315, 7
        %v317 = vsub.s32 %v314, %v316
        %v318 = vrot.slane %v304, %v317
        %v319 = vcombine.high %v311, %v311
        %v320 = vcombine.high %v318, %v318
        %v321 = vcombine.low %v212, %v212
        %v323 = vunpack.c.l.s4 1966171168
        %v324 = vunpack.c.0.s8 %v323
        %v325 = vlaneseq
        %v326 = vshrl.u32 %v325, 7
        %v327 = vsub.s32 %v324, %v326
        %v328 = vrot.slane %v321, %v327
        %v329 = vcombine.high %v328, %v328
        %v331 = vunpack.c.l.s4 1966171168
        %v332 = vunpack.c.0.s8 %v331
        %v333 = vlaneseq
        %v334 = vshrl.u32 %v333, 7
        %v335 = vsub.s32 %v332, %v334
        %v336 = vrot.slane %v328, %v335
        %v338 = vunpack.c.l.s4 1966171168
        %v339 = vunpack.c.0.s8 %v338
        %v340 = vlaneseq
        %v341 = vshrl.u32 %v340, 7
        %v342 = vsub.s32 %v339, %v341
        %v343 = vrot.slane %v329, %v342
        %344 = vrot.lane.b32.xlu0 %v311, 127
        %v345 = vpop.permute.xlu0 %344
        %346 = vrot.lane.b32.xlu0 %v318, 127
        %v347 = vpop.permute.xlu0 %346
        %348 = vrot.lane.b32.xlu0 %v319, 127
        %v349 = vpop.permute.xlu0 %348
        %350 = vrot.lane.b32.xlu0 %v320, 127
        %v351 = vpop.permute.xlu0 %350
        %352 = vrot.lane.b32.xlu0 %v238, 127
        %v353 = vpop.permute.xlu0 %352
        %354 = vrot.lane.b32.xlu0 %v252, 127
        %v355 = vpop.permute.xlu0 %354
        %356 = vrot.lane.b32.xlu0 %v260, 127
        %v357 = vpop.permute.xlu0 %356
        %358 = vrot.lane.b32.xlu0 %v262, 127
        %v359 = vpop.permute.xlu0 %358
        %360 = vrot.lane.b32.xlu0 %v336, 127
        %v361 = vpop.permute.xlu0 %360
        %362 = vrot.lane.b32.xlu0 %v343, 127
        %v363 = vpop.permute.xlu0 %362
        %vm364 = vcmask 1039360
        %v365 = vsel %vm364, %v345, %v347
        %v366 = vsel %vm364, %v347, %v349
        %v367 = vsel %vm364, %v349, %v351
        %v368 = vsel %vm364, %v351, %v353
        %v369 = vsel %vm364, %v353, %v355
        %v370 = vsel %vm364, %v355, %v357
        %v371 = vsel %vm364, %v357, %v359
        %v372 = vsel %vm364, %v359, %v361
        %v373 = vsel %vm364, %v361, %v363
        %383 = vst [vmem:[#allocation2] sm:$0x2] %v365
        %384 = vst [vmem:[#allocation2 + $0x8] sm:$0x2] %v366
        %385 = vst [vmem:[#allocation2 + $0x10] sm:$0x2] %v367
        %386 = vst [vmem:[#allocation2 + $0x18] sm:$0x2] %v368
        %387 = vst [vmem:[#allocation2 + $0x20] sm:$0x2] %v369
        %388 = vst [vmem:[#allocation2 + $0x28] sm:$0x2] %v370
        %389 = vst [vmem:[#allocation2 + $0x30] sm:$0x2] %v371
        %390 = vst [vmem:[#allocation2 + $0x38] sm:$0x2] %v372
        %391 = vst [vmem:[#allocation2 + $0x40] sm:$0x2] %v373
        %v392 = vcombine.low %v222, %v222
        %v393 = vcombine.low %v229, %v229
        %v395 = vunpack.c.l.s4 1966171168
        %v396 = vunpack.c.0.s8 %v395
        %v397 = vlaneseq
        %v398 = vshrl.u32 %v397, 7
        %v399 = vsub.s32 %v396, %v398
        %v400 = vrot.slane %v392, %v399
        %v402 = vunpack.c.l.s4 1966171168
        %v403 = vunpack.c.0.s8 %v402
        %v404 = vlaneseq
        %v405 = vshrl.u32 %v404, 7
        %v406 = vsub.s32 %v403, %v405
        %v407 = vrot.slane %v393, %v406
        %v408 = vcombine.high %v400, %v400
        %v409 = vcombine.high %v407, %v407
        %v410 = vcombine.low %v270, %v270
        %v412 = vunpack.c.l.s4 1966171168
        %v413 = vunpack.c.0.s8 %v412
        %v414 = vlaneseq
        %v415 = vshrl.u32 %v414, 7
        %v416 = vsub.s32 %v413, %v415
        %v417 = vrot.slane %v410, %v416
        %418 = vrot.lane.b32.xlu0 %v400, 126
        %v419 = vpop.permute.xlu0 %418
        %420 = vrot.lane.b32.xlu0 %v238, 126
        %v421 = vpop.permute.xlu0 %420
        %422 = vrot.lane.b32.xlu0 %v408, 126
        %v423 = vpop.permute.xlu0 %422
        %424 = vrot.lane.b32.xlu0 %v260, 126
        %v425 = vpop.permute.xlu0 %424
        %426 = vrot.lane.b32.xlu0 %v407, 126
        %v427 = vpop.permute.xlu0 %426
        %428 = vrot.lane.b32.xlu0 %v245, 126
        %v429 = vpop.permute.xlu0 %428
        %430 = vrot.lane.b32.xlu0 %v409, 126
        %v431 = vpop.permute.xlu0 %430
        %432 = vrot.lane.b32.xlu0 %v261, 126
        %v433 = vpop.permute.xlu0 %432
        %434 = vrot.lane.b32.xlu0 %v417, 126
        %v435 = vpop.permute.xlu0 %434
        %436 = vrot.lane.b32.xlu0 %v277, 126
        %v437 = vpop.permute.xlu0 %436
        %vm438 = vcmask 1031168
        %v439 = vsel %vm438, %v419, %v421
        %v440 = vsel %vm438, %v421, %v423
        %v441 = vsel %vm438, %v423, %v425
        %v442 = vsel %vm438, %v425, %v427
        %v443 = vsel %vm438, %v427, %v429
        %v444 = vsel %vm438, %v429, %v431
        %v445 = vsel %vm438, %v431, %v433
        %v446 = vsel %vm438, %v433, %v435
        %v447 = vsel %vm438, %v435, %v437
        %457 = vst [vmem:[#allocation2] sm:$0x4] %v439
        %458 = vst [vmem:[#allocation2 + $0x8] sm:$0x4] %v440
        %459 = vst [vmem:[#allocation2 + $0x10] sm:$0x4] %v441
        %460 = vst [vmem:[#allocation2 + $0x18] sm:$0x4] %v442
        %461 = vst [vmem:[#allocation2 + $0x20] sm:$0x4] %v443
        %462 = vst [vmem:[#allocation2 + $0x28] sm:$0x4] %v444
        %463 = vst [vmem:[#allocation2 + $0x30] sm:$0x4] %v445
        %464 = vst [vmem:[#allocation2 + $0x38] sm:$0x4] %v446
        %465 = vst [vmem:[#allocation2 + $0x40] sm:$0x4] %v447
        %v466 = vcombine.low %v303, %v303
        %v468 = vunpack.c.l.s4 1966171168
        %v469 = vunpack.c.0.s8 %v468
        %v470 = vlaneseq
        %v471 = vshrl.u32 %v470, 7
        %v472 = vsub.s32 %v469, %v471
        %v473 = vrot.slane %v466, %v472
        %v474 = vcombine.high %v473, %v473
        %v475 = vcombine.low %v328, %v328
        %v477 = vunpack.c.l.s4 1966171168
        %v478 = vunpack.c.0.s8 %v477
        %v479 = vlaneseq
        %v480 = vshrl.u32 %v479, 7
        %v481 = vsub.s32 %v478, %v480
        %v482 = vrot.slane %v475, %v481
        %483 = vrot.lane.b32.xlu0 %v473, 125
        %v484 = vpop.permute.xlu0 %483
        %485 = vrot.lane.b32.xlu0 %v311, 125
        %v486 = vpop.permute.xlu0 %485
        %487 = vrot.lane.b32.xlu0 %v474, 125
        %v488 = vpop.permute.xlu0 %487
        %489 = vrot.lane.b32.xlu0 %v319, 125
        %v490 = vpop.permute.xlu0 %489
        %491 = vrot.lane.b32.xlu0 %v400, 125
        %v492 = vpop.permute.xlu0 %491
        %493 = vrot.lane.b32.xlu0 %v238, 125
        %v494 = vpop.permute.xlu0 %493
        %495 = vrot.lane.b32.xlu0 %v408, 125
        %v496 = vpop.permute.xlu0 %495
        %497 = vrot.lane.b32.xlu0 %v260, 125
        %v498 = vpop.permute.xlu0 %497
        %499 = vrot.lane.b32.xlu0 %v482, 125
        %v500 = vpop.permute.xlu0 %499
        %501 = vrot.lane.b32.xlu0 %v336, 125
        %v502 = vpop.permute.xlu0 %501
        %vm503 = vcmask 1022976
        %v504 = vsel %vm503, %v484, %v486
        %v505 = vsel %vm503, %v486, %v488
        %v506 = vsel %vm503, %v488, %v490
        %v507 = vsel %vm503, %v490, %v492
        %v508 = vsel %vm503, %v492, %v494
        %v509 = vsel %vm503, %v494, %v496
        %v510 = vsel %vm503, %v496, %v498
        %v511 = vsel %vm503, %v498, %v500
        %v512 = vsel %vm503, %v500, %v502
        %522 = vst [vmem:[#allocation2] sm:$0x8] %v504
        %523 = vst [vmem:[#allocation2 + $0x8] sm:$0x8] %v505
        %524 = vst [vmem:[#allocation2 + $0x10] sm:$0x8] %v506
        %525 = vst [vmem:[#allocation2 + $0x18] sm:$0x8] %v507
        %526 = vst [vmem:[#allocation2 + $0x20] sm:$0x8] %v508
        %527 = vst [vmem:[#allocation2 + $0x28] sm:$0x8] %v509
        %528 = vst [vmem:[#allocation2 + $0x30] sm:$0x8] %v510
        %529 = vst [vmem:[#allocation2 + $0x38] sm:$0x8] %v511
        %530 = vst [vmem:[#allocation2 + $0x40] sm:$0x8] %v512
        %v531 = vcombine.low %v238, %v238
        %v532 = vcombine.low %v245, %v245
        %v533 = vcombine.low %v252, %v252
        %v534 = vcombine.low %v259, %v259
        %v535 = vcombine.high %v270, %v270
        %v537 = vunpack.c.l.s4 1966171168
        %v538 = vunpack.c.0.s8 %v537
        %v539 = vlaneseq
        %v540 = vshrl.u32 %v539, 7
        %v541 = vsub.s32 %v538, %v540
        %v542 = vrot.slane %v535, %v541
        %v543 = vcombine.low %v277, %v277
        %v544 = vcombine.low %v542, %v542
        %545 = vrot.lane.b32.xlu0 %v531, 124
        %v546 = vpop.permute.xlu0 %545
        %547 = vrot.lane.b32.xlu0 %v533, 124
        %v548 = vpop.permute.xlu0 %547
        %549 = vrot.lane.b32.xlu0 %v238, 124
        %v550 = vpop.permute.xlu0 %549
        %551 = vrot.lane.b32.xlu0 %v252, 124
        %v552 = vpop.permute.xlu0 %551
        %553 = vrot.lane.b32.xlu0 %v532, 124
        %v554 = vpop.permute.xlu0 %553
        %555 = vrot.lane.b32.xlu0 %v534, 124
        %v556 = vpop.permute.xlu0 %555
        %557 = vrot.lane.b32.xlu0 %v245, 124
        %v558 = vpop.permute.xlu0 %557
        %559 = vrot.lane.b32.xlu0 %v259, 124
        %v560 = vpop.permute.xlu0 %559
        %561 = vrot.lane.b32.xlu0 %v543, 124
        %v562 = vpop.permute.xlu0 %561
        %563 = vrot.lane.b32.xlu0 %v544, 124
        %v564 = vpop.permute.xlu0 %563
        %vm565 = vcmask 1014784
        %v566 = vsel %vm565, %v546, %v548
        %v567 = vsel %vm565, %v548, %v550
        %v568 = vsel %vm565, %v550, %v552
        %v569 = vsel %vm565, %v552, %v554
        %v570 = vsel %vm565, %v554, %v556
        %v571 = vsel %vm565, %v556, %v558
        %v572 = vsel %vm565, %v558, %v560
        %v573 = vsel %vm565, %v560, %v562
        %v574 = vsel %vm565, %v562, %v564
        %584 = vst [vmem:[#allocation2] sm:$0x10] %v566
        %585 = vst [vmem:[#allocation2 + $0x8] sm:$0x10] %v567
        %586 = vst [vmem:[#allocation2 + $0x10] sm:$0x10] %v568
        %587 = vst [vmem:[#allocation2 + $0x18] sm:$0x10] %v569
        %588 = vst [vmem:[#allocation2 + $0x20] sm:$0x10] %v570
        %589 = vst [vmem:[#allocation2 + $0x28] sm:$0x10] %v571
        %590 = vst [vmem:[#allocation2 + $0x30] sm:$0x10] %v572
        %591 = vst [vmem:[#allocation2 + $0x38] sm:$0x10] %v573
        %592 = vst [vmem:[#allocation2 + $0x40] sm:$0x10] %v574
        %v593 = vcombine.low %v311, %v311
        %v594 = vcombine.low %v318, %v318
        %v595 = vcombine.low %v336, %v336
        %v596 = vcombine.low %v343, %v343
        %597 = vrot.lane.b32.xlu0 %v593, 92
        %v598 = vpop.permute.xlu0 %597
        %599 = vrot.lane.b32.xlu0 %v594, 92
        %v600 = vpop.permute.xlu0 %599
        %601 = vrot.lane.b32.xlu0 %v311, 92
        %v602 = vpop.permute.xlu0 %601
        %603 = vrot.lane.b32.xlu0 %v318, 92
        %v604 = vpop.permute.xlu0 %603
        %605 = vrot.lane.b32.xlu0 %v531, 92
        %v606 = vpop.permute.xlu0 %605
        %607 = vrot.lane.b32.xlu0 %v533, 92
        %v608 = vpop.permute.xlu0 %607
        %609 = vrot.lane.b32.xlu0 %v238, 92
        %v610 = vpop.permute.xlu0 %609
        %611 = vrot.lane.b32.xlu0 %v252, 92
        %v612 = vpop.permute.xlu0 %611
        %613 = vrot.lane.b32.xlu0 %v595, 92
        %v614 = vpop.permute.xlu0 %613
        %615 = vrot.lane.b32.xlu0 %v596, 92
        %v616 = vpop.permute.xlu0 %615
        %vm617 = vcmask 752640
        %v618 = vsel %vm617, %v598, %v600
        %v619 = vsel %vm617, %v600, %v602
        %v620 = vsel %vm617, %v602, %v604
        %v621 = vsel %vm617, %v604, %v606
        %v622 = vsel %vm617, %v606, %v608
        %v623 = vsel %vm617, %v608, %v610
        %v624 = vsel %vm617, %v610, %v612
        %v625 = vsel %vm617, %v612, %v614
        %v626 = vsel %vm617, %v614, %v616
        %636 = vst [vmem:[#allocation2] sm:$0x20] %v618
        %637 = vst [vmem:[#allocation2 + $0x8] sm:$0x20] %v619
        %638 = vst [vmem:[#allocation2 + $0x10] sm:$0x20] %v620
        %639 = vst [vmem:[#allocation2 + $0x18] sm:$0x20] %v621
        %640 = vst [vmem:[#allocation2 + $0x20] sm:$0x20] %v622
        %641 = vst [vmem:[#allocation2 + $0x28] sm:$0x20] %v623
        %642 = vst [vmem:[#allocation2 + $0x30] sm:$0x20] %v624
        %643 = vst [vmem:[#allocation2 + $0x38] sm:$0x20] %v625
        %644 = vst [vmem:[#allocation2 + $0x40] sm:$0x20] %v626
        %v645 = vcombine.low %v400, %v400
        %v646 = vcombine.low %v407, %v407
        %v647 = vcombine.low %v417, %v417
        %648 = vrot.lane.b32.xlu0 %v645, 91
        %v649 = vpop.permute.xlu0 %648
        %650 = vrot.lane.b32.xlu0 %v531, 91
        %v651 = vpop.permute.xlu0 %650
        %652 = vrot.lane.b32.xlu0 %v400, 91
        %v653 = vpop.permute.xlu0 %652
        %654 = vrot.lane.b32.xlu0 %v238, 91
        %v655 = vpop.permute.xlu0 %654
        %656 = vrot.lane.b32.xlu0 %v646, 91
        %v657 = vpop.permute.xlu0 %656
        %658 = vrot.lane.b32.xlu0 %v532, 91
        %v659 = vpop.permute.xlu0 %658
        %660 = vrot.lane.b32.xlu0 %v407, 91
        %v661 = vpop.permute.xlu0 %660
        %662 = vrot.lane.b32.xlu0 %v245, 91
        %v663 = vpop.permute.xlu0 %662
        %664 = vrot.lane.b32.xlu0 %v647, 91
        %v665 = vpop.permute.xlu0 %664
        %666 = vrot.lane.b32.xlu0 %v543, 91
        %v667 = vpop.permute.xlu0 %666
        %vm668 = vcmask 744448
        %v669 = vsel %vm668, %v649, %v651
        %v670 = vsel %vm668, %v651, %v653
        %v671 = vsel %vm668, %v653, %v655
        %v672 = vsel %vm668, %v655, %v657
        %v673 = vsel %vm668, %v657, %v659
        %v674 = vsel %vm668, %v659, %v661
        %v675 = vsel %vm668, %v661, %v663
        %v676 = vsel %vm668, %v663, %v665
        %v677 = vsel %vm668, %v665, %v667
        %687 = vst [vmem:[#allocation2] sm:$0x40] %v669
        %688 = vst [vmem:[#allocation2 + $0x8] sm:$0x40] %v670
        %689 = vst [vmem:[#allocation2 + $0x10] sm:$0x40] %v671
        %690 = vst [vmem:[#allocation2 + $0x18] sm:$0x40] %v672
        %691 = vst [vmem:[#allocation2 + $0x20] sm:$0x40] %v673
        %692 = vst [vmem:[#allocation2 + $0x28] sm:$0x40] %v674
        %693 = vst [vmem:[#allocation2 + $0x30] sm:$0x40] %v675
        %694 = vst [vmem:[#allocation2 + $0x38] sm:$0x40] %v676
        %695 = vst [vmem:[#allocation2 + $0x40] sm:$0x40] %v677
        %v696 = vcombine.low %v473, %v473
        %v697 = vcombine.low %v482, %v482
        %698 = vrot.lane.b32.xlu0 %v696, 90
        %v699 = vpop.permute.xlu0 %698
        %700 = vrot.lane.b32.xlu0 %v593, 90
        %v701 = vpop.permute.xlu0 %700
        %702 = vrot.lane.b32.xlu0 %v473, 90
        %v703 = vpop.permute.xlu0 %702
        %704 = vrot.lane.b32.xlu0 %v311, 90
        %v705 = vpop.permute.xlu0 %704
        %706 = vrot.lane.b32.xlu0 %v645, 90
        %v707 = vpop.permute.xlu0 %706
        %708 = vrot.lane.b32.xlu0 %v531, 90
        %v709 = vpop.permute.xlu0 %708
        %710 = vrot.lane.b32.xlu0 %v400, 90
        %v711 = vpop.permute.xlu0 %710
        %712 = vrot.lane.b32.xlu0 %v238, 90
        %v713 = vpop.permute.xlu0 %712
        %714 = vrot.lane.b32.xlu0 %v697, 90
        %v715 = vpop.permute.xlu0 %714
        %716 = vrot.lane.b32.xlu0 %v595, 90
        %v717 = vpop.permute.xlu0 %716
        %vm718 = vcmask 736256
        %v719 = vsel %vm718, %v699, %v701
        %v720 = vsel %vm718, %v701, %v703
        %v721 = vsel %vm718, %v703, %v705
        %v722 = vsel %vm718, %v705, %v707
        %v723 = vsel %vm718, %v707, %v709
        %v724 = vsel %vm718, %v709, %v711
        %v725 = vsel %vm718, %v711, %v713
        %v726 = vsel %vm718, %v713, %v715
        %v727 = vsel %vm718, %v715, %v717
        %737 = vst [vmem:[#allocation2] sm:$0x80] %v719
        %738 = vst [vmem:[#allocation2 + $0x8] sm:$0x80] %v720
        %739 = vst [vmem:[#allocation2 + $0x10] sm:$0x80] %v721
        %740 = vst [vmem:[#allocation2 + $0x18] sm:$0x80] %v722
        %741 = vst [vmem:[#allocation2 + $0x20] sm:$0x80] %v723
        %742 = vst [vmem:[#allocation2 + $0x28] sm:$0x80] %v724
        %743 = vst [vmem:[#allocation2 + $0x30] sm:$0x80] %v725
        %744 = vst [vmem:[#allocation2 + $0x38] sm:$0x80] %v726
        %745 = vst [vmem:[#allocation2 + $0x40] sm:$0x80] %v727
        %746 = vrot.lane.b32.xlu0 %v238, 89
        %v747 = vpop.permute.xlu0 %746
        %748 = vrot.lane.b32.xlu0 %v252, 89
        %v749 = vpop.permute.xlu0 %748
        %750 = vrot.lane.b32.xlu0 %v260, 89
        %v751 = vpop.permute.xlu0 %750
        %752 = vrot.lane.b32.xlu0 %v262, 89
        %v753 = vpop.permute.xlu0 %752
        %754 = vrot.lane.b32.xlu0 %v245, 89
        %v755 = vpop.permute.xlu0 %754
        %756 = vrot.lane.b32.xlu0 %v259, 89
        %v757 = vpop.permute.xlu0 %756
        %758 = vrot.lane.b32.xlu0 %v261, 89
        %v759 = vpop.permute.xlu0 %758
        %760 = vrot.lane.b32.xlu0 %v263, 89
        %v761 = vpop.permute.xlu0 %760
        %762 = vrot.lane.b32.xlu0 %v277, 89
        %v763 = vpop.permute.xlu0 %762
        %764 = vrot.lane.b32.xlu0 %v542, 89
        %v765 = vpop.permute.xlu0 %764
        %vm766 = vcmask 728064
        %v767 = vsel %vm766, %v747, %v749
        %v768 = vsel %vm766, %v749, %v751
        %v769 = vsel %vm766, %v751, %v753
        %v770 = vsel %vm766, %v753, %v755
        %v771 = vsel %vm766, %v755, %v757
        %v772 = vsel %vm766, %v757, %v759
        %v773 = vsel %vm766, %v759, %v761
        %v774 = vsel %vm766, %v761, %v763
        %v775 = vsel %vm766, %v763, %v765
        %785 = vst [vmem:[#allocation2 + $0x48] sm:$0x1] %v767
        %786 = vst [vmem:[#allocation2 + $0x50] sm:$0x1] %v768
        %787 = vst [vmem:[#allocation2 + $0x58] sm:$0x1] %v769
        %788 = vst [vmem:[#allocation2 + $0x60] sm:$0x1] %v770
        %789 = vst [vmem:[#allocation2 + $0x68] sm:$0x1] %v771
        %790 = vst [vmem:[#allocation2 + $0x70] sm:$0x1] %v772
        %791 = vst [vmem:[#allocation2 + $0x78] sm:$0x1] %v773
        %792 = vst [vmem:[#allocation2 + $0x80] sm:$0x1] %v774
        %793 = vst [vmem:[#allocation2 + $0x88] sm:$0x1] %v775
        %794 = vrot.lane.b32.xlu0 %v311, 88
        %v795 = vpop.permute.xlu0 %794
        %796 = vrot.lane.b32.xlu0 %v318, 88
        %v797 = vpop.permute.xlu0 %796
        %798 = vrot.lane.b32.xlu0 %v319, 88
        %v799 = vpop.permute.xlu0 %798
        %800 = vrot.lane.b32.xlu0 %v320, 88
        %v801 = vpop.permute.xlu0 %800
        %802 = vrot.lane.b32.xlu0 %v238, 88
        %v803 = vpop.permute.xlu0 %802
        %804 = vrot.lane.b32.xlu0 %v252, 88
        %v805 = vpop.permute.xlu0 %804
        %806 = vrot.lane.b32.xlu0 %v260, 88
        %v807 = vpop.permute.xlu0 %806
        %808 = vrot.lane.b32.xlu0 %v262, 88
        %v809 = vpop.permute.xlu0 %808
        %810 = vrot.lane.b32.xlu0 %v336, 88
        %v811 = vpop.permute.xlu0 %810
        %812 = vrot.lane.b32.xlu0 %v343, 88
        %v813 = vpop.permute.xlu0 %812
        %vm814 = vcmask 719872
        %v815 = vsel %vm814, %v795, %v797
        %v816 = vsel %vm814, %v797, %v799
        %v817 = vsel %vm814, %v799, %v801
        %v818 = vsel %vm814, %v801, %v803
        %v819 = vsel %vm814, %v803, %v805
        %v820 = vsel %vm814, %v805, %v807
        %v821 = vsel %vm814, %v807, %v809
        %v822 = vsel %vm814, %v809, %v811
        %v823 = vsel %vm814, %v811, %v813
        %833 = vst [vmem:[#allocation2 + $0x48] sm:$0x2] %v815
        %834 = vst [vmem:[#allocation2 + $0x50] sm:$0x2] %v816
        %835 = vst [vmem:[#allocation2 + $0x58] sm:$0x2] %v817
        %836 = vst [vmem:[#allocation2 + $0x60] sm:$0x2] %v818
        %837 = vst [vmem:[#allocation2 + $0x68] sm:$0x2] %v819
        %838 = vst [vmem:[#allocation2 + $0x70] sm:$0x2] %v820
        %839 = vst [vmem:[#allocation2 + $0x78] sm:$0x2] %v821
        %840 = vst [vmem:[#allocation2 + $0x80] sm:$0x2] %v822
        %841 = vst [vmem:[#allocation2 + $0x88] sm:$0x2] %v823
        %842 = vrot.lane.b32.xlu0 %v400, 56
        %v843 = vpop.permute.xlu0 %842
        %844 = vrot.lane.b32.xlu0 %v238, 56
        %v845 = vpop.permute.xlu0 %844
        %846 = vrot.lane.b32.xlu0 %v408, 56
        %v847 = vpop.permute.xlu0 %846
        %848 = vrot.lane.b32.xlu0 %v260, 56
        %v849 = vpop.permute.xlu0 %848
        %850 = vrot.lane.b32.xlu0 %v407, 56
        %v851 = vpop.permute.xlu0 %850
        %852 = vrot.lane.b32.xlu0 %v245, 56
        %v853 = vpop.permute.xlu0 %852
        %854 = vrot.lane.b32.xlu0 %v409, 56
        %v855 = vpop.permute.xlu0 %854
        %856 = vrot.lane.b32.xlu0 %v261, 56
        %v857 = vpop.permute.xlu0 %856
        %858 = vrot.lane.b32.xlu0 %v417, 56
        %v859 = vpop.permute.xlu0 %858
        %860 = vrot.lane.b32.xlu0 %v277, 56
        %v861 = vpop.permute.xlu0 %860
        %vm862 = vcmask 457728
        %v863 = vsel %vm862, %v843, %v845
        %v864 = vsel %vm862, %v845, %v847
        %v865 = vsel %vm862, %v847, %v849
        %v866 = vsel %vm862, %v849, %v851
        %v867 = vsel %vm862, %v851, %v853
        %v868 = vsel %vm862, %v853, %v855
        %v869 = vsel %vm862, %v855, %v857
        %v870 = vsel %vm862, %v857, %v859
        %v871 = vsel %vm862, %v859, %v861
        %881 = vst [vmem:[#allocation2 + $0x48] sm:$0x4] %v863
        %882 = vst [vmem:[#allocation2 + $0x50] sm:$0x4] %v864
        %883 = vst [vmem:[#allocation2 + $0x58] sm:$0x4] %v865
        %884 = vst [vmem:[#allocation2 + $0x60] sm:$0x4] %v866
        %885 = vst [vmem:[#allocation2 + $0x68] sm:$0x4] %v867
        %886 = vst [vmem:[#allocation2 + $0x70] sm:$0x4] %v868
        %887 = vst [vmem:[#allocation2 + $0x78] sm:$0x4] %v869
        %888 = vst [vmem:[#allocation2 + $0x80] sm:$0x4] %v870
        %889 = vst [vmem:[#allocation2 + $0x88] sm:$0x4] %v871
        %890 = vrot.lane.b32.xlu0 %v473, 55
        %v891 = vpop.permute.xlu0 %890
        %892 = vrot.lane.b32.xlu0 %v311, 55
        %v893 = vpop.permute.xlu0 %892
        %894 = vrot.lane.b32.xlu0 %v474, 55
        %v895 = vpop.permute.xlu0 %894
        %896 = vrot.lane.b32.xlu0 %v319, 55
        %v897 = vpop.permute.xlu0 %896
        %898 = vrot.lane.b32.xlu0 %v400, 55
        %v899 = vpop.permute.xlu0 %898
        %900 = vrot.lane.b32.xlu0 %v238, 55
        %v901 = vpop.permute.xlu0 %900
        %902 = vrot.lane.b32.xlu0 %v408, 55
        %v903 = vpop.permute.xlu0 %902
        %904 = vrot.lane.b32.xlu0 %v260, 55
        %v905 = vpop.permute.xlu0 %904
        %906 = vrot.lane.b32.xlu0 %v482, 55
        %v907 = vpop.permute.xlu0 %906
        %908 = vrot.lane.b32.xlu0 %v336, 55
        %v909 = vpop.permute.xlu0 %908
        %vm910 = vcmask 449536
        %v911 = vsel %vm910, %v891, %v893
        %v912 = vsel %vm910, %v893, %v895
        %v913 = vsel %vm910, %v895, %v897
        %v914 = vsel %vm910, %v897, %v899
        %v915 = vsel %vm910, %v899, %v901
        %v916 = vsel %vm910, %v901, %v903
        %v917 = vsel %vm910, %v903, %v905
        %v918 = vsel %vm910, %v905, %v907
        %v919 = vsel %vm910, %v907, %v909
        %929 = vst [vmem:[#allocation2 + $0x48] sm:$0x8] %v911
        %930 = vst [vmem:[#allocation2 + $0x50] sm:$0x8] %v912
        %931 = vst [vmem:[#allocation2 + $0x58] sm:$0x8] %v913
        %932 = vst [vmem:[#allocation2 + $0x60] sm:$0x8] %v914
        %933 = vst [vmem:[#allocation2 + $0x68] sm:$0x8] %v915
        %934 = vst [vmem:[#allocation2 + $0x70] sm:$0x8] %v916
        %935 = vst [vmem:[#allocation2 + $0x78] sm:$0x8] %v917
        %936 = vst [vmem:[#allocation2 + $0x80] sm:$0x8] %v918
        %937 = vst [vmem:[#allocation2 + $0x88] sm:$0x8] %v919
        %938 = vrot.lane.b32.xlu0 %v531, 54
        %v939 = vpop.permute.xlu0 %938
        %940 = vrot.lane.b32.xlu0 %v533, 54
        %v941 = vpop.permute.xlu0 %940
        %942 = vrot.lane.b32.xlu0 %v238, 54
        %v943 = vpop.permute.xlu0 %942
        %944 = vrot.lane.b32.xlu0 %v252, 54
        %v945 = vpop.permute.xlu0 %944
        %946 = vrot.lane.b32.xlu0 %v532, 54
        %v947 = vpop.permute.xlu0 %946
        %948 = vrot.lane.b32.xlu0 %v534, 54
        %v949 = vpop.permute.xlu0 %948
        %950 = vrot.lane.b32.xlu0 %v245, 54
        %v951 = vpop.permute.xlu0 %950
        %952 = vrot.lane.b32.xlu0 %v259, 54
        %v953 = vpop.permute.xlu0 %952
        %954 = vrot.lane.b32.xlu0 %v543, 54
        %v955 = vpop.permute.xlu0 %954
        %956 = vrot.lane.b32.xlu0 %v544, 54
        %v957 = vpop.permute.xlu0 %956
        %vm958 = vcmask 441344
        %v959 = vsel %vm958, %v939, %v941
        %v960 = vsel %vm958, %v941, %v943
        %v961 = vsel %vm958, %v943, %v945
        %v962 = vsel %vm958, %v945, %v947
        %v963 = vsel %vm958, %v947, %v949
        %v964 = vsel %vm958, %v949, %v951
        %v965 = vsel %vm958, %v951, %v953
        %v966 = vsel %vm958, %v953, %v955
        %v967 = vsel %vm958, %v955, %v957
        %977 = vst [vmem:[#allocation2 + $0x48] sm:$0x10] %v959
        %978 = vst [vmem:[#allocation2 + $0x50] sm:$0x10] %v960
        %979 = vst [vmem:[#allocation2 + $0x58] sm:$0x10] %v961
        %980 = vst [vmem:[#allocation2 + $0x60] sm:$0x10] %v962
        %981 = vst [vmem:[#allocation2 + $0x68] sm:$0x10] %v963
        %982 = vst [vmem:[#allocation2 + $0x70] sm:$0x10] %v964
        %983 = vst [vmem:[#allocation2 + $0x78] sm:$0x10] %v965
        %984 = vst [vmem:[#allocation2 + $0x80] sm:$0x10] %v966
        %985 = vst [vmem:[#allocation2 + $0x88] sm:$0x10] %v967
        %986 = vrot.lane.b32.xlu0 %v593, 53
        %v987 = vpop.permute.xlu0 %986
        %988 = vrot.lane.b32.xlu0 %v594, 53
        %v989 = vpop.permute.xlu0 %988
        %990 = vrot.lane.b32.xlu0 %v311, 53
        %v991 = vpop.permute.xlu0 %990
        %992 = vrot.lane.b32.xlu0 %v318, 53
        %v993 = vpop.permute.xlu0 %992
        %994 = vrot.lane.b32.xlu0 %v531, 53
        %v995 = vpop.permute.xlu0 %994
        %996 = vrot.lane.b32.xlu0 %v533, 53
        %v997 = vpop.permute.xlu0 %996
        %998 = vrot.lane.b32.xlu0 %v238, 53
        %v999 = vpop.permute.xlu0 %998
        %1000 = vrot.lane.b32.xlu0 %v252, 53
        %v1001 = vpop.permute.xlu0 %1000
        %1002 = vrot.lane.b32.xlu0 %v595, 53
        %v1003 = vpop.permute.xlu0 %1002
        %1004 = vrot.lane.b32.xlu0 %v596, 53
        %v1005 = vpop.permute.xlu0 %1004
        %vm1006 = vcmask 433152
        %v1007 = vsel %vm1006, %v987, %v989
        %v1008 = vsel %vm1006, %v989, %v991
        %v1009 = vsel %vm1006, %v991, %v993
        %v1010 = vsel %vm1006, %v993, %v995
        %v1011 = vsel %vm1006, %v995, %v997
        %v1012 = vsel %vm1006, %v997, %v999
        %v1013 = vsel %vm1006, %v999, %v1001
        %v1014 = vsel %vm1006, %v1001, %v1003
        %v1015 = vsel %vm1006, %v1003, %v1005
        %1025 = vst [vmem:[#allocation2 + $0x48] sm:$0x20] %v1007
        %1026 = vst [vmem:[#allocation2 + $0x50] sm:$0x20] %v1008
        %1027 = vst [vmem:[#allocation2 + $0x58] sm:$0x20] %v1009
        %1028 = vst [vmem:[#allocation2 + $0x60] sm:$0x20] %v1010
        %1029 = vst [vmem:[#allocation2 + $0x68] sm:$0x20] %v1011
        %1030 = vst [vmem:[#allocation2 + $0x70] sm:$0x20] %v1012
        %1031 = vst [vmem:[#allocation2 + $0x78] sm:$0x20] %v1013
        %1032 = vst [vmem:[#allocation2 + $0x80] sm:$0x20] %v1014
        %1033 = vst [vmem:[#allocation2 + $0x88] sm:$0x20] %v1015
        %1034 = vrot.lane.b32.xlu0 %v645, 52
        %v1035 = vpop.permute.xlu0 %1034
        %1036 = vrot.lane.b32.xlu0 %v531, 52
        %v1037 = vpop.permute.xlu0 %1036
        %1038 = vrot.lane.b32.xlu0 %v400, 52
        %v1039 = vpop.permute.xlu0 %1038
        %1040 = vrot.lane.b32.xlu0 %v238, 52
        %v1041 = vpop.permute.xlu0 %1040
        %1042 = vrot.lane.b32.xlu0 %v646, 52
        %v1043 = vpop.permute.xlu0 %1042
        %1044 = vrot.lane.b32.xlu0 %v532, 52
        %v1045 = vpop.permute.xlu0 %1044
        %1046 = vrot.lane.b32.xlu0 %v407, 52
        %v1047 = vpop.permute.xlu0 %1046
        %1048 = vrot.lane.b32.xlu0 %v245, 52
        %v1049 = vpop.permute.xlu0 %1048
        %1050 = vrot.lane.b32.xlu0 %v647, 52
        %v1051 = vpop.permute.xlu0 %1050
        %1052 = vrot.lane.b32.xlu0 %v543, 52
        %v1053 = vpop.permute.xlu0 %1052
        %vm1054 = vcmask 424960
        %v1055 = vsel %vm1054, %v1035, %v1037
        %v1056 = vsel %vm1054, %v1037, %v1039
        %v1057 = vsel %vm1054, %v1039, %v1041
        %v1058 = vsel %vm1054, %v1041, %v1043
        %v1059 = vsel %vm1054, %v1043, %v1045
        %v1060 = vsel %vm1054, %v1045, %v1047
        %v1061 = vsel %vm1054, %v1047, %v1049
        %v1062 = vsel %vm1054, %v1049, %v1051
        %v1063 = vsel %vm1054, %v1051, %v1053
        %1073 = vst [vmem:[#allocation2 + $0x48] sm:$0x40] %v1055
        %1074 = vst [vmem:[#allocation2 + $0x50] sm:$0x40] %v1056
        %1075 = vst [vmem:[#allocation2 + $0x58] sm:$0x40] %v1057
        %1076 = vst [vmem:[#allocation2 + $0x60] sm:$0x40] %v1058
        %1077 = vst [vmem:[#allocation2 + $0x68] sm:$0x40] %v1059
        %1078 = vst [vmem:[#allocation2 + $0x70] sm:$0x40] %v1060
        %1079 = vst [vmem:[#allocation2 + $0x78] sm:$0x40] %v1061
        %1080 = vst [vmem:[#allocation2 + $0x80] sm:$0x40] %v1062
        %1081 = vst [vmem:[#allocation2 + $0x88] sm:$0x40] %v1063
        %1082 = vrot.lane.b32.xlu0 %v696, 20
        %v1083 = vpop.permute.xlu0 %1082
        %1084 = vrot.lane.b32.xlu0 %v593, 20
        %v1085 = vpop.permute.xlu0 %1084
        %1086 = vrot.lane.b32.xlu0 %v473, 20
        %v1087 = vpop.permute.xlu0 %1086
        %1088 = vrot.lane.b32.xlu0 %v311, 20
        %v1089 = vpop.permute.xlu0 %1088
        %1090 = vrot.lane.b32.xlu0 %v645, 20
        %v1091 = vpop.permute.xlu0 %1090
        %1092 = vrot.lane.b32.xlu0 %v531, 20
        %v1093 = vpop.permute.xlu0 %1092
        %1094 = vrot.lane.b32.xlu0 %v400, 20
        %v1095 = vpop.permute.xlu0 %1094
        %1096 = vrot.lane.b32.xlu0 %v238, 20
        %v1097 = vpop.permute.xlu0 %1096
        %1098 = vrot.lane.b32.xlu0 %v697, 20
        %v1099 = vpop.permute.xlu0 %1098
        %1100 = vrot.lane.b32.xlu0 %v595, 20
        %v1101 = vpop.permute.xlu0 %1100
        %vm1102 = vcmask 162816
        %v1103 = vsel %vm1102, %v1083, %v1085
        %v1104 = vsel %vm1102, %v1085, %v1087
        %v1105 = vsel %vm1102, %v1087, %v1089
        %v1106 = vsel %vm1102, %v1089, %v1091
        %v1107 = vsel %vm1102, %v1091, %v1093
        %v1108 = vsel %vm1102, %v1093, %v1095
        %v1109 = vsel %vm1102, %v1095, %v1097
        %v1110 = vsel %vm1102, %v1097, %v1099
        %v1111 = vsel %vm1102, %v1099, %v1101
        %1121 = vst [vmem:[#allocation2 + $0x48] sm:$0x80] %v1103
        %1122 = vst [vmem:[#allocation2 + $0x50] sm:$0x80] %v1104
        %1123 = vst [vmem:[#allocation2 + $0x58] sm:$0x80] %v1105
        %1124 = vst [vmem:[#allocation2 + $0x60] sm:$0x80] %v1106
        %1125 = vst [vmem:[#allocation2 + $0x68] sm:$0x80] %v1107
        %1126 = vst [vmem:[#allocation2 + $0x70] sm:$0x80] %v1108
        %1127 = vst [vmem:[#allocation2 + $0x78] sm:$0x80] %v1109
        %1128 = vst [vmem:[#allocation2 + $0x80] sm:$0x80] %v1110
        %1129 = vst [vmem:[#allocation2 + $0x88] sm:$0x80] %v1111
        %1130 = vrot.lane.b32.xlu0 %v238, 19
        %v1131 = vpop.permute.xlu0 %1130
        %1132 = vrot.lane.b32.xlu0 %v252, 19
        %v1133 = vpop.permute.xlu0 %1132
        %1134 = vrot.lane.b32.xlu0 %v260, 19
        %v1135 = vpop.permute.xlu0 %1134
        %1136 = vrot.lane.b32.xlu0 %v262, 19
        %v1137 = vpop.permute.xlu0 %1136
        %1138 = vrot.lane.b32.xlu0 %v245, 19
        %v1139 = vpop.permute.xlu0 %1138
        %1140 = vrot.lane.b32.xlu0 %v259, 19
        %v1141 = vpop.permute.xlu0 %1140
        %1142 = vrot.lane.b32.xlu0 %v261, 19
        %v1143 = vpop.permute.xlu0 %1142
        %1144 = vrot.lane.b32.xlu0 %v263, 19
        %v1145 = vpop.permute.xlu0 %1144
        %1146 = vrot.lane.b32.xlu0 %v277, 19
        %v1147 = vpop.permute.xlu0 %1146
        %1148 = vrot.lane.b32.xlu0 %v542, 19
        %v1149 = vpop.permute.xlu0 %1148
        %vm1150 = vcmask 154624
        %v1151 = vsel %vm1150, %v1131, %v1133
        %v1152 = vsel %vm1150, %v1133, %v1135
        %v1153 = vsel %vm1150, %v1135, %v1137
        %v1154 = vsel %vm1150, %v1137, %v1139
        %v1155 = vsel %vm1150, %v1139, %v1141
        %v1156 = vsel %vm1150, %v1141, %v1143
        %v1157 = vsel %vm1150, %v1143, %v1145
        %v1158 = vsel %vm1150, %v1145, %v1147
        %v1159 = vsel %vm1150, %v1147, %v1149
        %1169 = vst [vmem:[#allocation2 + $0x90] sm:$0x1] %v1151
        %1170 = vst [vmem:[#allocation2 + $0x98] sm:$0x1] %v1152
        %1171 = vst [vmem:[#allocation2 + $0xa0] sm:$0x1] %v1153
        %1172 = vst [vmem:[#allocation2 + $0xa8] sm:$0x1] %v1154
        %1173 = vst [vmem:[#allocation2 + $0xb0] sm:$0x1] %v1155
        %1174 = vst [vmem:[#allocation2 + $0xb8] sm:$0x1] %v1156
        %1175 = vst [vmem:[#allocation2 + $0xc0] sm:$0x1] %v1157
        %1176 = vst [vmem:[#allocation2 + $0xc8] sm:$0x1] %v1158
        %1177 = vst [vmem:[#allocation2 + $0xd0] sm:$0x1] %v1159
        %1178 = vrot.lane.b32.xlu0 %v311, 18
        %v1179 = vpop.permute.xlu0 %1178
        %1180 = vrot.lane.b32.xlu0 %v318, 18
        %v1181 = vpop.permute.xlu0 %1180
        %1182 = vrot.lane.b32.xlu0 %v319, 18
        %v1183 = vpop.permute.xlu0 %1182
        %1184 = vrot.lane.b32.xlu0 %v320, 18
        %v1185 = vpop.permute.xlu0 %1184
        %1186 = vrot.lane.b32.xlu0 %v238, 18
        %v1187 = vpop.permute.xlu0 %1186
        %1188 = vrot.lane.b32.xlu0 %v252, 18
        %v1189 = vpop.permute.xlu0 %1188
        %1190 = vrot.lane.b32.xlu0 %v260, 18
        %v1191 = vpop.permute.xlu0 %1190
        %1192 = vrot.lane.b32.xlu0 %v262, 18
        %v1193 = vpop.permute.xlu0 %1192
        %1194 = vrot.lane.b32.xlu0 %v336, 18
        %v1195 = vpop.permute.xlu0 %1194
        %1196 = vrot.lane.b32.xlu0 %v343, 18
        %v1197 = vpop.permute.xlu0 %1196
        %vm1198 = vcmask 146432
        %v1199 = vsel %vm1198, %v1179, %v1181
        %v1200 = vsel %vm1198, %v1181, %v1183
        %v1201 = vsel %vm1198, %v1183, %v1185
        %v1202 = vsel %vm1198, %v1185, %v1187
        %v1203 = vsel %vm1198, %v1187, %v1189
        %v1204 = vsel %vm1198, %v1189, %v1191
        %v1205 = vsel %vm1198, %v1191, %v1193
        %v1206 = vsel %vm1198, %v1193, %v1195
        %v1207 = vsel %vm1198, %v1195, %v1197
        %1217 = vst [vmem:[#allocation2 + $0x90] sm:$0x2] %v1199
        %1218 = vst [vmem:[#allocation2 + $0x98] sm:$0x2] %v1200
        %1219 = vst [vmem:[#allocation2 + $0xa0] sm:$0x2] %v1201
        %1220 = vst [vmem:[#allocation2 + $0xa8] sm:$0x2] %v1202
        %1221 = vst [vmem:[#allocation2 + $0xb0] sm:$0x2] %v1203
        %1222 = vst [vmem:[#allocation2 + $0xb8] sm:$0x2] %v1204
        %1223 = vst [vmem:[#allocation2 + $0xc0] sm:$0x2] %v1205
        %1224 = vst [vmem:[#allocation2 + $0xc8] sm:$0x2] %v1206
        %1225 = vst [vmem:[#allocation2 + $0xd0] sm:$0x2] %v1207
        %1226 = vrot.lane.b32.xlu0 %v400, 17
        %v1227 = vpop.permute.xlu0 %1226
        %1228 = vrot.lane.b32.xlu0 %v238, 17
        %v1229 = vpop.permute.xlu0 %1228
        %1230 = vrot.lane.b32.xlu0 %v408, 17
        %v1231 = vpop.permute.xlu0 %1230
        %1232 = vrot.lane.b32.xlu0 %v260, 17
        %v1233 = vpop.permute.xlu0 %1232
        %1234 = vrot.lane.b32.xlu0 %v407, 17
        %v1235 = vpop.permute.xlu0 %1234
        %1236 = vrot.lane.b32.xlu0 %v245, 17
        %v1237 = vpop.permute.xlu0 %1236
        %1238 = vrot.lane.b32.xlu0 %v409, 17
        %v1239 = vpop.permute.xlu0 %1238
        %1240 = vrot.lane.b32.xlu0 %v261, 17
        %v1241 = vpop.permute.xlu0 %1240
        %1242 = vrot.lane.b32.xlu0 %v417, 17
        %v1243 = vpop.permute.xlu0 %1242
        %1244 = vrot.lane.b32.xlu0 %v277, 17
        %v1245 = vpop.permute.xlu0 %1244
        %vm1246 = vcmask 138240
        %v1247 = vsel %vm1246, %v1227, %v1229
        %v1248 = vsel %vm1246, %v1229, %v1231
        %v1249 = vsel %vm1246, %v1231, %v1233
        %v1250 = vsel %vm1246, %v1233, %v1235
        %v1251 = vsel %vm1246, %v1235, %v1237
        %v1252 = vsel %vm1246, %v1237, %v1239
        %v1253 = vsel %vm1246, %v1239, %v1241
        %v1254 = vsel %vm1246, %v1241, %v1243
        %v1255 = vsel %vm1246, %v1243, %v1245
        %1265 = vst [vmem:[#allocation2 + $0x90] sm:$0x4] %v1247
        %1266 = vst [vmem:[#allocation2 + $0x98] sm:$0x4] %v1248
        %1267 = vst [vmem:[#allocation2 + $0xa0] sm:$0x4] %v1249
        %1268 = vst [vmem:[#allocation2 + $0xa8] sm:$0x4] %v1250
        %1269 = vst [vmem:[#allocation2 + $0xb0] sm:$0x4] %v1251
        %1270 = vst [vmem:[#allocation2 + $0xb8] sm:$0x4] %v1252
        %1271 = vst [vmem:[#allocation2 + $0xc0] sm:$0x4] %v1253
        %1272 = vst [vmem:[#allocation2 + $0xc8] sm:$0x4] %v1254
        %1273 = vst [vmem:[#allocation2 + $0xd0] sm:$0x4] %v1255
        %1274 = vrot.lane.b32.xlu0 %v473, 16
        %v1275 = vpop.permute.xlu0 %1274
        %1276 = vrot.lane.b32.xlu0 %v311, 16
        %v1277 = vpop.permute.xlu0 %1276
        %1278 = vrot.lane.b32.xlu0 %v474, 16
        %v1279 = vpop.permute.xlu0 %1278
        %1280 = vrot.lane.b32.xlu0 %v319, 16
        %v1281 = vpop.permute.xlu0 %1280
        %1282 = vrot.lane.b32.xlu0 %v400, 16
        %v1283 = vpop.permute.xlu0 %1282
        %1284 = vrot.lane.b32.xlu0 %v238, 16
        %v1285 = vpop.permute.xlu0 %1284
        %1286 = vrot.lane.b32.xlu0 %v408, 16
        %v1287 = vpop.permute.xlu0 %1286
        %1288 = vrot.lane.b32.xlu0 %v260, 16
        %v1289 = vpop.permute.xlu0 %1288
        %1290 = vrot.lane.b32.xlu0 %v482, 16
        %v1291 = vpop.permute.xlu0 %1290
        %1292 = vrot.lane.b32.xlu0 %v336, 16
        %v1293 = vpop.permute.xlu0 %1292
        %vm1294 = vcmask 130048
        %v1295 = vsel %vm1294, %v1275, %v1277
        %v1296 = vsel %vm1294, %v1277, %v1279
        %v1297 = vsel %vm1294, %v1279, %v1281
        %v1298 = vsel %vm1294, %v1281, %v1283
        %v1299 = vsel %vm1294, %v1283, %v1285
        %v1300 = vsel %vm1294, %v1285, %v1287
        %v1301 = vsel %vm1294, %v1287, %v1289
        %v1302 = vsel %vm1294, %v1289, %v1291
        %v1303 = vsel %vm1294, %v1291, %v1293
        %1313 = vst [vmem:[#allocation2 + $0x90] sm:$0x8] %v1295
        %1314 = vst [vmem:[#allocation2 + $0x98] sm:$0x8] %v1296
        %1315 = vst [vmem:[#allocation2 + $0xa0] sm:$0x8] %v1297
        %1316 = vst [vmem:[#allocation2 + $0xa8] sm:$0x8] %v1298
        %1317 = vst [vmem:[#allocation2 + $0xb0] sm:$0x8] %v1299
        %1318 = vst [vmem:[#allocation2 + $0xb8] sm:$0x8] %v1300
        %1319 = vst [vmem:[#allocation2 + $0xc0] sm:$0x8] %v1301
        %1320 = vst [vmem:[#allocation2 + $0xc8] sm:$0x8] %v1302
        %1321 = vst [vmem:[#allocation2 + $0xd0] sm:$0x8] %v1303
        %1322 = vrot.lane.b32.xlu0 %v533, 112
        %v1323 = vpop.permute.xlu0 %1322
        %1324 = vrot.lane.b32.xlu0 %v238, 112
        %v1325 = vpop.permute.xlu0 %1324
        %1326 = vrot.lane.b32.xlu0 %v252, 112
        %v1327 = vpop.permute.xlu0 %1326
        %1328 = vrot.lane.b32.xlu0 %v532, 112
        %v1329 = vpop.permute.xlu0 %1328
        %1330 = vrot.lane.b32.xlu0 %v534, 112
        %v1331 = vpop.permute.xlu0 %1330
        %1332 = vrot.lane.b32.xlu0 %v245, 112
        %v1333 = vpop.permute.xlu0 %1332
        %1334 = vrot.lane.b32.xlu0 %v259, 112
        %v1335 = vpop.permute.xlu0 %1334
        %1336 = vrot.lane.b32.xlu0 %v543, 112
        %v1337 = vpop.permute.xlu0 %1336
        %1338 = vrot.lane.b32.xlu0 %v544, 112
        %v1339 = vpop.permute.xlu0 %1338
        %1340 = vrot.lane.b32.xlu0 %v277, 112
        %v1341 = vpop.permute.xlu0 %1340
        %vm1342 = vcmask 916480
        %v1343 = vsel %vm1342, %v1323, %v1325
        %v1344 = vsel %vm1342, %v1325, %v1327
        %v1345 = vsel %vm1342, %v1327, %v1329
        %v1346 = vsel %vm1342, %v1329, %v1331
        %v1347 = vsel %vm1342, %v1331, %v1333
        %v1348 = vsel %vm1342, %v1333, %v1335
        %v1349 = vsel %vm1342, %v1335, %v1337
        %v1350 = vsel %vm1342, %v1337, %v1339
        %v1351 = vsel %vm1342, %v1339, %v1341
        %1361 = vst [vmem:[#allocation2 + $0x90] sm:$0x10] %v1343
        %1362 = vst [vmem:[#allocation2 + $0x98] sm:$0x10] %v1344
        %1363 = vst [vmem:[#allocation2 + $0xa0] sm:$0x10] %v1345
        %1364 = vst [vmem:[#allocation2 + $0xa8] sm:$0x10] %v1346
        %1365 = vst [vmem:[#allocation2 + $0xb0] sm:$0x10] %v1347
        %1366 = vst [vmem:[#allocation2 + $0xb8] sm:$0x10] %v1348
        %1367 = vst [vmem:[#allocation2 + $0xc0] sm:$0x10] %v1349
        %1368 = vst [vmem:[#allocation2 + $0xc8] sm:$0x10] %v1350
        %1369 = vst [vmem:[#allocation2 + $0xd0] sm:$0x10] %v1351
        %1370 = vrot.lane.b32.xlu0 %v594, 111
        %v1371 = vpop.permute.xlu0 %1370
        %1372 = vrot.lane.b32.xlu0 %v311, 111
        %v1373 = vpop.permute.xlu0 %1372
        %1374 = vrot.lane.b32.xlu0 %v318, 111
        %v1375 = vpop.permute.xlu0 %1374
        %1376 = vrot.lane.b32.xlu0 %v531, 111
        %v1377 = vpop.permute.xlu0 %1376
        %1378 = vrot.lane.b32.xlu0 %v533, 111
        %v1379 = vpop.permute.xlu0 %1378
        %1380 = vrot.lane.b32.xlu0 %v238, 111
        %v1381 = vpop.permute.xlu0 %1380
        %1382 = vrot.lane.b32.xlu0 %v252, 111
        %v1383 = vpop.permute.xlu0 %1382
        %1384 = vrot.lane.b32.xlu0 %v595, 111
        %v1385 = vpop.permute.xlu0 %1384
        %1386 = vrot.lane.b32.xlu0 %v596, 111
        %v1387 = vpop.permute.xlu0 %1386
        %1388 = vrot.lane.b32.xlu0 %v336, 111
        %v1389 = vpop.permute.xlu0 %1388
        %vm1390 = vcmask 908288
        %v1391 = vsel %vm1390, %v1371, %v1373
        %v1392 = vsel %vm1390, %v1373, %v1375
        %v1393 = vsel %vm1390, %v1375, %v1377
        %v1394 = vsel %vm1390, %v1377, %v1379
        %v1395 = vsel %vm1390, %v1379, %v1381
        %v1396 = vsel %vm1390, %v1381, %v1383
        %v1397 = vsel %vm1390, %v1383, %v1385
        %v1398 = vsel %vm1390, %v1385, %v1387
        %v1399 = vsel %vm1390, %v1387, %v1389
        %1409 = vst [vmem:[#allocation2 + $0x90] sm:$0x20] %v1391
        %1410 = vst [vmem:[#allocation2 + $0x98] sm:$0x20] %v1392
        %1411 = vst [vmem:[#allocation2 + $0xa0] sm:$0x20] %v1393
        %1412 = vst [vmem:[#allocation2 + $0xa8] sm:$0x20] %v1394
        %1413 = vst [vmem:[#allocation2 + $0xb0] sm:$0x20] %v1395
        %1414 = vst [vmem:[#allocation2 + $0xb8] sm:$0x20] %v1396
        %1415 = vst [vmem:[#allocation2 + $0xc0] sm:$0x20] %v1397
        %1416 = vst [vmem:[#allocation2 + $0xc8] sm:$0x20] %v1398
        %1417 = vst [vmem:[#allocation2 + $0xd0] sm:$0x20] %v1399
        %1418 = vrot.lane.b32.xlu0 %v531, 110
        %v1419 = vpop.permute.xlu0 %1418
        %1420 = vrot.lane.b32.xlu0 %v400, 110
        %v1421 = vpop.permute.xlu0 %1420
        %1422 = vrot.lane.b32.xlu0 %v238, 110
        %v1423 = vpop.permute.xlu0 %1422
        %1424 = vrot.lane.b32.xlu0 %v646, 110
        %v1425 = vpop.permute.xlu0 %1424
        %1426 = vrot.lane.b32.xlu0 %v532, 110
        %v1427 = vpop.permute.xlu0 %1426
        %1428 = vrot.lane.b32.xlu0 %v407, 110
        %v1429 = vpop.permute.xlu0 %1428
        %1430 = vrot.lane.b32.xlu0 %v245, 110
        %v1431 = vpop.permute.xlu0 %1430
        %1432 = vrot.lane.b32.xlu0 %v647, 110
        %v1433 = vpop.permute.xlu0 %1432
        %1434 = vrot.lane.b32.xlu0 %v543, 110
        %v1435 = vpop.permute.xlu0 %1434
        %1436 = vrot.lane.b32.xlu0 %v417, 110
        %v1437 = vpop.permute.xlu0 %1436
        %vm1438 = vcmask 900096
        %v1439 = vsel %vm1438, %v1419, %v1421
        %v1440 = vsel %vm1438, %v1421, %v1423
        %v1441 = vsel %vm1438, %v1423, %v1425
        %v1442 = vsel %vm1438, %v1425, %v1427
        %v1443 = vsel %vm1438, %v1427, %v1429
        %v1444 = vsel %vm1438, %v1429, %v1431
        %v1445 = vsel %vm1438, %v1431, %v1433
        %v1446 = vsel %vm1438, %v1433, %v1435
        %v1447 = vsel %vm1438, %v1435, %v1437
        %1457 = vst [vmem:[#allocation2 + $0x90] sm:$0x40] %v1439
        %1458 = vst [vmem:[#allocation2 + $0x98] sm:$0x40] %v1440
        %1459 = vst [vmem:[#allocation2 + $0xa0] sm:$0x40] %v1441
        %1460 = vst [vmem:[#allocation2 + $0xa8] sm:$0x40] %v1442
        %1461 = vst [vmem:[#allocation2 + $0xb0] sm:$0x40] %v1443
        %1462 = vst [vmem:[#allocation2 + $0xb8] sm:$0x40] %v1444
        %1463 = vst [vmem:[#allocation2 + $0xc0] sm:$0x40] %v1445
        %1464 = vst [vmem:[#allocation2 + $0xc8] sm:$0x40] %v1446
        %1465 = vst [vmem:[#allocation2 + $0xd0] sm:$0x40] %v1447
        %1466 = vrot.lane.b32.xlu0 %v593, 109
        %v1467 = vpop.permute.xlu0 %1466
        %1468 = vrot.lane.b32.xlu0 %v473, 109
        %v1469 = vpop.permute.xlu0 %1468
        %1470 = vrot.lane.b32.xlu0 %v311, 109
        %v1471 = vpop.permute.xlu0 %1470
        %1472 = vrot.lane.b32.xlu0 %v645, 109
        %v1473 = vpop.permute.xlu0 %1472
        %1474 = vrot.lane.b32.xlu0 %v531, 109
        %v1475 = vpop.permute.xlu0 %1474
        %1476 = vrot.lane.b32.xlu0 %v400, 109
        %v1477 = vpop.permute.xlu0 %1476
        %1478 = vrot.lane.b32.xlu0 %v238, 109
        %v1479 = vpop.permute.xlu0 %1478
        %1480 = vrot.lane.b32.xlu0 %v697, 109
        %v1481 = vpop.permute.xlu0 %1480
        %1482 = vrot.lane.b32.xlu0 %v595, 109
        %v1483 = vpop.permute.xlu0 %1482
        %1484 = vrot.lane.b32.xlu0 %v482, 109
        %v1485 = vpop.permute.xlu0 %1484
        %vm1486 = vcmask 891904
        %v1487 = vsel %vm1486, %v1467, %v1469
        %v1488 = vsel %vm1486, %v1469, %v1471
        %v1489 = vsel %vm1486, %v1471, %v1473
        %v1490 = vsel %vm1486, %v1473, %v1475
        %v1491 = vsel %vm1486, %v1475, %v1477
        %v1492 = vsel %vm1486, %v1477, %v1479
        %v1493 = vsel %vm1486, %v1479, %v1481
        %v1494 = vsel %vm1486, %v1481, %v1483
        %v1495 = vsel %vm1486, %v1483, %v1485
        %1505 = vst [vmem:[#allocation2 + $0x90] sm:$0x80] %v1487
        %1506 = vst [vmem:[#allocation2 + $0x98] sm:$0x80] %v1488
        %1507 = vst [vmem:[#allocation2 + $0xa0] sm:$0x80] %v1489
        %1508 = vst [vmem:[#allocation2 + $0xa8] sm:$0x80] %v1490
        %1509 = vst [vmem:[#allocation2 + $0xb0] sm:$0x80] %v1491
        %1510 = vst [vmem:[#allocation2 + $0xb8] sm:$0x80] %v1492
        %1511 = vst [vmem:[#allocation2 + $0xc0] sm:$0x80] %v1493
        %1512 = vst [vmem:[#allocation2 + $0xc8] sm:$0x80] %v1494
        %1513 = vst [vmem:[#allocation2 + $0xd0] sm:$0x80] %v1495
        %v1514 = vcombine.high %v277, %v277
        %1515 = vrot.lane.b32.xlu0 %v252, 108
        %v1516 = vpop.permute.xlu0 %1515
        %1517 = vrot.lane.b32.xlu0 %v260, 108
        %v1518 = vpop.permute.xlu0 %1517
        %1519 = vrot.lane.b32.xlu0 %v262, 108
        %v1520 = vpop.permute.xlu0 %1519
        %1521 = vrot.lane.b32.xlu0 %v245, 108
        %v1522 = vpop.permute.xlu0 %1521
        %1523 = vrot.lane.b32.xlu0 %v259, 108
        %v1524 = vpop.permute.xlu0 %1523
        %1525 = vrot.lane.b32.xlu0 %v261, 108
        %v1526 = vpop.permute.xlu0 %1525
        %1527 = vrot.lane.b32.xlu0 %v263, 108
        %v1528 = vpop.permute.xlu0 %1527
        %1529 = vrot.lane.b32.xlu0 %v277, 108
        %v1530 = vpop.permute.xlu0 %1529
        %1531 = vrot.lane.b32.xlu0 %v542, 108
        %v1532 = vpop.permute.xlu0 %1531
        %1533 = vrot.lane.b32.xlu0 %v1514, 108
        %v1534 = vpop.permute.xlu0 %1533
        %vm1535 = vcmask 883712
        %v1536 = vsel %vm1535, %v1516, %v1518
        %v1537 = vsel %vm1535, %v1518, %v1520
        %v1538 = vsel %vm1535, %v1520, %v1522
        %v1539 = vsel %vm1535, %v1522, %v1524
        %v1540 = vsel %vm1535, %v1524, %v1526
        %v1541 = vsel %vm1535, %v1526, %v1528
        %v1542 = vsel %vm1535, %v1528, %v1530
        %v1543 = vsel %vm1535, %v1530, %v1532
        %v1544 = vsel %vm1535, %v1532, %v1534
        %1554 = vst [vmem:[#allocation2 + $0xd8] sm:$0x1] %v1536
        %1555 = vst [vmem:[#allocation2 + $0xe0] sm:$0x1] %v1537
        %1556 = vst [vmem:[#allocation2 + $0xe8] sm:$0x1] %v1538
        %1557 = vst [vmem:[#allocation2 + $0xf0] sm:$0x1] %v1539
        %1558 = vst [vmem:[#allocation2 + $0xf8] sm:$0x1] %v1540
        %1559 = vst [vmem:[#allocation2 + $0x100] sm:$0x1] %v1541
        %1560 = vst [vmem:[#allocation2 + $0x108] sm:$0x1] %v1542
        %1561 = vst [vmem:[#allocation2 + $0x110] sm:$0x1] %v1543
        %1562 = vst [vmem:[#allocation2 + $0x118] sm:$0x1] %v1544
        %1563 = vst [vmem:[#allocation2 + $0xd8] sm:$0xfe] 0
        %1564 = vst [vmem:[#allocation2 + $0xe0] sm:$0xfe] 0
        %1565 = vst [vmem:[#allocation2 + $0xe8] sm:$0xfe] 0
        %1566 = vst [vmem:[#allocation2 + $0xf0] sm:$0xfe] 0
        %1567 = vst [vmem:[#allocation2 + $0xf8] sm:$0xfe] 0
        %1568 = vst [vmem:[#allocation2 + $0x100] sm:$0xfe] 0
        %1569 = vst [vmem:[#allocation2 + $0x108] sm:$0xfe] 0
        %1570 = vst [vmem:[#allocation2 + $0x110] sm:$0xfe] 0
        %1571 = vst [vmem:[#allocation2 + $0x118] sm:$0xfe] 0
        %v1572 = vld [vmem:[%s1] sm:$0x3]
        %v1573 = vld [vmem:[#allocation2] sm:$0xff]
        %v1574 = vld [vmem:[#allocation2 + $0x8] sm:$0xff]
        %v1575 = vld [vmem:[#allocation2 + $0x10] sm:$0xff]
        %v1576 = vld [vmem:[#allocation2 + $0x18] sm:$0xff]
        %v1577 = vld [vmem:[#allocation2 + $0x20] sm:$0xff]
        %v1578 = vld [vmem:[#allocation2 + $0x28] sm:$0xff]
        %v1579 = vld [vmem:[#allocation2 + $0x30] sm:$0xff]
        %v1580 = vld [vmem:[#allocation2 + $0x38] sm:$0xff]
        %v1581 = vld [vmem:[#allocation2 + $0x40] sm:$0xff]
        %v1582 = vld [vmem:[#allocation2 + $0x48] sm:$0xff]
        %v1583 = vld [vmem:[#allocation2 + $0x50] sm:$0xff]
        %v1584 = vld [vmem:[#allocation2 + $0x58] sm:$0xff]
        %v1585 = vld [vmem:[#allocation2 + $0x60] sm:$0xff]
        %v1586 = vld [vmem:[#allocation2 + $0x68] sm:$0xff]
        %v1587 = vld [vmem:[#allocation2 + $0x70] sm:$0xff]
        %v1588 = vld [vmem:[#allocation2 + $0x78] sm:$0xff]
        %v1589 = vld [vmem:[#allocation2 + $0x80] sm:$0xff]
        %v1590 = vld [vmem:[#allocation2 + $0x88] sm:$0xff]
        %v1591 = vld [vmem:[#allocation2 + $0x90] sm:$0xff]
        %v1592 = vld [vmem:[#allocation2 + $0x98] sm:$0xff]
        %v1593 = vld [vmem:[#allocation2 + $0xa0] sm:$0xff]
        %v1594 = vld [vmem:[#allocation2 + $0xa8] sm:$0xff]
        %v1595 = vld [vmem:[#allocation2 + $0xb0] sm:$0xff]
        %v1596 = vld [vmem:[#allocation2 + $0xb8] sm:$0xff]
        %v1597 = vld [vmem:[#allocation2 + $0xc0] sm:$0xff]
        %v1598 = vld [vmem:[#allocation2 + $0xc8] sm:$0xff]
        %v1599 = vld [vmem:[#allocation2 + $0xd0] sm:$0xff]
        %v1600 = vld [vmem:[#allocation2 + $0xd8] sm:$0xff]
        %v1601 = vld [vmem:[#allocation2 + $0xe0] sm:$0xff]
        %v1602 = vld [vmem:[#allocation2 + $0xe8] sm:$0xff]
        %v1603 = vld [vmem:[#allocation2 + $0xf0] sm:$0xff]
        %v1604 = vld [vmem:[#allocation2 + $0xf8] sm:$0xff]
        %v1605 = vld [vmem:[#allocation2 + $0x100] sm:$0xff]
        %v1606 = vld [vmem:[#allocation2 + $0x108] sm:$0xff]
        %v1607 = vld [vmem:[#allocation2 + $0x110] sm:$0xff]
        %v1608 = vld [vmem:[#allocation2 + $0x118] sm:$0xff]
        %v1609 = vld [vmem:[%s2] sm:$0xf]
        %1611 = vset.pattern.permute.xlu0 0
        %1612 = vperm.xlu0 %1611, %v1609
        %v1613 = vpop.permute.xlu0 %1612
        %vm1615 = vcmask 523264
        %v1617 = vsel %vm1615, %v1572, 0
        %1619 = vmatprep.subr.bf16.mxu0 %v1574
        %1620 = vmatpush1.bf16.msra.mxu0 %v1573
        %1621 = vmatprep.subr.bf16.mxu0 %v1583
        %1622 = vmatpush1.bf16.msra.mxu0 %v1582
        %1623 = vmatprep.subr.bf16.mxu0 %v1592
        %1624 = vmatpush1.bf16.msra.mxu0 %v1591
        %1625 = vmatprep.subr.bf16.mxu0 %v1601
        %1626 = vmatpush1.bf16.msra.mxu0 %v1600
        %1627 = vmatprep.subr.bf16.mxu0 0
        %1628 = vmatpush1.bf16.msra.mxu0 0
        %1629 = vmatprep.subr.bf16.mxu0 0
        %1630 = vmatpush1.bf16.msra.mxu0 0
        %1631 = vmatprep.subr.bf16.mxu0 0
        %1632 = vmatpush1.bf16.msra.mxu0 0
        %1633 = vmatprep.subr.bf16.mxu0 0
        %1634 = vmatpush1.bf16.msra.mxu0 0
        %1635 = vmatprep.subr.bf16.mxu0 0
        %1636 = vmatpush1.bf16.msra.mxu0 0
        %1637 = vmatprep.subr.bf16.mxu0 0
        %1638 = vmatpush1.bf16.msra.mxu0 0
        %1639 = vmatprep.subr.bf16.mxu0 0
        %1640 = vmatpush1.bf16.msra.mxu0 0
        %1641 = vmatprep.subr.bf16.mxu0 0
        %1642 = vmatpush1.bf16.msra.mxu0 0
        %1643 = vmatprep.subr.bf16.mxu0 0
        %1644 = vmatpush1.bf16.msra.mxu0 0
        %1645 = vmatprep.subr.bf16.mxu0 0
        %1646 = vmatpush1.bf16.msra.mxu0 0
        %1647 = vmatprep.subr.bf16.mxu0 0
        %1648 = vmatpush1.bf16.msra.mxu0 0
        %1649 = vmatprep.subr.bf16.mxu0 0
        %1650 = vmatpush1.bf16.msra.mxu0 0
        %1651 = vmatprep.mubr.bf16.mxu0 0
        %1652 = vmatmul.mubr.bf16.gmra.mrb[0].mxu0 %v1617
        %v1653 = vpop.f32.mrb[0].mxu0
        %v1654 = vadd.f32 %v1613, %v1653
        %v1655 = vpop.f32.mrb[0].mxu0
        %v1656 = vadd.f32 %v1613, %v1655
        %v1657 = vpop.f32.mrb[0].mxu0
        %v1658 = vpop.f32.mrb[0].mxu0
        %1659 = vdwg.mxu0
        %1660 = vmatprep.subr.bf16.mxu0 %v1576
        %1661 = vmatpush1.bf16.msra.mxu0 %v1575
        %1662 = vmatprep.subr.bf16.mxu0 %v1585
        %1663 = vmatpush1.bf16.msra.mxu0 %v1584
        %1664 = vmatprep.subr.bf16.mxu0 %v1594
        %1665 = vmatpush1.bf16.msra.mxu0 %v1593
        %1666 = vmatprep.subr.bf16.mxu0 %v1603
        %1667 = vmatpush1.bf16.msra.mxu0 %v1602
        %1668 = vmatprep.subr.bf16.mxu0 0
        %1669 = vmatpush1.bf16.msra.mxu0 0
        %1670 = vmatprep.subr.bf16.mxu0 0
        %1671 = vmatpush1.bf16.msra.mxu0 0
        %1672 = vmatprep.subr.bf16.mxu0 0
        %1673 = vmatpush1.bf16.msra.mxu0 0
        %1674 = vmatprep.subr.bf16.mxu0 0
        %1675 = vmatpush1.bf16.msra.mxu0 0
        %1676 = vmatprep.subr.bf16.mxu0 0
        %1677 = vmatpush1.bf16.msra.mxu0 0
        %1678 = vmatprep.subr.bf16.mxu0 0
        %1679 = vmatpush1.bf16.msra.mxu0 0
        %1680 = vmatprep.subr.bf16.mxu0 0
        %1681 = vmatpush1.bf16.msra.mxu0 0
        %1682 = vmatprep.subr.bf16.mxu0 0
        %1683 = vmatpush1.bf16.msra.mxu0 0
        %1684 = vmatprep.subr.bf16.mxu0 0
        %1685 = vmatpush1.bf16.msra.mxu0 0
        %1686 = vmatprep.subr.bf16.mxu0 0
        %1687 = vmatpush1.bf16.msra.mxu0 0
        %1688 = vmatprep.subr.bf16.mxu0 0
        %1689 = vmatpush1.bf16.msra.mxu0 0
        %1690 = vmatprep.subr.bf16.mxu0 0
        %1691 = vmatpush1.bf16.msra.mxu0 0
        %1692 = vmatprep.mubr.bf16.mxu0 0
        %1693 = vmatmul.mubr.bf16.gmra.mrb[0].mxu0 %v1617
        %v1694 = vpop.f32.mrb[0].mxu0
        %v1695 = vadd.f32 %v1613, %v1694
        %v1696 = vpop.f32.mrb[0].mxu0
        %v1697 = vadd.f32 %v1613, %v1696
        %v1698 = vpop.f32.mrb[0].mxu0
        %v1699 = vpop.f32.mrb[0].mxu0
        %1700 = vdwg.mxu0
        %1701 = vmatprep.subr.bf16.mxu0 %v1578
        %1702 = vmatpush1.bf16.msra.mxu0 %v1577
        %1703 = vmatprep.subr.bf16.mxu0 %v1587
        %1704 = vmatpush1.bf16.msra.mxu0 %v1586
        %1705 = vmatprep.subr.bf16.mxu0 %v1596
        %1706 = vmatpush1.bf16.msra.mxu0 %v1595
        %1707 = vmatprep.subr.bf16.mxu0 %v1605
        %1708 = vmatpush1.bf16.msra.mxu0 %v1604
        %1709 = vmatprep.subr.bf16.mxu0 0
        %1710 = vmatpush1.bf16.msra.mxu0 0
        %1711 = vmatprep.subr.bf16.mxu0 0
        %1712 = vmatpush1.bf16.msra.mxu0 0
        %1713 = vmatprep.subr.bf16.mxu0 0
        %1714 = vmatpush1.bf16.msra.mxu0 0
        %1715 = vmatprep.subr.bf16.mxu0 0
        %1716 = vmatpush1.bf16.msra.mxu0 0
        %1717 = vmatprep.subr.bf16.mxu0 0
        %1718 = vmatpush1.bf16.msra.mxu0 0
        %1719 = vmatprep.subr.bf16.mxu0 0
        %1720 = vmatpush1.bf16.msra.mxu0 0
        %1721 = vmatprep.subr.bf16.mxu0 0
        %1722 = vmatpush1.bf16.msra.mxu0 0
        %1723 = vmatprep.subr.bf16.mxu0 0
        %1724 = vmatpush1.bf16.msra.mxu0 0
        %1725 = vmatprep.subr.bf16.mxu0 0
        %1726 = vmatpush1.bf16.msra.mxu0 0
        %1727 = vmatprep.subr.bf16.mxu0 0
        %1728 = vmatpush1.bf16.msra.mxu0 0
        %1729 = vmatprep.subr.bf16.mxu0 0
        %1730 = vmatpush1.bf16.msra.mxu0 0
        %1731 = vmatprep.subr.bf16.mxu0 0
        %1732 = vmatpush1.bf16.msra.mxu0 0
        %1733 = vmatprep.mubr.bf16.mxu0 0
        %1734 = vmatmul.mubr.bf16.gmra.mrb[0].mxu0 %v1617
        %v1735 = vpop.f32.mrb[0].mxu0
        %v1736 = vadd.f32 %v1613, %v1735
        %v1737 = vpop.f32.mrb[0].mxu0
        %v1738 = vadd.f32 %v1613, %v1737
        %v1739 = vpop.f32.mrb[0].mxu0
        %v1740 = vpop.f32.mrb[0].mxu0
        %1741 = vdwg.mxu0
        %1742 = vmatprep.subr.bf16.mxu0 %v1580
        %1743 = vmatpush1.bf16.msra.mxu0 %v1579
        %1744 = vmatprep.subr.bf16.mxu0 %v1589
        %1745 = vmatpush1.bf16.msra.mxu0 %v1588
        %1746 = vmatprep.subr.bf16.mxu0 %v1598
        %1747 = vmatpush1.bf16.msra.mxu0 %v1597
        %1748 = vmatprep.subr.bf16.mxu0 %v1607
        %1749 = vmatpush1.bf16.msra.mxu0 %v1606
        %1750 = vmatprep.subr.bf16.mxu0 0
        %1751 = vmatpush1.bf16.msra.mxu0 0
        %1752 = vmatprep.subr.bf16.mxu0 0
        %1753 = vmatpush1.bf16.msra.mxu0 0
        %1754 = vmatprep.subr.bf16.mxu0 0
        %1755 = vmatpush1.bf16.msra.mxu0 0
        %1756 = vmatprep.subr.bf16.mxu0 0
        %1757 = vmatpush1.bf16.msra.mxu0 0
        %1758 = vmatprep.subr.bf16.mxu0 0
        %1759 = vmatpush1.bf16.msra.mxu0 0
        %1760 = vmatprep.subr.bf16.mxu0 0
        %1761 = vmatpush1.bf16.msra.mxu0 0
        %1762 = vmatprep.subr.bf16.mxu0 0
        %1763 = vmatpush1.bf16.msra.mxu0 0
        %1764 = vmatprep.subr.bf16.mxu0 0
        %1765 = vmatpush1.bf16.msra.mxu0 0
        %1766 = vmatprep.subr.bf16.mxu0 0
        %1767 = vmatpush1.bf16.msra.mxu0 0
        %1768 = vmatprep.subr.bf16.mxu0 0
        %1769 = vmatpush1.bf16.msra.mxu0 0
        %1770 = vmatprep.subr.bf16.mxu0 0
        %1771 = vmatpush1.bf16.msra.mxu0 0
        %1772 = vmatprep.subr.bf16.mxu0 0
        %1773 = vmatpush1.bf16.msra.mxu0 0
        %1774 = vmatprep.mubr.bf16.mxu0 0
        %1775 = vmatmul.mubr.bf16.gmra.mrb[0].mxu0 %v1617
        %v1776 = vpop.f32.mrb[0].mxu0
        %v1777 = vadd.f32 %v1613, %v1776
        %v1778 = vpop.f32.mrb[0].mxu0
        %v1779 = vadd.f32 %v1613, %v1778
        %v1780 = vpop.f32.mrb[0].mxu0
        %v1781 = vpop.f32.mrb[0].mxu0
        %1782 = vdwg.mxu0
        %1783 = vmatprep.subr.bf16.mxu0 0
        %1784 = vmatpush1.bf16.msra.mxu0 %v1581
        %1785 = vmatprep.subr.bf16.mxu0 0
        %1786 = vmatpush1.bf16.msra.mxu0 %v1590
        %1787 = vmatprep.subr.bf16.mxu0 0
        %1788 = vmatpush1.bf16.msra.mxu0 %v1599
        %1789 = vmatprep.subr.bf16.mxu0 0
        %1790 = vmatpush1.bf16.msra.mxu0 %v1608
        %1791 = vmatprep.subr.bf16.mxu0 0
        %1792 = vmatpush1.bf16.msra.mxu0 0
        %1793 = vmatprep.subr.bf16.mxu0 0
        %1794 = vmatpush1.bf16.msra.mxu0 0
        %1795 = vmatprep.subr.bf16.mxu0 0
        %1796 = vmatpush1.bf16.msra.mxu0 0
        %1797 = vmatprep.subr.bf16.mxu0 0
        %1798 = vmatpush1.bf16.msra.mxu0 0
        %1799 = vmatprep.subr.bf16.mxu0 0
        %1800 = vmatpush1.bf16.msra.mxu0 0
        %1801 = vmatprep.subr.bf16.mxu0 0
        %1802 = vmatpush1.bf16.msra.mxu0 0
        %1803 = vmatprep.subr.bf16.mxu0 0
        %1804 = vmatpush1.bf16.msra.mxu0 0
        %1805 = vmatprep.subr.bf16.mxu0 0
        %1806 = vmatpush1.bf16.msra.mxu0 0
        %1807 = vmatprep.subr.bf16.mxu0 0
        %1808 = vmatpush1.bf16.msra.mxu0 0
        %1809 = vmatprep.subr.bf16.mxu0 0
        %1810 = vmatpush1.bf16.msra.mxu0 0
        %1811 = vmatprep.subr.bf16.mxu0 0
        %1812 = vmatpush1.bf16.msra.mxu0 0
        %1813 = vmatprep.subr.bf16.mxu0 0
        %1814 = vmatpush1.bf16.msra.mxu0 0
        %1815 = vmatprep.mubr.bf16.mxu0 0
        %1816 = vmatmul.mubr.bf16.gmra.mrb[0].mxu0 %v1617
        %v1817 = vpop.f32.mrb[0].mxu0
        %v1818 = vadd.f32 %v1613, %v1817
        %v1819 = vpop.f32.mrb[0].mxu0
        %v1820 = vpop.f32.mrb[0].mxu0
        %v1821 = vpop.f32.mrb[0].mxu0
        %1822 = vdwg.mxu0
        %v1823 = vmax.f32 %v1654, 0.0
        %v1824 = vmax.f32 %v1656, 0.0
        %v1825 = vmax.f32 %v1695, 0.0
        %v1826 = vmax.f32 %v1697, 0.0
        %v1827 = vmax.f32 %v1736, 0.0
        %v1828 = vmax.f32 %v1738, 0.0
        %v1829 = vmax.f32 %v1777, 0.0
        %v1830 = vmax.f32 %v1779, 0.0
        %v1831 = vmax.f32 %v1818, 0.0
        %1841 = vrot.lane.b32.xlu0 %v1823, 127
        %v1842 = vpop.permute.xlu0 %1841
        %1843 = vrot.lane.b32.xlu0 %v1824, 127
        %v1844 = vpop.permute.xlu0 %1843
        %1845 = vrot.lane.b32.xlu0 %v1825, 127
        %v1846 = vpop.permute.xlu0 %1845
        %1847 = vrot.lane.b32.xlu0 %v1826, 127
        %v1848 = vpop.permute.xlu0 %1847
        %1849 = vrot.lane.b32.xlu0 %v1827, 127
        %v1850 = vpop.permute.xlu0 %1849
        %1851 = vrot.lane.b32.xlu0 %v1828, 127
        %v1852 = vpop.permute.xlu0 %1851
        %1853 = vrot.lane.b32.xlu0 %v1829, 127
        %v1854 = vpop.permute.xlu0 %1853
        %1855 = vrot.lane.b32.xlu0 %v1830, 127
        %v1856 = vpop.permute.xlu0 %1855
        %1857 = vrot.lane.b32.xlu0 %v1831, 127
        %v1858 = vpop.permute.xlu0 %1857
        %vm1859 = vcmask 1039360
        %v1860 = vsel %vm1859, %v1842, %v1844
        %v1861 = vsel %vm1859, %v1844, %v1846
        %v1862 = vsel %vm1859, %v1846, %v1848
        %v1863 = vsel %vm1859, %v1848, %v1850
        %v1864 = vsel %vm1859, %v1850, %v1852
        %v1865 = vsel %vm1859, %v1852, %v1854
        %v1866 = vsel %vm1859, %v1854, %v1856
        %v1867 = vsel %vm1859, %v1856, %v1858
        %v1878 = vsel %vm1859, %v1858, %v1842
        %v1879 = vmax.f32 %v1823, %v1860
        %v1880 = vmax.f32 %v1824, %v1861
        %v1881 = vmax.f32 %v1825, %v1862
        %v1882 = vmax.f32 %v1826, %v1863
        %v1883 = vmax.f32 %v1827, %v1864
        %v1884 = vmax.f32 %v1828, %v1865
        %v1885 = vmax.f32 %v1829, %v1866
        %v1886 = vmax.f32 %v1830, %v1867
        %v1887 = vmax.f32 %v1831, %v1878
        %1897 = vrot.lane.b32.xlu0 %v1879, 92
        %v1898 = vpop.permute.xlu0 %1897
        %1899 = vrot.lane.b32.xlu0 %v1880, 92
        %v1900 = vpop.permute.xlu0 %1899
        %1901 = vrot.lane.b32.xlu0 %v1881, 92
        %v1902 = vpop.permute.xlu0 %1901
        %1903 = vrot.lane.b32.xlu0 %v1882, 92
        %v1904 = vpop.permute.xlu0 %1903
        %1905 = vrot.lane.b32.xlu0 %v1883, 92
        %v1906 = vpop.permute.xlu0 %1905
        %1907 = vrot.lane.b32.xlu0 %v1884, 92
        %v1908 = vpop.permute.xlu0 %1907
        %1909 = vrot.lane.b32.xlu0 %v1885, 92
        %v1910 = vpop.permute.xlu0 %1909
        %1911 = vrot.lane.b32.xlu0 %v1886, 92
        %v1912 = vpop.permute.xlu0 %1911
        %1913 = vrot.lane.b32.xlu0 %v1887, 92
        %v1914 = vpop.permute.xlu0 %1913
        %vm1915 = vcmask 752640
        %v1916 = vsel %vm1915, %v1898, %v1900
        %v1917 = vsel %vm1915, %v1900, %v1902
        %v1918 = vsel %vm1915, %v1902, %v1904
        %v1919 = vsel %vm1915, %v1904, %v1906
        %v1920 = vsel %vm1915, %v1906, %v1908
        %v1921 = vsel %vm1915, %v1908, %v1910
        %v1922 = vsel %vm1915, %v1910, %v1912
        %v1923 = vsel %vm1915, %v1912, %v1914
        %v1934 = vsel %vm1915, %v1914, %v1898
        %v1935 = vmax.f32 %v1879, %v1916
        %v1936 = vmax.f32 %v1880, %v1917
        %v1937 = vmax.f32 %v1881, %v1918
        %v1938 = vmax.f32 %v1882, %v1919
        %v1939 = vmax.f32 %v1883, %v1920
        %v1940 = vmax.f32 %v1884, %v1921
        %v1941 = vmax.f32 %v1885, %v1922
        %v1942 = vmax.f32 %v1886, %v1923
        %v1943 = vmax.f32 %v1887, %v1934
        %v1944 = vpack.c.bf16 %v1935, %v1935
        %v1945 = vpack.c.bf16 %v1936, %v1936
        %v1946 = vpack.c.bf16 %v1937, %v1937
        %v1947 = vpack.c.bf16 %v1938, %v1938
        %v1948 = vpack.c.bf16 %v1939, %v1939
        %v1949 = vpack.c.bf16 %v1940, %v1940
        %v1950 = vpack.c.bf16 %v1941, %v1941
        %v1951 = vpack.c.bf16 %v1942, %v1942
        %v1952 = vpack.c.bf16 %v1943, %v1943
        %v1953 = vld [vmem:[#allocation3] sm:$0xff]
        %v1954 = vld [vmem:[#allocation3 + $0x8] sm:$0xff]
        %v1955 = vld [vmem:[#allocation3 + $0x10] sm:$0xff]
        %v1956 = vld [vmem:[#allocation3 + $0x18] sm:$0xff]
        %v1957 = vld [vmem:[#allocation3 + $0x20] sm:$0xff]
        %v1958 = vld [vmem:[#allocation3 + $0x28] sm:$0xff]
        %v1959 = vld [vmem:[#allocation3 + $0x30] sm:$0xff]
        %v1960 = vld [vmem:[#allocation3 + $0x38] sm:$0xff]
        %v1961 = vld [vmem:[#allocation3 + $0x40] sm:$0xff]
        %v1962 = vld [vmem:[#allocation3 + $0x48] sm:$0xff]
        %v1963 = vld [vmem:[#allocation3 + $0x50] sm:$0xff]
        %v1964 = vld [vmem:[#allocation3 + $0x58] sm:$0xff]
        %v1965 = vld [vmem:[#allocation3 + $0x60] sm:$0xff]
        %v1966 = vld [vmem:[#allocation3 + $0x68] sm:$0xff]
        %v1967 = vld [vmem:[#allocation3 + $0x70] sm:$0xff]
        %v1968 = vld [vmem:[#allocation3 + $0x78] sm:$0xff]
        %v1969 = vld [vmem:[#allocation3 + $0x80] sm:$0xff]
        %v1970 = vld [vmem:[#allocation3 + $0x88] sm:$0xff]
        %v1971 = vld [vmem:[#allocation3 + $0x90] sm:$0xff]
        %v1972 = vld [vmem:[#allocation3 + $0x98] sm:$0xff]
        %v1973 = vld [vmem:[#allocation3 + $0xa0] sm:$0xff]
        %v1974 = vld [vmem:[#allocation3 + $0xa8] sm:$0xff]
        %v1975 = vld [vmem:[#allocation3 + $0xb0] sm:$0xff]
        %v1976 = vld [vmem:[#allocation3 + $0xb8] sm:$0xff]
        %v1977 = vld [vmem:[#allocation3 + $0xc0] sm:$0xff]
        %v1978 = vld [vmem:[#allocation3 + $0xc8] sm:$0xff]
        %v1979 = vld [vmem:[#allocation3 + $0xd0] sm:$0xff]
        %v1980 = vld [vmem:[#allocation3 + $0xd8] sm:$0xff]
        %v1981 = vld [vmem:[#allocation3 + $0xe0] sm:$0xff]
        %v1982 = vld [vmem:[#allocation3 + $0xe8] sm:$0xff]
        %v1983 = vld [vmem:[#allocation3 + $0xf0] sm:$0xff]
        %v1984 = vld [vmem:[#allocation3 + $0xf8] sm:$0xff]
        %v1985 = vld [vmem:[#allocation3 + $0x100] sm:$0xff]
        %v1986 = vld [vmem:[#allocation3 + $0x108] sm:$0xff]
        %v1987 = vld [vmem:[#allocation3 + $0x110] sm:$0xff]
        %v1988 = vld [vmem:[#allocation3 + $0x118] sm:$0xff]
        %v1989 = vld [vmem:[#allocation3 + $0x120] sm:$0xff]
        %v1990 = vld [vmem:[#allocation3 + $0x128] sm:$0xff]
        %v1991 = vld [vmem:[#allocation3 + $0x130] sm:$0xff]
        %v1992 = vld [vmem:[#allocation3 + $0x138] sm:$0xff]
        %v1993 = vld [vmem:[#allocation3 + $0x140] sm:$0xff]
        %v1994 = vld [vmem:[#allocation3 + $0x148] sm:$0xff]
        %v1995 = vld [vmem:[#allocation3 + $0x150] sm:$0xff]
        %v1996 = vld [vmem:[#allocation3 + $0x158] sm:$0xff]
        %v1997 = vld [vmem:[#allocation3 + $0x160] sm:$0xff]
        %v1998 = vld [vmem:[#allocation3 + $0x168] sm:$0xff]
        %v1999 = vld [vmem:[#allocation3 + $0x170] sm:$0xff]
        %v2000 = vld [vmem:[#allocation3 + $0x178] sm:$0xff]
        %v2001 = vld [vmem:[#allocation3 + $0x180] sm:$0xff]
        %v2002 = vld [vmem:[#allocation3 + $0x188] sm:$0xff]
        %v2003 = vld [vmem:[#allocation3 + $0x190] sm:$0xff]
        %v2004 = vld [vmem:[#allocation3 + $0x198] sm:$0xff]
        %v2005 = vld [vmem:[#allocation3 + $0x1a0] sm:$0xff]
        %v2006 = vld [vmem:[#allocation3 + $0x1a8] sm:$0xff]
        %v2007 = vld [vmem:[#allocation3 + $0x1b0] sm:$0xff]
        %v2008 = vld [vmem:[#allocation3 + $0x1b8] sm:$0xff]
        %v2009 = vld [vmem:[#allocation3 + $0x1c0] sm:$0xff]
        %v2010 = vld [vmem:[#allocation3 + $0x1c8] sm:$0xff]
        %v2011 = vld [vmem:[#allocation3 + $0x1d0] sm:$0xff]
        %v2012 = vld [vmem:[#allocation3 + $0x1d8] sm:$0xff]
        %v2013 = vld [vmem:[#allocation3 + $0x1e0] sm:$0xff]
        %v2014 = vld [vmem:[#allocation3 + $0x1e8] sm:$0xff]
        %v2015 = vld [vmem:[#allocation3 + $0x1f0] sm:$0xff]
        %v2016 = vld [vmem:[#allocation3 + $0x1f8] sm:$0xff]
        %v2017 = vld [vmem:[#allocation3 + $0x200] sm:$0xff]
        %v2018 = vld [vmem:[#allocation3 + $0x208] sm:$0xff]
        %v2019 = vld [vmem:[#allocation3 + $0x210] sm:$0xff]
        %v2020 = vld [vmem:[#allocation3 + $0x218] sm:$0xff]
        %v2021 = vld [vmem:[#allocation3 + $0x220] sm:$0xff]
        %v2022 = vld [vmem:[#allocation3 + $0x228] sm:$0xff]
        %v2023 = vld [vmem:[#allocation3 + $0x230] sm:$0xff]
        %v2024 = vld [vmem:[#allocation3 + $0x238] sm:$0xff]
        %v2025 = vld [vmem:[#allocation3 + $0x240] sm:$0xff]
        %v2026 = vld [vmem:[#allocation3 + $0x248] sm:$0xff]
        %v2027 = vld [vmem:[#allocation3 + $0x250] sm:$0xff]
        %v2028 = vld [vmem:[#allocation3 + $0x258] sm:$0xff]
        %v2029 = vld [vmem:[#allocation3 + $0x260] sm:$0xff]
        %v2030 = vld [vmem:[#allocation3 + $0x268] sm:$0xff]
        %v2031 = vld [vmem:[#allocation3 + $0x270] sm:$0xff]
        %v2032 = vld [vmem:[#allocation3 + $0x278] sm:$0xff]
        %v2033 = vld [vmem:[#allocation3 + $0x280] sm:$0xff]
        %v2034 = vld [vmem:[#allocation3 + $0x288] sm:$0xff]
        %v2035 = vld [vmem:[#allocation3 + $0x290] sm:$0xff]
        %v2036 = vld [vmem:[#allocation3 + $0x298] sm:$0xff]
        %v2037 = vld [vmem:[#allocation3 + $0x2a0] sm:$0xff]
        %v2038 = vld [vmem:[#allocation3 + $0x2a8] sm:$0xff]
        %v2039 = vld [vmem:[#allocation3 + $0x2b0] sm:$0xff]
        %v2040 = vld [vmem:[#allocation3 + $0x2b8] sm:$0xff]
        %v2041 = vld [vmem:[#allocation3 + $0x2c0] sm:$0xff]
        %v2042 = vld [vmem:[#allocation3 + $0x2c8] sm:$0xff]
        %v2043 = vld [vmem:[#allocation3 + $0x2d0] sm:$0xff]
        %v2044 = vld [vmem:[#allocation3 + $0x2d8] sm:$0xff]
        %v2045 = vld [vmem:[#allocation3 + $0x2e0] sm:$0xff]
        %v2046 = vld [vmem:[#allocation3 + $0x2e8] sm:$0xff]
        %v2047 = vld [vmem:[#allocation3 + $0x2f0] sm:$0xff]
        %v2048 = vld [vmem:[#allocation3 + $0x2f8] sm:$0xff]
        %v2049 = vld [vmem:[#allocation3 + $0x300] sm:$0xff]
        %v2050 = vld [vmem:[#allocation3 + $0x308] sm:$0xff]
        %v2051 = vld [vmem:[#allocation3 + $0x310] sm:$0xff]
        %v2052 = vld [vmem:[#allocation3 + $0x318] sm:$0xff]
        %v2053 = vld [vmem:[#allocation3 + $0x320] sm:$0xff]
        %v2054 = vld [vmem:[#allocation3 + $0x328] sm:$0xff]
        %v2055 = vld [vmem:[#allocation3 + $0x330] sm:$0xff]
        %v2056 = vld [vmem:[#allocation3 + $0x338] sm:$0xff]
        %v2057 = vld [vmem:[#allocation3 + $0x340] sm:$0xff]
        %v2058 = vld [vmem:[#allocation3 + $0x348] sm:$0xff]
        %v2059 = vld [vmem:[#allocation3 + $0x350] sm:$0xff]
        %v2060 = vld [vmem:[#allocation3 + $0x358] sm:$0xff]
        %v2061 = vld [vmem:[#allocation3 + $0x360] sm:$0xff]
        %v2062 = vld [vmem:[#allocation3 + $0x368] sm:$0xff]
        %v2063 = vld [vmem:[#allocation3 + $0x370] sm:$0xff]
        %v2064 = vld [vmem:[#allocation3 + $0x378] sm:$0xff]
        %v2065 = vld [vmem:[#allocation3 + $0x380] sm:$0xff]
        %v2066 = vld [vmem:[#allocation3 + $0x388] sm:$0xff]
        %v2067 = vld [vmem:[#allocation3 + $0x390] sm:$0xff]
        %v2068 = vld [vmem:[#allocation3 + $0x398] sm:$0xff]
        %v2069 = vld [vmem:[#allocation3 + $0x3a0] sm:$0xff]
        %v2070 = vld [vmem:[#allocation3 + $0x3a8] sm:$0xff]
        %v2071 = vld [vmem:[#allocation3 + $0x3b0] sm:$0xff]
        %v2072 = vld [vmem:[#allocation3 + $0x3b8] sm:$0xff]
        %v2073 = vld [vmem:[#allocation3 + $0x3c0] sm:$0xff]
        %v2074 = vld [vmem:[#allocation3 + $0x3c8] sm:$0xff]
        %v2075 = vld [vmem:[#allocation3 + $0x3d0] sm:$0xff]
        %v2076 = vld [vmem:[#allocation3 + $0x3d8] sm:$0xff]
        %v2077 = vld [vmem:[#allocation3 + $0x3e0] sm:$0xff]
        %v2078 = vld [vmem:[#allocation3 + $0x3e8] sm:$0xff]
        %v2079 = vld [vmem:[#allocation3 + $0x3f0] sm:$0xff]
        %v2080 = vld [vmem:[#allocation3 + $0x3f8] sm:$0xff]
        %v2081 = vld [vmem:[#allocation3 + $0x400] sm:$0xff]
        %v2082 = vld [vmem:[#allocation3 + $0x408] sm:$0xff]
        %v2083 = vld [vmem:[#allocation3 + $0x410] sm:$0xff]
        %v2084 = vld [vmem:[#allocation3 + $0x418] sm:$0xff]
        %v2085 = vld [vmem:[#allocation3 + $0x420] sm:$0xff]
        %v2086 = vld [vmem:[#allocation3 + $0x428] sm:$0xff]
        %v2087 = vld [vmem:[#allocation3 + $0x430] sm:$0xff]
        %v2088 = vld [vmem:[#allocation3 + $0x438] sm:$0xff]
        %v2089 = vld [vmem:[#allocation3 + $0x440] sm:$0xff]
        %v2090 = vld [vmem:[#allocation3 + $0x448] sm:$0xff]
        %v2091 = vld [vmem:[#allocation3 + $0x450] sm:$0xff]
        %v2092 = vld [vmem:[#allocation3 + $0x458] sm:$0xff]
        %v2093 = vld [vmem:[#allocation3 + $0x460] sm:$0xff]
        %v2094 = vld [vmem:[#allocation3 + $0x468] sm:$0xff]
        %v2095 = vld [vmem:[#allocation3 + $0x470] sm:$0xff]
        %v2096 = vld [vmem:[#allocation3 + $0x478] sm:$0xff]
        %v2241 = vunpack.c.l.b16 %v1953
        %v2242 = vunpack.c.h.b16 %v1953
        %v2243 = vunpack.c.l.b16 %v1954
        %v2244 = vunpack.c.h.b16 %v1954
        %v2245 = vunpack.c.l.b16 %v1955
        %v2246 = vunpack.c.h.b16 %v1955
        %v2247 = vunpack.c.l.b16 %v1956
        %v2248 = vunpack.c.h.b16 %v1956
        %v2249 = vunpack.c.l.b16 %v1957
        %v2250 = vunpack.c.h.b16 %v1957
        %v2251 = vunpack.c.l.b16 %v1958
        %v2252 = vunpack.c.h.b16 %v1958
        %v2253 = vunpack.c.l.b16 %v1959
        %v2254 = vunpack.c.h.b16 %v1959
        %v2255 = vunpack.c.l.b16 %v1960
        %v2256 = vunpack.c.h.b16 %v1960
        %v2257 = vunpack.c.l.b16 %v1961
        %v2258 = vunpack.c.h.b16 %v1961
        %v2259 = vunpack.c.l.b16 %v1962
        %v2260 = vunpack.c.h.b16 %v1962
        %v2261 = vunpack.c.l.b16 %v1963
        %v2262 = vunpack.c.h.b16 %v1963
        %v2263 = vunpack.c.l.b16 %v1964
        %v2264 = vunpack.c.h.b16 %v1964
        %v2265 = vunpack.c.l.b16 %v1965
        %v2266 = vunpack.c.h.b16 %v1965
        %v2267 = vunpack.c.l.b16 %v1966
        %v2268 = vunpack.c.h.b16 %v1966
        %v2269 = vunpack.c.l.b16 %v1967
        %v2270 = vunpack.c.h.b16 %v1967
        %v2271 = vunpack.c.l.b16 %v1968
        %v2272 = vunpack.c.h.b16 %v1968
        %v2273 = vunpack.c.l.b16 %v1969
        %v2274 = vunpack.c.h.b16 %v1969
        %v2275 = vunpack.c.l.b16 %v1970
        %v2276 = vunpack.c.h.b16 %v1970
        %v2277 = vunpack.c.l.b16 %v1971
        %v2278 = vunpack.c.h.b16 %v1971
        %v2279 = vunpack.c.l.b16 %v1972
        %v2280 = vunpack.c.h.b16 %v1972
        %v2281 = vunpack.c.l.b16 %v1973
        %v2282 = vunpack.c.h.b16 %v1973
        %v2283 = vunpack.c.l.b16 %v1974
        %v2284 = vunpack.c.h.b16 %v1974
        %v2285 = vunpack.c.l.b16 %v1975
        %v2286 = vunpack.c.h.b16 %v1975
        %v2287 = vunpack.c.l.b16 %v1976
        %v2288 = vunpack.c.h.b16 %v1976
        %v2289 = vunpack.c.l.b16 %v1977
        %v2290 = vunpack.c.h.b16 %v1977
        %v2291 = vunpack.c.l.b16 %v1978
        %v2292 = vunpack.c.h.b16 %v1978
        %v2293 = vunpack.c.l.b16 %v1979
        %v2294 = vunpack.c.h.b16 %v1979
        %v2295 = vunpack.c.l.b16 %v1980
        %v2296 = vunpack.c.h.b16 %v1980
        %v2297 = vunpack.c.l.b16 %v1981
        %v2298 = vunpack.c.h.b16 %v1981
        %v2299 = vunpack.c.l.b16 %v1982
        %v2300 = vunpack.c.h.b16 %v1982
        %v2301 = vunpack.c.l.b16 %v1983
        %v2302 = vunpack.c.h.b16 %v1983
        %v2303 = vunpack.c.l.b16 %v1984
        %v2304 = vunpack.c.h.b16 %v1984
        %v2305 = vunpack.c.l.b16 %v1985
        %v2306 = vunpack.c.h.b16 %v1985
        %v2307 = vunpack.c.l.b16 %v1986
        %v2308 = vunpack.c.h.b16 %v1986
        %v2309 = vunpack.c.l.b16 %v1987
        %v2310 = vunpack.c.h.b16 %v1987
        %v2311 = vunpack.c.l.b16 %v1988
        %v2312 = vunpack.c.h.b16 %v1988
        %v2313 = vunpack.c.l.b16 %v1989
        %v2314 = vunpack.c.h.b16 %v1989
        %v2315 = vunpack.c.l.b16 %v1990
        %v2316 = vunpack.c.h.b16 %v1990
        %v2317 = vunpack.c.l.b16 %v1991
        %v2318 = vunpack.c.h.b16 %v1991
        %v2319 = vunpack.c.l.b16 %v1992
        %v2320 = vunpack.c.h.b16 %v1992
        %v2321 = vunpack.c.l.b16 %v1993
        %v2322 = vunpack.c.h.b16 %v1993
        %v2323 = vunpack.c.l.b16 %v1994
        %v2324 = vunpack.c.h.b16 %v1994
        %v2325 = vunpack.c.l.b16 %v1995
        %v2326 = vunpack.c.h.b16 %v1995
        %v2327 = vunpack.c.l.b16 %v1996
        %v2328 = vunpack.c.h.b16 %v1996
        %v2329 = vunpack.c.l.b16 %v1997
        %v2330 = vunpack.c.h.b16 %v1997
        %v2331 = vunpack.c.l.b16 %v1998
        %v2332 = vunpack.c.h.b16 %v1998
        %v2333 = vunpack.c.l.b16 %v1999
        %v2334 = vunpack.c.h.b16 %v1999
        %v2335 = vunpack.c.l.b16 %v2000
        %v2336 = vunpack.c.h.b16 %v2000
        %v2337 = vunpack.c.l.b16 %v2001
        %v2338 = vunpack.c.h.b16 %v2001
        %v2339 = vunpack.c.l.b16 %v2002
        %v2340 = vunpack.c.h.b16 %v2002
        %v2341 = vunpack.c.l.b16 %v2003
        %v2342 = vunpack.c.h.b16 %v2003
        %v2343 = vunpack.c.l.b16 %v2004
        %v2344 = vunpack.c.h.b16 %v2004
        %v2345 = vunpack.c.l.b16 %v2005
        %v2346 = vunpack.c.h.b16 %v2005
        %v2347 = vunpack.c.l.b16 %v2006
        %v2348 = vunpack.c.h.b16 %v2006
        %v2349 = vunpack.c.l.b16 %v2007
        %v2350 = vunpack.c.h.b16 %v2007
        %v2351 = vunpack.c.l.b16 %v2008
        %v2352 = vunpack.c.h.b16 %v2008
        %v2353 = vunpack.c.l.b16 %v2009
        %v2354 = vunpack.c.h.b16 %v2009
        %v2355 = vunpack.c.l.b16 %v2010
        %v2356 = vunpack.c.h.b16 %v2010
        %v2357 = vunpack.c.l.b16 %v2011
        %v2358 = vunpack.c.h.b16 %v2011
        %v2359 = vunpack.c.l.b16 %v2012
        %v2360 = vunpack.c.h.b16 %v2012
        %v2361 = vunpack.c.l.b16 %v2013
        %v2362 = vunpack.c.h.b16 %v2013
        %v2363 = vunpack.c.l.b16 %v2014
        %v2364 = vunpack.c.h.b16 %v2014
        %v2365 = vunpack.c.l.b16 %v2015
        %v2366 = vunpack.c.h.b16 %v2015
        %v2367 = vunpack.c.l.b16 %v2016
        %v2368 = vunpack.c.h.b16 %v2016
        %v2369 = vunpack.c.l.b16 %v2017
        %v2370 = vunpack.c.h.b16 %v2017
        %v2371 = vunpack.c.l.b16 %v2018
        %v2372 = vunpack.c.h.b16 %v2018
        %v2373 = vunpack.c.l.b16 %v2019
        %v2374 = vunpack.c.h.b16 %v2019
        %v2375 = vunpack.c.l.b16 %v2020
        %v2376 = vunpack.c.h.b16 %v2020
        %v2377 = vunpack.c.l.b16 %v2021
        %v2378 = vunpack.c.h.b16 %v2021
        %v2379 = vunpack.c.l.b16 %v2022
        %v2380 = vunpack.c.h.b16 %v2022
        %v2381 = vunpack.c.l.b16 %v2023
        %v2382 = vunpack.c.h.b16 %v2023
        %v2383 = vunpack.c.l.b16 %v2024
        %v2384 = vunpack.c.h.b16 %v2024
        %v2385 = vunpack.c.l.b16 %v2025
        %v2386 = vunpack.c.h.b16 %v2025
        %v2387 = vunpack.c.l.b16 %v2026
        %v2388 = vunpack.c.h.b16 %v2026
        %v2389 = vunpack.c.l.b16 %v2027
        %v2390 = vunpack.c.h.b16 %v2027
        %v2391 = vunpack.c.l.b16 %v2028
        %v2392 = vunpack.c.h.b16 %v2028
        %v2393 = vunpack.c.l.b16 %v2029
        %v2394 = vunpack.c.h.b16 %v2029
        %v2395 = vunpack.c.l.b16 %v2030
        %v2396 = vunpack.c.h.b16 %v2030
        %v2397 = vunpack.c.l.b16 %v2031
        %v2398 = vunpack.c.h.b16 %v2031
        %v2399 = vunpack.c.l.b16 %v2032
        %v2400 = vunpack.c.h.b16 %v2032
        %v2401 = vunpack.c.l.b16 %v2033
        %v2402 = vunpack.c.h.b16 %v2033
        %v2403 = vunpack.c.l.b16 %v2034
        %v2404 = vunpack.c.h.b16 %v2034
        %v2405 = vunpack.c.l.b16 %v2035
        %v2406 = vunpack.c.h.b16 %v2035
        %v2407 = vunpack.c.l.b16 %v2036
        %v2408 = vunpack.c.h.b16 %v2036
        %v2409 = vunpack.c.l.b16 %v2037
        %v2410 = vunpack.c.h.b16 %v2037
        %v2411 = vunpack.c.l.b16 %v2038
        %v2412 = vunpack.c.h.b16 %v2038
        %v2413 = vunpack.c.l.b16 %v2039
        %v2414 = vunpack.c.h.b16 %v2039
        %v2415 = vunpack.c.l.b16 %v2040
        %v2416 = vunpack.c.h.b16 %v2040
        %v2417 = vunpack.c.l.b16 %v2041
        %v2418 = vunpack.c.h.b16 %v2041
        %v2419 = vunpack.c.l.b16 %v2042
        %v2420 = vunpack.c.h.b16 %v2042
        %v2421 = vunpack.c.l.b16 %v2043
        %v2422 = vunpack.c.h.b16 %v2043
        %v2423 = vunpack.c.l.b16 %v2044
        %v2424 = vunpack.c.h.b16 %v2044
        %v2425 = vunpack.c.l.b16 %v2045
        %v2426 = vunpack.c.h.b16 %v2045
        %v2427 = vunpack.c.l.b16 %v2046
        %v2428 = vunpack.c.h.b16 %v2046
        %v2429 = vunpack.c.l.b16 %v2047
        %v2430 = vunpack.c.h.b16 %v2047
        %v2431 = vunpack.c.l.b16 %v2048
        %v2432 = vunpack.c.h.b16 %v2048
        %v2433 = vunpack.c.l.b16 %v2049
        %v2434 = vunpack.c.h.b16 %v2049
        %v2435 = vunpack.c.l.b16 %v2050
        %v2436 = vunpack.c.h.b16 %v2050
        %v2437 = vunpack.c.l.b16 %v2051
        %v2438 = vunpack.c.h.b16 %v2051
        %v2439 = vunpack.c.l.b16 %v2052
        %v2440 = vunpack.c.h.b16 %v2052
        %v2441 = vunpack.c.l.b16 %v2053
        %v2442 = vunpack.c.h.b16 %v2053
        %v2443 = vunpack.c.l.b16 %v2054
        %v2444 = vunpack.c.h.b16 %v2054
        %v2445 = vunpack.c.l.b16 %v2055
        %v2446 = vunpack.c.h.b16 %v2055
        %v2447 = vunpack.c.l.b16 %v2056
        %v2448 = vunpack.c.h.b16 %v2056
        %v2449 = vunpack.c.l.b16 %v2057
        %v2450 = vunpack.c.h.b16 %v2057
        %v2451 = vunpack.c.l.b16 %v2058
        %v2452 = vunpack.c.h.b16 %v2058
        %v2453 = vunpack.c.l.b16 %v2059
        %v2454 = vunpack.c.h.b16 %v2059
        %v2455 = vunpack.c.l.b16 %v2060
        %v2456 = vunpack.c.h.b16 %v2060
        %v2457 = vunpack.c.l.b16 %v2061
        %v2458 = vunpack.c.h.b16 %v2061
        %v2459 = vunpack.c.l.b16 %v2062
        %v2460 = vunpack.c.h.b16 %v2062
        %v2461 = vunpack.c.l.b16 %v2063
        %v2462 = vunpack.c.h.b16 %v2063
        %v2463 = vunpack.c.l.b16 %v2064
        %v2464 = vunpack.c.h.b16 %v2064
        %v2465 = vunpack.c.l.b16 %v2065
        %v2466 = vunpack.c.h.b16 %v2065
        %v2467 = vunpack.c.l.b16 %v2066
        %v2468 = vunpack.c.h.b16 %v2066
        %v2469 = vunpack.c.l.b16 %v2067
        %v2470 = vunpack.c.h.b16 %v2067
        %v2471 = vunpack.c.l.b16 %v2068
        %v2472 = vunpack.c.h.b16 %v2068
        %v2473 = vunpack.c.l.b16 %v2069
        %v2474 = vunpack.c.h.b16 %v2069
        %v2475 = vunpack.c.l.b16 %v2070
        %v2476 = vunpack.c.h.b16 %v2070
        %v2477 = vunpack.c.l.b16 %v2071
        %v2478 = vunpack.c.h.b16 %v2071
        %v2479 = vunpack.c.l.b16 %v2072
        %v2480 = vunpack.c.h.b16 %v2072
        %v2481 = vunpack.c.l.b16 %v2073
        %v2482 = vunpack.c.h.b16 %v2073
        %v2483 = vunpack.c.l.b16 %v2074
        %v2484 = vunpack.c.h.b16 %v2074
        %v2485 = vunpack.c.l.b16 %v2075
        %v2486 = vunpack.c.h.b16 %v2075
        %v2487 = vunpack.c.l.b16 %v2076
        %v2488 = vunpack.c.h.b16 %v2076
        %v2489 = vunpack.c.l.b16 %v2077
        %v2490 = vunpack.c.h.b16 %v2077
        %v2491 = vunpack.c.l.b16 %v2078
        %v2492 = vunpack.c.h.b16 %v2078
        %v2493 = vunpack.c.l.b16 %v2079
        %v2494 = vunpack.c.h.b16 %v2079
        %v2495 = vunpack.c.l.b16 %v2080
        %v2496 = vunpack.c.h.b16 %v2080
        %v2497 = vunpack.c.l.b16 %v2081
        %v2498 = vunpack.c.h.b16 %v2081
        %v2499 = vunpack.c.l.b16 %v2082
        %v2500 = vunpack.c.h.b16 %v2082
        %v2501 = vunpack.c.l.b16 %v2083
        %v2502 = vunpack.c.h.b16 %v2083
        %v2503 = vunpack.c.l.b16 %v2084
        %v2504 = vunpack.c.h.b16 %v2084
        %v2505 = vunpack.c.l.b16 %v2085
        %v2506 = vunpack.c.h.b16 %v2085
        %v2507 = vunpack.c.l.b16 %v2086
        %v2508 = vunpack.c.h.b16 %v2086
        %v2509 = vunpack.c.l.b16 %v2087
        %v2510 = vunpack.c.h.b16 %v2087
        %v2511 = vunpack.c.l.b16 %v2088
        %v2512 = vunpack.c.h.b16 %v2088
        %v2513 = vunpack.c.l.b16 %v2089
        %v2514 = vunpack.c.h.b16 %v2089
        %v2515 = vunpack.c.l.b16 %v2090
        %v2516 = vunpack.c.h.b16 %v2090
        %v2517 = vunpack.c.l.b16 %v2091
        %v2518 = vunpack.c.h.b16 %v2091
        %v2519 = vunpack.c.l.b16 %v2092
        %v2520 = vunpack.c.h.b16 %v2092
        %v2521 = vunpack.c.l.b16 %v2093
        %v2522 = vunpack.c.h.b16 %v2093
        %v2523 = vunpack.c.l.b16 %v2094
        %v2524 = vunpack.c.h.b16 %v2094
        %v2525 = vunpack.c.l.b16 %v2095
        %v2526 = vunpack.c.h.b16 %v2095
        %v2527 = vunpack.c.l.b16 %v2096
        %v2528 = vunpack.c.h.b16 %v2096
        %v2529 = vpack.c.b16 %v2243, %v2241
        %v2530 = vpack.c.b16 %v2244, %v2242
        %v2531 = vpack.c.b16 %v2247, %v2245
        %v2532 = vpack.c.b16 %v2248, %v2246
        %v2533 = vpack.c.b16 %v2251, %v2249
        %v2534 = vpack.c.b16 %v2252, %v2250
        %v2535 = vpack.c.b16 %v2255, %v2253
        %v2536 = vpack.c.b16 %v2256, %v2254
        %v2537 = vpack.c.b16 %v2259, %v2257
        %v2538 = vpack.c.b16 %v2260, %v2258
        %v2539 = vpack.c.b16 %v2263, %v2261
        %v2540 = vpack.c.b16 %v2264, %v2262
        %v2541 = vpack.c.b16 %v2267, %v2265
        %v2542 = vpack.c.b16 %v2268, %v2266
        %v2543 = vpack.c.b16 %v2271, %v2269
        %v2544 = vpack.c.b16 %v2272, %v2270
        %v2545 = vpack.c.b16 %v2275, %v2273
        %v2546 = vpack.c.b16 %v2276, %v2274
        %v2547 = vpack.c.b16 %v2279, %v2277
        %v2548 = vpack.c.b16 %v2280, %v2278
        %v2549 = vpack.c.b16 %v2283, %v2281
        %v2550 = vpack.c.b16 %v2284, %v2282
        %v2551 = vpack.c.b16 %v2287, %v2285
        %v2552 = vpack.c.b16 %v2288, %v2286
        %v2553 = vpack.c.b16 %v2291, %v2289
        %v2554 = vpack.c.b16 %v2292, %v2290
        %v2555 = vpack.c.b16 %v2295, %v2293
        %v2556 = vpack.c.b16 %v2296, %v2294
        %v2557 = vpack.c.b16 %v2299, %v2297
        %v2558 = vpack.c.b16 %v2300, %v2298
        %v2559 = vpack.c.b16 %v2303, %v2301
        %v2560 = vpack.c.b16 %v2304, %v2302
        %v2561 = vpack.c.b16 %v2307, %v2305
        %v2562 = vpack.c.b16 %v2308, %v2306
        %v2563 = vpack.c.b16 %v2311, %v2309
        %v2564 = vpack.c.b16 %v2312, %v2310
        %v2565 = vpack.c.b16 %v2315, %v2313
        %v2566 = vpack.c.b16 %v2316, %v2314
        %v2567 = vpack.c.b16 %v2319, %v2317
        %v2568 = vpack.c.b16 %v2320, %v2318
        %v2569 = vpack.c.b16 %v2323, %v2321
        %v2570 = vpack.c.b16 %v2324, %v2322
        %v2571 = vpack.c.b16 %v2327, %v2325
        %v2572 = vpack.c.b16 %v2328, %v2326
        %v2573 = vpack.c.b16 %v2331, %v2329
        %v2574 = vpack.c.b16 %v2332, %v2330
        %v2575 = vpack.c.b16 %v2335, %v2333
        %v2576 = vpack.c.b16 %v2336, %v2334
        %v2577 = vpack.c.b16 %v2339, %v2337
        %v2578 = vpack.c.b16 %v2340, %v2338
        %v2579 = vpack.c.b16 %v2343, %v2341
        %v2580 = vpack.c.b16 %v2344, %v2342
        %v2581 = vpack.c.b16 %v2347, %v2345
        %v2582 = vpack.c.b16 %v2348, %v2346
        %v2583 = vpack.c.b16 %v2351, %v2349
        %v2584 = vpack.c.b16 %v2352, %v2350
        %v2585 = vpack.c.b16 %v2355, %v2353
        %v2586 = vpack.c.b16 %v2356, %v2354
        %v2587 = vpack.c.b16 %v2359, %v2357
        %v2588 = vpack.c.b16 %v2360, %v2358
        %v2589 = vpack.c.b16 %v2363, %v2361
        %v2590 = vpack.c.b16 %v2364, %v2362
        %v2591 = vpack.c.b16 %v2367, %v2365
        %v2592 = vpack.c.b16 %v2368, %v2366
        %v2593 = vpack.c.b16 %v2371, %v2369
        %v2594 = vpack.c.b16 %v2372, %v2370
        %v2595 = vpack.c.b16 %v2375, %v2373
        %v2596 = vpack.c.b16 %v2376, %v2374
        %v2597 = vpack.c.b16 %v2379, %v2377
        %v2598 = vpack.c.b16 %v2380, %v2378
        %v2599 = vpack.c.b16 %v2383, %v2381
        %v2600 = vpack.c.b16 %v2384, %v2382
        %v2601 = vpack.c.b16 %v2387, %v2385
        %v2602 = vpack.c.b16 %v2388, %v2386
        %v2603 = vpack.c.b16 %v2391, %v2389
        %v2604 = vpack.c.b16 %v2392, %v2390
        %v2605 = vpack.c.b16 %v2395, %v2393
        %v2606 = vpack.c.b16 %v2396, %v2394
        %v2607 = vpack.c.b16 %v2399, %v2397
        %v2608 = vpack.c.b16 %v2400, %v2398
        %v2609 = vpack.c.b16 %v2403, %v2401
        %v2610 = vpack.c.b16 %v2404, %v2402
        %v2611 = vpack.c.b16 %v2407, %v2405
        %v2612 = vpack.c.b16 %v2408, %v2406
        %v2613 = vpack.c.b16 %v2411, %v2409
        %v2614 = vpack.c.b16 %v2412, %v2410
        %v2615 = vpack.c.b16 %v2415, %v2413
        %v2616 = vpack.c.b16 %v2416, %v2414
        %v2617 = vpack.c.b16 %v2419, %v2417
        %v2618 = vpack.c.b16 %v2420, %v2418
        %v2619 = vpack.c.b16 %v2423, %v2421
        %v2620 = vpack.c.b16 %v2424, %v2422
        %v2621 = vpack.c.b16 %v2427, %v2425
        %v2622 = vpack.c.b16 %v2428, %v2426
        %v2623 = vpack.c.b16 %v2431, %v2429
        %v2624 = vpack.c.b16 %v2432, %v2430
        %v2625 = vpack.c.b16 %v2435, %v2433
        %v2626 = vpack.c.b16 %v2436, %v2434
        %v2627 = vpack.c.b16 %v2439, %v2437
        %v2628 = vpack.c.b16 %v2440, %v2438
        %v2629 = vpack.c.b16 %v2443, %v2441
        %v2630 = vpack.c.b16 %v2444, %v2442
        %v2631 = vpack.c.b16 %v2447, %v2445
        %v2632 = vpack.c.b16 %v2448, %v2446
        %v2633 = vpack.c.b16 %v2451, %v2449
        %v2634 = vpack.c.b16 %v2452, %v2450
        %v2635 = vpack.c.b16 %v2455, %v2453
        %v2636 = vpack.c.b16 %v2456, %v2454
        %v2637 = vpack.c.b16 %v2459, %v2457
        %v2638 = vpack.c.b16 %v2460, %v2458
        %v2639 = vpack.c.b16 %v2463, %v2461
        %v2640 = vpack.c.b16 %v2464, %v2462
        %v2641 = vpack.c.b16 %v2467, %v2465
        %v2642 = vpack.c.b16 %v2468, %v2466
        %v2643 = vpack.c.b16 %v2471, %v2469
        %v2644 = vpack.c.b16 %v2472, %v2470
        %v2645 = vpack.c.b16 %v2475, %v2473
        %v2646 = vpack.c.b16 %v2476, %v2474
        %v2647 = vpack.c.b16 %v2479, %v2477
        %v2648 = vpack.c.b16 %v2480, %v2478
        %v2649 = vpack.c.b16 %v2483, %v2481
        %v2650 = vpack.c.b16 %v2484, %v2482
        %v2651 = vpack.c.b16 %v2487, %v2485
        %v2652 = vpack.c.b16 %v2488, %v2486
        %v2653 = vpack.c.b16 %v2491, %v2489
        %v2654 = vpack.c.b16 %v2492, %v2490
        %v2655 = vpack.c.b16 %v2495, %v2493
        %v2656 = vpack.c.b16 %v2496, %v2494
        %v2657 = vpack.c.b16 %v2499, %v2497
        %v2658 = vpack.c.b16 %v2500, %v2498
        %v2659 = vpack.c.b16 %v2503, %v2501
        %v2660 = vpack.c.b16 %v2504, %v2502
        %v2661 = vpack.c.b16 %v2507, %v2505
        %v2662 = vpack.c.b16 %v2508, %v2506
        %v2663 = vpack.c.b16 %v2511, %v2509
        %v2664 = vpack.c.b16 %v2512, %v2510
        %v2665 = vpack.c.b16 %v2515, %v2513
        %v2666 = vpack.c.b16 %v2516, %v2514
        %v2667 = vpack.c.b16 %v2519, %v2517
        %v2668 = vpack.c.b16 %v2520, %v2518
        %v2669 = vpack.c.b16 %v2523, %v2521
        %v2670 = vpack.c.b16 %v2524, %v2522
        %v2671 = vpack.c.b16 %v2527, %v2525
        %v2672 = vpack.c.b16 %v2528, %v2526
        %2817 = vmatprep.subr.bf16.mxu0 %v2530
        %2818 = vmatpush1.bf16.msra.mxu0 %v2529
        %2819 = vmatprep.subr.bf16.mxu0 %v2532
        %2820 = vmatpush1.bf16.msra.mxu0 %v2531
        %2821 = vmatprep.subr.bf16.mxu0 %v2534
        %2822 = vmatpush1.bf16.msra.mxu0 %v2533
        %2823 = vmatprep.subr.bf16.mxu0 %v2536
        %2824 = vmatpush1.bf16.msra.mxu0 %v2535
        %2825 = vmatprep.subr.bf16.mxu0 %v2538
        %2826 = vmatpush1.bf16.msra.mxu0 %v2537
        %2827 = vmatprep.subr.bf16.mxu0 %v2540
        %2828 = vmatpush1.bf16.msra.mxu0 %v2539
        %2829 = vmatprep.subr.bf16.mxu0 %v2542
        %2830 = vmatpush1.bf16.msra.mxu0 %v2541
        %2831 = vmatprep.subr.bf16.mxu0 %v2544
        %2832 = vmatpush1.bf16.msra.mxu0 %v2543
        %2833 = vmatprep.subr.bf16.mxu0 %v2546
        %2834 = vmatpush1.bf16.msra.mxu0 %v2545
        %2835 = vmatprep.subr.bf16.mxu0 %v2548
        %2836 = vmatpush1.bf16.msra.mxu0 %v2547
        %2837 = vmatprep.subr.bf16.mxu0 %v2550
        %2838 = vmatpush1.bf16.msra.mxu0 %v2549
        %2839 = vmatprep.subr.bf16.mxu0 %v2552
        %2840 = vmatpush1.bf16.msra.mxu0 %v2551
        %2841 = vmatprep.subr.bf16.mxu0 %v2554
        %2842 = vmatpush1.bf16.msra.mxu0 %v2553
        %2843 = vmatprep.subr.bf16.mxu0 %v2556
        %2844 = vmatpush1.bf16.msra.mxu0 %v2555
        %2845 = vmatprep.subr.bf16.mxu0 %v2558
        %2846 = vmatpush1.bf16.msra.mxu0 %v2557
        %2847 = vmatprep.subr.bf16.mxu0 %v2560
        %2848 = vmatpush1.bf16.msra.mxu0 %v2559
        %2849 = vmatprep.mubr.bf16.mxu0 %v1945
        %2850 = vmatmul.mubr.bf16.gmra.mrb[0].mxu0 %v1944
        %v2851 = vpop.f32.mrb[0].mxu0
        %v2852 = vadd.f32 0.0, %v2851
        %v2853 = vpop.f32.mrb[0].mxu0
        %v2854 = vadd.f32 0.0, %v2853
        %v2855 = vpop.f32.mrb[0].mxu0
        %v2856 = vpop.f32.mrb[0].mxu0
        %2857 = vdwg.mxu0
        %2858 = vmatprep.subr.bf16.mxu0 %v2562
        %2859 = vmatpush1.bf16.msra.mxu0 %v2561
        %2860 = vmatprep.subr.bf16.mxu0 %v2564
        %2861 = vmatpush1.bf16.msra.mxu0 %v2563
        %2862 = vmatprep.subr.bf16.mxu0 %v2566
        %2863 = vmatpush1.bf16.msra.mxu0 %v2565
        %2864 = vmatprep.subr.bf16.mxu0 %v2568
        %2865 = vmatpush1.bf16.msra.mxu0 %v2567
        %2866 = vmatprep.subr.bf16.mxu0 %v2570
        %2867 = vmatpush1.bf16.msra.mxu0 %v2569
        %2868 = vmatprep.subr.bf16.mxu0 %v2572
        %2869 = vmatpush1.bf16.msra.mxu0 %v2571
        %2870 = vmatprep.subr.bf16.mxu0 %v2574
        %2871 = vmatpush1.bf16.msra.mxu0 %v2573
        %2872 = vmatprep.subr.bf16.mxu0 %v2576
        %2873 = vmatpush1.bf16.msra.mxu0 %v2575
        %2874 = vmatprep.subr.bf16.mxu0 %v2578
        %2875 = vmatpush1.bf16.msra.mxu0 %v2577
        %2876 = vmatprep.subr.bf16.mxu0 %v2580
        %2877 = vmatpush1.bf16.msra.mxu0 %v2579
        %2878 = vmatprep.subr.bf16.mxu0 %v2582
        %2879 = vmatpush1.bf16.msra.mxu0 %v2581
        %2880 = vmatprep.subr.bf16.mxu0 %v2584
        %2881 = vmatpush1.bf16.msra.mxu0 %v2583
        %2882 = vmatprep.subr.bf16.mxu0 %v2586
        %2883 = vmatpush1.bf16.msra.mxu0 %v2585
        %2884 = vmatprep.subr.bf16.mxu0 %v2588
        %2885 = vmatpush1.bf16.msra.mxu0 %v2587
        %2886 = vmatprep.subr.bf16.mxu0 %v2590
        %2887 = vmatpush1.bf16.msra.mxu0 %v2589
        %2888 = vmatprep.subr.bf16.mxu0 %v2592
        %2889 = vmatpush1.bf16.msra.mxu0 %v2591
        %2890 = vmatprep.mubr.bf16.mxu0 %v1947
        %2891 = vmatmul.mubr.bf16.gmra.mrb[0].mxu0 %v1946
        %v2892 = vpop.f32.mrb[0].mxu0
        %v2893 = vadd.f32 %v2852, %v2892
        %v2894 = vpop.f32.mrb[0].mxu0
        %v2895 = vadd.f32 %v2854, %v2894
        %v2896 = vpop.f32.mrb[0].mxu0
        %v2897 = vpop.f32.mrb[0].mxu0
        %2898 = vdwg.mxu0
        %2899 = vmatprep.subr.bf16.mxu0 %v2594
        %2900 = vmatpush1.bf16.msra.mxu0 %v2593
        %2901 = vmatprep.subr.bf16.mxu0 %v2596
        %2902 = vmatpush1.bf16.msra.mxu0 %v2595
        %2903 = vmatprep.subr.bf16.mxu0 %v2598
        %2904 = vmatpush1.bf16.msra.mxu0 %v2597
        %2905 = vmatprep.subr.bf16.mxu0 %v2600
        %2906 = vmatpush1.bf16.msra.mxu0 %v2599
        %2907 = vmatprep.subr.bf16.mxu0 %v2602
        %2908 = vmatpush1.bf16.msra.mxu0 %v2601
        %2909 = vmatprep.subr.bf16.mxu0 %v2604
        %2910 = vmatpush1.bf16.msra.mxu0 %v2603
        %2911 = vmatprep.subr.bf16.mxu0 %v2606
        %2912 = vmatpush1.bf16.msra.mxu0 %v2605
        %2913 = vmatprep.subr.bf16.mxu0 %v2608
        %2914 = vmatpush1.bf16.msra.mxu0 %v2607
        %2915 = vmatprep.subr.bf16.mxu0 %v2610
        %2916 = vmatpush1.bf16.msra.mxu0 %v2609
        %2917 = vmatprep.subr.bf16.mxu0 %v2612
        %2918 = vmatpush1.bf16.msra.mxu0 %v2611
        %2919 = vmatprep.subr.bf16.mxu0 %v2614
        %2920 = vmatpush1.bf16.msra.mxu0 %v2613
        %2921 = vmatprep.subr.bf16.mxu0 %v2616
        %2922 = vmatpush1.bf16.msra.mxu0 %v2615
        %2923 = vmatprep.subr.bf16.mxu0 %v2618
        %2924 = vmatpush1.bf16.msra.mxu0 %v2617
        %2925 = vmatprep.subr.bf16.mxu0 %v2620
        %2926 = vmatpush1.bf16.msra.mxu0 %v2619
        %2927 = vmatprep.subr.bf16.mxu0 %v2622
        %2928 = vmatpush1.bf16.msra.mxu0 %v2621
        %2929 = vmatprep.subr.bf16.mxu0 %v2624
        %2930 = vmatpush1.bf16.msra.mxu0 %v2623
        %2931 = vmatprep.mubr.bf16.mxu0 %v1949
        %2932 = vmatmul.mubr.bf16.gmra.mrb[0].mxu0 %v1948
        %v2933 = vpop.f32.mrb[0].mxu0
        %v2934 = vadd.f32 %v2893, %v2933
        %v2935 = vpop.f32.mrb[0].mxu0
        %v2936 = vadd.f32 %v2895, %v2935
        %v2937 = vpop.f32.mrb[0].mxu0
        %v2938 = vpop.f32.mrb[0].mxu0
        %2939 = vdwg.mxu0
        %2940 = vmatprep.subr.bf16.mxu0 %v2626
        %2941 = vmatpush1.bf16.msra.mxu0 %v2625
        %2942 = vmatprep.subr.bf16.mxu0 %v2628
        %2943 = vmatpush1.bf16.msra.mxu0 %v2627
        %2944 = vmatprep.subr.bf16.mxu0 %v2630
        %2945 = vmatpush1.bf16.msra.mxu0 %v2629
        %2946 = vmatprep.subr.bf16.mxu0 %v2632
        %2947 = vmatpush1.bf16.msra.mxu0 %v2631
        %2948 = vmatprep.subr.bf16.mxu0 %v2634
        %2949 = vmatpush1.bf16.msra.mxu0 %v2633
        %2950 = vmatprep.subr.bf16.mxu0 %v2636
        %2951 = vmatpush1.bf16.msra.mxu0 %v2635
        %2952 = vmatprep.subr.bf16.mxu0 %v2638
        %2953 = vmatpush1.bf16.msra.mxu0 %v2637
        %2954 = vmatprep.subr.bf16.mxu0 %v2640
        %2955 = vmatpush1.bf16.msra.mxu0 %v2639
        %2956 = vmatprep.subr.bf16.mxu0 %v2642
        %2957 = vmatpush1.bf16.msra.mxu0 %v2641
        %2958 = vmatprep.subr.bf16.mxu0 %v2644
        %2959 = vmatpush1.bf16.msra.mxu0 %v2643
        %2960 = vmatprep.subr.bf16.mxu0 %v2646
        %2961 = vmatpush1.bf16.msra.mxu0 %v2645
        %2962 = vmatprep.subr.bf16.mxu0 %v2648
        %2963 = vmatpush1.bf16.msra.mxu0 %v2647
        %2964 = vmatprep.subr.bf16.mxu0 %v2650
        %2965 = vmatpush1.bf16.msra.mxu0 %v2649
        %2966 = vmatprep.subr.bf16.mxu0 %v2652
        %2967 = vmatpush1.bf16.msra.mxu0 %v2651
        %2968 = vmatprep.subr.bf16.mxu0 %v2654
        %2969 = vmatpush1.bf16.msra.mxu0 %v2653
        %2970 = vmatprep.subr.bf16.mxu0 %v2656
        %2971 = vmatpush1.bf16.msra.mxu0 %v2655
        %2972 = vmatprep.mubr.bf16.mxu0 %v1951
        %2973 = vmatmul.mubr.bf16.gmra.mrb[0].mxu0 %v1950
        %v2974 = vpop.f32.mrb[0].mxu0
        %v2975 = vadd.f32 %v2934, %v2974
        %v2976 = vpop.f32.mrb[0].mxu0
        %v2977 = vadd.f32 %v2936, %v2976
        %v2978 = vpop.f32.mrb[0].mxu0
        %v2979 = vpop.f32.mrb[0].mxu0
        %2980 = vdwg.mxu0
        %2981 = vmatprep.subr.bf16.mxu0 %v2658
        %2982 = vmatpush1.bf16.msra.mxu0 %v2657
        %2983 = vmatprep.subr.bf16.mxu0 %v2660
        %2984 = vmatpush1.bf16.msra.mxu0 %v2659
        %2985 = vmatprep.subr.bf16.mxu0 %v2662
        %2986 = vmatpush1.bf16.msra.mxu0 %v2661
        %2987 = vmatprep.subr.bf16.mxu0 %v2664
        %2988 = vmatpush1.bf16.msra.mxu0 %v2663
        %2989 = vmatprep.subr.bf16.mxu0 %v2666
        %2990 = vmatpush1.bf16.msra.mxu0 %v2665
        %2991 = vmatprep.subr.bf16.mxu0 %v2668
        %2992 = vmatpush1.bf16.msra.mxu0 %v2667
        %2993 = vmatprep.subr.bf16.mxu0 %v2670
        %2994 = vmatpush1.bf16.msra.mxu0 %v2669
        %2995 = vmatprep.subr.bf16.mxu0 %v2672
        %2996 = vmatpush1.bf16.msra.mxu0 %v2671
        %2997 = vmatprep.subr.bf16.mxu0 0
        %2998 = vmatpush1.bf16.msra.mxu0 0
        %2999 = vmatprep.subr.bf16.mxu0 0
        %3000 = vmatpush1.bf16.msra.mxu0 0
        %3001 = vmatprep.subr.bf16.mxu0 0
        %3002 = vmatpush1.bf16.msra.mxu0 0
        %3003 = vmatprep.subr.bf16.mxu0 0
        %3004 = vmatpush1.bf16.msra.mxu0 0
        %3005 = vmatprep.subr.bf16.mxu0 0
        %3006 = vmatpush1.bf16.msra.mxu0 0
        %3007 = vmatprep.subr.bf16.mxu0 0
        %3008 = vmatpush1.bf16.msra.mxu0 0
        %3009 = vmatprep.subr.bf16.mxu0 0
        %3010 = vmatpush1.bf16.msra.mxu0 0
        %3011 = vmatprep.subr.bf16.mxu0 0
        %3012 = vmatpush1.bf16.msra.mxu0 0
        %3013 = vmatprep.mubr.bf16.mxu0 0
        %3014 = vmatmul.mubr.bf16.gmra.mrb[0].mxu0 %v1952
        %v3015 = vpop.f32.mrb[0].mxu0
        %v3016 = vadd.f32 %v2975, %v3015
        %v3017 = vpop.f32.mrb[0].mxu0
        %v3018 = vadd.f32 %v2977, %v3017
        %v3019 = vpop.f32.mrb[0].mxu0
        %v3020 = vpop.f32.mrb[0].mxu0
        %3021 = vdwg.mxu0
        %v3022 = vpack.c.bf16 %v3016, %v3016
        %v3023 = vpack.c.bf16 %v3018, %v3018
        %v3026 = vcombine.low %v3022, %v3023
        %v3028 = vunpack.c.l.s4 1983009808
        %v3029 = vunpack.c.0.s8 %v3028
        %v3030 = vlaneseq
        %v3031 = vshrl.u32 %v3030, 7
        %v3032 = vsub.s32 %v3029, %v3031
        %v3033 = vrot.slane %v3026, %v3032
        %3035 = vst [vmem:[%s209] sm:$0xf] %v3033
        %p3036 = scmp.lt.s32.totalorder %s16, 1
        %s3037 = scalar_select %p3036, %s16, 1
        %s3038 = smul.addr %s3037, 2
        %s3039 = smul.addr %s3038, 2
        %s3040 = scalar_lea.vmem %s4, %s3039
        // Predicated region
        $region41: #{stn_forward.5} parent=35 // pred_check
          %p3041 = pneg %p123
        $region42: #{stn_forward.5} parent=35 // pred_check_branch
          %3043 = sbr.rel (%p3041) target = $region44
        $region43: #{stn_forward.5} parent=35 // pred_region
          _
        $region44: #{stn_forward.5} parent=35 // pred_fallthru
          _
      $region36: #{stn_forward.5} parent=5 // pred_fallthru
        _
      %p3044 = scmp.le.s32.totalorder 2, %s11
      // Predicated region
      $region45: #{stn_forward.5} parent=5 // pred_check
        %p3045 = pneg %p3044
      $region46: #{stn_forward.5} parent=5 // pred_check_branch
        %3047 = sbr.rel (%p3045) target = $region48
      $region47: #{stn_forward.5} parent=5 // pred_region
        %s3048 = ssub.s32 %s11, 2
        // Predicated region
        $region49: #{stn_forward.5} parent=47 // pred_check
          %p3049 = pneg %p129
        $region50: #{stn_forward.5} parent=47 // pred_check_branch
          %3051 = sbr.rel (%p3049) target = $region52
        $region51: #{stn_forward.5} parent=47 // pred_region
          %p3052 = scmp.lt.s32.totalorder %s17, 1
          %s3053 = scalar_select %p3052, %s17, 1
          %s3054 = smul.addr %s3053, 2
          %s3055 = smul.addr %s3054, 2
          %s3056 = scalar_lea.vmem %s4, %s3055
        $region52: #{stn_forward.5} parent=47 // pred_fallthru
          _
      $region48: #{stn_forward.5} parent=5 // pred_fallthru
        _
    $region6: #{stn_forward.5} parent=1 // loop_footer
      %s15 = sadd.s32 1, %s11
    $region7: #{stn_forward.5} parent=1 // loop_footer_branch
      %10 = sbr.rel target = $region3
    $region8: #{stn_forward.5} parent=1 // loop_exit
      _
    %3057 = vsyncpa [#allocation4], 1
    %s3058 = scalar_lea.sflag [#allocation4], 1
    %3059 = vsyncpa %s3058, 1

// kernel: stn_forward.9
$region0: #{stn_forward.9}
  #allocation0 [shape = 'u32[]', space=smem, size = 0x4, offset = 0x4, fixed_abs, tag = 'smem constant byte address 0x4 - core index']
  #allocation1 [shape = 'u32[144,128]{1,0:T(1,128)}', space=vmem, size = 0x12000, scoped, tag = 'internal scratch']
  %s0 = inlined_call_operand.vmem [shape: f32[2,1,1024], index: 0, kind: input, shape index: {}]
  %s1 = inlined_call_operand.vmem [shape: f32[2,1,1024], index: 1, kind: input, shape index: {}]
  %s2 = inlined_call_operand.vmem [shape: bf16[2,64,32], index: 2, kind: input, shape index: {}]
  %s3 = inlined_call_operand.vmem [shape: f32[2,2,1024], index: 3, kind: output, shape index: {}]
  %s4 = sld [smem:[#allocation0]]
  $region45: #{stn_forward.9} parent=0
    _
  %s6 = ssub.s32 1, %s4
  %s7 = scalar_select 0, %s6, %s4
  loop: start=0, step=1, limit=4
  $region2: #{stn_forward.9} parent=0 // loop_pre_header
    _
  $region3: #{stn_forward.9} parent=0 // loop_header
    %s9 = sphi 0, %s13
    %p10 = scmp.ge.s32.totalorder %s9, 4
    %s16 = sphi 0, %s28
    %s17 = sphi 0, %s24
    %s18 = sphi 0, %s16
    %s19 = sphi 0, %s17
    %s20 = sphi 0, %s18
    %s21 = sphi 0, %s19
    %s33 = sphi 0, %s35
    %s36 = sphi 0, %s33
    %s37 = sphi 0, %s36
    %s53 = sphi 0, %s37
    %s61 = sphi 0, %s63
    %s64 = sphi 0, %s61
    %s65 = sphi 0, %s64
    %s81 = sphi 0, %s65
    %s87 = sphi 0, %s89
    %s90 = sphi 0, %s87
    %s91 = sphi 0, %s90
    %s107 = sphi 0, %s91
    %s115 = sphi 0, %s117
    %s118 = sphi 0, %s115
    %s119 = sphi 0, %s118
    %s135 = sphi 0, %s119
  $region4: #{stn_forward.9} parent=0 // loop_header_branch
    %12 = sbr.rel (%p10) target = $region8
  $region5: #{stn_forward.9} parent=0 // loop_body
    %s14 = ssub.s32 %s9, 1
    %s15 = ssub.s32 %s9, 2
    %s22 = sadd.s32 1, %s17
    %p23 = scmp.ge.s32.totalorder %s22, 1
    %s24 = scalar_select %p23, 0, %s22
    %s25 = sadd.s32 1, %s16
    %s26 = scalar_select %p23, %s25, %s16
    %p27 = scmp.ge.s32.totalorder %s26, 2
    %s28 = scalar_select %p27, 0, %s26
    %s29 = ssub.s32 %s16, %s28
    %s30 = ssub.s32 %s17, %s24
    %s31 = sor.u32 %s29, %s30
    %p32 = scmp.eq.s32.totalorder %s31, 0
    %s34 = sadd.s32 %s33, 1
    %s35 = scalar_select %p32, %s33, %s34
    %p38 = pneg %p32
    %p39 = scmp.eq.s32.totalorder %s9, 1
    %p40 = por %p38, %p39
    %p41 = scmp.ne.s32.totalorder %s33, %s36
    %p42 = scmp.eq.s32.totalorder %s9, 0
    %p43 = por %p41, %p42
    %p44 = scmp.ne.s32.totalorder %s33, %s36
    %p45 = scmp.eq.s32.totalorder %s14, 1
    %p46 = por %p44, %p45
    %p47 = scmp.ne.s32.totalorder %s36, %s37
    %p48 = scmp.eq.s32.totalorder %s14, 0
    %p49 = por %p47, %p48
    %p50 = scmp.ne.s32.totalorder %s36, %s37
    %p51 = scmp.eq.s32.totalorder %s15, 1
    %p52 = por %p50, %p51
    %p54 = scmp.ne.s32.totalorder %s37, %s53
    %p55 = scmp.eq.s32.totalorder %s15, 0
    %p56 = por %p54, %p55
    %s57 = ssub.s32 %s16, %s28
    %s58 = ssub.s32 %s17, %s24
    %s59 = sor.u32 %s57, %s58
    %p60 = scmp.eq.s32.totalorder %s59, 0
    %s62 = sadd.s32 %s61, 1
    %s63 = scalar_select %p60, %s61, %s62
    %p66 = pneg %p60
    %p67 = scmp.eq.s32.totalorder %s9, 1
    %p68 = por %p66, %p67
    %p69 = scmp.ne.s32.totalorder %s61, %s64
    %p70 = scmp.eq.s32.totalorder %s9, 0
    %p71 = por %p69, %p70
    %p72 = scmp.ne.s32.totalorder %s61, %s64
    %p73 = scmp.eq.s32.totalorder %s14, 1
    %p74 = por %p72, %p73
    %p75 = scmp.ne.s32.totalorder %s64, %s65
    %p76 = scmp.eq.s32.totalorder %s14, 0
    %p77 = por %p75, %p76
    %p78 = scmp.ne.s32.totalorder %s64, %s65
    %p79 = scmp.eq.s32.totalorder %s15, 1
    %p80 = por %p78, %p79
    %p82 = scmp.ne.s32.totalorder %s65, %s81
    %p83 = scmp.eq.s32.totalorder %s15, 0
    %p84 = por %p82, %p83
    %s85 = ssub.s32 %s16, %s28
    %p86 = scmp.eq.s32.totalorder %s85, 0
    %s88 = sadd.s32 %s87, 1
    %s89 = scalar_select %p86, %s87, %s88
    %p92 = pneg %p86
    %p93 = scmp.eq.s32.totalorder %s9, 1
    %p94 = por %p92, %p93
    %p95 = scmp.ne.s32.totalorder %s87, %s90
    %p96 = scmp.eq.s32.totalorder %s9, 0
    %p97 = por %p95, %p96
    %p98 = scmp.ne.s32.totalorder %s87, %s90
    %p99 = scmp.eq.s32.totalorder %s14, 1
    %p100 = por %p98, %p99
    %p101 = scmp.ne.s32.totalorder %s90, %s91
    %p102 = scmp.eq.s32.totalorder %s14, 0
    %p103 = por %p101, %p102
    %p104 = scmp.ne.s32.totalorder %s90, %s91
    %p105 = scmp.eq.s32.totalorder %s15, 1
    %p106 = por %p104, %p105
    %p108 = scmp.ne.s32.totalorder %s91, %s107
    %p109 = scmp.eq.s32.totalorder %s15, 0
    %p110 = por %p108, %p109
    %s111 = ssub.s32 %s16, %s28
    %s112 = ssub.s32 %s17, %s24
    %s113 = sor.u32 %s111, %s112
    %p114 = scmp.eq.s32.totalorder %s113, 0
    %s116 = sadd.s32 %s115, 1
    %s117 = scalar_select %p114, %s115, %s116
    %p120 = pneg %p114
    %p121 = scmp.eq.s32.totalorder %s9, 1
    %p122 = por %p120, %p121
    %p123 = scmp.ne.s32.totalorder %s115, %s118
    %p124 = scmp.eq.s32.totalorder %s9, 0
    %p125 = por %p123, %p124
    %p126 = scmp.ne.s32.totalorder %s115, %s118
    %p127 = scmp.eq.s32.totalorder %s14, 1
    %p128 = por %p126, %p127
    %p129 = scmp.ne.s32.totalorder %s118, %s119
    %p130 = scmp.eq.s32.totalorder %s14, 0
    %p131 = por %p129, %p130
    %p132 = scmp.ne.s32.totalorder %s118, %s119
    %p133 = scmp.eq.s32.totalorder %s15, 1
    %p134 = por %p132, %p133
    %p136 = scmp.ne.s32.totalorder %s119, %s135
    %p137 = scmp.eq.s32.totalorder %s15, 0
    %p138 = por %p136, %p137
    %p139 = scmp.le.s32.totalorder 1, %s9
    %p140 = scmp.lt.s32.totalorder %s9, 3
    %p141 = pnand %p139, %p140
    %p142 = pneg %p141
    // Predicated region
    $region9: #{stn_forward.9} parent=5 // pred_check
      _
    $region10: #{stn_forward.9} parent=5 // pred_check_branch
      %144 = sbr.rel (%p141) target = $region12
    $region11: #{stn_forward.9} parent=5 // pred_region
      %s145 = ssub.s32 %s9, 1
    $region12: #{stn_forward.9} parent=5 // pred_fallthru
      _
    %p146 = scmp.lt.s32.totalorder %s9, 2
    // Predicated region
    $region13: #{stn_forward.9} parent=5 // pred_check
      %p147 = pneg %p146
    $region14: #{stn_forward.9} parent=5 // pred_check_branch
      %149 = sbr.rel (%p147) target = $region16
    $region15: #{stn_forward.9} parent=5 // pred_region
      // Predicated region
      $region17: #{stn_forward.9} parent=15 // pred_check
        %p150 = pneg %p43
      $region18: #{stn_forward.9} parent=15 // pred_check_branch
        %152 = sbr.rel (%p150) target = $region20
      $region19: #{stn_forward.9} parent=15 // pred_region
        %s153 = smul.u32 8, %s17
        %p154 = scmp.lt.s32.totalorder %s16, 1
        %s155 = scalar_select %p154, %s16, 1
        %p156 = scmp.lt.s32.totalorder %s153, 7
        %s157 = scalar_select %p156, %s153, 7
        %s158 = smul.addr %s155, 8
        %s159 = sadd.s32 %s157, %s158
        %s160 = scalar_lea.vmem %s0, %s159
        %s161 = smul.u32 8, %s17
      $region20: #{stn_forward.9} parent=15 // pred_fallthru
        _
      // Predicated region
      $region21: #{stn_forward.9} parent=15 // pred_check
        %p162 = pneg %p71
      $region22: #{stn_forward.9} parent=15 // pred_check_branch
        %164 = sbr.rel (%p162) target = $region24
      $region23: #{stn_forward.9} parent=15 // pred_region
        %s165 = smul.u32 8, %s17
        %p166 = scmp.lt.s32.totalorder %s16, 1
        %s167 = scalar_select %p166, %s16, 1
        %p168 = scmp.lt.s32.totalorder %s165, 7
        %s169 = scalar_select %p168, %s165, 7
        %s170 = smul.addr %s167, 8
        %s171 = sadd.s32 %s169, %s170
        %s172 = scalar_lea.vmem %s1, %s171
        %s173 = smul.u32 8, %s17
      $region24: #{stn_forward.9} parent=15 // pred_fallthru
        _
      // Predicated region
      $region25: #{stn_forward.9} parent=15 // pred_check
        %p174 = pneg %p97
      $region26: #{stn_forward.9} parent=15 // pred_check_branch
        %176 = sbr.rel (%p174) target = $region28
      $region27: #{stn_forward.9} parent=15 // pred_region
        %p177 = scmp.lt.s32.totalorder %s16, 1
        %s178 = scalar_select %p177, %s16, 1
        %s179 = smul.addr %s178, 8
        %s180 = smul.addr %s179, 4
        %s181 = scalar_lea.vmem %s2, %s180
      $region28: #{stn_forward.9} parent=15 // pred_fallthru
        _
    $region16: #{stn_forward.9} parent=5 // pred_fallthru
      _
    %p182 = scmp.le.s32.totalorder 1, %s9
    %p183 = scmp.lt.s32.totalorder %s9, 3
    %p184 = pnand %p182, %p183
    %p185 = pneg %p184
    // Predicated region
    $region29: #{stn_forward.9} parent=5 // pred_check
      _
    $region30: #{stn_forward.9} parent=5 // pred_check_branch
      %187 = sbr.rel (%p184) target = $region32
    $region31: #{stn_forward.9} parent=5 // pred_region
      %s188 = ssub.s32 %s9, 1
      %s189 = smul.u32 8, %s19
      %p190 = scmp.lt.s32.totalorder %s18, 1
      %s191 = scalar_select %p190, %s18, 1
      %p192 = scmp.lt.s32.totalorder %s189, 7
      %s193 = scalar_select %p192, %s189, 7
      %s194 = smul.addr %s191, 8
      %s195 = sadd.s32 %s193, %s194
      %s196 = scalar_lea.vmem %s0, %s195
      %p197 = pneg %p49
      %p198 = pneg %p46
      %s199 = smul.u32 8, %s19
      %p200 = scmp.lt.s32.totalorder %s18, 1
      %s201 = scalar_select %p200, %s18, 1
      %p202 = scmp.lt.s32.totalorder %s199, 7
      %s203 = scalar_select %p202, %s199, 7
      %s204 = smul.addr %s201, 8
      %s205 = sadd.s32 %s203, %s204
      %s206 = scalar_lea.vmem %s1, %s205
      %p207 = pneg %p77
      %p208 = pneg %p74
      %p209 = scmp.lt.s32.totalorder %s18, 1
      %s210 = scalar_select %p209, %s18, 1
      %s211 = smul.addr %s210, 8
      %s212 = smul.addr %s211, 4
      %s213 = scalar_lea.vmem %s2, %s212
      %p214 = pneg %p103
      %p215 = pneg %p100
      %p216 = pneg %p131
      %p217 = pneg %p128
      %s218 = smul.u32 8, %s19
      %p219 = scmp.lt.s32.totalorder %s18, 1
      %s220 = scalar_select %p219, %s18, 1
      %p221 = scmp.lt.s32.totalorder %s218, 7
      %s222 = scalar_select %p221, %s218, 7
      %s223 = smul.addr %s220, 8
      %s224 = sadd.s32 %s222, %s223
      %s225 = smul.addr %s224, 2
      %s226 = scalar_lea.vmem %s3, %s225
      %s227 = smul.u32 8, %s19
      %p228 = scmp.lt.s32.totalorder %s18, 1
      %s229 = scalar_select %p228, %s18, 1
      %p230 = scmp.lt.s32.totalorder %s227, 7
      %s231 = scalar_select %p230, %s227, 7
      %s232 = smul.addr %s229, 8
      %s233 = sadd.s32 %s231, %s232
      %s234 = scalar_lea.vmem %s0, %s233
      %s235 = smul.u32 8, %s19
      %s236 = smul.u32 8, %s19
      %p237 = scmp.lt.s32.totalorder %s18, 1
      %s238 = scalar_select %p237, %s18, 1
      %p239 = scmp.lt.s32.totalorder %s236, 7
      %s240 = scalar_select %p239, %s236, 7
      %s241 = smul.addr %s238, 8
      %s242 = sadd.s32 %s240, %s241
      %s243 = scalar_lea.vmem %s1, %s242
      %s244 = smul.u32 8, %s19
      %p245 = scmp.lt.s32.totalorder %s18, 1
      %s246 = scalar_select %p245, %s18, 1
      %s247 = smul.addr %s246, 8
      %s248 = smul.addr %s247, 4
      %s249 = scalar_lea.vmem %s2, %s248
      %s250 = smul.u32 8, %s19
      %p251 = scmp.lt.s32.totalorder %s18, 1
      %s252 = scalar_select %p251, %s18, 1
      %p253 = scmp.lt.s32.totalorder %s250, 7
      %s254 = scalar_select %p253, %s250, 7
      %s255 = smul.addr %s252, 8
      %s256 = sadd.s32 %s254, %s255
      %s257 = smul.addr %s256, 2
      %s258 = scalar_lea.vmem %s3, %s257
      %s259 = smul.u32 8, %s19
      %v261 = vld [vmem:[%s234] sm:$0xff]
      %v262 = vld [vmem:[%s243] sm:$0xff]
      %v263 = vld [vmem:[%s249] sm:$0xf]
      %v264 = vld [vmem:[%s249 + $0x4] sm:$0xf]
      %v265 = vld [vmem:[%s249 + $0x8] sm:$0xf]
      %v266 = vld [vmem:[%s249 + $0xc] sm:$0xf]
      %v267 = vld [vmem:[%s249 + $0x10] sm:$0xf]
      %v268 = vld [vmem:[%s249 + $0x14] sm:$0xf]
      %v269 = vld [vmem:[%s249 + $0x18] sm:$0xf]
      %v270 = vld [vmem:[%s249 + $0x1c] sm:$0xf]
      %v271 = vfloor.f32 %v261
      %v272 = vfloor.f32 %v262
      %v273 = vsub.f32 %v261, %v271
      %v274 = vsub.f32 %v262, %v272
      %vm275 = vcmp.ge.f32.partialorder %v271, 0.0
      %vm276 = vcmp.le.f32.partialorder %v271, 31.0
      %vm277 = vmand %vm275, %vm276
      %v278 = vadd.f32 %v271, 1.0
      %vm279 = vcmp.ge.f32.partialorder %v278, 0.0
      %vm280 = vcmp.le.f32.partialorder %v278, 31.0
      %vm281 = vmand %vm279, %vm280
      %v282 = vsub.f32 1.0, %v273
      %v283 = vsel %vm277, %v282, 0.0
      %v284 = vsel %vm281, %v273, 0.0
      %v285 = vmax.f32 %v271, 0.0
      %v286 = vmin.f32 %v285, 31.0
      %v287 = vcvt.f32.s32.to.zero.pseudo %v286
      %v288 = vmax.f32 %v278, 0.0
      %v289 = vmin.f32 %v288, 31.0
      %v290 = vcvt.f32.s32.to.zero.pseudo %v289
      %v291 = vlaneseq
      %v292 = vshrl.u32 %v291, 7
      %v293 = vadd.s32 %v292, 8
      %v294 = vadd.s32 %v292, 16
      %v295 = vadd.s32 %v292, 24
      %v296 = vlaneseq
      %v297 = vshrl.u32 %v296, 7
      %v298 = vsub.s32 0, %v297
      %v299 = vrot.slane %v287, %v298
      %v300 = vlaneseq
      %v301 = vshrl.u32 %v300, 7
      %v302 = vsub.s32 1, %v301
      %v303 = vrot.slane %v287, %v302
      %v304 = vlaneseq
      %v305 = vshrl.u32 %v304, 7
      %v306 = vsub.s32 2, %v305
      %v307 = vrot.slane %v287, %v306
      %v308 = vlaneseq
      %v309 = vshrl.u32 %v308, 7
      %v310 = vsub.s32 3, %v309
      %v311 = vrot.slane %v287, %v310
      %v312 = vlaneseq
      %v313 = vshrl.u32 %v312, 7
      %v314 = vsub.s32 4, %v313
      %v315 = vrot.slane %v287, %v314
      %v316 = vlaneseq
      %v317 = vshrl.u32 %v316, 7
      %v318 = vsub.s32 5, %v317
      %v319 = vrot.slane %v287, %v318
      %v320 = vlaneseq
      %v321 = vshrl.u32 %v320, 7
      %v322 = vsub.s32 6, %v321
      %v323 = vrot.slane %v287, %v322
      %v324 = vlaneseq
      %v325 = vshrl.u32 %v324, 7
      %v326 = vsub.s32 7, %v325
      %v327 = vrot.slane %v287, %v326
      %vm328 = vcmp.eq.s32.totalorder %v292, %v299
      %vm329 = vcmp.eq.s32.totalorder %v292, %v303
      %vm330 = vcmp.eq.s32.totalorder %v292, %v307
      %vm331 = vcmp.eq.s32.totalorder %v292, %v311
      %vm332 = vcmp.eq.s32.totalorder %v292, %v315
      %vm333 = vcmp.eq.s32.totalorder %v292, %v319
      %vm334 = vcmp.eq.s32.totalorder %v292, %v323
      %vm335 = vcmp.eq.s32.totalorder %v292, %v327
      %vm336 = vcmp.eq.s32.totalorder %v293, %v299
      %vm337 = vcmp.eq.s32.totalorder %v293, %v303
      %vm338 = vcmp.eq.s32.totalorder %v293, %v307
      %vm339 = vcmp.eq.s32.totalorder %v293, %v311
      %vm340 = vcmp.eq.s32.totalorder %v293, %v315
      %vm341 = vcmp.eq.s32.totalorder %v293, %v319
      %vm342 = vcmp.eq.s32.totalorder %v293, %v323
      %vm343 = vcmp.eq.s32.totalorder %v293, %v327
      %vm344 = vcmp.eq.s32.totalorder %v294, %v299
      %vm345 = vcmp.eq.s32.totalorder %v294, %v303
      %vm346 = vcmp.eq.s32.totalorder %v294, %v307
      %vm347 = vcmp.eq.s32.totalorder %v294, %v311
      %vm348 = vcmp.eq.s32.totalorder %v294, %v315
      %vm349 = vcmp.eq.s32.totalorder %v294, %v319
      %vm350 = vcmp.eq.s32.totalorder %v294, %v323
      %vm351 = vcmp.eq.s32.totalorder %v294, %v327
      %vm352 = vcmp.eq.s32.totalorder %v295, %v299
      %vm353 = vcmp.eq.s32.totalorder %v295, %v303
      %vm354 = vcmp.eq.s32.totalorder %v295, %v307
      %vm355 = vcmp.eq.s32.totalorder %v295, %v311
      %vm356 = vcmp.eq.s32.totalorder %v295, %v315
      %vm357 = vcmp.eq.s32.totalorder %v295, %v319
      %vm358 = vcmp.eq.s32.totalorder %v295, %v323
      %vm359 = vcmp.eq.s32.totalorder %v295, %v327
      %v361 = vlaneseq
      %v362 = vshrl.u32 %v361, 7
      %v363 = vsub.s32 0, %v362
      %v364 = vrot.slane %v283, %v363
      %v365 = vlaneseq
      %v366 = vshrl.u32 %v365, 7
      %v367 = vsub.s32 1, %v366
      %v368 = vrot.slane %v283, %v367
      %v369 = vlaneseq
      %v370 = vshrl.u32 %v369, 7
      %v371 = vsub.s32 2, %v370
      %v372 = vrot.slane %v283, %v371
      %v373 = vlaneseq
      %v374 = vshrl.u32 %v373, 7
      %v375 = vsub.s32 3, %v374
      %v376 = vrot.slane %v283, %v375
      %v377 = vlaneseq
      %v378 = vshrl.u32 %v377, 7
      %v379 = vsub.s32 4, %v378
      %v380 = vrot.slane %v283, %v379
      %v381 = vlaneseq
      %v382 = vshrl.u32 %v381, 7
      %v383 = vsub.s32 5, %v382
      %v384 = vrot.slane %v283, %v383
      %v385 = vlaneseq
      %v386 = vshrl.u32 %v385, 7
      %v387 = vsub.s32 6, %v386
      %v388 = vrot.slane %v283, %v387
      %v389 = vlaneseq
      %v390 = vshrl.u32 %v389, 7
      %v391 = vsub.s32 7, %v390
      %v392 = vrot.slane %v283, %v391
      %v401 = vsel %vm328, %v364, 0.0
      %v402 = vsel %vm329, %v368, 0.0
      %v403 = vsel %vm330, %v372, 0.0
      %v404 = vsel %vm331, %v376, 0.0
      %v405 = vsel %vm332, %v380, 0.0
      %v406 = vsel %vm333, %v384, 0.0
      %v407 = vsel %vm334, %v388, 0.0
      %v408 = vsel %vm335, %v392, 0.0
      %v409 = vsel %vm336, %v364, 0.0
      %v410 = vsel %vm337, %v368, 0.0
      %v411 = vsel %vm338, %v372, 0.0
      %v412 = vsel %vm339, %v376, 0.0
      %v413 = vsel %vm340, %v380, 0.0
      %v414 = vsel %vm341, %v384, 0.0
      %v415 = vsel %vm342, %v388, 0.0
      %v416 = vsel %vm343, %v392, 0.0
      %v417 = vsel %vm344, %v364, 0.0
      %v418 = vsel %vm345, %v368, 0.0
      %v419 = vsel %vm346, %v372, 0.0
      %v420 = vsel %vm347, %v376, 0.0
      %v421 = vsel %vm348, %v380, 0.0
      %v422 = vsel %vm349, %v384, 0.0
      %v423 = vsel %vm350, %v388, 0.0
      %v424 = vsel %vm351, %v392, 0.0
      %v425 = vsel %vm352, %v364, 0.0
      %v426 = vsel %vm353, %v368, 0.0
      %v427 = vsel %vm354, %v372, 0.0
      %v428 = vsel %vm355, %v376, 0.0
      %v429 = vsel %vm356, %v380, 0.0
      %v430 = vsel %vm357, %v384, 0.0
      %v431 = vsel %vm358, %v388, 0.0
      %v432 = vsel %vm359, %v392, 0.0
      %v433 = vlaneseq
      %v434 = vshrl.u32 %v433, 7
      %v435 = vsub.s32 0, %v434
      %v436 = vrot.slane %v290, %v435
      %v437 = vlaneseq
      %v438 = vshrl.u32 %v437, 7
      %v439 = vsub.s32 1, %v438
      %v440 = vrot.slane %v290, %v439
      %v441 = vlaneseq
      %v442 = vshrl.u32 %v441, 7
      %v443 = vsub.s32 2, %v442
      %v444 = vrot.slane %v290, %v443
      %v445 = vlaneseq
      %v446 = vshrl.u32 %v445, 7
      %v447 = vsub.s32 3, %v446
      %v448 = vrot.slane %v290, %v447
      %v449 = vlaneseq
      %v450 = vshrl.u32 %v449, 7
      %v451 = vsub.s32 4, %v450
      %v452 = vrot.slane %v290, %v451
      %v453 = vlaneseq
      %v454 = vshrl.u32 %v453, 7
      %v455 = vsub.s32 5, %v454
      %v456 = vrot.slane %v290, %v455
      %v457 = vlaneseq
      %v458 = vshrl.u32 %v457, 7
      %v459 = vsub.s32 6, %v458
      %v460 = vrot.slane %v290, %v459
      %v461 = vlaneseq
      %v462 = vshrl.u32 %v461, 7
      %v463 = vsub.s32 7, %v462
      %v464 = vrot.slane %v290, %v463
      %vm465 = vcmp.eq.s32.totalorder %v292, %v436
      %vm466 = vcmp.eq.s32.totalorder %v292, %v440
      %vm467 = vcmp.eq.s32.totalorder %v292, %v444
      %vm468 = vcmp.eq.s32.totalorder %v292, %v448
      %vm469 = vcmp.eq.s32.totalorder %v292, %v452
      %vm470 = vcmp.eq.s32.totalorder %v292, %v456
      %vm471 = vcmp.eq.s32.totalorder %v292, %v460
      %vm472 = vcmp.eq.s32.totalorder %v292, %v464
      %vm473 = vcmp.eq.s32.totalorder %v293, %v436
      %vm474 = vcmp.eq.s32.totalorder %v293, %v440
      %vm475 = vcmp.eq.s32.totalorder %v293, %v444
      %vm476 = vcmp.eq.s32.totalorder %v293, %v448
      %vm477 = vcmp.eq.s32.totalorder %v293, %v452
      %vm478 = vcmp.eq.s32.totalorder %v293, %v456
      %vm479 = vcmp.eq.s32.totalorder %v293, %v460
      %vm480 = vcmp.eq.s32.totalorder %v293, %v464
      %vm481 = vcmp.eq.s32.totalorder %v294, %v436
      %vm482 = vcmp.eq.s32.totalorder %v294, %v440
      %vm483 = vcmp.eq.s32.totalorder %v294, %v444
      %vm484 = vcmp.eq.s32.totalorder %v294, %v448
      %vm485 = vcmp.eq.s32.totalorder %v294, %v452
      %vm486 = vcmp.eq.s32.totalorder %v294, %v456
      %vm487 = vcmp.eq.s32.totalorder %v294, %v460
      %vm488 = vcmp.eq.s32.totalorder %v294, %v464
      %vm489 = vcmp.eq.s32.totalorder %v295, %v436
      %vm490 = vcmp.eq.s32.totalorder %v295, %v440
      %vm491 = vcmp.eq.s32.totalorder %v295, %v444
      %vm492 = vcmp.eq.s32.totalorder %v295, %v448
      %vm493 = vcmp.eq.s32.totalorder %v295, %v452
      %vm494 = vcmp.eq.s32.totalorder %v295, %v456
      %vm495 = vcmp.eq.s32.totalorder %v295, %v460
      %vm496 = vcmp.eq.s32.totalorder %v295, %v464
      %v498 = vlaneseq
      %v499 = vshrl.u32 %v498, 7
      %v500 = vsub.s32 0, %v499
      %v501 = vrot.slane %v284, %v500
      %v502 = vlaneseq
      %v503 = vshrl.u32 %v502, 7
      %v504 = vsub.s32 1, %v503
      %v505 = vrot.slane %v284, %v504
      %v506 = vlaneseq
      %v507 = vshrl.u32 %v506, 7
      %v508 = vsub.s32 2, %v507
      %v509 = vrot.slane %v284, %v508
      %v510 = vlaneseq
      %v511 = vshrl.u32 %v510, 7
      %v512 = vsub.s32 3, %v511
      %v513 = vrot.slane %v284, %v512
      %v514 = vlaneseq
      %v515 = vshrl.u32 %v514, 7
      %v516 = vsub.s32 4, %v515
      %v517 = vrot.slane %v284, %v516
      %v518 = vlaneseq
      %v519 = vshrl.u32 %v518, 7
      %v520 = vsub.s32 5, %v519
      %v521 = vrot.slane %v284, %v520
      %v522 = vlaneseq
      %v523 = vshrl.u32 %v522, 7
      %v524 = vsub.s32 6, %v523
      %v525 = vrot.slane %v284, %v524
      %v526 = vlaneseq
      %v527 = vshrl.u32 %v526, 7
      %v528 = vsub.s32 7, %v527
      %v529 = vrot.slane %v284, %v528
      %v538 = vsel %vm465, %v501, 0.0
      %v539 = vsel %vm466, %v505, 0.0
      %v540 = vsel %vm467, %v509, 0.0
      %v541 = vsel %vm468, %v513, 0.0
      %v542 = vsel %vm469, %v517, 0.0
      %v543 = vsel %vm470, %v521, 0.0
      %v544 = vsel %vm471, %v525, 0.0
      %v545 = vsel %vm472, %v529, 0.0
      %v546 = vsel %vm473, %v501, 0.0
      %v547 = vsel %vm474, %v505, 0.0
      %v548 = vsel %vm475, %v509, 0.0
      %v549 = vsel %vm476, %v513, 0.0
      %v550 = vsel %vm477, %v517, 0.0
      %v551 = vsel %vm478, %v521, 0.0
      %v552 = vsel %vm479, %v525, 0.0
      %v553 = vsel %vm480, %v529, 0.0
      %v554 = vsel %vm481, %v501, 0.0
      %v555 = vsel %vm482, %v505, 0.0
      %v556 = vsel %vm483, %v509, 0.0
      %v557 = vsel %vm484, %v513, 0.0
      %v558 = vsel %vm485, %v517, 0.0
      %v559 = vsel %vm486, %v521, 0.0
      %v560 = vsel %vm487, %v525, 0.0
      %v561 = vsel %vm488, %v529, 0.0
      %v562 = vsel %vm489, %v501, 0.0
      %v563 = vsel %vm490, %v505, 0.0
      %v564 = vsel %vm491, %v509, 0.0
      %v565 = vsel %vm492, %v513, 0.0
      %v566 = vsel %vm493, %v517, 0.0
      %v567 = vsel %vm494, %v521, 0.0
      %v568 = vsel %vm495, %v525, 0.0
      %v569 = vsel %vm496, %v529, 0.0
      %v570 = vadd.f32 %v401, %v538
      %v571 = vadd.f32 %v402, %v539
      %v572 = vadd.f32 %v403, %v540
      %v573 = vadd.f32 %v404, %v541
      %v574 = vadd.f32 %v405, %v542
      %v575 = vadd.f32 %v406, %v543
      %v576 = vadd.f32 %v407, %v544
      %v577 = vadd.f32 %v408, %v545
      %v578 = vadd.f32 %v409, %v546
      %v579 = vadd.f32 %v410, %v547
      %v580 = vadd.f32 %v411, %v548
      %v581 = vadd.f32 %v412, %v549
      %v582 = vadd.f32 %v413, %v550
      %v583 = vadd.f32 %v414, %v551
      %v584 = vadd.f32 %v415, %v552
      %v585 = vadd.f32 %v416, %v553
      %v586 = vadd.f32 %v417, %v554
      %v587 = vadd.f32 %v418, %v555
      %v588 = vadd.f32 %v419, %v556
      %v589 = vadd.f32 %v420, %v557
      %v590 = vadd.f32 %v421, %v558
      %v591 = vadd.f32 %v422, %v559
      %v592 = vadd.f32 %v423, %v560
      %v593 = vadd.f32 %v424, %v561
      %v594 = vadd.f32 %v425, %v562
      %v595 = vadd.f32 %v426, %v563
      %v596 = vadd.f32 %v427, %v564
      %v597 = vadd.f32 %v428, %v565
      %v598 = vadd.f32 %v429, %v566
      %v599 = vadd.f32 %v430, %v567
      %v600 = vadd.f32 %v431, %v568
      %v601 = vadd.f32 %v432, %v569
      %v602 = vpack.c.bf16 %v578, %v570
      %v603 = vpack.c.bf16 %v579, %v571
      %v604 = vpack.c.bf16 %v580, %v572
      %v605 = vpack.c.bf16 %v581, %v573
      %v606 = vpack.c.bf16 %v582, %v574
      %v607 = vpack.c.bf16 %v583, %v575
      %v608 = vpack.c.bf16 %v584, %v576
      %v609 = vpack.c.bf16 %v585, %v577
      %v610 = vpack.c.bf16 %v594, %v586
      %v611 = vpack.c.bf16 %v595, %v587
      %v612 = vpack.c.bf16 %v596, %v588
      %v613 = vpack.c.bf16 %v597, %v589
      %v614 = vpack.c.bf16 %v598, %v590
      %v615 = vpack.c.bf16 %v599, %v591
      %v616 = vpack.c.bf16 %v600, %v592
      %v617 = vpack.c.bf16 %v601, %v593
      %vm618 = vcmp.ge.f32.partialorder %v272, 0.0
      %vm619 = vcmp.le.f32.partialorder %v272, 31.0
      %vm620 = vmand %vm618, %vm619
      %v621 = vadd.f32 %v272, 1.0
      %vm622 = vcmp.ge.f32.partialorder %v621, 0.0
      %vm623 = vcmp.le.f32.partialorder %v621, 31.0
      %vm624 = vmand %vm622, %vm623
      %v625 = vsub.f32 1.0, %v274
      %v626 = vsel %vm620, %v625, 0.0
      %v627 = vsel %vm624, %v274, 0.0
      %v628 = vmax.f32 %v272, 0.0
      %v629 = vmin.f32 %v628, 31.0
      %v630 = vcvt.f32.s32.to.zero.pseudo %v629
      %v631 = vmax.f32 %v621, 0.0
      %v632 = vmin.f32 %v631, 31.0
      %v633 = vcvt.f32.s32.to.zero.pseudo %v632
      %v634 = vlaneseq
      %v635 = vshrl.u32 %v634, 7
      %v636 = vsub.s32 0, %v635
      %v637 = vrot.slane %v630, %v636
      %v638 = vlaneseq
      %v639 = vshrl.u32 %v638, 7
      %v640 = vsub.s32 1, %v639
      %v641 = vrot.slane %v630, %v640
      %v642 = vlaneseq
      %v643 = vshrl.u32 %v642, 7
      %v644 = vsub.s32 2, %v643
      %v645 = vrot.slane %v630, %v644
      %v646 = vlaneseq
      %v647 = vshrl.u32 %v646, 7
      %v648 = vsub.s32 3, %v647
      %v649 = vrot.slane %v630, %v648
      %v650 = vlaneseq
      %v651 = vshrl.u32 %v650, 7
      %v652 = vsub.s32 4, %v651
      %v653 = vrot.slane %v630, %v652
      %v654 = vlaneseq
      %v655 = vshrl.u32 %v654, 7
      %v656 = vsub.s32 5, %v655
      %v657 = vrot.slane %v630, %v656
      %v658 = vlaneseq
      %v659 = vshrl.u32 %v658, 7
      %v660 = vsub.s32 6, %v659
      %v661 = vrot.slane %v630, %v660
      %v662 = vlaneseq
      %v663 = vshrl.u32 %v662, 7
      %v664 = vsub.s32 7, %v663
      %v665 = vrot.slane %v630, %v664
      %vm666 = vcmp.eq.s32.totalorder %v292, %v637
      %vm667 = vcmp.eq.s32.totalorder %v292, %v641
      %vm668 = vcmp.eq.s32.totalorder %v292, %v645
      %vm669 = vcmp.eq.s32.totalorder %v292, %v649
      %vm670 = vcmp.eq.s32.totalorder %v292, %v653
      %vm671 = vcmp.eq.s32.totalorder %v292, %v657
      %vm672 = vcmp.eq.s32.totalorder %v292, %v661
      %vm673 = vcmp.eq.s32.totalorder %v292, %v665
      %vm674 = vcmp.eq.s32.totalorder %v293, %v637
      %vm675 = vcmp.eq.s32.totalorder %v293, %v641
      %vm676 = vcmp.eq.s32.totalorder %v293, %v645
      %vm677 = vcmp.eq.s32.totalorder %v293, %v649
      %vm678 = vcmp.eq.s32.totalorder %v293, %v653
      %vm679 = vcmp.eq.s32.totalorder %v293, %v657
      %vm680 = vcmp.eq.s32.totalorder %v293, %v661
      %vm681 = vcmp.eq.s32.totalorder %v293, %v665
      %vm682 = vcmp.eq.s32.totalorder %v294, %v637
      %vm683 = vcmp.eq.s32.totalorder %v294, %v641
      %vm684 = vcmp.eq.s32.totalorder %v294, %v645
      %vm685 = vcmp.eq.s32.totalorder %v294, %v649
      %vm686 = vcmp.eq.s32.totalorder %v294, %v653
      %vm687 = vcmp.eq.s32.totalorder %v294, %v657
      %vm688 = vcmp.eq.s32.totalorder %v294, %v661
      %vm689 = vcmp.eq.s32.totalorder %v294, %v665
      %vm690 = vcmp.eq.s32.totalorder %v295, %v637
      %vm691 = vcmp.eq.s32.totalorder %v295, %v641
      %vm692 = vcmp.eq.s32.totalorder %v295, %v645
      %vm693 = vcmp.eq.s32.totalorder %v295, %v649
      %vm694 = vcmp.eq.s32.totalorder %v295, %v653
      %vm695 = vcmp.eq.s32.totalorder %v295, %v657
      %vm696 = vcmp.eq.s32.totalorder %v295, %v661
      %vm697 = vcmp.eq.s32.totalorder %v295, %v665
      %v699 = vlaneseq
      %v700 = vshrl.u32 %v699, 7
      %v701 = vsub.s32 0, %v700
      %v702 = vrot.slane %v626, %v701
      %v703 = vlaneseq
      %v704 = vshrl.u32 %v703, 7
      %v705 = vsub.s32 1, %v704
      %v706 = vrot.slane %v626, %v705
      %v707 = vlaneseq
      %v708 = vshrl.u32 %v707, 7
      %v709 = vsub.s32 2, %v708
      %v710 = vrot.slane %v626, %v709
      %v711 = vlaneseq
      %v712 = vshrl.u32 %v711, 7
      %v713 = vsub.s32 3, %v712
      %v714 = vrot.slane %v626, %v713
      %v715 = vlaneseq
      %v716 = vshrl.u32 %v715, 7
      %v717 = vsub.s32 4, %v716
      %v718 = vrot.slane %v626, %v717
      %v719 = vlaneseq
      %v720 = vshrl.u32 %v719, 7
      %v721 = vsub.s32 5, %v720
      %v722 = vrot.slane %v626, %v721
      %v723 = vlaneseq
      %v724 = vshrl.u32 %v723, 7
      %v725 = vsub.s32 6, %v724
      %v726 = vrot.slane %v626, %v725
      %v727 = vlaneseq
      %v728 = vshrl.u32 %v727, 7
      %v729 = vsub.s32 7, %v728
      %v730 = vrot.slane %v626, %v729
      %v739 = vsel %vm666, %v702, 0.0
      %v740 = vsel %vm667, %v706, 0.0
      %v741 = vsel %vm668, %v710, 0.0
      %v742 = vsel %vm669, %v714, 0.0
      %v743 = vsel %vm670, %v718, 0.0
      %v744 = vsel %vm671, %v722, 0.0
      %v745 = vsel %vm672, %v726, 0.0
      %v746 = vsel %vm673, %v730, 0.0
      %v747 = vsel %vm674, %v702, 0.0
      %v748 = vsel %vm675, %v706, 0.0
      %v749 = vsel %vm676, %v710, 0.0
      %v750 = vsel %vm677, %v714, 0.0
      %v751 = vsel %vm678, %v718, 0.0
      %v752 = vsel %vm679, %v722, 0.0
      %v753 = vsel %vm680, %v726, 0.0
      %v754 = vsel %vm681, %v730, 0.0
      %v755 = vsel %vm682, %v702, 0.0
      %v756 = vsel %vm683, %v706, 0.0
      %v757 = vsel %vm684, %v710, 0.0
      %v758 = vsel %vm685, %v714, 0.0
      %v759 = vsel %vm686, %v718, 0.0
      %v760 = vsel %vm687, %v722, 0.0
      %v761 = vsel %vm688, %v726, 0.0
      %v762 = vsel %vm689, %v730, 0.0
      %v763 = vsel %vm690, %v702, 0.0
      %v764 = vsel %vm691, %v706, 0.0
      %v765 = vsel %vm692, %v710, 0.0
      %v766 = vsel %vm693, %v714, 0.0
      %v767 = vsel %vm694, %v718, 0.0
      %v768 = vsel %vm695, %v722, 0.0
      %v769 = vsel %vm696, %v726, 0.0
      %v770 = vsel %vm697, %v730, 0.0
      %v771 = vlaneseq
      %v772 = vshrl.u32 %v771, 7
      %v773 = vsub.s32 0, %v772
      %v774 = vrot.slane %v633, %v773
      %v775 = vlaneseq
      %v776 = vshrl.u32 %v775, 7
      %v777 = vsub.s32 1, %v776
      %v778 = vrot.slane %v633, %v777
      %v779 = vlaneseq
      %v780 = vshrl.u32 %v779, 7
      %v781 = vsub.s32 2, %v780
      %v782 = vrot.slane %v633, %v781
      %v783 = vlaneseq
      %v784 = vshrl.u32 %v783, 7
      %v785 = vsub.s32 3, %v784
      %v786 = vrot.slane %v633, %v785
      %v787 = vlaneseq
      %v788 = vshrl.u32 %v787, 7
      %v789 = vsub.s32 4, %v788
      %v790 = vrot.slane %v633, %v789
      %v791 = vlaneseq
      %v792 = vshrl.u32 %v791, 7
      %v793 = vsub.s32 5, %v792
      %v794 = vrot.slane %v633, %v793
      %v795 = vlaneseq
      %v796 = vshrl.u32 %v795, 7
      %v797 = vsub.s32 6, %v796
      %v798 = vrot.slane %v633, %v797
      %v799 = vlaneseq
      %v800 = vshrl.u32 %v799, 7
      %v801 = vsub.s32 7, %v800
      %v802 = vrot.slane %v633, %v801
      %vm803 = vcmp.eq.s32.totalorder %v292, %v774
      %vm804 = vcmp.eq.s32.totalorder %v292, %v778
      %vm805 = vcmp.eq.s32.totalorder %v292, %v782
      %vm806 = vcmp.eq.s32.totalorder %v292, %v786
      %vm807 = vcmp.eq.s32.totalorder %v292, %v790
      %vm808 = vcmp.eq.s32.totalorder %v292, %v794
      %vm809 = vcmp.eq.s32.totalorder %v292, %v798
      %vm810 = vcmp.eq.s32.totalorder %v292, %v802
      %vm811 = vcmp.eq.s32.totalorder %v293, %v774
      %vm812 = vcmp.eq.s32.totalorder %v293, %v778
      %vm813 = vcmp.eq.s32.totalorder %v293, %v782
      %vm814 = vcmp.eq.s32.totalorder %v293, %v786
      %vm815 = vcmp.eq.s32.totalorder %v293, %v790
      %vm816 = vcmp.eq.s32.totalorder %v293, %v794
      %vm817 = vcmp.eq.s32.totalorder %v293, %v798
      %vm818 = vcmp.eq.s32.totalorder %v293, %v802
      %vm819 = vcmp.eq.s32.totalorder %v294, %v774
      %vm820 = vcmp.eq.s32.totalorder %v294, %v778
      %vm821 = vcmp.eq.s32.totalorder %v294, %v782
      %vm822 = vcmp.eq.s32.totalorder %v294, %v786
      %vm823 = vcmp.eq.s32.totalorder %v294, %v790
      %vm824 = vcmp.eq.s32.totalorder %v294, %v794
      %vm825 = vcmp.eq.s32.totalorder %v294, %v798
      %vm826 = vcmp.eq.s32.totalorder %v294, %v802
      %vm827 = vcmp.eq.s32.totalorder %v295, %v774
      %vm828 = vcmp.eq.s32.totalorder %v295, %v778
      %vm829 = vcmp.eq.s32.totalorder %v295, %v782
      %vm830 = vcmp.eq.s32.totalorder %v295, %v786
      %vm831 = vcmp.eq.s32.totalorder %v295, %v790
      %vm832 = vcmp.eq.s32.totalorder %v295, %v794
      %vm833 = vcmp.eq.s32.totalorder %v295, %v798
      %vm834 = vcmp.eq.s32.totalorder %v295, %v802
      %v836 = vlaneseq
      %v837 = vshrl.u32 %v836, 7
      %v838 = vsub.s32 0, %v837
      %v839 = vrot.slane %v627, %v838
      %v840 = vlaneseq
      %v841 = vshrl.u32 %v840, 7
      %v842 = vsub.s32 1, %v841
      %v843 = vrot.slane %v627, %v842
      %v844 = vlaneseq
      %v845 = vshrl.u32 %v844, 7
      %v846 = vsub.s32 2, %v845
      %v847 = vrot.slane %v627, %v846
      %v848 = vlaneseq
      %v849 = vshrl.u32 %v848, 7
      %v850 = vsub.s32 3, %v849
      %v851 = vrot.slane %v627, %v850
      %v852 = vlaneseq
      %v853 = vshrl.u32 %v852, 7
      %v854 = vsub.s32 4, %v853
      %v855 = vrot.slane %v627, %v854
      %v856 = vlaneseq
      %v857 = vshrl.u32 %v856, 7
      %v858 = vsub.s32 5, %v857
      %v859 = vrot.slane %v627, %v858
      %v860 = vlaneseq
      %v861 = vshrl.u32 %v860, 7
      %v862 = vsub.s32 6, %v861
      %v863 = vrot.slane %v627, %v862
      %v864 = vlaneseq
      %v865 = vshrl.u32 %v864, 7
      %v866 = vsub.s32 7, %v865
      %v867 = vrot.slane %v627, %v866
      %v876 = vsel %vm803, %v839, 0.0
      %v877 = vsel %vm804, %v843, 0.0
      %v878 = vsel %vm805, %v847, 0.0
      %v879 = vsel %vm806, %v851, 0.0
      %v880 = vsel %vm807, %v855, 0.0
      %v881 = vsel %vm808, %v859, 0.0
      %v882 = vsel %vm809, %v863, 0.0
      %v883 = vsel %vm810, %v867, 0.0
      %v884 = vsel %vm811, %v839, 0.0
      %v885 = vsel %vm812, %v843, 0.0
      %v886 = vsel %vm813, %v847, 0.0
      %v887 = vsel %vm814, %v851, 0.0
      %v888 = vsel %vm815, %v855, 0.0
      %v889 = vsel %vm816, %v859, 0.0
      %v890 = vsel %vm817, %v863, 0.0
      %v891 = vsel %vm818, %v867, 0.0
      %v892 = vsel %vm819, %v839, 0.0
      %v893 = vsel %vm820, %v843, 0.0
      %v894 = vsel %vm821, %v847, 0.0
      %v895 = vsel %vm822, %v851, 0.0
      %v896 = vsel %vm823, %v855, 0.0
      %v897 = vsel %vm824, %v859, 0.0
      %v898 = vsel %vm825, %v863, 0.0
      %v899 = vsel %vm826, %v867, 0.0
      %v900 = vsel %vm827, %v839, 0.0
      %v901 = vsel %vm828, %v843, 0.0
      %v902 = vsel %vm829, %v847, 0.0
      %v903 = vsel %vm830, %v851, 0.0
      %v904 = vsel %vm831, %v855, 0.0
      %v905 = vsel %vm832, %v859, 0.0
      %v906 = vsel %vm833, %v863, 0.0
      %v907 = vsel %vm834, %v867, 0.0
      %v908 = vadd.f32 %v739, %v876
      %v909 = vadd.f32 %v740, %v877
      %v910 = vadd.f32 %v741, %v878
      %v911 = vadd.f32 %v742, %v879
      %v912 = vadd.f32 %v743, %v880
      %v913 = vadd.f32 %v744, %v881
      %v914 = vadd.f32 %v745, %v882
      %v915 = vadd.f32 %v746, %v883
      %v916 = vadd.f32 %v747, %v884
      %v917 = vadd.f32 %v748, %v885
      %v918 = vadd.f32 %v749, %v886
      %v919 = vadd.f32 %v750, %v887
      %v920 = vadd.f32 %v751, %v888
      %v921 = vadd.f32 %v752, %v889
      %v922 = vadd.f32 %v753, %v890
      %v923 = vadd.f32 %v754, %v891
      %v924 = vadd.f32 %v755, %v892
      %v925 = vadd.f32 %v756, %v893
      %v926 = vadd.f32 %v757, %v894
      %v927 = vadd.f32 %v758, %v895
      %v928 = vadd.f32 %v759, %v896
      %v929 = vadd.f32 %v760, %v897
      %v930 = vadd.f32 %v761, %v898
      %v931 = vadd.f32 %v762, %v899
      %v932 = vadd.f32 %v763, %v900
      %v933 = vadd.f32 %v764, %v901
      %v934 = vadd.f32 %v765, %v902
      %v935 = vadd.f32 %v766, %v903
      %v936 = vadd.f32 %v767, %v904
      %v937 = vadd.f32 %v768, %v905
      %v938 = vadd.f32 %v769, %v906
      %v939 = vadd.f32 %v770, %v907
      %v948 = vunpack.c.l.b16 %v263
      %v949 = vunpack.c.l.b16 %v264
      %v950 = vunpack.c.l.b16 %v265
      %v951 = vunpack.c.l.b16 %v266
      %v952 = vunpack.c.l.b16 %v267
      %v953 = vunpack.c.l.b16 %v268
      %v954 = vunpack.c.l.b16 %v269
      %v955 = vunpack.c.l.b16 %v270
      %v956 = vpack.c.b16 %v949, %v948
      %v957 = vpack.c.b16 %v951, %v950
      %v958 = vpack.c.b16 %v953, %v952
      %v959 = vpack.c.b16 %v955, %v954
      %vm960 = vcmask 261120
      %v962 = vsel %vm960, %v956, 0
      %v965 = vsel %vm960, %v957, 0
      %v968 = vsel %vm960, %v958, 0
      %v971 = vsel %vm960, %v959, 0
      %973 = vmatprep.subr.bf16.mxu0 %v603
      %974 = vmatpush1.bf16.msra.mxu0 %v602
      %975 = vmatprep.subr.bf16.mxu0 %v611
      %976 = vmatpush1.bf16.msra.mxu0 %v610
      %977 = vmatprep.subr.bf16.mxu0 0
      %978 = vmatpush1.bf16.msra.mxu0 0
      %979 = vmatprep.subr.bf16.mxu0 0
      %980 = vmatpush1.bf16.msra.mxu0 0
      %981 = vmatprep.subr.bf16.mxu0 0
      %982 = vmatpush1.bf16.msra.mxu0 0
      %983 = vmatprep.subr.bf16.mxu0 0
      %984 = vmatpush1.bf16.msra.mxu0 0
      %985 = vmatprep.subr.bf16.mxu0 0
      %986 = vmatpush1.bf16.msra.mxu0 0
      %987 = vmatprep.subr.bf16.mxu0 0
      %988 = vmatpush1.bf16.msra.mxu0 0
      %989 = vmatprep.subr.bf16.mxu0 0
      %990 = vmatpush1.bf16.msra.mxu0 0
      %991 = vmatprep.subr.bf16.mxu0 0
      %992 = vmatpush1.bf16.msra.mxu0 0
      %993 = vmatprep.subr.bf16.mxu0 0
      %994 = vmatpush1.bf16.msra.mxu0 0
      %995 = vmatprep.subr.bf16.mxu0 0
      %996 = vmatpush1.bf16.msra.mxu0 0
      %997 = vmatprep.subr.bf16.mxu0 0
      %998 = vmatpush1.bf16.msra.mxu0 0
      %999 = vmatprep.subr.bf16.mxu0 0
      %1000 = vmatpush1.bf16.msra.mxu0 0
      %1001 = vmatprep.subr.bf16.mxu0 0
      %1002 = vmatpush1.bf16.msra.mxu0 0
      %1003 = vmatprep.subr.bf16.mxu0 0
      %1004 = vmatpush1.bf16.msra.mxu0 0
      %1005 = vmatprep.mubr.bf16.mxu0 0
      %1006 = vmatmul.mubr.bf16.gmra.mrb[0].mxu0 %v962
      %v1007 = vpop.f32.mrb[0].mxu0
      %v1008 = vadd.f32 0.0, %v1007
      %v1009 = vpop.f32.mrb[0].mxu0
      %v1010 = vadd.f32 0.0, %v1009
      %v1011 = vpop.f32.mrb[0].mxu0
      %v1012 = vadd.f32 0.0, %v1011
      %v1013 = vpop.f32.mrb[0].mxu0
      %v1014 = vadd.f32 0.0, %v1013
      %1015 = vmatprep.mubr.bf16.mxu0 0
      %1016 = vmatmul.mubr.bf16.gmra.mrb[0].mxu0 %v965
      %v1017 = vpop.f32.mrb[0].mxu0
      %v1018 = vadd.f32 0.0, %v1017
      %v1019 = vpop.f32.mrb[0].mxu0
      %v1020 = vadd.f32 0.0, %v1019
      %v1021 = vpop.f32.mrb[0].mxu0
      %v1022 = vadd.f32 0.0, %v1021
      %v1023 = vpop.f32.mrb[0].mxu0
      %v1024 = vadd.f32 0.0, %v1023
      %1025 = vmatprep.mubr.bf16.mxu0 0
      %1026 = vmatmul.mubr.bf16.gmra.mrb[0].mxu0 %v968
      %v1027 = vpop.f32.mrb[0].mxu0
      %v1028 = vadd.f32 0.0, %v1027
      %v1029 = vpop.f32.mrb[0].mxu0
      %v1030 = vadd.f32 0.0, %v1029
      %v1031 = vpop.f32.mrb[0].mxu0
      %v1032 = vadd.f32 0.0, %v1031
      %v1033 = vpop.f32.mrb[0].mxu0
      %v1034 = vadd.f32 0.0, %v1033
      %1035 = vmatprep.mubr.bf16.mxu0 0
      %1036 = vmatmul.mubr.bf16.gmra.mrb[0].mxu0 %v971
      %v1037 = vpop.f32.mrb[0].mxu0
      %v1038 = vadd.f32 0.0, %v1037
      %v1039 = vpop.f32.mrb[0].mxu0
      %v1040 = vadd.f32 0.0, %v1039
      %v1041 = vpop.f32.mrb[0].mxu0
      %v1042 = vadd.f32 0.0, %v1041
      %v1043 = vpop.f32.mrb[0].mxu0
      %v1044 = vadd.f32 0.0, %v1043
      %1045 = vdwg.mxu0
      %1046 = vmatprep.subr.bf16.mxu0 %v605
      %1047 = vmatpush1.bf16.msra.mxu0 %v604
      %1048 = vmatprep.subr.bf16.mxu0 %v613
      %1049 = vmatpush1.bf16.msra.mxu0 %v612
      %1050 = vmatprep.subr.bf16.mxu0 0
      %1051 = vmatpush1.bf16.msra.mxu0 0
      %1052 = vmatprep.subr.bf16.mxu0 0
      %1053 = vmatpush1.bf16.msra.mxu0 0
      %1054 = vmatprep.subr.bf16.mxu0 0
      %1055 = vmatpush1.bf16.msra.mxu0 0
      %1056 = vmatprep.subr.bf16.mxu0 0
      %1057 = vmatpush1.bf16.msra.mxu0 0
      %1058 = vmatprep.subr.bf16.mxu0 0
      %1059 = vmatpush1.bf16.msra.mxu0 0
      %1060 = vmatprep.subr.bf16.mxu0 0
      %1061 = vmatpush1.bf16.msra.mxu0 0
      %1062 = vmatprep.subr.bf16.mxu0 0
      %1063 = vmatpush1.bf16.msra.mxu0 0
      %1064 = vmatprep.subr.bf16.mxu0 0
      %1065 = vmatpush1.bf16.msra.mxu0 0
      %1066 = vmatprep.subr.bf16.mxu0 0
      %1067 = vmatpush1.bf16.msra.mxu0 0
      %1068 = vmatprep.subr.bf16.mxu0 0
      %1069 = vmatpush1.bf16.msra.mxu0 0
      %1070 = vmatprep.subr.bf16.mxu0 0
      %1071 = vmatpush1.bf16.msra.mxu0 0
      %1072 = vmatprep.subr.bf16.mxu0 0
      %1073 = vmatpush1.bf16.msra.mxu0 0
      %1074 = vmatprep.subr.bf16.mxu0 0
      %1075 = vmatpush1.bf16.msra.mxu0 0
      %1076 = vmatprep.subr.bf16.mxu0 0
      %1077 = vmatpush1.bf16.msra.mxu0 0
      %1078 = vmatprep.mubr.bf16.mxu0 0
      %1079 = vmatmul.mubr.bf16.gmra.mrb[0].mxu0 %v962
      %v1080 = vpop.f32.mrb[0].mxu0
      %v1081 = vadd.f32 0.0, %v1080
      %v1082 = vpop.f32.mrb[0].mxu0
      %v1083 = vadd.f32 0.0, %v1082
      %v1084 = vpop.f32.mrb[0].mxu0
      %v1085 = vadd.f32 0.0, %v1084
      %v1086 = vpop.f32.mrb[0].mxu0
      %v1087 = vadd.f32 0.0, %v1086
      %1088 = vmatprep.mubr.bf16.mxu0 0
      %1089 = vmatmul.mubr.bf16.gmra.mrb[0].mxu0 %v965
      %v1090 = vpop.f32.mrb[0].mxu0
      %v1091 = vadd.f32 0.0, %v1090
      %v1092 = vpop.f32.mrb[0].mxu0
      %v1093 = vadd.f32 0.0, %v1092
      %v1094 = vpop.f32.mrb[0].mxu0
      %v1095 = vadd.f32 0.0, %v1094
      %v1096 = vpop.f32.mrb[0].mxu0
      %v1097 = vadd.f32 0.0, %v1096
      %1098 = vmatprep.mubr.bf16.mxu0 0
      %1099 = vmatmul.mubr.bf16.gmra.mrb[0].mxu0 %v968
      %v1100 = vpop.f32.mrb[0].mxu0
      %v1101 = vadd.f32 0.0, %v1100
      %v1102 = vpop.f32.mrb[0].mxu0
      %v1103 = vadd.f32 0.0, %v1102
      %v1104 = vpop.f32.mrb[0].mxu0
      %v1105 = vadd.f32 0.0, %v1104
      %v1106 = vpop.f32.mrb[0].mxu0
      %v1107 = vadd.f32 0.0, %v1106
      %1108 = vmatprep.mubr.bf16.mxu0 0
      %1109 = vmatmul.mubr.bf16.gmra.mrb[0].mxu0 %v971
      %v1110 = vpop.f32.mrb[0].mxu0
      %v1111 = vadd.f32 0.0, %v1110
      %v1112 = vpop.f32.mrb[0].mxu0
      %v1113 = vadd.f32 0.0, %v1112
      %v1114 = vpop.f32.mrb[0].mxu0
      %v1115 = vadd.f32 0.0, %v1114
      %v1116 = vpop.f32.mrb[0].mxu0
      %v1117 = vadd.f32 0.0, %v1116
      %1118 = vdwg.mxu0
      %1119 = vmatprep.subr.bf16.mxu0 %v607
      %1120 = vmatpush1.bf16.msra.mxu0 %v606
      %1121 = vmatprep.subr.bf16.mxu0 %v615
      %1122 = vmatpush1.bf16.msra.mxu0 %v614
      %1123 = vmatprep.subr.bf16.mxu0 0
      %1124 = vmatpush1.bf16.msra.mxu0 0
      %1125 = vmatprep.subr.bf16.mxu0 0
      %1126 = vmatpush1.bf16.msra.mxu0 0
      %1127 = vmatprep.subr.bf16.mxu0 0
      %1128 = vmatpush1.bf16.msra.mxu0 0
      %1129 = vmatprep.subr.bf16.mxu0 0
      %1130 = vmatpush1.bf16.msra.mxu0 0
      %1131 = vmatprep.subr.bf16.mxu0 0
      %1132 = vmatpush1.bf16.msra.mxu0 0
      %1133 = vmatprep.subr.bf16.mxu0 0
      %1134 = vmatpush1.bf16.msra.mxu0 0
      %1135 = vmatprep.subr.bf16.mxu0 0
      %1136 = vmatpush1.bf16.msra.mxu0 0
      %1137 = vmatprep.subr.bf16.mxu0 0
      %1138 = vmatpush1.bf16.msra.mxu0 0
      %1139 = vmatprep.subr.bf16.mxu0 0
      %1140 = vmatpush1.bf16.msra.mxu0 0
      %1141 = vmatprep.subr.bf16.mxu0 0
      %1142 = vmatpush1.bf16.msra.mxu0 0
      %1143 = vmatprep.subr.bf16.mxu0 0
      %1144 = vmatpush1.bf16.msra.mxu0 0
      %1145 = vmatprep.subr.bf16.mxu0 0
      %1146 = vmatpush1.bf16.msra.mxu0 0
      %1147 = vmatprep.subr.bf16.mxu0 0
      %1148 = vmatpush1.bf16.msra.mxu0 0
      %1149 = vmatprep.subr.bf16.mxu0 0
      %1150 = vmatpush1.bf16.msra.mxu0 0
      %1151 = vmatprep.mubr.bf16.mxu0 0
      %1152 = vmatmul.mubr.bf16.gmra.mrb[0].mxu0 %v962
      %v1153 = vpop.f32.mrb[0].mxu0
      %v1154 = vadd.f32 0.0, %v1153
      %v1155 = vpop.f32.mrb[0].mxu0
      %v1156 = vadd.f32 0.0, %v1155
      %v1157 = vpop.f32.mrb[0].mxu0
      %v1158 = vadd.f32 0.0, %v1157
      %v1159 = vpop.f32.mrb[0].mxu0
      %v1160 = vadd.f32 0.0, %v1159
      %1161 = vmatprep.mubr.bf16.mxu0 0
      %1162 = vmatmul.mubr.bf16.gmra.mrb[0].mxu0 %v965
      %v1163 = vpop.f32.mrb[0].mxu0
      %v1164 = vadd.f32 0.0, %v1163
      %v1165 = vpop.f32.mrb[0].mxu0
      %v1166 = vadd.f32 0.0, %v1165
      %v1167 = vpop.f32.mrb[0].mxu0
      %v1168 = vadd.f32 0.0, %v1167
      %v1169 = vpop.f32.mrb[0].mxu0
      %v1170 = vadd.f32 0.0, %v1169
      %1171 = vmatprep.mubr.bf16.mxu0 0
      %1172 = vmatmul.mubr.bf16.gmra.mrb[0].mxu0 %v968
      %v1173 = vpop.f32.mrb[0].mxu0
      %v1174 = vadd.f32 0.0, %v1173
      %v1175 = vpop.f32.mrb[0].mxu0
      %v1176 = vadd.f32 0.0, %v1175
      %v1177 = vpop.f32.mrb[0].mxu0
      %v1178 = vadd.f32 0.0, %v1177
      %v1179 = vpop.f32.mrb[0].mxu0
      %v1180 = vadd.f32 0.0, %v1179
      %1181 = vmatprep.mubr.bf16.mxu0 0
      %1182 = vmatmul.mubr.bf16.gmra.mrb[0].mxu0 %v971
      %v1183 = vpop.f32.mrb[0].mxu0
      %v1184 = vadd.f32 0.0, %v1183
      %v1185 = vpop.f32.mrb[0].mxu0
      %v1186 = vadd.f32 0.0, %v1185
      %v1187 = vpop.f32.mrb[0].mxu0
      %v1188 = vadd.f32 0.0, %v1187
      %v1189 = vpop.f32.mrb[0].mxu0
      %v1190 = vadd.f32 0.0, %v1189
      %1191 = vdwg.mxu0
      %1192 = vmatprep.subr.bf16.mxu0 %v609
      %1193 = vmatpush1.bf16.msra.mxu0 %v608
      %1194 = vmatprep.subr.bf16.mxu0 %v617
      %1195 = vmatpush1.bf16.msra.mxu0 %v616
      %1196 = vmatprep.subr.bf16.mxu0 0
      %1197 = vmatpush1.bf16.msra.mxu0 0
      %1198 = vmatprep.subr.bf16.mxu0 0
      %1199 = vmatpush1.bf16.msra.mxu0 0
      %1200 = vmatprep.subr.bf16.mxu0 0
      %1201 = vmatpush1.bf16.msra.mxu0 0
      %1202 = vmatprep.subr.bf16.mxu0 0
      %1203 = vmatpush1.bf16.msra.mxu0 0
      %1204 = vmatprep.subr.bf16.mxu0 0
      %1205 = vmatpush1.bf16.msra.mxu0 0
      %1206 = vmatprep.subr.bf16.mxu0 0
      %1207 = vmatpush1.bf16.msra.mxu0 0
      %1208 = vmatprep.subr.bf16.mxu0 0
      %1209 = vmatpush1.bf16.msra.mxu0 0
      %1210 = vmatprep.subr.bf16.mxu0 0
      %1211 = vmatpush1.bf16.msra.mxu0 0
      %1212 = vmatprep.subr.bf16.mxu0 0
      %1213 = vmatpush1.bf16.msra.mxu0 0
      %1214 = vmatprep.subr.bf16.mxu0 0
      %1215 = vmatpush1.bf16.msra.mxu0 0
      %1216 = vmatprep.subr.bf16.mxu0 0
      %1217 = vmatpush1.bf16.msra.mxu0 0
      %1218 = vmatprep.subr.bf16.mxu0 0
      %1219 = vmatpush1.bf16.msra.mxu0 0
      %1220 = vmatprep.subr.bf16.mxu0 0
      %1221 = vmatpush1.bf16.msra.mxu0 0
      %1222 = vmatprep.subr.bf16.mxu0 0
      %1223 = vmatpush1.bf16.msra.mxu0 0
      %1224 = vmatprep.mubr.bf16.mxu0 0
      %1225 = vmatmul.mubr.bf16.gmra.mrb[0].mxu0 %v962
      %v1226 = vpop.f32.mrb[0].mxu0
      %v1227 = vadd.f32 0.0, %v1226
      %v1228 = vpop.f32.mrb[0].mxu0
      %v1229 = vadd.f32 0.0, %v1228
      %v1230 = vpop.f32.mrb[0].mxu0
      %v1231 = vadd.f32 0.0, %v1230
      %v1232 = vpop.f32.mrb[0].mxu0
      %v1233 = vadd.f32 0.0, %v1232
      %1234 = vmatprep.mubr.bf16.mxu0 0
      %1235 = vmatmul.mubr.bf16.gmra.mrb[0].mxu0 %v965
      %v1236 = vpop.f32.mrb[0].mxu0
      %v1237 = vadd.f32 0.0, %v1236
      %v1238 = vpop.f32.mrb[0].mxu0
      %v1239 = vadd.f32 0.0, %v1238
      %v1240 = vpop.f32.mrb[0].mxu0
      %v1241 = vadd.f32 0.0, %v1240
      %v1242 = vpop.f32.mrb[0].mxu0
      %v1243 = vadd.f32 0.0, %v1242
      %1244 = vmatprep.mubr.bf16.mxu0 0
      %1245 = vmatmul.mubr.bf16.gmra.mrb[0].mxu0 %v968
      %v1246 = vpop.f32.mrb[0].mxu0
      %v1247 = vadd.f32 0.0, %v1246
      %v1248 = vpop.f32.mrb[0].mxu0
      %v1249 = vadd.f32 0.0, %v1248
      %v1250 = vpop.f32.mrb[0].mxu0
      %v1251 = vadd.f32 0.0, %v1250
      %v1252 = vpop.f32.mrb[0].mxu0
      %v1253 = vadd.f32 0.0, %v1252
      %1254 = vmatprep.mubr.bf16.mxu0 0
      %1255 = vmatmul.mubr.bf16.gmra.mrb[0].mxu0 %v971
      %v1256 = vpop.f32.mrb[0].mxu0
      %v1257 = vadd.f32 0.0, %v1256
      %v1258 = vpop.f32.mrb[0].mxu0
      %v1259 = vadd.f32 0.0, %v1258
      %v1260 = vpop.f32.mrb[0].mxu0
      %v1261 = vadd.f32 0.0, %v1260
      %v1262 = vpop.f32.mrb[0].mxu0
      %v1263 = vadd.f32 0.0, %v1262
      %1264 = vdwg.mxu0
      %v1265 = vmul.f32 %v1008, %v908
      %v1266 = vmul.f32 %v1010, %v909
      %v1267 = vmul.f32 %v1081, %v910
      %v1268 = vmul.f32 %v1083, %v911
      %v1269 = vmul.f32 %v1154, %v912
      %v1270 = vmul.f32 %v1156, %v913
      %v1271 = vmul.f32 %v1227, %v914
      %v1272 = vmul.f32 %v1229, %v915
      %v1273 = vmul.f32 %v1012, %v916
      %v1274 = vmul.f32 %v1014, %v917
      %v1275 = vmul.f32 %v1085, %v918
      %v1276 = vmul.f32 %v1087, %v919
      %v1277 = vmul.f32 %v1158, %v920
      %v1278 = vmul.f32 %v1160, %v921
      %v1279 = vmul.f32 %v1231, %v922
      %v1280 = vmul.f32 %v1233, %v923
      %v1281 = vmul.f32 %v1018, %v924
      %v1282 = vmul.f32 %v1020, %v925
      %v1283 = vmul.f32 %v1091, %v926
      %v1284 = vmul.f32 %v1093, %v927
      %v1285 = vmul.f32 %v1164, %v928
      %v1286 = vmul.f32 %v1166, %v929
      %v1287 = vmul.f32 %v1237, %v930
      %v1288 = vmul.f32 %v1239, %v931
      %v1289 = vmul.f32 %v1022, %v932
      %v1290 = vmul.f32 %v1024, %v933
      %v1291 = vmul.f32 %v1095, %v934
      %v1292 = vmul.f32 %v1097, %v935
      %v1293 = vmul.f32 %v1168, %v936
      %v1294 = vmul.f32 %v1170, %v937
      %v1295 = vmul.f32 %v1241, %v938
      %v1296 = vmul.f32 %v1243, %v939
      %v1297 = vmul.f32 %v1028, %v908
      %v1298 = vmul.f32 %v1030, %v909
      %v1299 = vmul.f32 %v1101, %v910
      %v1300 = vmul.f32 %v1103, %v911
      %v1301 = vmul.f32 %v1174, %v912
      %v1302 = vmul.f32 %v1176, %v913
      %v1303 = vmul.f32 %v1247, %v914
      %v1304 = vmul.f32 %v1249, %v915
      %v1305 = vmul.f32 %v1032, %v916
      %v1306 = vmul.f32 %v1034, %v917
      %v1307 = vmul.f32 %v1105, %v918
      %v1308 = vmul.f32 %v1107, %v919
      %v1309 = vmul.f32 %v1178, %v920
      %v1310 = vmul.f32 %v1180, %v921
      %v1311 = vmul.f32 %v1251, %v922
      %v1312 = vmul.f32 %v1253, %v923
      %v1313 = vmul.f32 %v1038, %v924
      %v1314 = vmul.f32 %v1040, %v925
      %v1315 = vmul.f32 %v1111, %v926
      %v1316 = vmul.f32 %v1113, %v927
      %v1317 = vmul.f32 %v1184, %v928
      %v1318 = vmul.f32 %v1186, %v929
      %v1319 = vmul.f32 %v1257, %v930
      %v1320 = vmul.f32 %v1259, %v931
      %v1321 = vmul.f32 %v1042, %v932
      %v1322 = vmul.f32 %v1044, %v933
      %v1323 = vmul.f32 %v1115, %v934
      %v1324 = vmul.f32 %v1117, %v935
      %v1325 = vmul.f32 %v1188, %v936
      %v1326 = vmul.f32 %v1190, %v937
      %v1327 = vmul.f32 %v1261, %v938
      %v1328 = vmul.f32 %v1263, %v939
      %v1329 = vadd.f32 %v1265, %v1273
      %v1330 = vadd.f32 %v1329, %v1281
      %v1331 = vadd.f32 %v1330, %v1289
      %v1332 = vrot.slane %v1331, 4
      %v1333 = vadd.f32 %v1331, %v1332
      %v1334 = vrot.slane %v1333, 2
      %v1335 = vadd.f32 %v1333, %v1334
      %v1336 = vrot.slane %v1335, 1
      %v1337 = vadd.f32 %v1335, %v1336
      %v1338 = vadd.f32 %v1266, %v1274
      %v1339 = vadd.f32 %v1338, %v1282
      %v1340 = vadd.f32 %v1339, %v1290
      %v1341 = vrot.slane %v1340, 4
      %v1342 = vadd.f32 %v1340, %v1341
      %v1343 = vrot.slane %v1342, 2
      %v1344 = vadd.f32 %v1342, %v1343
      %v1345 = vrot.slane %v1344, 1
      %v1346 = vadd.f32 %v1344, %v1345
      %v1347 = vadd.f32 %v1267, %v1275
      %v1348 = vadd.f32 %v1347, %v1283
      %v1349 = vadd.f32 %v1348, %v1291
      %v1350 = vrot.slane %v1349, 4
      %v1351 = vadd.f32 %v1349, %v1350
      %v1352 = vrot.slane %v1351, 2
      %v1353 = vadd.f32 %v1351, %v1352
      %v1354 = vrot.slane %v1353, 1
      %v1355 = vadd.f32 %v1353, %v1354
      %v1356 = vadd.f32 %v1268, %v1276
      %v1357 = vadd.f32 %v1356, %v1284
      %v1358 = vadd.f32 %v1357, %v1292
      %v1359 = vrot.slane %v1358, 4
      %v1360 = vadd.f32 %v1358, %v1359
      %v1361 = vrot.slane %v1360, 2
      %v1362 = vadd.f32 %v1360, %v1361
      %v1363 = vrot.slane %v1362, 1
      %v1364 = vadd.f32 %v1362, %v1363
      %v1365 = vadd.f32 %v1269, %v1277
      %v1366 = vadd.f32 %v1365, %v1285
      %v1367 = vadd.f32 %v1366, %v1293
      %v1368 = vrot.slane %v1367, 4
      %v1369 = vadd.f32 %v1367, %v1368
      %v1370 = vrot.slane %v1369, 2
      %v1371 = vadd.f32 %v1369, %v1370
      %v1372 = vrot.slane %v1371, 1
      %v1373 = vadd.f32 %v1371, %v1372
      %v1374 = vadd.f32 %v1270, %v1278
      %v1375 = vadd.f32 %v1374, %v1286
      %v1376 = vadd.f32 %v1375, %v1294
      %v1377 = vrot.slane %v1376, 4
      %v1378 = vadd.f32 %v1376, %v1377
      %v1379 = vrot.slane %v1378, 2
      %v1380 = vadd.f32 %v1378, %v1379
      %v1381 = vrot.slane %v1380, 1
      %v1382 = vadd.f32 %v1380, %v1381
      %v1383 = vadd.f32 %v1271, %v1279
      %v1384 = vadd.f32 %v1383, %v1287
      %v1385 = vadd.f32 %v1384, %v1295
      %v1386 = vrot.slane %v1385, 4
      %v1387 = vadd.f32 %v1385, %v1386
      %v1388 = vrot.slane %v1387, 2
      %v1389 = vadd.f32 %v1387, %v1388
      %v1390 = vrot.slane %v1389, 1
      %v1391 = vadd.f32 %v1389, %v1390
      %v1392 = vadd.f32 %v1272, %v1280
      %v1393 = vadd.f32 %v1392, %v1288
      %v1394 = vadd.f32 %v1393, %v1296
      %v1395 = vrot.slane %v1394, 4
      %v1396 = vadd.f32 %v1394, %v1395
      %v1397 = vrot.slane %v1396, 2
      %v1398 = vadd.f32 %v1396, %v1397
      %v1399 = vrot.slane %v1398, 1
      %v1400 = vadd.f32 %v1398, %v1399
      %v1401 = vadd.f32 %v1297, %v1305
      %v1402 = vadd.f32 %v1401, %v1313
      %v1403 = vadd.f32 %v1402, %v1321
      %v1404 = vrot.slane %v1403, 4
      %v1405 = vadd.f32 %v1403, %v1404
      %v1406 = vrot.slane %v1405, 2
      %v1407 = vadd.f32 %v1405, %v1406
      %v1408 = vrot.slane %v1407, 1
      %v1409 = vadd.f32 %v1407, %v1408
      %v1410 = vadd.f32 %v1298, %v1306
      %v1411 = vadd.f32 %v1410, %v1314
      %v1412 = vadd.f32 %v1411, %v1322
      %v1413 = vrot.slane %v1412, 4
      %v1414 = vadd.f32 %v1412, %v1413
      %v1415 = vrot.slane %v1414, 2
      %v1416 = vadd.f32 %v1414, %v1415
      %v1417 = vrot.slane %v1416, 1
      %v1418 = vadd.f32 %v1416, %v1417
      %v1419 = vadd.f32 %v1299, %v1307
      %v1420 = vadd.f32 %v1419, %v1315
      %v1421 = vadd.f32 %v1420, %v1323
      %v1422 = vrot.slane %v1421, 4
      %v1423 = vadd.f32 %v1421, %v1422
      %v1424 = vrot.slane %v1423, 2
      %v1425 = vadd.f32 %v1423, %v1424
      %v1426 = vrot.slane %v1425, 1
      %v1427 = vadd.f32 %v1425, %v1426
      %v1428 = vadd.f32 %v1300, %v1308
      %v1429 = vadd.f32 %v1428, %v1316
      %v1430 = vadd.f32 %v1429, %v1324
      %v1431 = vrot.slane %v1430, 4
      %v1432 = vadd.f32 %v1430, %v1431
      %v1433 = vrot.slane %v1432, 2
      %v1434 = vadd.f32 %v1432, %v1433
      %v1435 = vrot.slane %v1434, 1
      %v1436 = vadd.f32 %v1434, %v1435
      %v1437 = vadd.f32 %v1301, %v1309
      %v1438 = vadd.f32 %v1437, %v1317
      %v1439 = vadd.f32 %v1438, %v1325
      %v1440 = vrot.slane %v1439, 4
      %v1441 = vadd.f32 %v1439, %v1440
      %v1442 = vrot.slane %v1441, 2
      %v1443 = vadd.f32 %v1441, %v1442
      %v1444 = vrot.slane %v1443, 1
      %v1445 = vadd.f32 %v1443, %v1444
      %v1446 = vadd.f32 %v1302, %v1310
      %v1447 = vadd.f32 %v1446, %v1318
      %v1448 = vadd.f32 %v1447, %v1326
      %v1449 = vrot.slane %v1448, 4
      %v1450 = vadd.f32 %v1448, %v1449
      %v1451 = vrot.slane %v1450, 2
      %v1452 = vadd.f32 %v1450, %v1451
      %v1453 = vrot.slane %v1452, 1
      %v1454 = vadd.f32 %v1452, %v1453
      %v1455 = vadd.f32 %v1303, %v1311
      %v1456 = vadd.f32 %v1455, %v1319
      %v1457 = vadd.f32 %v1456, %v1327
      %v1458 = vrot.slane %v1457, 4
      %v1459 = vadd.f32 %v1457, %v1458
      %v1460 = vrot.slane %v1459, 2
      %v1461 = vadd.f32 %v1459, %v1460
      %v1462 = vrot.slane %v1461, 1
      %v1463 = vadd.f32 %v1461, %v1462
      %v1464 = vadd.f32 %v1304, %v1312
      %v1465 = vadd.f32 %v1464, %v1320
      %v1466 = vadd.f32 %v1465, %v1328
      %v1467 = vrot.slane %v1466, 4
      %v1468 = vadd.f32 %v1466, %v1467
      %v1469 = vrot.slane %v1468, 2
      %v1470 = vadd.f32 %v1468, %v1469
      %v1471 = vrot.slane %v1470, 1
      %v1472 = vadd.f32 %v1470, %v1471
      %v1489 = vcombine.low %v1337, %v1346
      %v1490 = vcombine.low %v1355, %v1364
      %v1492 = vunpack.c.l.s4 1983009808
      %v1493 = vunpack.c.0.s8 %v1492
      %v1494 = vlaneseq
      %v1495 = vshrl.u32 %v1494, 7
      %v1496 = vsub.s32 %v1493, %v1495
      %v1497 = vrot.slane %v1489, %v1496
      %v1499 = vunpack.c.l.s4 1983009808
      %v1500 = vunpack.c.0.s8 %v1499
      %v1501 = vlaneseq
      %v1502 = vshrl.u32 %v1501, 7
      %v1503 = vsub.s32 %v1500, %v1502
      %v1504 = vrot.slane %v1490, %v1503
      %v1505 = vcombine.low %v1497, %v1504
      %v1506 = vcombine.low %v1373, %v1382
      %v1507 = vcombine.low %v1391, %v1400
      %v1509 = vunpack.c.l.s4 1983009808
      %v1510 = vunpack.c.0.s8 %v1509
      %v1511 = vlaneseq
      %v1512 = vshrl.u32 %v1511, 7
      %v1513 = vsub.s32 %v1510, %v1512
      %v1514 = vrot.slane %v1506, %v1513
      %v1516 = vunpack.c.l.s4 1983009808
      %v1517 = vunpack.c.0.s8 %v1516
      %v1518 = vlaneseq
      %v1519 = vshrl.u32 %v1518, 7
      %v1520 = vsub.s32 %v1517, %v1519
      %v1521 = vrot.slane %v1507, %v1520
      %v1522 = vcombine.low %v1514, %v1521
      %v1523 = vcombine.low %v1409, %v1418
      %v1524 = vcombine.low %v1427, %v1436
      %v1526 = vunpack.c.l.s4 1983009808
      %v1527 = vunpack.c.0.s8 %v1526
      %v1528 = vlaneseq
      %v1529 = vshrl.u32 %v1528, 7
      %v1530 = vsub.s32 %v1527, %v1529
      %v1531 = vrot.slane %v1523, %v1530
      %v1533 = vunpack.c.l.s4 1983009808
      %v1534 = vunpack.c.0.s8 %v1533
      %v1535 = vlaneseq
      %v1536 = vshrl.u32 %v1535, 7
      %v1537 = vsub.s32 %v1534, %v1536
      %v1538 = vrot.slane %v1524, %v1537
      %v1539 = vcombine.low %v1531, %v1538
      %v1540 = vcombine.low %v1445, %v1454
      %v1541 = vcombine.low %v1463, %v1472
      %v1543 = vunpack.c.l.s4 1983009808
      %v1544 = vunpack.c.0.s8 %v1543
      %v1545 = vlaneseq
      %v1546 = vshrl.u32 %v1545, 7
      %v1547 = vsub.s32 %v1544, %v1546
      %v1548 = vrot.slane %v1540, %v1547
      %v1550 = vunpack.c.l.s4 1983009808
      %v1551 = vunpack.c.0.s8 %v1550
      %v1552 = vlaneseq
      %v1553 = vshrl.u32 %v1552, 7
      %v1554 = vsub.s32 %v1551, %v1553
      %v1555 = vrot.slane %v1541, %v1554
      %v1556 = vcombine.low %v1548, %v1555
      %vm1557 = vcmask 1044484
      %v1558 = vsel %vm1557, %v1505, %v1505
      %vm1559 = vcmask 1046534
      %v1560 = vsel %vm1559, %v1505, %v1558
      %v1561 = vrot.slane %v1539, 7
      %vm1562 = vcmask 1041409
      %v1563 = vsel %vm1562, %v1561, %v1560
      %vm1564 = vcmask 1043459
      %v1565 = vsel %vm1564, %v1561, %v1563
      %vm1566 = vcmask 1045509
      %v1567 = vsel %vm1566, %v1561, %v1565
      %vm1568 = vcmask 1047559
      %v1569 = vsel %vm1568, %v1561, %v1567
      %v1570 = vsel %vm1557, %v1522, %v1522
      %v1571 = vsel %vm1559, %v1522, %v1570
      %v1572 = vrot.slane %v1556, 7
      %v1573 = vsel %vm1562, %v1572, %v1571
      %v1574 = vsel %vm1564, %v1572, %v1573
      %v1575 = vsel %vm1566, %v1572, %v1574
      %v1576 = vsel %vm1568, %v1572, %v1575
      %1579 = vst [vmem:[%s258] sm:$0xff] %v1569
      %1580 = vst [vmem:[%s258 + $0x8] sm:$0xff] %v1576
      %s1581 = smul.u32 8, %s19
      %p1582 = scmp.lt.s32.totalorder %s18, 1
      %s1583 = scalar_select %p1582, %s18, 1
      %p1584 = scmp.lt.s32.totalorder %s1581, 7
      %s1585 = scalar_select %p1584, %s1581, 7
      %s1586 = smul.addr %s1583, 8
      %s1587 = sadd.s32 %s1585, %s1586
      %s1588 = smul.addr %s1587, 2
      %s1589 = scalar_lea.vmem %s3, %s1588
      // Predicated region
      $region33: #{stn_forward.9} parent=31 // pred_check
        %p1590 = pneg %p128
      $region34: #{stn_forward.9} parent=31 // pred_check_branch
        %1592 = sbr.rel (%p1590) target = $region36
      $region35: #{stn_forward.9} parent=31 // pred_region
        %s1593 = smul.u32 8, %s19
      $region36: #{stn_forward.9} parent=31 // pred_fallthru
        _
    $region32: #{stn_forward.9} parent=5 // pred_fallthru
      _
    %p1594 = scmp.le.s32.totalorder 2, %s9
    // Predicated region
    $region37: #{stn_forward.9} parent=5 // pred_check
      %p1595 = pneg %p1594
    $region38: #{stn_forward.9} parent=5 // pred_check_branch
      %1597 = sbr.rel (%p1595) target = $region40
    $region39: #{stn_forward.9} parent=5 // pred_region
      %s1598 = ssub.s32 %s9, 2
      // Predicated region
      $region41: #{stn_forward.9} parent=39 // pred_check
        %p1599 = pneg %p134
      $region42: #{stn_forward.9} parent=39 // pred_check_branch
        %1601 = sbr.rel (%p1599) target = $region44
      $region43: #{stn_forward.9} parent=39 // pred_region
        %s1602 = smul.u32 8, %s21
        %p1603 = scmp.lt.s32.totalorder %s20, 1
        %s1604 = scalar_select %p1603, %s20, 1
        %p1605 = scmp.lt.s32.totalorder %s1602, 7
        %s1606 = scalar_select %p1605, %s1602, 7
        %s1607 = smul.addr %s1604, 8
        %s1608 = sadd.s32 %s1606, %s1607
        %s1609 = smul.addr %s1608, 2
        %s1610 = scalar_lea.vmem %s3, %s1609
      $region44: #{stn_forward.9} parent=39 // pred_fallthru
        _
    $region40: #{stn_forward.9} parent=5 // pred_fallthru
      _
  $region6: #{stn_forward.9} parent=0 // loop_footer
    %s13 = sadd.s32 1, %s9
  $region7: #{stn_forward.9} parent=0 // loop_footer_branch
    %8 = sbr.rel target = $region3
  $region8: #{stn_forward.9} parent=0 // loop_exit
    _

</llo_original>
